<compile_context>
chip_gen: v5e
topology: v5e:2x2
jax: 0.10.0
libtpu: 0.0.40
codegen_flags: <defaults>
</compile_context>

<pallas_src>
import functools
import math

import jax
import jax.numpy as jnp
from jax import lax
from jax.experimental import pallas as pl
from jax.experimental.pallas import tpu as pltpu

# ----------------------------- module configuration --------------------------
D_MODEL = 32                      # configs.d_model
D_STATE = 8                       # configs.d_state
D_CONV  = 4                       # configs.d_conv
S_EXT   = 512                     # hardcoded: TemporalExternalAttn(d_model, 512)
D_INNER = 2 * D_MODEL             # Mamba expand = 2
DT_RANK = math.ceil(D_MODEL / 16) # Mamba dt_rank = "auto"
EPS_LN  = 1e-5
_SQRT2  = math.sqrt(2.0)

B_BLOCK = 8                       # sequences per grid step ("parallel" axis tile);
                                  # multiple of 8 keeps per-timestep row offsets
                                  # sublane-aligned.  Raise to cap-fill VMEM if the
                                  # problem ever scales (v7x: keep 2*(L*B_BLOCK*512*4B)
                                  # + weights well under the ~32 MiB scoped VMEM).
ATTN_DTYPE = jnp.bfloat16         # set to jnp.float32 on v5e if exact-f32 attention
                                  # is preferred (GEMMs are latency-bound there).


# ------------------------------- kernel helpers ------------------------------
def _gelu_exact(x):
    # matches torch nn.GELU() (approximate='none')
    return 0.5 * x * (1.0 + lax.erf(x / _SQRT2))


def _sigmoid(x):
    # approx reciprocal goes to the EUP slot; ~2^-12 rel err vs exact divide.
    return pl.reciprocal(1.0 + jnp.exp(-x), approx=True)


def _silu(x):
    return x * _sigmoid(x)


def _softplus(x):
    return jnp.maximum(x, 0.0) + jnp.log(1.0 + jnp.exp(-jnp.abs(x)))


# --------------------------------- fused kernel ------------------------------
def _msb_kernel(x_ref, wmk_ref, wmv_ref, lng_ref, lnb_ref,
                win_ref, cw_ref, cb_ref, wxp_ref, wdt_ref, bdt_ref,
                alog_ref, dskip_ref, wout_ref,
                o_ref, convpad_ref, *, seq_len):
    L = seq_len
    R = x_ref.shape[0]            # L * B_BLOCK, time-major rows
    Bb = R // L                   # sequences in this grid block

    x = x_ref[...]                                                         # (R, d_model) f32

    # ---- TemporalExternalAttn: softmax(x @ Wmk) @ Wmv ------------------------
    q = x.astype(wmk_ref.dtype)
    attn = jnp.dot(q, wmk_ref[...], preferred_element_type=jnp.float32)    # (R, 512)
    attn = jnp.exp(attn - jnp.max(attn, axis=-1, keepdims=True))
    denom = jnp.sum(attn, axis=-1, keepdims=True)                          # (R, 1)
    out = jnp.dot(attn.astype(wmv_ref.dtype), wmv_ref[...],
                  preferred_element_type=jnp.float32)                      # (R, d_model)
    # softmax denominator folded after the (linear) second GEMM: scales a
    # (R, d_model) tensor instead of the (R, 512) attn matrix — identical math.
    out = out * pl.reciprocal(denom, approx=True)

    # ---- LayerNorm + GELU + residual -----------------------------------------
    mu = jnp.mean(out, axis=-1, keepdims=True)
    var = jnp.mean((out - mu) ** 2, axis=-1, keepdims=True)
    out = (out - mu) * lax.rsqrt(var + EPS_LN)
    out = out * lng_ref[...] + lnb_ref[...]
    xo = _gelu_exact(out) + x                                              # (R, d_model)

    # ---- Mamba ----------------------------------------------------------------
    # fused in-projection [x | z]: single lane-dense (d_model, 2*d_inner) GEMM.
    xz = jnp.dot(xo, win_ref[...], preferred_element_type=jnp.float32)     # (R, 2*d_inner)
    xc = xz[:, :D_INNER]
    z = xz[:, D_INNER:]

    # causal depthwise conv1d (kernel d_conv, pad d_conv-1, truncate to L):
    # zero ONLY the left-pad rows, write the body, read shifted row windows.
    lp = (D_CONV - 1) * Bb
    convpad_ref[0:lp, :] = jnp.zeros((lp, D_INNER), jnp.float32)
    convpad_ref[lp:, :] = xc
    cw = cw_ref[...]                                                       # (d_conv, d_inner)
    acc = convpad_ref[0:R, :] * cw[0:1, :]
    for k in range(1, D_CONV):
        acc = acc + convpad_ref[k * Bb:k * Bb + R, :] * cw[k:k + 1, :]
    u = _silu(acc + cb_ref[...])                                           # (R, d_inner)

    # fused x_proj [dt | B | C]: one (d_inner, dt_rank + 2*d_state) GEMM.
    dbc = jnp.dot(u, wxp_ref[...], preferred_element_type=jnp.float32)     # (R, 18)
    dt_in = dbc[:, :DT_RANK]
    Bm = dbc[:, DT_RANK:DT_RANK + D_STATE]                                 # (R, d_state)
    Cm = dbc[:, DT_RANK + D_STATE:]                                        # (R, d_state)

    dt = jnp.dot(dt_in, wdt_ref[...],
                 preferred_element_type=jnp.float32) + bdt_ref[...]
    dt = _softplus(dt)                                                     # (R, d_inner)

    A_neg = -jnp.exp(alog_ref[...])                                        # (d_state, d_inner)

    # Precompute dA / dB*u for ALL timesteps: moves the exp-heavy work out of
    # the serial recurrence onto the EUP/VPU ahead of the scan.
    dA = jnp.exp(dt[:, None, :] * A_neg[None, :, :])                       # (R, ds, di)
    dBu = (dt * u)[:, None, :] * Bm[:, :, None]                            # (R, ds, di)

    silu_z = _silu(z)                                                      # (R, d_inner)
    dskip = dskip_ref[...]                                                 # (1, d_inner)
    wout = wout_ref[...]                                                   # (d_inner, d_model)

    # selective scan over time, batched over the Bb sequences; unrolled (L is
    # small — switch to lax.fori_loop with pl.ds/pl.multiple_of if L grows).
    h = jnp.zeros((Bb, D_STATE, D_INNER), jnp.float32)
    for t in range(L):
        r0 = t * Bb
        h = dA[r0:r0 + Bb] * h + dBu[r0:r0 + Bb]
        y_t = jnp.sum(h * Cm[r0:r0 + Bb, :, None], axis=1)                 # (Bb, d_inner)
        y_t = (y_t + u[r0:r0 + Bb, :] * dskip) * silu_z[r0:r0 + Bb, :]
        # gated out-projection written straight into the output ref: no y
        # scratch round-trip, each timestep's store retires independently.
        o_ref[r0:r0 + Bb, :] = jnp.dot(y_t, wout,
                                       preferred_element_type=jnp.float32)


# --------------------------------- wrapper ------------------------------------
def multi_scale_block(params, x, *, b_block=B_BLOCK):
    """MultiScaleBlock.forward.  x: (B, L, d_model) -> (B, L, d_model)."""
    B, L, D = x.shape
    assert D == D_MODEL

    # pad the batch up to a multiple of the block tile (host-side glue; padded
    # sequences are all-zero and sliced off the output).
    pad = (-B) % b_block
    if pad:
        x = jnp.concatenate([x, jnp.zeros((pad, L, D), x.dtype)], axis=0)
    Bp = B + pad
    nb = Bp // b_block
    r_blk = L * b_block

    # time-major rows inside each batch block: row = t * b_block + b
    rows = x.reshape(nb, b_block, L, D).transpose(0, 2, 1, 3).reshape(nb, r_blk, D)

    # attention weights: stored f32, cast once on the host to the compute dtype.
    weights = (params['w_mk'].astype(ATTN_DTYPE),
               params['w_mv'].astype(ATTN_DTYPE),
               params['ln_g'], params['ln_b'],
               params['w_in'], params['conv_w'], params['conv_b'],
               params['w_xproj'], params['w_dt'], params['b_dt'],
               params['A_log'], params['D'], params['w_out'])

    def _const_spec(a):
        # constant index_map: weight block never changes -> fetched once and
        # VMEM-resident across all grid steps.
        n = a.ndim
        return pl.BlockSpec(a.shape, lambda i, _n=n: (0,) * _n)

    in_specs = ([pl.BlockSpec((None, r_blk, D_MODEL), lambda i: (i, 0, 0))]
                + [_const_spec(w) for w in weights])

    out = pl.pallas_call(
        functools.partial(_msb_kernel, seq_len=L),
        out_shape=jax.ShapeDtypeStruct((nb, r_blk, D_MODEL), jnp.float32),
        grid=(nb,),
        in_specs=in_specs,
        out_specs=pl.BlockSpec((None, r_blk, D_MODEL), lambda i: (i, 0, 0)),
        scratch_shapes=[
            pltpu.VMEM(((L + D_CONV - 1) * b_block, D_INNER), jnp.float32),  # conv pad
        ],
        compiler_params=pltpu.CompilerParams(
            dimension_semantics=("parallel",)),       # batch blocks -> v7x megacore
    )(rows, *weights)

    y = out.reshape(nb, L, b_block, D).transpose(0, 2, 1, 3).reshape(Bp, L, D)
    return y[:B]


# ------------------------------- parameters -----------------------------------
def init_params(key):
    ks = jax.random.split(key, 16)
    it = iter(ks)

    def nrm(shape, scale=0.1):
        return scale * jax.random.normal(next(it), shape, jnp.float32)

    return {
        # TemporalExternalAttn: Linear(d_model, 512, bias=False), Linear(512, d_model, bias=False)
        'w_mk': nrm((D_MODEL, S_EXT)),
        'w_mv': nrm((S_EXT, D_MODEL)),
        # LayerNorm(d_model)
        'ln_g': jnp.ones((1, D_MODEL), jnp.float32),
        'ln_b': jnp.zeros((1, D_MODEL), jnp.float32),
        # Mamba in_proj (bias=False), fused [x | z] halves
        'w_in': nrm((D_MODEL, 2 * D_INNER)),
        # depthwise causal conv1d (groups=d_inner, bias=True)
        'conv_w': nrm((D_CONV, D_INNER)),
        'conv_b': nrm((1, D_INNER)),
        # x_proj (bias=False), fused [dt | B | C]
        'w_xproj': nrm((D_INNER, DT_RANK + 2 * D_STATE)),
        # dt_proj (bias=True)
        'w_dt': nrm((DT_RANK, D_INNER)),
        'b_dt': nrm((1, D_INNER), 0.5),
        # S4D-real A init, stored transposed as (d_state, d_inner)
        'A_log': jnp.broadcast_to(
            jnp.log(jnp.arange(1, D_STATE + 1, dtype=jnp.float32))[:, None],
            (D_STATE, D_INNER)),
        'D': jnp.ones((1, D_INNER), jnp.float32),
        # out_proj (bias=False)
        'w_out': nrm((D_INNER, D_MODEL)),
    }


# ----------------------------------- main --------------------------------------
if __name__ == "__main__":
    key = jax.random.PRNGKey(0)
    pkey, xkey = jax.random.split(key)
    params = init_params(pkey)

    # (batch * n_vars, patch_num, d_model) — the shape this block sees in PAMNet.
    B, L = 16, 16
    x = jax.random.normal(xkey, (B, L, D_MODEL), jnp.float32)

    y = jax.jit(multi_scale_block)(params, x)
    jax.block_until_ready(y)

    assert y.shape == (B, L, D_MODEL), y.shape
    assert bool(jnp.all(jnp.isfinite(y)))
    print("KERNEL_OK")
</pallas_src>

<mosaic_0001>
module attributes {stable_mosaic.version = 11 : i64} {
  func.func @_msb_kernel(%arg0: i32, %arg1: memref<1x128x32xf32, #tpu.memory_space<vmem>>, %arg2: memref<32x512xbf16, #tpu.memory_space<vmem>>, %arg3: memref<512x32xbf16, #tpu.memory_space<vmem>>, %arg4: memref<1x32xf32, #tpu.memory_space<vmem>>, %arg5: memref<1x32xf32, #tpu.memory_space<vmem>>, %arg6: memref<32x128xf32, #tpu.memory_space<vmem>>, %arg7: memref<4x64xf32, #tpu.memory_space<vmem>>, %arg8: memref<1x64xf32, #tpu.memory_space<vmem>>, %arg9: memref<64x18xf32, #tpu.memory_space<vmem>>, %arg10: memref<2x64xf32, #tpu.memory_space<vmem>>, %arg11: memref<1x64xf32, #tpu.memory_space<vmem>>, %arg12: memref<8x64xf32, #tpu.memory_space<vmem>>, %arg13: memref<1x64xf32, #tpu.memory_space<vmem>>, %arg14: memref<64x32xf32, #tpu.memory_space<vmem>>, %arg15: memref<1x128x32xf32, #tpu.memory_space<vmem>>, %arg16: memref<152x64xf32, #tpu.memory_space<vmem>>) attributes {dimension_semantics = [#tpu.dimension_semantics<parallel>], iteration_bounds = array<i64: 2>, scalar_prefetch = 0 : i64, scratch_operands = 1 : i64, tpu.core_type = #tpu.core_type<tc>, window_params = [{transform_indices = @transform_0, window_bounds = array<i64: 1, 128, 32>}, {pipeline_mode = #tpu.pipeline_mode<synchronous>, transform_indices = @transform_1, window_bounds = array<i64: 32, 512>}, {pipeline_mode = #tpu.pipeline_mode<synchronous>, transform_indices = @transform_2, window_bounds = array<i64: 512, 32>}, {pipeline_mode = #tpu.pipeline_mode<synchronous>, transform_indices = @transform_3, window_bounds = array<i64: 1, 32>}, {pipeline_mode = #tpu.pipeline_mode<synchronous>, transform_indices = @transform_4, window_bounds = array<i64: 1, 32>}, {pipeline_mode = #tpu.pipeline_mode<synchronous>, transform_indices = @transform_5, window_bounds = array<i64: 32, 128>}, {pipeline_mode = #tpu.pipeline_mode<synchronous>, transform_indices = @transform_6, window_bounds = array<i64: 4, 64>}, {pipeline_mode = #tpu.pipeline_mode<synchronous>, transform_indices = @transform_7, window_bounds = array<i64: 1, 64>}, {pipeline_mode = #tpu.pipeline_mode<synchronous>, transform_indices = @transform_8, window_bounds = array<i64: 64, 18>}, {pipeline_mode = #tpu.pipeline_mode<synchronous>, transform_indices = @transform_9, window_bounds = array<i64: 2, 64>}, {pipeline_mode = #tpu.pipeline_mode<synchronous>, transform_indices = @transform_10, window_bounds = array<i64: 1, 64>}, {pipeline_mode = #tpu.pipeline_mode<synchronous>, transform_indices = @transform_11, window_bounds = array<i64: 8, 64>}, {pipeline_mode = #tpu.pipeline_mode<synchronous>, transform_indices = @transform_12, window_bounds = array<i64: 1, 64>}, {pipeline_mode = #tpu.pipeline_mode<synchronous>, transform_indices = @transform_13, window_bounds = array<i64: 64, 32>}, {transform_indices = @transform_14, window_bounds = array<i64: 1, 128, 32>}]} {
    %c0 = arith.constant 0 : index
    %c0_0 = arith.constant 0 : index
    %c0_1 = arith.constant 0 : index
    %0 = vector.load %arg1[%c0, %c0_0, %c0_1] : memref<1x128x32xf32, #tpu.memory_space<vmem>>, vector<1x128x32xf32>
    %1 = vector.shape_cast %0 : vector<1x128x32xf32> to vector<128x32xf32>
    %2 = arith.truncf %1 : vector<128x32xf32> to vector<128x32xbf16>
    %c0_2 = arith.constant 0 : index
    %c0_3 = arith.constant 0 : index
    %3 = vector.load %arg2[%c0_2, %c0_3] : memref<32x512xbf16, #tpu.memory_space<vmem>>, vector<32x512xbf16>
    %cst = arith.constant dense<0.000000e+00> : vector<128x512xf32>
    %4 = tpu.matmul %2, %3, %cst {dimension_numbers = #tpu.dot_dimension_numbers<[1], [0], [0], [1], [0, 0, 1, 1], [], []>} : vector<128x32xbf16>, vector<32x512xbf16>, vector<128x512xf32> -> vector<128x512xf32>
    %cst_4 = arith.constant dense<0xFF800000> : vector<128xf32>
    %5 = vector.multi_reduction <maximumf>, %4, %cst_4 [1] : vector<128x512xf32> to vector<128xf32>
    %6 = vector.shape_cast %5 : vector<128xf32> to vector<128x1xf32>
    %7 = vector.broadcast %6 : vector<128x1xf32> to vector<128x512xf32>
    %8 = arith.subf %4, %7 : vector<128x512xf32>
    %9 = math.exp %8 : vector<128x512xf32>
    %cst_5 = arith.constant dense<0.000000e+00> : vector<128xf32>
    %10 = vector.multi_reduction <add>, %9, %cst_5 [1] : vector<128x512xf32> to vector<128xf32>
    %11 = vector.shape_cast %10 : vector<128xf32> to vector<128x1xf32>
    %12 = arith.truncf %9 : vector<128x512xf32> to vector<128x512xbf16>
    %c0_6 = arith.constant 0 : index
    %c0_7 = arith.constant 0 : index
    %13 = vector.load %arg3[%c0_6, %c0_7] : memref<512x32xbf16, #tpu.memory_space<vmem>>, vector<512x32xbf16>
    %cst_8 = arith.constant dense<0.000000e+00> : vector<128x32xf32>
    %14 = tpu.matmul %12, %13, %cst_8 {dimension_numbers = #tpu.dot_dimension_numbers<[1], [0], [0], [1], [0, 0, 1, 1], [], []>} : vector<128x512xbf16>, vector<512x32xbf16>, vector<128x32xf32> -> vector<128x32xf32>
    %15 = tpu.reciprocal %11 {approx = true} : vector<128x1xf32> -> vector<128x1xf32>
    %16 = vector.broadcast %15 : vector<128x1xf32> to vector<128x32xf32>
    %17 = arith.mulf %14, %16 : vector<128x32xf32>
    %cst_9 = arith.constant dense<0.000000e+00> : vector<128xf32>
    %18 = vector.multi_reduction <add>, %17, %cst_9 [1] : vector<128x32xf32> to vector<128xf32>
    %19 = vector.shape_cast %18 : vector<128xf32> to vector<128x1xf32>
    %cst_10 = arith.constant 3.200000e+01 : f32
    %20 = vector.broadcast %cst_10 : f32 to vector<128x1xf32>
    %21 = arith.divf %19, %20 : vector<128x1xf32>
    %22 = vector.broadcast %21 : vector<128x1xf32> to vector<128x32xf32>
    %23 = arith.subf %17, %22 : vector<128x32xf32>
    %24 = arith.mulf %23, %23 : vector<128x32xf32>
    %cst_11 = arith.constant dense<0.000000e+00> : vector<128xf32>
    %25 = vector.multi_reduction <add>, %24, %cst_11 [1] : vector<128x32xf32> to vector<128xf32>
    %26 = vector.shape_cast %25 : vector<128xf32> to vector<128x1xf32>
    %cst_12 = arith.constant 3.200000e+01 : f32
    %27 = vector.broadcast %cst_12 : f32 to vector<128x1xf32>
    %28 = arith.divf %26, %27 : vector<128x1xf32>
    %29 = vector.broadcast %21 : vector<128x1xf32> to vector<128x32xf32>
    %30 = arith.subf %17, %29 : vector<128x32xf32>
    %cst_13 = arith.constant 9.99999974E-6 : f32
    %31 = vector.broadcast %cst_13 : f32 to vector<128x1xf32>
    %32 = arith.addf %28, %31 : vector<128x1xf32>
    %33 = math.rsqrt %32 : vector<128x1xf32>
    %34 = vector.broadcast %33 : vector<128x1xf32> to vector<128x32xf32>
    %35 = arith.mulf %30, %34 : vector<128x32xf32>
    %c0_14 = arith.constant 0 : index
    %c0_15 = arith.constant 0 : index
    %36 = vector.load %arg4[%c0_14, %c0_15] : memref<1x32xf32, #tpu.memory_space<vmem>>, vector<1x32xf32>
    %37 = vector.broadcast %36 : vector<1x32xf32> to vector<128x32xf32>
    %38 = arith.mulf %35, %37 : vector<128x32xf32>
    %c0_16 = arith.constant 0 : index
    %c0_17 = arith.constant 0 : index
    %39 = vector.load %arg5[%c0_16, %c0_17] : memref<1x32xf32, #tpu.memory_space<vmem>>, vector<1x32xf32>
    %40 = vector.broadcast %39 : vector<1x32xf32> to vector<128x32xf32>
    %41 = arith.addf %38, %40 : vector<128x32xf32>
    %cst_18 = arith.constant 5.000000e-01 : f32
    %42 = vector.broadcast %cst_18 : f32 to vector<128x32xf32>
    %43 = arith.mulf %42, %41 : vector<128x32xf32>
    %cst_19 = arith.constant 1.41421354 : f32
    %44 = vector.broadcast %cst_19 : f32 to vector<128x32xf32>
    %45 = arith.divf %41, %44 : vector<128x32xf32>
    %46 = math.erf %45 : vector<128x32xf32>
    %cst_20 = arith.constant 1.000000e+00 : f32
    %47 = vector.broadcast %cst_20 : f32 to vector<128x32xf32>
    %48 = arith.addf %47, %46 : vector<128x32xf32>
    %49 = arith.mulf %43, %48 : vector<128x32xf32>
    %50 = arith.addf %49, %1 : vector<128x32xf32>
    %c0_21 = arith.constant 0 : index
    %c0_22 = arith.constant 0 : index
    %51 = vector.load %arg6[%c0_21, %c0_22] : memref<32x128xf32, #tpu.memory_space<vmem>>, vector<32x128xf32>
    %cst_23 = arith.constant dense<0.000000e+00> : vector<128x128xf32>
    %52 = tpu.matmul %50, %51, %cst_23 {dimension_numbers = #tpu.dot_dimension_numbers<[1], [0], [0], [1], [0, 0, 1, 1], [], []>} : vector<128x32xf32>, vector<32x128xf32>, vector<128x128xf32> -> vector<128x128xf32>
    %53 = vector.extract_strided_slice %52 {offsets = [0, 0], sizes = [128, 64], strides = [1, 1]} : vector<128x128xf32> to vector<128x64xf32>
    %54 = vector.extract_strided_slice %52 {offsets = [0, 64], sizes = [128, 64], strides = [1, 1]} : vector<128x128xf32> to vector<128x64xf32>
    %cst_24 = arith.constant 0.000000e+00 : f32
    %55 = vector.broadcast %cst_24 : f32 to vector<24x64xf32>
    %c0_25 = arith.constant 0 : index
    %c0_26 = arith.constant 0 : index
    %56 = vector.load %arg16[%c0_25, %c0_26] : memref<152x64xf32, #tpu.memory_space<vmem>>, vector<24x64xf32>
    tpu.vector_store %arg16[%c0_25, %c0_26], %55 {strides = array<i32>} : memref<152x64xf32, #tpu.memory_space<vmem>>, vector<24x64xf32>,
    %c24 = arith.constant 24 : index
    %c0_27 = arith.constant 0 : index
    %57 = vector.load %arg16[%c24, %c0_27] : memref<152x64xf32, #tpu.memory_space<vmem>>, vector<128x64xf32>
    tpu.vector_store %arg16[%c24, %c0_27], %53 {strides = array<i32>} : memref<152x64xf32, #tpu.memory_space<vmem>>, vector<128x64xf32>,
    %c0_28 = arith.constant 0 : index
    %c0_29 = arith.constant 0 : index
    %58 = vector.load %arg7[%c0_28, %c0_29] : memref<4x64xf32, #tpu.memory_space<vmem>>, vector<4x64xf32>
    %c0_30 = arith.constant 0 : index
    %c0_31 = arith.constant 0 : index
    %59 = vector.load %arg16[%c0_30, %c0_31] : memref<152x64xf32, #tpu.memory_space<vmem>>, vector<128x64xf32>
    %60 = vector.extract_strided_slice %58 {offsets = [0, 0], sizes = [1, 64], strides = [1, 1]} : vector<4x64xf32> to vector<1x64xf32>
    %61 = vector.broadcast %60 : vector<1x64xf32> to vector<128x64xf32>
    %62 = arith.mulf %59, %61 : vector<128x64xf32>
    %c8 = arith.constant 8 : index
    %c0_32 = arith.constant 0 : index
    %63 = vector.load %arg16[%c8, %c0_32] : memref<152x64xf32, #tpu.memory_space<vmem>>, vector<128x64xf32>
    %64 = vector.extract_strided_slice %58 {offsets = [1, 0], sizes = [1, 64], strides = [1, 1]} : vector<4x64xf32> to vector<1x64xf32>
    %65 = vector.broadcast %64 : vector<1x64xf32> to vector<128x64xf32>
    %66 = arith.mulf %63, %65 : vector<128x64xf32>
    %67 = arith.addf %62, %66 : vector<128x64xf32>
    %c16 = arith.constant 16 : index
    %c0_33 = arith.constant 0 : index
    %68 = vector.load %arg16[%c16, %c0_33] : memref<152x64xf32, #tpu.memory_space<vmem>>, vector<128x64xf32>
    %69 = vector.extract_strided_slice %58 {offsets = [2, 0], sizes = [1, 64], strides = [1, 1]} : vector<4x64xf32> to vector<1x64xf32>
    %70 = vector.broadcast %69 : vector<1x64xf32> to vector<128x64xf32>
    %71 = arith.mulf %68, %70 : vector<128x64xf32>
    %72 = arith.addf %67, %71 : vector<128x64xf32>
    %c24_34 = arith.constant 24 : index
    %c0_35 = arith.constant 0 : index
    %73 = vector.load %arg16[%c24_34, %c0_35] : memref<152x64xf32, #tpu.memory_space<vmem>>, vector<128x64xf32>
    %74 = vector.extract_strided_slice %58 {offsets = [3, 0], sizes = [1, 64], strides = [1, 1]} : vector<4x64xf32> to vector<1x64xf32>
    %75 = vector.broadcast %74 : vector<1x64xf32> to vector<128x64xf32>
    %76 = arith.mulf %73, %75 : vector<128x64xf32>
    %77 = arith.addf %72, %76 : vector<128x64xf32>
    %c0_36 = arith.constant 0 : index
    %c0_37 = arith.constant 0 : index
    %78 = vector.load %arg8[%c0_36, %c0_37] : memref<1x64xf32, #tpu.memory_space<vmem>>, vector<1x64xf32>
    %79 = vector.broadcast %78 : vector<1x64xf32> to vector<128x64xf32>
    %80 = arith.addf %77, %79 : vector<128x64xf32>
    %cst_38 = arith.constant 0.000000e+00 : f32
    %81 = vector.broadcast %cst_38 : f32 to vector<128x64xf32>
    %82 = arith.subf %81, %80 : vector<128x64xf32>
    %83 = math.exp %82 : vector<128x64xf32>
    %cst_39 = arith.constant 1.000000e+00 : f32
    %84 = vector.broadcast %cst_39 : f32 to vector<128x64xf32>
    %85 = arith.addf %84, %83 : vector<128x64xf32>
    %86 = tpu.reciprocal %85 {approx = true} : vector<128x64xf32> -> vector<128x64xf32>
    %87 = arith.mulf %80, %86 : vector<128x64xf32>
    %c0_40 = arith.constant 0 : index
    %c0_41 = arith.constant 0 : index
    %88 = vector.load %arg9[%c0_40, %c0_41] : memref<64x18xf32, #tpu.memory_space<vmem>>, vector<64x18xf32>
    %cst_42 = arith.constant dense<0.000000e+00> : vector<128x18xf32>
    %89 = tpu.matmul %87, %88, %cst_42 {dimension_numbers = #tpu.dot_dimension_numbers<[1], [0], [0], [1], [0, 0, 1, 1], [], []>} : vector<128x64xf32>, vector<64x18xf32>, vector<128x18xf32> -> vector<128x18xf32>
    %90 = vector.extract_strided_slice %89 {offsets = [0, 0], sizes = [128, 2], strides = [1, 1]} : vector<128x18xf32> to vector<128x2xf32>
    %91 = vector.extract_strided_slice %89 {offsets = [0, 2], sizes = [128, 8], strides = [1, 1]} : vector<128x18xf32> to vector<128x8xf32>
    %92 = vector.extract_strided_slice %89 {offsets = [0, 10], sizes = [128, 8], strides = [1, 1]} : vector<128x18xf32> to vector<128x8xf32>
    %c0_43 = arith.constant 0 : index
    %c0_44 = arith.constant 0 : index
    %93 = vector.load %arg10[%c0_43, %c0_44] : memref<2x64xf32, #tpu.memory_space<vmem>>, vector<2x64xf32>
    %cst_45 = arith.constant dense<0.000000e+00> : vector<128x64xf32>
    %94 = tpu.matmul %90, %93, %cst_45 {dimension_numbers = #tpu.dot_dimension_numbers<[1], [0], [0], [1], [0, 0, 1, 1], [], []>} : vector<128x2xf32>, vector<2x64xf32>, vector<128x64xf32> -> vector<128x64xf32>
    %c0_46 = arith.constant 0 : index
    %c0_47 = arith.constant 0 : index
    %95 = vector.load %arg11[%c0_46, %c0_47] : memref<1x64xf32, #tpu.memory_space<vmem>>, vector<1x64xf32>
    %96 = vector.broadcast %95 : vector<1x64xf32> to vector<128x64xf32>
    %97 = arith.addf %94, %96 : vector<128x64xf32>
    %cst_48 = arith.constant 0.000000e+00 : f32
    %98 = vector.broadcast %cst_48 : f32 to vector<128x64xf32>
    %99 = arith.maximumf %97, %98 : vector<128x64xf32>
    %100 = math.absf %97 : vector<128x64xf32>
    %cst_49 = arith.constant 0.000000e+00 : f32
    %101 = vector.broadcast %cst_49 : f32 to vector<128x64xf32>
    %102 = arith.subf %101, %100 : vector<128x64xf32>
    %103 = math.exp %102 : vector<128x64xf32>
    %cst_50 = arith.constant 1.000000e+00 : f32
    %104 = vector.broadcast %cst_50 : f32 to vector<128x64xf32>
    %105 = arith.addf %104, %103 : vector<128x64xf32>
    %106 = math.log %105 : vector<128x64xf32>
    %107 = arith.addf %99, %106 : vector<128x64xf32>
    %c0_51 = arith.constant 0 : index
    %c0_52 = arith.constant 0 : index
    %108 = vector.load %arg12[%c0_51, %c0_52] : memref<8x64xf32, #tpu.memory_space<vmem>>, vector<8x64xf32>
    %109 = math.exp %108 : vector<8x64xf32>
    %cst_53 = arith.constant 0.000000e+00 : f32
    %110 = vector.broadcast %cst_53 : f32 to vector<8x64xf32>
    %111 = arith.subf %110, %109 : vector<8x64xf32>
    %112 = vector.shape_cast %107 : vector<128x64xf32> to vector<128x1x64xf32>
    %113 = vector.shape_cast %111 : vector<8x64xf32> to vector<1x8x64xf32>
    %114 = vector.broadcast %112 : vector<128x1x64xf32> to vector<128x8x64xf32>
    %115 = vector.broadcast %113 : vector<1x8x64xf32> to vector<128x8x64xf32>
    %116 = arith.mulf %114, %115 : vector<128x8x64xf32>
    %117 = math.exp %116 : vector<128x8x64xf32>
    %118 = arith.mulf %107, %87 : vector<128x64xf32>
    %119 = vector.shape_cast %118 : vector<128x64xf32> to vector<128x1x64xf32>
    %120 = vector.shape_cast %91 : vector<128x8xf32> to vector<128x8x1xf32>
    %121 = vector.broadcast %119 : vector<128x1x64xf32> to vector<128x8x64xf32>
    %122 = vector.broadcast %120 : vector<128x8x1xf32> to vector<128x8x64xf32>
    %123 = arith.mulf %121, %122 : vector<128x8x64xf32>
    %cst_54 = arith.constant 0.000000e+00 : f32
    %124 = vector.broadcast %cst_54 : f32 to vector<128x64xf32>
    %125 = arith.subf %124, %54 : vector<128x64xf32>
    %126 = math.exp %125 : vector<128x64xf32>
    %cst_55 = arith.constant 1.000000e+00 : f32
    %127 = vector.broadcast %cst_55 : f32 to vector<128x64xf32>
    %128 = arith.addf %127, %126 : vector<128x64xf32>
    %129 = tpu.reciprocal %128 {approx = true} : vector<128x64xf32> -> vector<128x64xf32>
    %130 = arith.mulf %54, %129 : vector<128x64xf32>
    %c0_56 = arith.constant 0 : index
    %c0_57 = arith.constant 0 : index
    %131 = vector.load %arg13[%c0_56, %c0_57] : memref<1x64xf32, #tpu.memory_space<vmem>>, vector<1x64xf32>
    %c0_58 = arith.constant 0 : index
    %c0_59 = arith.constant 0 : index
    %132 = vector.load %arg14[%c0_58, %c0_59] : memref<64x32xf32, #tpu.memory_space<vmem>>, vector<64x32xf32>
    %cst_60 = arith.constant 0.000000e+00 : f32
    %133 = vector.broadcast %cst_60 : f32 to vector<8x8x64xf32>
    %134 = vector.extract_strided_slice %117 {offsets = [0, 0, 0], sizes = [8, 8, 64], strides = [1, 1, 1]} : vector<128x8x64xf32> to vector<8x8x64xf32>
    %135 = arith.mulf %134, %133 : vector<8x8x64xf32>
    %136 = vector.extract_strided_slice %123 {offsets = [0, 0, 0], sizes = [8, 8, 64], strides = [1, 1, 1]} : vector<128x8x64xf32> to vector<8x8x64xf32>
    %137 = arith.addf %135, %136 : vector<8x8x64xf32>
    %138 = vector.extract_strided_slice %92 {offsets = [0, 0], sizes = [8, 8], strides = [1, 1]} : vector<128x8xf32> to vector<8x8xf32>
    %139 = vector.shape_cast %138 : vector<8x8xf32> to vector<8x8x1xf32>
    %140 = vector.broadcast %139 : vector<8x8x1xf32> to vector<8x8x64xf32>
    %141 = arith.mulf %137, %140 : vector<8x8x64xf32>
    %cst_61 = arith.constant dense<0.000000e+00> : vector<8x64xf32>
    %142 = vector.multi_reduction <add>, %141, %cst_61 [1] : vector<8x8x64xf32> to vector<8x64xf32>
    %143 = vector.extract_strided_slice %87 {offsets = [0, 0], sizes = [8, 64], strides = [1, 1]} : vector<128x64xf32> to vector<8x64xf32>
    %144 = vector.broadcast %131 : vector<1x64xf32> to vector<8x64xf32>
    %145 = arith.mulf %143, %144 : vector<8x64xf32>
    %146 = arith.addf %142, %145 : vector<8x64xf32>
    %147 = vector.extract_strided_slice %130 {offsets = [0, 0], sizes = [8, 64], strides = [1, 1]} : vector<128x64xf32> to vector<8x64xf32>
    %148 = arith.mulf %146, %147 : vector<8x64xf32>
    %cst_62 = arith.constant dense<0.000000e+00> : vector<8x32xf32>
    %149 = tpu.matmul %148, %132, %cst_62 {dimension_numbers = #tpu.dot_dimension_numbers<[1], [0], [0], [1], [0, 0, 1, 1], [], []>} : vector<8x64xf32>, vector<64x32xf32>, vector<8x32xf32> -> vector<8x32xf32>
    %c0_63 = arith.constant 0 : index
    %c0_64 = arith.constant 0 : index
    %c0_65 = arith.constant 0 : index
    %150 = vector.load %arg15[%c0_63, %c0_64, %c0_65] : memref<1x128x32xf32, #tpu.memory_space<vmem>>, vector<1x8x32xf32>
    %151 = vector.shape_cast %150 : vector<1x8x32xf32> to vector<8x32xf32>
    %152 = vector.shape_cast %149 : vector<8x32xf32> to vector<1x8x32xf32>
    tpu.vector_store %arg15[%c0_63, %c0_64, %c0_65], %152 {strides = array<i32>} : memref<1x128x32xf32, #tpu.memory_space<vmem>>, vector<1x8x32xf32>,
    %153 = vector.extract_strided_slice %117 {offsets = [8, 0, 0], sizes = [8, 8, 64], strides = [1, 1, 1]} : vector<128x8x64xf32> to vector<8x8x64xf32>
    %154 = arith.mulf %153, %137 : vector<8x8x64xf32>
    %155 = vector.extract_strided_slice %123 {offsets = [8, 0, 0], sizes = [8, 8, 64], strides = [1, 1, 1]} : vector<128x8x64xf32> to vector<8x8x64xf32>
    %156 = arith.addf %154, %155 : vector<8x8x64xf32>
    %157 = vector.extract_strided_slice %92 {offsets = [8, 0], sizes = [8, 8], strides = [1, 1]} : vector<128x8xf32> to vector<8x8xf32>
    %158 = vector.shape_cast %157 : vector<8x8xf32> to vector<8x8x1xf32>
    %159 = vector.broadcast %158 : vector<8x8x1xf32> to vector<8x8x64xf32>
    %160 = arith.mulf %156, %159 : vector<8x8x64xf32>
    %cst_66 = arith.constant dense<0.000000e+00> : vector<8x64xf32>
    %161 = vector.multi_reduction <add>, %160, %cst_66 [1] : vector<8x8x64xf32> to vector<8x64xf32>
    %162 = vector.extract_strided_slice %87 {offsets = [8, 0], sizes = [8, 64], strides = [1, 1]} : vector<128x64xf32> to vector<8x64xf32>
    %163 = vector.broadcast %131 : vector<1x64xf32> to vector<8x64xf32>
    %164 = arith.mulf %162, %163 : vector<8x64xf32>
    %165 = arith.addf %161, %164 : vector<8x64xf32>
    %166 = vector.extract_strided_slice %130 {offsets = [8, 0], sizes = [8, 64], strides = [1, 1]} : vector<128x64xf32> to vector<8x64xf32>
    %167 = arith.mulf %165, %166 : vector<8x64xf32>
    %cst_67 = arith.constant dense<0.000000e+00> : vector<8x32xf32>
    %168 = tpu.matmul %167, %132, %cst_67 {dimension_numbers = #tpu.dot_dimension_numbers<[1], [0], [0], [1], [0, 0, 1, 1], [], []>} : vector<8x64xf32>, vector<64x32xf32>, vector<8x32xf32> -> vector<8x32xf32>
    %c0_68 = arith.constant 0 : index
    %c8_69 = arith.constant 8 : index
    %c0_70 = arith.constant 0 : index
    %169 = vector.load %arg15[%c0_68, %c8_69, %c0_70] : memref<1x128x32xf32, #tpu.memory_space<vmem>>, vector<1x8x32xf32>
    %170 = vector.shape_cast %169 : vector<1x8x32xf32> to vector<8x32xf32>
    %171 = vector.shape_cast %168 : vector<8x32xf32> to vector<1x8x32xf32>
    tpu.vector_store %arg15[%c0_68, %c8_69, %c0_70], %171 {strides = array<i32>} : memref<1x128x32xf32, #tpu.memory_space<vmem>>, vector<1x8x32xf32>,
    %172 = vector.extract_strided_slice %117 {offsets = [16, 0, 0], sizes = [8, 8, 64], strides = [1, 1, 1]} : vector<128x8x64xf32> to vector<8x8x64xf32>
    %173 = arith.mulf %172, %156 : vector<8x8x64xf32>
    %174 = vector.extract_strided_slice %123 {offsets = [16, 0, 0], sizes = [8, 8, 64], strides = [1, 1, 1]} : vector<128x8x64xf32> to vector<8x8x64xf32>
    %175 = arith.addf %173, %174 : vector<8x8x64xf32>
    %176 = vector.extract_strided_slice %92 {offsets = [16, 0], sizes = [8, 8], strides = [1, 1]} : vector<128x8xf32> to vector<8x8xf32>
    %177 = vector.shape_cast %176 : vector<8x8xf32> to vector<8x8x1xf32>
    %178 = vector.broadcast %177 : vector<8x8x1xf32> to vector<8x8x64xf32>
    %179 = arith.mulf %175, %178 : vector<8x8x64xf32>
    %cst_71 = arith.constant dense<0.000000e+00> : vector<8x64xf32>
    %180 = vector.multi_reduction <add>, %179, %cst_71 [1] : vector<8x8x64xf32> to vector<8x64xf32>
    %181 = vector.extract_strided_slice %87 {offsets = [16, 0], sizes = [8, 64], strides = [1, 1]} : vector<128x64xf32> to vector<8x64xf32>
    %182 = vector.broadcast %131 : vector<1x64xf32> to vector<8x64xf32>
    %183 = arith.mulf %181, %182 : vector<8x64xf32>
    %184 = arith.addf %180, %183 : vector<8x64xf32>
    %185 = vector.extract_strided_slice %130 {offsets = [16, 0], sizes = [8, 64], strides = [1, 1]} : vector<128x64xf32> to vector<8x64xf32>
    %186 = arith.mulf %184, %185 : vector<8x64xf32>
    %cst_72 = arith.constant dense<0.000000e+00> : vector<8x32xf32>
    %187 = tpu.matmul %186, %132, %cst_72 {dimension_numbers = #tpu.dot_dimension_numbers<[1], [0], [0], [1], [0, 0, 1, 1], [], []>} : vector<8x64xf32>, vector<64x32xf32>, vector<8x32xf32> -> vector<8x32xf32>
    %c0_73 = arith.constant 0 : index
    %c16_74 = arith.constant 16 : index
    %c0_75 = arith.constant 0 : index
    %188 = vector.load %arg15[%c0_73, %c16_74, %c0_75] : memref<1x128x32xf32, #tpu.memory_space<vmem>>, vector<1x8x32xf32>
    %189 = vector.shape_cast %188 : vector<1x8x32xf32> to vector<8x32xf32>
    %190 = vector.shape_cast %187 : vector<8x32xf32> to vector<1x8x32xf32>
    tpu.vector_store %arg15[%c0_73, %c16_74, %c0_75], %190 {strides = array<i32>} : memref<1x128x32xf32, #tpu.memory_space<vmem>>, vector<1x8x32xf32>,
    %191 = vector.extract_strided_slice %117 {offsets = [24, 0, 0], sizes = [8, 8, 64], strides = [1, 1, 1]} : vector<128x8x64xf32> to vector<8x8x64xf32>
    %192 = arith.mulf %191, %175 : vector<8x8x64xf32>
    %193 = vector.extract_strided_slice %123 {offsets = [24, 0, 0], sizes = [8, 8, 64], strides = [1, 1, 1]} : vector<128x8x64xf32> to vector<8x8x64xf32>
    %194 = arith.addf %192, %193 : vector<8x8x64xf32>
    %195 = vector.extract_strided_slice %92 {offsets = [24, 0], sizes = [8, 8], strides = [1, 1]} : vector<128x8xf32> to vector<8x8xf32>
    %196 = vector.shape_cast %195 : vector<8x8xf32> to vector<8x8x1xf32>
    %197 = vector.broadcast %196 : vector<8x8x1xf32> to vector<8x8x64xf32>
    %198 = arith.mulf %194, %197 : vector<8x8x64xf32>
    %cst_76 = arith.constant dense<0.000000e+00> : vector<8x64xf32>
    %199 = vector.multi_reduction <add>, %198, %cst_76 [1] : vector<8x8x64xf32> to vector<8x64xf32>
    %200 = vector.extract_strided_slice %87 {offsets = [24, 0], sizes = [8, 64], strides = [1, 1]} : vector<128x64xf32> to vector<8x64xf32>
    %201 = vector.broadcast %131 : vector<1x64xf32> to vector<8x64xf32>
    %202 = arith.mulf %200, %201 : vector<8x64xf32>
    %203 = arith.addf %199, %202 : vector<8x64xf32>
    %204 = vector.extract_strided_slice %130 {offsets = [24, 0], sizes = [8, 64], strides = [1, 1]} : vector<128x64xf32> to vector<8x64xf32>
    %205 = arith.mulf %203, %204 : vector<8x64xf32>
    %cst_77 = arith.constant dense<0.000000e+00> : vector<8x32xf32>
    %206 = tpu.matmul %205, %132, %cst_77 {dimension_numbers = #tpu.dot_dimension_numbers<[1], [0], [0], [1], [0, 0, 1, 1], [], []>} : vector<8x64xf32>, vector<64x32xf32>, vector<8x32xf32> -> vector<8x32xf32>
    %c0_78 = arith.constant 0 : index
    %c24_79 = arith.constant 24 : index
    %c0_80 = arith.constant 0 : index
    %207 = vector.load %arg15[%c0_78, %c24_79, %c0_80] : memref<1x128x32xf32, #tpu.memory_space<vmem>>, vector<1x8x32xf32>
    %208 = vector.shape_cast %207 : vector<1x8x32xf32> to vector<8x32xf32>
    %209 = vector.shape_cast %206 : vector<8x32xf32> to vector<1x8x32xf32>
    tpu.vector_store %arg15[%c0_78, %c24_79, %c0_80], %209 {strides = array<i32>} : memref<1x128x32xf32, #tpu.memory_space<vmem>>, vector<1x8x32xf32>,
    %210 = vector.extract_strided_slice %117 {offsets = [32, 0, 0], sizes = [8, 8, 64], strides = [1, 1, 1]} : vector<128x8x64xf32> to vector<8x8x64xf32>
    %211 = arith.mulf %210, %194 : vector<8x8x64xf32>
    %212 = vector.extract_strided_slice %123 {offsets = [32, 0, 0], sizes = [8, 8, 64], strides = [1, 1, 1]} : vector<128x8x64xf32> to vector<8x8x64xf32>
    %213 = arith.addf %211, %212 : vector<8x8x64xf32>
    %214 = vector.extract_strided_slice %92 {offsets = [32, 0], sizes = [8, 8], strides = [1, 1]} : vector<128x8xf32> to vector<8x8xf32>
    %215 = vector.shape_cast %214 : vector<8x8xf32> to vector<8x8x1xf32>
    %216 = vector.broadcast %215 : vector<8x8x1xf32> to vector<8x8x64xf32>
    %217 = arith.mulf %213, %216 : vector<8x8x64xf32>
    %cst_81 = arith.constant dense<0.000000e+00> : vector<8x64xf32>
    %218 = vector.multi_reduction <add>, %217, %cst_81 [1] : vector<8x8x64xf32> to vector<8x64xf32>
    %219 = vector.extract_strided_slice %87 {offsets = [32, 0], sizes = [8, 64], strides = [1, 1]} : vector<128x64xf32> to vector<8x64xf32>
    %220 = vector.broadcast %131 : vector<1x64xf32> to vector<8x64xf32>
    %221 = arith.mulf %219, %220 : vector<8x64xf32>
    %222 = arith.addf %218, %221 : vector<8x64xf32>
    %223 = vector.extract_strided_slice %130 {offsets = [32, 0], sizes = [8, 64], strides = [1, 1]} : vector<128x64xf32> to vector<8x64xf32>
    %224 = arith.mulf %222, %223 : vector<8x64xf32>
    %cst_82 = arith.constant dense<0.000000e+00> : vector<8x32xf32>
    %225 = tpu.matmul %224, %132, %cst_82 {dimension_numbers = #tpu.dot_dimension_numbers<[1], [0], [0], [1], [0, 0, 1, 1], [], []>} : vector<8x64xf32>, vector<64x32xf32>, vector<8x32xf32> -> vector<8x32xf32>
    %c0_83 = arith.constant 0 : index
    %c32 = arith.constant 32 : index
    %c0_84 = arith.constant 0 : index
    %226 = vector.load %arg15[%c0_83, %c32, %c0_84] : memref<1x128x32xf32, #tpu.memory_space<vmem>>, vector<1x8x32xf32>
    %227 = vector.shape_cast %226 : vector<1x8x32xf32> to vector<8x32xf32>
    %228 = vector.shape_cast %225 : vector<8x32xf32> to vector<1x8x32xf32>
    tpu.vector_store %arg15[%c0_83, %c32, %c0_84], %228 {strides = array<i32>} : memref<1x128x32xf32, #tpu.memory_space<vmem>>, vector<1x8x32xf32>,
    %229 = vector.extract_strided_slice %117 {offsets = [40, 0, 0], sizes = [8, 8, 64], strides = [1, 1, 1]} : vector<128x8x64xf32> to vector<8x8x64xf32>
    %230 = arith.mulf %229, %213 : vector<8x8x64xf32>
    %231 = vector.extract_strided_slice %123 {offsets = [40, 0, 0], sizes = [8, 8, 64], strides = [1, 1, 1]} : vector<128x8x64xf32> to vector<8x8x64xf32>
    %232 = arith.addf %230, %231 : vector<8x8x64xf32>
    %233 = vector.extract_strided_slice %92 {offsets = [40, 0], sizes = [8, 8], strides = [1, 1]} : vector<128x8xf32> to vector<8x8xf32>
    %234 = vector.shape_cast %233 : vector<8x8xf32> to vector<8x8x1xf32>
    %235 = vector.broadcast %234 : vector<8x8x1xf32> to vector<8x8x64xf32>
    %236 = arith.mulf %232, %235 : vector<8x8x64xf32>
    %cst_85 = arith.constant dense<0.000000e+00> : vector<8x64xf32>
    %237 = vector.multi_reduction <add>, %236, %cst_85 [1] : vector<8x8x64xf32> to vector<8x64xf32>
    %238 = vector.extract_strided_slice %87 {offsets = [40, 0], sizes = [8, 64], strides = [1, 1]} : vector<128x64xf32> to vector<8x64xf32>
    %239 = vector.broadcast %131 : vector<1x64xf32> to vector<8x64xf32>
    %240 = arith.mulf %238, %239 : vector<8x64xf32>
    %241 = arith.addf %237, %240 : vector<8x64xf32>
    %242 = vector.extract_strided_slice %130 {offsets = [40, 0], sizes = [8, 64], strides = [1, 1]} : vector<128x64xf32> to vector<8x64xf32>
    %243 = arith.mulf %241, %242 : vector<8x64xf32>
    %cst_86 = arith.constant dense<0.000000e+00> : vector<8x32xf32>
    %244 = tpu.matmul %243, %132, %cst_86 {dimension_numbers = #tpu.dot_dimension_numbers<[1], [0], [0], [1], [0, 0, 1, 1], [], []>} : vector<8x64xf32>, vector<64x32xf32>, vector<8x32xf32> -> vector<8x32xf32>
    %c0_87 = arith.constant 0 : index
    %c40 = arith.constant 40 : index
    %c0_88 = arith.constant 0 : index
    %245 = vector.load %arg15[%c0_87, %c40, %c0_88] : memref<1x128x32xf32, #tpu.memory_space<vmem>>, vector<1x8x32xf32>
    %246 = vector.shape_cast %245 : vector<1x8x32xf32> to vector<8x32xf32>
    %247 = vector.shape_cast %244 : vector<8x32xf32> to vector<1x8x32xf32>
    tpu.vector_store %arg15[%c0_87, %c40, %c0_88], %247 {strides = array<i32>} : memref<1x128x32xf32, #tpu.memory_space<vmem>>, vector<1x8x32xf32>,
    %248 = vector.extract_strided_slice %117 {offsets = [48, 0, 0], sizes = [8, 8, 64], strides = [1, 1, 1]} : vector<128x8x64xf32> to vector<8x8x64xf32>
    %249 = arith.mulf %248, %232 : vector<8x8x64xf32>
    %250 = vector.extract_strided_slice %123 {offsets = [48, 0, 0], sizes = [8, 8, 64], strides = [1, 1, 1]} : vector<128x8x64xf32> to vector<8x8x64xf32>
    %251 = arith.addf %249, %250 : vector<8x8x64xf32>
    %252 = vector.extract_strided_slice %92 {offsets = [48, 0], sizes = [8, 8], strides = [1, 1]} : vector<128x8xf32> to vector<8x8xf32>
    %253 = vector.shape_cast %252 : vector<8x8xf32> to vector<8x8x1xf32>
    %254 = vector.broadcast %253 : vector<8x8x1xf32> to vector<8x8x64xf32>
    %255 = arith.mulf %251, %254 : vector<8x8x64xf32>
    %cst_89 = arith.constant dense<0.000000e+00> : vector<8x64xf32>
    %256 = vector.multi_reduction <add>, %255, %cst_89 [1] : vector<8x8x64xf32> to vector<8x64xf32>
    %257 = vector.extract_strided_slice %87 {offsets = [48, 0], sizes = [8, 64], strides = [1, 1]} : vector<128x64xf32> to vector<8x64xf32>
    %258 = vector.broadcast %131 : vector<1x64xf32> to vector<8x64xf32>
    %259 = arith.mulf %257, %258 : vector<8x64xf32>
    %260 = arith.addf %256, %259 : vector<8x64xf32>
    %261 = vector.extract_strided_slice %130 {offsets = [48, 0], sizes = [8, 64], strides = [1, 1]} : vector<128x64xf32> to vector<8x64xf32>
    %262 = arith.mulf %260, %261 : vector<8x64xf32>
    %cst_90 = arith.constant dense<0.000000e+00> : vector<8x32xf32>
    %263 = tpu.matmul %262, %132, %cst_90 {dimension_numbers = #tpu.dot_dimension_numbers<[1], [0], [0], [1], [0, 0, 1, 1], [], []>} : vector<8x64xf32>, vector<64x32xf32>, vector<8x32xf32> -> vector<8x32xf32>
    %c0_91 = arith.constant 0 : index
    %c48 = arith.constant 48 : index
    %c0_92 = arith.constant 0 : index
    %264 = vector.load %arg15[%c0_91, %c48, %c0_92] : memref<1x128x32xf32, #tpu.memory_space<vmem>>, vector<1x8x32xf32>
    %265 = vector.shape_cast %264 : vector<1x8x32xf32> to vector<8x32xf32>
    %266 = vector.shape_cast %263 : vector<8x32xf32> to vector<1x8x32xf32>
    tpu.vector_store %arg15[%c0_91, %c48, %c0_92], %266 {strides = array<i32>} : memref<1x128x32xf32, #tpu.memory_space<vmem>>, vector<1x8x32xf32>,
    %267 = vector.extract_strided_slice %117 {offsets = [56, 0, 0], sizes = [8, 8, 64], strides = [1, 1, 1]} : vector<128x8x64xf32> to vector<8x8x64xf32>
    %268 = arith.mulf %267, %251 : vector<8x8x64xf32>
    %269 = vector.extract_strided_slice %123 {offsets = [56, 0, 0], sizes = [8, 8, 64], strides = [1, 1, 1]} : vector<128x8x64xf32> to vector<8x8x64xf32>
    %270 = arith.addf %268, %269 : vector<8x8x64xf32>
    %271 = vector.extract_strided_slice %92 {offsets = [56, 0], sizes = [8, 8], strides = [1, 1]} : vector<128x8xf32> to vector<8x8xf32>
    %272 = vector.shape_cast %271 : vector<8x8xf32> to vector<8x8x1xf32>
    %273 = vector.broadcast %272 : vector<8x8x1xf32> to vector<8x8x64xf32>
    %274 = arith.mulf %270, %273 : vector<8x8x64xf32>
    %cst_93 = arith.constant dense<0.000000e+00> : vector<8x64xf32>
    %275 = vector.multi_reduction <add>, %274, %cst_93 [1] : vector<8x8x64xf32> to vector<8x64xf32>
    %276 = vector.extract_strided_slice %87 {offsets = [56, 0], sizes = [8, 64], strides = [1, 1]} : vector<128x64xf32> to vector<8x64xf32>
    %277 = vector.broadcast %131 : vector<1x64xf32> to vector<8x64xf32>
    %278 = arith.mulf %276, %277 : vector<8x64xf32>
    %279 = arith.addf %275, %278 : vector<8x64xf32>
    %280 = vector.extract_strided_slice %130 {offsets = [56, 0], sizes = [8, 64], strides = [1, 1]} : vector<128x64xf32> to vector<8x64xf32>
    %281 = arith.mulf %279, %280 : vector<8x64xf32>
    %cst_94 = arith.constant dense<0.000000e+00> : vector<8x32xf32>
    %282 = tpu.matmul %281, %132, %cst_94 {dimension_numbers = #tpu.dot_dimension_numbers<[1], [0], [0], [1], [0, 0, 1, 1], [], []>} : vector<8x64xf32>, vector<64x32xf32>, vector<8x32xf32> -> vector<8x32xf32>
    %c0_95 = arith.constant 0 : index
    %c56 = arith.constant 56 : index
    %c0_96 = arith.constant 0 : index
    %283 = vector.load %arg15[%c0_95, %c56, %c0_96] : memref<1x128x32xf32, #tpu.memory_space<vmem>>, vector<1x8x32xf32>
    %284 = vector.shape_cast %283 : vector<1x8x32xf32> to vector<8x32xf32>
    %285 = vector.shape_cast %282 : vector<8x32xf32> to vector<1x8x32xf32>
    tpu.vector_store %arg15[%c0_95, %c56, %c0_96], %285 {strides = array<i32>} : memref<1x128x32xf32, #tpu.memory_space<vmem>>, vector<1x8x32xf32>,
    %286 = vector.extract_strided_slice %117 {offsets = [64, 0, 0], sizes = [8, 8, 64], strides = [1, 1, 1]} : vector<128x8x64xf32> to vector<8x8x64xf32>
    %287 = arith.mulf %286, %270 : vector<8x8x64xf32>
    %288 = vector.extract_strided_slice %123 {offsets = [64, 0, 0], sizes = [8, 8, 64], strides = [1, 1, 1]} : vector<128x8x64xf32> to vector<8x8x64xf32>
    %289 = arith.addf %287, %288 : vector<8x8x64xf32>
    %290 = vector.extract_strided_slice %92 {offsets = [64, 0], sizes = [8, 8], strides = [1, 1]} : vector<128x8xf32> to vector<8x8xf32>
    %291 = vector.shape_cast %290 : vector<8x8xf32> to vector<8x8x1xf32>
    %292 = vector.broadcast %291 : vector<8x8x1xf32> to vector<8x8x64xf32>
    %293 = arith.mulf %289, %292 : vector<8x8x64xf32>
    %cst_97 = arith.constant dense<0.000000e+00> : vector<8x64xf32>
    %294 = vector.multi_reduction <add>, %293, %cst_97 [1] : vector<8x8x64xf32> to vector<8x64xf32>
    %295 = vector.extract_strided_slice %87 {offsets = [64, 0], sizes = [8, 64], strides = [1, 1]} : vector<128x64xf32> to vector<8x64xf32>
    %296 = vector.broadcast %131 : vector<1x64xf32> to vector<8x64xf32>
    %297 = arith.mulf %295, %296 : vector<8x64xf32>
    %298 = arith.addf %294, %297 : vector<8x64xf32>
    %299 = vector.extract_strided_slice %130 {offsets = [64, 0], sizes = [8, 64], strides = [1, 1]} : vector<128x64xf32> to vector<8x64xf32>
    %300 = arith.mulf %298, %299 : vector<8x64xf32>
    %cst_98 = arith.constant dense<0.000000e+00> : vector<8x32xf32>
    %301 = tpu.matmul %300, %132, %cst_98 {dimension_numbers = #tpu.dot_dimension_numbers<[1], [0], [0], [1], [0, 0, 1, 1], [], []>} : vector<8x64xf32>, vector<64x32xf32>, vector<8x32xf32> -> vector<8x32xf32>
    %c0_99 = arith.constant 0 : index
    %c64 = arith.constant 64 : index
    %c0_100 = arith.constant 0 : index
    %302 = vector.load %arg15[%c0_99, %c64, %c0_100] : memref<1x128x32xf32, #tpu.memory_space<vmem>>, vector<1x8x32xf32>
    %303 = vector.shape_cast %302 : vector<1x8x32xf32> to vector<8x32xf32>
    %304 = vector.shape_cast %301 : vector<8x32xf32> to vector<1x8x32xf32>
    tpu.vector_store %arg15[%c0_99, %c64, %c0_100], %304 {strides = array<i32>} : memref<1x128x32xf32, #tpu.memory_space<vmem>>, vector<1x8x32xf32>,
    %305 = vector.extract_strided_slice %117 {offsets = [72, 0, 0], sizes = [8, 8, 64], strides = [1, 1, 1]} : vector<128x8x64xf32> to vector<8x8x64xf32>
    %306 = arith.mulf %305, %289 : vector<8x8x64xf32>
    %307 = vector.extract_strided_slice %123 {offsets = [72, 0, 0], sizes = [8, 8, 64], strides = [1, 1, 1]} : vector<128x8x64xf32> to vector<8x8x64xf32>
    %308 = arith.addf %306, %307 : vector<8x8x64xf32>
    %309 = vector.extract_strided_slice %92 {offsets = [72, 0], sizes = [8, 8], strides = [1, 1]} : vector<128x8xf32> to vector<8x8xf32>
    %310 = vector.shape_cast %309 : vector<8x8xf32> to vector<8x8x1xf32>
    %311 = vector.broadcast %310 : vector<8x8x1xf32> to vector<8x8x64xf32>
    %312 = arith.mulf %308, %311 : vector<8x8x64xf32>
    %cst_101 = arith.constant dense<0.000000e+00> : vector<8x64xf32>
    %313 = vector.multi_reduction <add>, %312, %cst_101 [1] : vector<8x8x64xf32> to vector<8x64xf32>
    %314 = vector.extract_strided_slice %87 {offsets = [72, 0], sizes = [8, 64], strides = [1, 1]} : vector<128x64xf32> to vector<8x64xf32>
    %315 = vector.broadcast %131 : vector<1x64xf32> to vector<8x64xf32>
    %316 = arith.mulf %314, %315 : vector<8x64xf32>
    %317 = arith.addf %313, %316 : vector<8x64xf32>
    %318 = vector.extract_strided_slice %130 {offsets = [72, 0], sizes = [8, 64], strides = [1, 1]} : vector<128x64xf32> to vector<8x64xf32>
    %319 = arith.mulf %317, %318 : vector<8x64xf32>
    %cst_102 = arith.constant dense<0.000000e+00> : vector<8x32xf32>
    %320 = tpu.matmul %319, %132, %cst_102 {dimension_numbers = #tpu.dot_dimension_numbers<[1], [0], [0], [1], [0, 0, 1, 1], [], []>} : vector<8x64xf32>, vector<64x32xf32>, vector<8x32xf32> -> vector<8x32xf32>
    %c0_103 = arith.constant 0 : index
    %c72 = arith.constant 72 : index
    %c0_104 = arith.constant 0 : index
    %321 = vector.load %arg15[%c0_103, %c72, %c0_104] : memref<1x128x32xf32, #tpu.memory_space<vmem>>, vector<1x8x32xf32>
    %322 = vector.shape_cast %321 : vector<1x8x32xf32> to vector<8x32xf32>
    %323 = vector.shape_cast %320 : vector<8x32xf32> to vector<1x8x32xf32>
    tpu.vector_store %arg15[%c0_103, %c72, %c0_104], %323 {strides = array<i32>} : memref<1x128x32xf32, #tpu.memory_space<vmem>>, vector<1x8x32xf32>,
    %324 = vector.extract_strided_slice %117 {offsets = [80, 0, 0], sizes = [8, 8, 64], strides = [1, 1, 1]} : vector<128x8x64xf32> to vector<8x8x64xf32>
    %325 = arith.mulf %324, %308 : vector<8x8x64xf32>
    %326 = vector.extract_strided_slice %123 {offsets = [80, 0, 0], sizes = [8, 8, 64], strides = [1, 1, 1]} : vector<128x8x64xf32> to vector<8x8x64xf32>
    %327 = arith.addf %325, %326 : vector<8x8x64xf32>
    %328 = vector.extract_strided_slice %92 {offsets = [80, 0], sizes = [8, 8], strides = [1, 1]} : vector<128x8xf32> to vector<8x8xf32>
    %329 = vector.shape_cast %328 : vector<8x8xf32> to vector<8x8x1xf32>
    %330 = vector.broadcast %329 : vector<8x8x1xf32> to vector<8x8x64xf32>
    %331 = arith.mulf %327, %330 : vector<8x8x64xf32>
    %cst_105 = arith.constant dense<0.000000e+00> : vector<8x64xf32>
    %332 = vector.multi_reduction <add>, %331, %cst_105 [1] : vector<8x8x64xf32> to vector<8x64xf32>
    %333 = vector.extract_strided_slice %87 {offsets = [80, 0], sizes = [8, 64], strides = [1, 1]} : vector<128x64xf32> to vector<8x64xf32>
    %334 = vector.broadcast %131 : vector<1x64xf32> to vector<8x64xf32>
    %335 = arith.mulf %333, %334 : vector<8x64xf32>
    %336 = arith.addf %332, %335 : vector<8x64xf32>
    %337 = vector.extract_strided_slice %130 {offsets = [80, 0], sizes = [8, 64], strides = [1, 1]} : vector<128x64xf32> to vector<8x64xf32>
    %338 = arith.mulf %336, %337 : vector<8x64xf32>
    %cst_106 = arith.constant dense<0.000000e+00> : vector<8x32xf32>
    %339 = tpu.matmul %338, %132, %cst_106 {dimension_numbers = #tpu.dot_dimension_numbers<[1], [0], [0], [1], [0, 0, 1, 1], [], []>} : vector<8x64xf32>, vector<64x32xf32>, vector<8x32xf32> -> vector<8x32xf32>
    %c0_107 = arith.constant 0 : index
    %c80 = arith.constant 80 : index
    %c0_108 = arith.constant 0 : index
    %340 = vector.load %arg15[%c0_107, %c80, %c0_108] : memref<1x128x32xf32, #tpu.memory_space<vmem>>, vector<1x8x32xf32>
    %341 = vector.shape_cast %340 : vector<1x8x32xf32> to vector<8x32xf32>
    %342 = vector.shape_cast %339 : vector<8x32xf32> to vector<1x8x32xf32>
    tpu.vector_store %arg15[%c0_107, %c80, %c0_108], %342 {strides = array<i32>} : memref<1x128x32xf32, #tpu.memory_space<vmem>>, vector<1x8x32xf32>,
    %343 = vector.extract_strided_slice %117 {offsets = [88, 0, 0], sizes = [8, 8, 64], strides = [1, 1, 1]} : vector<128x8x64xf32> to vector<8x8x64xf32>
    %344 = arith.mulf %343, %327 : vector<8x8x64xf32>
    %345 = vector.extract_strided_slice %123 {offsets = [88, 0, 0], sizes = [8, 8, 64], strides = [1, 1, 1]} : vector<128x8x64xf32> to vector<8x8x64xf32>
    %346 = arith.addf %344, %345 : vector<8x8x64xf32>
    %347 = vector.extract_strided_slice %92 {offsets = [88, 0], sizes = [8, 8], strides = [1, 1]} : vector<128x8xf32> to vector<8x8xf32>
    %348 = vector.shape_cast %347 : vector<8x8xf32> to vector<8x8x1xf32>
    %349 = vector.broadcast %348 : vector<8x8x1xf32> to vector<8x8x64xf32>
    %350 = arith.mulf %346, %349 : vector<8x8x64xf32>
    %cst_109 = arith.constant dense<0.000000e+00> : vector<8x64xf32>
    %351 = vector.multi_reduction <add>, %350, %cst_109 [1] : vector<8x8x64xf32> to vector<8x64xf32>
    %352 = vector.extract_strided_slice %87 {offsets = [88, 0], sizes = [8, 64], strides = [1, 1]} : vector<128x64xf32> to vector<8x64xf32>
    %353 = vector.broadcast %131 : vector<1x64xf32> to vector<8x64xf32>
    %354 = arith.mulf %352, %353 : vector<8x64xf32>
    %355 = arith.addf %351, %354 : vector<8x64xf32>
    %356 = vector.extract_strided_slice %130 {offsets = [88, 0], sizes = [8, 64], strides = [1, 1]} : vector<128x64xf32> to vector<8x64xf32>
    %357 = arith.mulf %355, %356 : vector<8x64xf32>
    %cst_110 = arith.constant dense<0.000000e+00> : vector<8x32xf32>
    %358 = tpu.matmul %357, %132, %cst_110 {dimension_numbers = #tpu.dot_dimension_numbers<[1], [0], [0], [1], [0, 0, 1, 1], [], []>} : vector<8x64xf32>, vector<64x32xf32>, vector<8x32xf32> -> vector<8x32xf32>
    %c0_111 = arith.constant 0 : index
    %c88 = arith.constant 88 : index
    %c0_112 = arith.constant 0 : index
    %359 = vector.load %arg15[%c0_111, %c88, %c0_112] : memref<1x128x32xf32, #tpu.memory_space<vmem>>, vector<1x8x32xf32>
    %360 = vector.shape_cast %359 : vector<1x8x32xf32> to vector<8x32xf32>
    %361 = vector.shape_cast %358 : vector<8x32xf32> to vector<1x8x32xf32>
    tpu.vector_store %arg15[%c0_111, %c88, %c0_112], %361 {strides = array<i32>} : memref<1x128x32xf32, #tpu.memory_space<vmem>>, vector<1x8x32xf32>,
    %362 = vector.extract_strided_slice %117 {offsets = [96, 0, 0], sizes = [8, 8, 64], strides = [1, 1, 1]} : vector<128x8x64xf32> to vector<8x8x64xf32>
    %363 = arith.mulf %362, %346 : vector<8x8x64xf32>
    %364 = vector.extract_strided_slice %123 {offsets = [96, 0, 0], sizes = [8, 8, 64], strides = [1, 1, 1]} : vector<128x8x64xf32> to vector<8x8x64xf32>
    %365 = arith.addf %363, %364 : vector<8x8x64xf32>
    %366 = vector.extract_strided_slice %92 {offsets = [96, 0], sizes = [8, 8], strides = [1, 1]} : vector<128x8xf32> to vector<8x8xf32>
    %367 = vector.shape_cast %366 : vector<8x8xf32> to vector<8x8x1xf32>
    %368 = vector.broadcast %367 : vector<8x8x1xf32> to vector<8x8x64xf32>
    %369 = arith.mulf %365, %368 : vector<8x8x64xf32>
    %cst_113 = arith.constant dense<0.000000e+00> : vector<8x64xf32>
    %370 = vector.multi_reduction <add>, %369, %cst_113 [1] : vector<8x8x64xf32> to vector<8x64xf32>
    %371 = vector.extract_strided_slice %87 {offsets = [96, 0], sizes = [8, 64], strides = [1, 1]} : vector<128x64xf32> to vector<8x64xf32>
    %372 = vector.broadcast %131 : vector<1x64xf32> to vector<8x64xf32>
    %373 = arith.mulf %371, %372 : vector<8x64xf32>
    %374 = arith.addf %370, %373 : vector<8x64xf32>
    %375 = vector.extract_strided_slice %130 {offsets = [96, 0], sizes = [8, 64], strides = [1, 1]} : vector<128x64xf32> to vector<8x64xf32>
    %376 = arith.mulf %374, %375 : vector<8x64xf32>
    %cst_114 = arith.constant dense<0.000000e+00> : vector<8x32xf32>
    %377 = tpu.matmul %376, %132, %cst_114 {dimension_numbers = #tpu.dot_dimension_numbers<[1], [0], [0], [1], [0, 0, 1, 1], [], []>} : vector<8x64xf32>, vector<64x32xf32>, vector<8x32xf32> -> vector<8x32xf32>
    %c0_115 = arith.constant 0 : index
    %c96 = arith.constant 96 : index
    %c0_116 = arith.constant 0 : index
    %378 = vector.load %arg15[%c0_115, %c96, %c0_116] : memref<1x128x32xf32, #tpu.memory_space<vmem>>, vector<1x8x32xf32>
    %379 = vector.shape_cast %378 : vector<1x8x32xf32> to vector<8x32xf32>
    %380 = vector.shape_cast %377 : vector<8x32xf32> to vector<1x8x32xf32>
    tpu.vector_store %arg15[%c0_115, %c96, %c0_116], %380 {strides = array<i32>} : memref<1x128x32xf32, #tpu.memory_space<vmem>>, vector<1x8x32xf32>,
    %381 = vector.extract_strided_slice %117 {offsets = [104, 0, 0], sizes = [8, 8, 64], strides = [1, 1, 1]} : vector<128x8x64xf32> to vector<8x8x64xf32>
    %382 = arith.mulf %381, %365 : vector<8x8x64xf32>
    %383 = vector.extract_strided_slice %123 {offsets = [104, 0, 0], sizes = [8, 8, 64], strides = [1, 1, 1]} : vector<128x8x64xf32> to vector<8x8x64xf32>
    %384 = arith.addf %382, %383 : vector<8x8x64xf32>
    %385 = vector.extract_strided_slice %92 {offsets = [104, 0], sizes = [8, 8], strides = [1, 1]} : vector<128x8xf32> to vector<8x8xf32>
    %386 = vector.shape_cast %385 : vector<8x8xf32> to vector<8x8x1xf32>
    %387 = vector.broadcast %386 : vector<8x8x1xf32> to vector<8x8x64xf32>
    %388 = arith.mulf %384, %387 : vector<8x8x64xf32>
    %cst_117 = arith.constant dense<0.000000e+00> : vector<8x64xf32>
    %389 = vector.multi_reduction <add>, %388, %cst_117 [1] : vector<8x8x64xf32> to vector<8x64xf32>
    %390 = vector.extract_strided_slice %87 {offsets = [104, 0], sizes = [8, 64], strides = [1, 1]} : vector<128x64xf32> to vector<8x64xf32>
    %391 = vector.broadcast %131 : vector<1x64xf32> to vector<8x64xf32>
    %392 = arith.mulf %390, %391 : vector<8x64xf32>
    %393 = arith.addf %389, %392 : vector<8x64xf32>
    %394 = vector.extract_strided_slice %130 {offsets = [104, 0], sizes = [8, 64], strides = [1, 1]} : vector<128x64xf32> to vector<8x64xf32>
    %395 = arith.mulf %393, %394 : vector<8x64xf32>
    %cst_118 = arith.constant dense<0.000000e+00> : vector<8x32xf32>
    %396 = tpu.matmul %395, %132, %cst_118 {dimension_numbers = #tpu.dot_dimension_numbers<[1], [0], [0], [1], [0, 0, 1, 1], [], []>} : vector<8x64xf32>, vector<64x32xf32>, vector<8x32xf32> -> vector<8x32xf32>
    %c0_119 = arith.constant 0 : index
    %c104 = arith.constant 104 : index
    %c0_120 = arith.constant 0 : index
    %397 = vector.load %arg15[%c0_119, %c104, %c0_120] : memref<1x128x32xf32, #tpu.memory_space<vmem>>, vector<1x8x32xf32>
    %398 = vector.shape_cast %397 : vector<1x8x32xf32> to vector<8x32xf32>
    %399 = vector.shape_cast %396 : vector<8x32xf32> to vector<1x8x32xf32>
    tpu.vector_store %arg15[%c0_119, %c104, %c0_120], %399 {strides = array<i32>} : memref<1x128x32xf32, #tpu.memory_space<vmem>>, vector<1x8x32xf32>,
    %400 = vector.extract_strided_slice %117 {offsets = [112, 0, 0], sizes = [8, 8, 64], strides = [1, 1, 1]} : vector<128x8x64xf32> to vector<8x8x64xf32>
    %401 = arith.mulf %400, %384 : vector<8x8x64xf32>
    %402 = vector.extract_strided_slice %123 {offsets = [112, 0, 0], sizes = [8, 8, 64], strides = [1, 1, 1]} : vector<128x8x64xf32> to vector<8x8x64xf32>
    %403 = arith.addf %401, %402 : vector<8x8x64xf32>
    %404 = vector.extract_strided_slice %92 {offsets = [112, 0], sizes = [8, 8], strides = [1, 1]} : vector<128x8xf32> to vector<8x8xf32>
    %405 = vector.shape_cast %404 : vector<8x8xf32> to vector<8x8x1xf32>
    %406 = vector.broadcast %405 : vector<8x8x1xf32> to vector<8x8x64xf32>
    %407 = arith.mulf %403, %406 : vector<8x8x64xf32>
    %cst_121 = arith.constant dense<0.000000e+00> : vector<8x64xf32>
    %408 = vector.multi_reduction <add>, %407, %cst_121 [1] : vector<8x8x64xf32> to vector<8x64xf32>
    %409 = vector.extract_strided_slice %87 {offsets = [112, 0], sizes = [8, 64], strides = [1, 1]} : vector<128x64xf32> to vector<8x64xf32>
    %410 = vector.broadcast %131 : vector<1x64xf32> to vector<8x64xf32>
    %411 = arith.mulf %409, %410 : vector<8x64xf32>
    %412 = arith.addf %408, %411 : vector<8x64xf32>
    %413 = vector.extract_strided_slice %130 {offsets = [112, 0], sizes = [8, 64], strides = [1, 1]} : vector<128x64xf32> to vector<8x64xf32>
    %414 = arith.mulf %412, %413 : vector<8x64xf32>
    %cst_122 = arith.constant dense<0.000000e+00> : vector<8x32xf32>
    %415 = tpu.matmul %414, %132, %cst_122 {dimension_numbers = #tpu.dot_dimension_numbers<[1], [0], [0], [1], [0, 0, 1, 1], [], []>} : vector<8x64xf32>, vector<64x32xf32>, vector<8x32xf32> -> vector<8x32xf32>
    %c0_123 = arith.constant 0 : index
    %c112 = arith.constant 112 : index
    %c0_124 = arith.constant 0 : index
    %416 = vector.load %arg15[%c0_123, %c112, %c0_124] : memref<1x128x32xf32, #tpu.memory_space<vmem>>, vector<1x8x32xf32>
    %417 = vector.shape_cast %416 : vector<1x8x32xf32> to vector<8x32xf32>
    %418 = vector.shape_cast %415 : vector<8x32xf32> to vector<1x8x32xf32>
    tpu.vector_store %arg15[%c0_123, %c112, %c0_124], %418 {strides = array<i32>} : memref<1x128x32xf32, #tpu.memory_space<vmem>>, vector<1x8x32xf32>,
    %419 = vector.extract_strided_slice %117 {offsets = [120, 0, 0], sizes = [8, 8, 64], strides = [1, 1, 1]} : vector<128x8x64xf32> to vector<8x8x64xf32>
    %420 = arith.mulf %419, %403 : vector<8x8x64xf32>
    %421 = vector.extract_strided_slice %123 {offsets = [120, 0, 0], sizes = [8, 8, 64], strides = [1, 1, 1]} : vector<128x8x64xf32> to vector<8x8x64xf32>
    %422 = arith.addf %420, %421 : vector<8x8x64xf32>
    %423 = vector.extract_strided_slice %92 {offsets = [120, 0], sizes = [8, 8], strides = [1, 1]} : vector<128x8xf32> to vector<8x8xf32>
    %424 = vector.shape_cast %423 : vector<8x8xf32> to vector<8x8x1xf32>
    %425 = vector.broadcast %424 : vector<8x8x1xf32> to vector<8x8x64xf32>
    %426 = arith.mulf %422, %425 : vector<8x8x64xf32>
    %cst_125 = arith.constant dense<0.000000e+00> : vector<8x64xf32>
    %427 = vector.multi_reduction <add>, %426, %cst_125 [1] : vector<8x8x64xf32> to vector<8x64xf32>
    %428 = vector.extract_strided_slice %87 {offsets = [120, 0], sizes = [8, 64], strides = [1, 1]} : vector<128x64xf32> to vector<8x64xf32>
    %429 = vector.broadcast %131 : vector<1x64xf32> to vector<8x64xf32>
    %430 = arith.mulf %428, %429 : vector<8x64xf32>
    %431 = arith.addf %427, %430 : vector<8x64xf32>
    %432 = vector.extract_strided_slice %130 {offsets = [120, 0], sizes = [8, 64], strides = [1, 1]} : vector<128x64xf32> to vector<8x64xf32>
    %433 = arith.mulf %431, %432 : vector<8x64xf32>
    %cst_126 = arith.constant dense<0.000000e+00> : vector<8x32xf32>
    %434 = tpu.matmul %433, %132, %cst_126 {dimension_numbers = #tpu.dot_dimension_numbers<[1], [0], [0], [1], [0, 0, 1, 1], [], []>} : vector<8x64xf32>, vector<64x32xf32>, vector<8x32xf32> -> vector<8x32xf32>
    %c0_127 = arith.constant 0 : index
    %c120 = arith.constant 120 : index
    %c0_128 = arith.constant 0 : index
    %435 = vector.load %arg15[%c0_127, %c120, %c0_128] : memref<1x128x32xf32, #tpu.memory_space<vmem>>, vector<1x8x32xf32>
    %436 = vector.shape_cast %435 : vector<1x8x32xf32> to vector<8x32xf32>
    %437 = vector.shape_cast %434 : vector<8x32xf32> to vector<1x8x32xf32>
    tpu.vector_store %arg15[%c0_127, %c120, %c0_128], %437 {strides = array<i32>} : memref<1x128x32xf32, #tpu.memory_space<vmem>>, vector<1x8x32xf32>,
    return
  }
  func.func @transform_0(%arg0: i32) -> (i32, i32, i32) {
    %c0_i32 = arith.constant 0 : i32
    %c0_i32_0 = arith.constant 0 : i32
    %c0_i32_1 = arith.constant 0 : i32
    return %arg0, %c0_i32, %c0_i32_0 : i32, i32, i32
  }
  func.func @transform_1(%arg0: i32) -> (i32, i32) {
    %c0_i32 = arith.constant 0 : i32
    %c0_i32_0 = arith.constant 0 : i32
    %c0_i32_1 = arith.constant 0 : i32
    return %c0_i32, %c0_i32_0 : i32, i32
  }
  func.func @transform_2(%arg0: i32) -> (i32, i32) {
    %c0_i32 = arith.constant 0 : i32
    %c0_i32_0 = arith.constant 0 : i32
    %c0_i32_1 = arith.constant 0 : i32
    return %c0_i32, %c0_i32_0 : i32, i32
  }
  func.func @transform_3(%arg0: i32) -> (i32, i32) {
    %c0_i32 = arith.constant 0 : i32
    %c0_i32_0 = arith.constant 0 : i32
    %c0_i32_1 = arith.constant 0 : i32
    return %c0_i32, %c0_i32_0 : i32, i32
  }
  func.func @transform_4(%arg0: i32) -> (i32, i32) {
    %c0_i32 = arith.constant 0 : i32
    %c0_i32_0 = arith.constant 0 : i32
    %c0_i32_1 = arith.constant 0 : i32
    return %c0_i32, %c0_i32_0 : i32, i32
  }
  func.func @transform_5(%arg0: i32) -> (i32, i32) {
    %c0_i32 = arith.constant 0 : i32
    %c0_i32_0 = arith.constant 0 : i32
    %c0_i32_1 = arith.constant 0 : i32
    return %c0_i32, %c0_i32_0 : i32, i32
  }
  func.func @transform_6(%arg0: i32) -> (i32, i32) {
    %c0_i32 = arith.constant 0 : i32
    %c0_i32_0 = arith.constant 0 : i32
    %c0_i32_1 = arith.constant 0 : i32
    return %c0_i32, %c0_i32_0 : i32, i32
  }
  func.func @transform_7(%arg0: i32) -> (i32, i32) {
    %c0_i32 = arith.constant 0 : i32
    %c0_i32_0 = arith.constant 0 : i32
    %c0_i32_1 = arith.constant 0 : i32
    return %c0_i32, %c0_i32_0 : i32, i32
  }
  func.func @transform_8(%arg0: i32) -> (i32, i32) {
    %c0_i32 = arith.constant 0 : i32
    %c0_i32_0 = arith.constant 0 : i32
    %c0_i32_1 = arith.constant 0 : i32
    return %c0_i32, %c0_i32_0 : i32, i32
  }
  func.func @transform_9(%arg0: i32) -> (i32, i32) {
    %c0_i32 = arith.constant 0 : i32
    %c0_i32_0 = arith.constant 0 : i32
    %c0_i32_1 = arith.constant 0 : i32
    return %c0_i32, %c0_i32_0 : i32, i32
  }
  func.func @transform_10(%arg0: i32) -> (i32, i32) {
    %c0_i32 = arith.constant 0 : i32
    %c0_i32_0 = arith.constant 0 : i32
    %c0_i32_1 = arith.constant 0 : i32
    return %c0_i32, %c0_i32_0 : i32, i32
  }
  func.func @transform_11(%arg0: i32) -> (i32, i32) {
    %c0_i32 = arith.constant 0 : i32
    %c0_i32_0 = arith.constant 0 : i32
    %c0_i32_1 = arith.constant 0 : i32
    return %c0_i32, %c0_i32_0 : i32, i32
  }
  func.func @transform_12(%arg0: i32) -> (i32, i32) {
    %c0_i32 = arith.constant 0 : i32
    %c0_i32_0 = arith.constant 0 : i32
    %c0_i32_1 = arith.constant 0 : i32
    return %c0_i32, %c0_i32_0 : i32, i32
  }
  func.func @transform_13(%arg0: i32) -> (i32, i32) {
    %c0_i32 = arith.constant 0 : i32
    %c0_i32_0 = arith.constant 0 : i32
    %c0_i32_1 = arith.constant 0 : i32
    return %c0_i32, %c0_i32_0 : i32, i32
  }
  func.func @transform_14(%arg0: i32) -> (i32, i32, i32) {
    %c0_i32 = arith.constant 0 : i32
    %c0_i32_0 = arith.constant 0 : i32
    %c0_i32_1 = arith.constant 0 : i32
    return %arg0, %c0_i32, %c0_i32_0 : i32, i32, i32
  }
}

</mosaic_0001>

<llo_original>
// kernel: multi_scale_block.1
$region0: #{multi_scale_block.1}
  #allocation0 [shape = 'u32[]', space=smem, size = 0x4, offset = 0x4, fixed_abs, tag = 'smem constant byte address 0x4 - core index']
  #allocation1 [shape = 'u32[72,128]{1,0:T(1,128)}', space=vmem, size = 0x9000, scoped, tag = 'internal scratch']
  #allocation2 [shape = 'f32[152,64]{1,0:T(8,128)}', space=vmem, size = 0x13000, scoped, tag = 'scratch operand']
  %s0 = inlined_call_operand.vmem [shape: f32[2,128,32], index: 0, kind: input, shape index: {}]
  %s1 = inlined_call_operand.vmem [shape: bf16[32,512], index: 1, kind: input, shape index: {}]
  %s2 = inlined_call_operand.vmem [shape: bf16[512,32], index: 2, kind: input, shape index: {}]
  %s3 = inlined_call_operand.vmem [shape: f32[1,32], index: 3, kind: input, shape index: {}]
  %s4 = inlined_call_operand.vmem [shape: f32[1,32], index: 4, kind: input, shape index: {}]
  %s5 = inlined_call_operand.vmem [shape: f32[32,128], index: 5, kind: input, shape index: {}]
  %s6 = inlined_call_operand.vmem [shape: f32[4,64], index: 6, kind: input, shape index: {}]
  %s7 = inlined_call_operand.vmem [shape: f32[1,64], index: 7, kind: input, shape index: {}]
  %s8 = inlined_call_operand.vmem [shape: f32[64,18], index: 8, kind: input, shape index: {}]
  %s9 = inlined_call_operand.vmem [shape: f32[2,64], index: 9, kind: input, shape index: {}]
  %s10 = inlined_call_operand.vmem [shape: f32[1,64], index: 10, kind: input, shape index: {}]
  %s11 = inlined_call_operand.vmem [shape: f32[8,64], index: 11, kind: input, shape index: {}]
  %s12 = inlined_call_operand.vmem [shape: f32[1,64], index: 12, kind: input, shape index: {}]
  %s13 = inlined_call_operand.vmem [shape: f32[64,32], index: 13, kind: input, shape index: {}]
  %s14 = inlined_call_operand.vmem [shape: f32[2,128,32], index: 14, kind: output, shape index: {}]
  %s15 = sld [smem:[#allocation0]]
  $region89: #{multi_scale_block.1} parent=0
    _
  %s17 = ssub.s32 1, %s15
  %s18 = scalar_select 0, %s17, %s15
  loop: start=0, step=1, limit=4
  $region2: #{multi_scale_block.1} parent=0 // loop_pre_header
    _
  $region3: #{multi_scale_block.1} parent=0 // loop_header
    %s20 = sphi 0, %s24
    %p21 = scmp.ge.s32.totalorder %s20, 4
    %s30 = sphi 0, %s32
    %s33 = sphi 0, %s30
    %s34 = sphi 0, %s33
    %s50 = sphi 0, %s34
    %s54 = sphi 0, %s54
    %s56 = sphi 0, %s54
    %s57 = sphi 0, %s56
    %s71 = sphi 0, %s57
    %s75 = sphi 0, %s75
    %s77 = sphi 0, %s75
    %s78 = sphi 0, %s77
    %s92 = sphi 0, %s78
    %s96 = sphi 0, %s96
    %s98 = sphi 0, %s96
    %s99 = sphi 0, %s98
    %s113 = sphi 0, %s99
    %s117 = sphi 0, %s117
    %s119 = sphi 0, %s117
    %s120 = sphi 0, %s119
    %s134 = sphi 0, %s120
    %s138 = sphi 0, %s138
    %s140 = sphi 0, %s138
    %s141 = sphi 0, %s140
    %s155 = sphi 0, %s141
    %s159 = sphi 0, %s159
    %s161 = sphi 0, %s159
    %s162 = sphi 0, %s161
    %s176 = sphi 0, %s162
    %s180 = sphi 0, %s180
    %s182 = sphi 0, %s180
    %s183 = sphi 0, %s182
    %s197 = sphi 0, %s183
    %s201 = sphi 0, %s201
    %s203 = sphi 0, %s201
    %s204 = sphi 0, %s203
    %s218 = sphi 0, %s204
    %s222 = sphi 0, %s222
    %s224 = sphi 0, %s222
    %s225 = sphi 0, %s224
    %s239 = sphi 0, %s225
    %s243 = sphi 0, %s243
    %s245 = sphi 0, %s243
    %s246 = sphi 0, %s245
    %s260 = sphi 0, %s246
    %s264 = sphi 0, %s264
    %s266 = sphi 0, %s264
    %s267 = sphi 0, %s266
    %s281 = sphi 0, %s267
    %s285 = sphi 0, %s285
    %s287 = sphi 0, %s285
    %s288 = sphi 0, %s287
    %s302 = sphi 0, %s288
    %s306 = sphi 0, %s306
    %s308 = sphi 0, %s306
    %s309 = sphi 0, %s308
    %s323 = sphi 0, %s309
    %s329 = sphi 0, %s331
    %s332 = sphi 0, %s329
    %s333 = sphi 0, %s332
    %s349 = sphi 0, %s333
  $region4: #{multi_scale_block.1} parent=0 // loop_header_branch
    %23 = sbr.rel (%p21) target = $region8
  $region5: #{multi_scale_block.1} parent=0 // loop_body
    %s25 = ssub.s32 %s20, 1
    %s26 = ssub.s32 %s20, 2
    %s27 = sadd.s32 %s20, 1
    %s28 = ssub.s32 %s20, %s27
    %p29 = scmp.eq.s32.totalorder %s28, 0
    %s31 = sadd.s32 %s30, 1
    %s32 = scalar_select %p29, %s30, %s31
    %p35 = pneg %p29
    %p36 = scmp.eq.s32.totalorder %s20, 1
    %p37 = por %p35, %p36
    %p38 = scmp.ne.s32.totalorder %s30, %s33
    %p39 = scmp.eq.s32.totalorder %s20, 0
    %p40 = por %p38, %p39
    %p41 = scmp.ne.s32.totalorder %s30, %s33
    %p42 = scmp.eq.s32.totalorder %s25, 1
    %p43 = por %p41, %p42
    %p44 = scmp.ne.s32.totalorder %s33, %s34
    %p45 = scmp.eq.s32.totalorder %s25, 0
    %p46 = por %p44, %p45
    %p47 = scmp.ne.s32.totalorder %s33, %s34
    %p48 = scmp.eq.s32.totalorder %s26, 1
    %p49 = por %p47, %p48
    %p51 = scmp.ne.s32.totalorder %s34, %s50
    %p52 = scmp.eq.s32.totalorder %s26, 0
    %p53 = por %p51, %p52
    %s55 = sadd.s32 %s54, 1
    %p58 = scmp.eq.s32.totalorder %s20, 1
    %p59 = scmp.ne.s32.totalorder %s54, %s56
    %p60 = scmp.eq.s32.totalorder %s20, 0
    %p61 = por %p59, %p60
    %p62 = scmp.ne.s32.totalorder %s54, %s56
    %p63 = scmp.eq.s32.totalorder %s25, 1
    %p64 = por %p62, %p63
    %p65 = scmp.ne.s32.totalorder %s56, %s57
    %p66 = scmp.eq.s32.totalorder %s25, 0
    %p67 = por %p65, %p66
    %p68 = scmp.ne.s32.totalorder %s56, %s57
    %p69 = scmp.eq.s32.totalorder %s26, 1
    %p70 = por %p68, %p69
    %p72 = scmp.ne.s32.totalorder %s57, %s71
    %p73 = scmp.eq.s32.totalorder %s26, 0
    %p74 = por %p72, %p73
    %s76 = sadd.s32 %s75, 1
    %p79 = scmp.eq.s32.totalorder %s20, 1
    %p80 = scmp.ne.s32.totalorder %s75, %s77
    %p81 = scmp.eq.s32.totalorder %s20, 0
    %p82 = por %p80, %p81
    %p83 = scmp.ne.s32.totalorder %s75, %s77
    %p84 = scmp.eq.s32.totalorder %s25, 1
    %p85 = por %p83, %p84
    %p86 = scmp.ne.s32.totalorder %s77, %s78
    %p87 = scmp.eq.s32.totalorder %s25, 0
    %p88 = por %p86, %p87
    %p89 = scmp.ne.s32.totalorder %s77, %s78
    %p90 = scmp.eq.s32.totalorder %s26, 1
    %p91 = por %p89, %p90
    %p93 = scmp.ne.s32.totalorder %s78, %s92
    %p94 = scmp.eq.s32.totalorder %s26, 0
    %p95 = por %p93, %p94
    %s97 = sadd.s32 %s96, 1
    %p100 = scmp.eq.s32.totalorder %s20, 1
    %p101 = scmp.ne.s32.totalorder %s96, %s98
    %p102 = scmp.eq.s32.totalorder %s20, 0
    %p103 = por %p101, %p102
    %p104 = scmp.ne.s32.totalorder %s96, %s98
    %p105 = scmp.eq.s32.totalorder %s25, 1
    %p106 = por %p104, %p105
    %p107 = scmp.ne.s32.totalorder %s98, %s99
    %p108 = scmp.eq.s32.totalorder %s25, 0
    %p109 = por %p107, %p108
    %p110 = scmp.ne.s32.totalorder %s98, %s99
    %p111 = scmp.eq.s32.totalorder %s26, 1
    %p112 = por %p110, %p111
    %p114 = scmp.ne.s32.totalorder %s99, %s113
    %p115 = scmp.eq.s32.totalorder %s26, 0
    %p116 = por %p114, %p115
    %s118 = sadd.s32 %s117, 1
    %p121 = scmp.eq.s32.totalorder %s20, 1
    %p122 = scmp.ne.s32.totalorder %s117, %s119
    %p123 = scmp.eq.s32.totalorder %s20, 0
    %p124 = por %p122, %p123
    %p125 = scmp.ne.s32.totalorder %s117, %s119
    %p126 = scmp.eq.s32.totalorder %s25, 1
    %p127 = por %p125, %p126
    %p128 = scmp.ne.s32.totalorder %s119, %s120
    %p129 = scmp.eq.s32.totalorder %s25, 0
    %p130 = por %p128, %p129
    %p131 = scmp.ne.s32.totalorder %s119, %s120
    %p132 = scmp.eq.s32.totalorder %s26, 1
    %p133 = por %p131, %p132
    %p135 = scmp.ne.s32.totalorder %s120, %s134
    %p136 = scmp.eq.s32.totalorder %s26, 0
    %p137 = por %p135, %p136
    %s139 = sadd.s32 %s138, 1
    %p142 = scmp.eq.s32.totalorder %s20, 1
    %p143 = scmp.ne.s32.totalorder %s138, %s140
    %p144 = scmp.eq.s32.totalorder %s20, 0
    %p145 = por %p143, %p144
    %p146 = scmp.ne.s32.totalorder %s138, %s140
    %p147 = scmp.eq.s32.totalorder %s25, 1
    %p148 = por %p146, %p147
    %p149 = scmp.ne.s32.totalorder %s140, %s141
    %p150 = scmp.eq.s32.totalorder %s25, 0
    %p151 = por %p149, %p150
    %p152 = scmp.ne.s32.totalorder %s140, %s141
    %p153 = scmp.eq.s32.totalorder %s26, 1
    %p154 = por %p152, %p153
    %p156 = scmp.ne.s32.totalorder %s141, %s155
    %p157 = scmp.eq.s32.totalorder %s26, 0
    %p158 = por %p156, %p157
    %s160 = sadd.s32 %s159, 1
    %p163 = scmp.eq.s32.totalorder %s20, 1
    %p164 = scmp.ne.s32.totalorder %s159, %s161
    %p165 = scmp.eq.s32.totalorder %s20, 0
    %p166 = por %p164, %p165
    %p167 = scmp.ne.s32.totalorder %s159, %s161
    %p168 = scmp.eq.s32.totalorder %s25, 1
    %p169 = por %p167, %p168
    %p170 = scmp.ne.s32.totalorder %s161, %s162
    %p171 = scmp.eq.s32.totalorder %s25, 0
    %p172 = por %p170, %p171
    %p173 = scmp.ne.s32.totalorder %s161, %s162
    %p174 = scmp.eq.s32.totalorder %s26, 1
    %p175 = por %p173, %p174
    %p177 = scmp.ne.s32.totalorder %s162, %s176
    %p178 = scmp.eq.s32.totalorder %s26, 0
    %p179 = por %p177, %p178
    %s181 = sadd.s32 %s180, 1
    %p184 = scmp.eq.s32.totalorder %s20, 1
    %p185 = scmp.ne.s32.totalorder %s180, %s182
    %p186 = scmp.eq.s32.totalorder %s20, 0
    %p187 = por %p185, %p186
    %p188 = scmp.ne.s32.totalorder %s180, %s182
    %p189 = scmp.eq.s32.totalorder %s25, 1
    %p190 = por %p188, %p189
    %p191 = scmp.ne.s32.totalorder %s182, %s183
    %p192 = scmp.eq.s32.totalorder %s25, 0
    %p193 = por %p191, %p192
    %p194 = scmp.ne.s32.totalorder %s182, %s183
    %p195 = scmp.eq.s32.totalorder %s26, 1
    %p196 = por %p194, %p195
    %p198 = scmp.ne.s32.totalorder %s183, %s197
    %p199 = scmp.eq.s32.totalorder %s26, 0
    %p200 = por %p198, %p199
    %s202 = sadd.s32 %s201, 1
    %p205 = scmp.eq.s32.totalorder %s20, 1
    %p206 = scmp.ne.s32.totalorder %s201, %s203
    %p207 = scmp.eq.s32.totalorder %s20, 0
    %p208 = por %p206, %p207
    %p209 = scmp.ne.s32.totalorder %s201, %s203
    %p210 = scmp.eq.s32.totalorder %s25, 1
    %p211 = por %p209, %p210
    %p212 = scmp.ne.s32.totalorder %s203, %s204
    %p213 = scmp.eq.s32.totalorder %s25, 0
    %p214 = por %p212, %p213
    %p215 = scmp.ne.s32.totalorder %s203, %s204
    %p216 = scmp.eq.s32.totalorder %s26, 1
    %p217 = por %p215, %p216
    %p219 = scmp.ne.s32.totalorder %s204, %s218
    %p220 = scmp.eq.s32.totalorder %s26, 0
    %p221 = por %p219, %p220
    %s223 = sadd.s32 %s222, 1
    %p226 = scmp.eq.s32.totalorder %s20, 1
    %p227 = scmp.ne.s32.totalorder %s222, %s224
    %p228 = scmp.eq.s32.totalorder %s20, 0
    %p229 = por %p227, %p228
    %p230 = scmp.ne.s32.totalorder %s222, %s224
    %p231 = scmp.eq.s32.totalorder %s25, 1
    %p232 = por %p230, %p231
    %p233 = scmp.ne.s32.totalorder %s224, %s225
    %p234 = scmp.eq.s32.totalorder %s25, 0
    %p235 = por %p233, %p234
    %p236 = scmp.ne.s32.totalorder %s224, %s225
    %p237 = scmp.eq.s32.totalorder %s26, 1
    %p238 = por %p236, %p237
    %p240 = scmp.ne.s32.totalorder %s225, %s239
    %p241 = scmp.eq.s32.totalorder %s26, 0
    %p242 = por %p240, %p241
    %s244 = sadd.s32 %s243, 1
    %p247 = scmp.eq.s32.totalorder %s20, 1
    %p248 = scmp.ne.s32.totalorder %s243, %s245
    %p249 = scmp.eq.s32.totalorder %s20, 0
    %p250 = por %p248, %p249
    %p251 = scmp.ne.s32.totalorder %s243, %s245
    %p252 = scmp.eq.s32.totalorder %s25, 1
    %p253 = por %p251, %p252
    %p254 = scmp.ne.s32.totalorder %s245, %s246
    %p255 = scmp.eq.s32.totalorder %s25, 0
    %p256 = por %p254, %p255
    %p257 = scmp.ne.s32.totalorder %s245, %s246
    %p258 = scmp.eq.s32.totalorder %s26, 1
    %p259 = por %p257, %p258
    %p261 = scmp.ne.s32.totalorder %s246, %s260
    %p262 = scmp.eq.s32.totalorder %s26, 0
    %p263 = por %p261, %p262
    %s265 = sadd.s32 %s264, 1
    %p268 = scmp.eq.s32.totalorder %s20, 1
    %p269 = scmp.ne.s32.totalorder %s264, %s266
    %p270 = scmp.eq.s32.totalorder %s20, 0
    %p271 = por %p269, %p270
    %p272 = scmp.ne.s32.totalorder %s264, %s266
    %p273 = scmp.eq.s32.totalorder %s25, 1
    %p274 = por %p272, %p273
    %p275 = scmp.ne.s32.totalorder %s266, %s267
    %p276 = scmp.eq.s32.totalorder %s25, 0
    %p277 = por %p275, %p276
    %p278 = scmp.ne.s32.totalorder %s266, %s267
    %p279 = scmp.eq.s32.totalorder %s26, 1
    %p280 = por %p278, %p279
    %p282 = scmp.ne.s32.totalorder %s267, %s281
    %p283 = scmp.eq.s32.totalorder %s26, 0
    %p284 = por %p282, %p283
    %s286 = sadd.s32 %s285, 1
    %p289 = scmp.eq.s32.totalorder %s20, 1
    %p290 = scmp.ne.s32.totalorder %s285, %s287
    %p291 = scmp.eq.s32.totalorder %s20, 0
    %p292 = por %p290, %p291
    %p293 = scmp.ne.s32.totalorder %s285, %s287
    %p294 = scmp.eq.s32.totalorder %s25, 1
    %p295 = por %p293, %p294
    %p296 = scmp.ne.s32.totalorder %s287, %s288
    %p297 = scmp.eq.s32.totalorder %s25, 0
    %p298 = por %p296, %p297
    %p299 = scmp.ne.s32.totalorder %s287, %s288
    %p300 = scmp.eq.s32.totalorder %s26, 1
    %p301 = por %p299, %p300
    %p303 = scmp.ne.s32.totalorder %s288, %s302
    %p304 = scmp.eq.s32.totalorder %s26, 0
    %p305 = por %p303, %p304
    %s307 = sadd.s32 %s306, 1
    %p310 = scmp.eq.s32.totalorder %s20, 1
    %p311 = scmp.ne.s32.totalorder %s306, %s308
    %p312 = scmp.eq.s32.totalorder %s20, 0
    %p313 = por %p311, %p312
    %p314 = scmp.ne.s32.totalorder %s306, %s308
    %p315 = scmp.eq.s32.totalorder %s25, 1
    %p316 = por %p314, %p315
    %p317 = scmp.ne.s32.totalorder %s308, %s309
    %p318 = scmp.eq.s32.totalorder %s25, 0
    %p319 = por %p317, %p318
    %p320 = scmp.ne.s32.totalorder %s308, %s309
    %p321 = scmp.eq.s32.totalorder %s26, 1
    %p322 = por %p320, %p321
    %p324 = scmp.ne.s32.totalorder %s309, %s323
    %p325 = scmp.eq.s32.totalorder %s26, 0
    %p326 = por %p324, %p325
    %s327 = ssub.s32 %s20, %s27
    %p328 = scmp.eq.s32.totalorder %s327, 0
    %s330 = sadd.s32 %s329, 1
    %s331 = scalar_select %p328, %s329, %s330
    %p334 = pneg %p328
    %p335 = scmp.eq.s32.totalorder %s20, 1
    %p336 = por %p334, %p335
    %p337 = scmp.ne.s32.totalorder %s329, %s332
    %p338 = scmp.eq.s32.totalorder %s20, 0
    %p339 = por %p337, %p338
    %p340 = scmp.ne.s32.totalorder %s329, %s332
    %p341 = scmp.eq.s32.totalorder %s25, 1
    %p342 = por %p340, %p341
    %p343 = scmp.ne.s32.totalorder %s332, %s333
    %p344 = scmp.eq.s32.totalorder %s25, 0
    %p345 = por %p343, %p344
    %p346 = scmp.ne.s32.totalorder %s332, %s333
    %p347 = scmp.eq.s32.totalorder %s26, 1
    %p348 = por %p346, %p347
    %p350 = scmp.ne.s32.totalorder %s333, %s349
    %p351 = scmp.eq.s32.totalorder %s26, 0
    %p352 = por %p350, %p351
    %p353 = scmp.le.s32.totalorder 1, %s20
    %p354 = scmp.lt.s32.totalorder %s20, 3
    %p355 = pnand %p353, %p354
    %p356 = pneg %p355
    // Predicated region
    $region9: #{multi_scale_block.1} parent=5 // pred_check
      _
    $region10: #{multi_scale_block.1} parent=5 // pred_check_branch
      %358 = sbr.rel (%p355) target = $region12
    $region11: #{multi_scale_block.1} parent=5 // pred_region
      %s359 = ssub.s32 %s20, 1
      // Predicated region
      $region13: #{multi_scale_block.1} parent=11 // pred_check
        %p360 = pneg %p67
      $region14: #{multi_scale_block.1} parent=11 // pred_check_branch
        %362 = sbr.rel (%p360) target = $region16
      $region15: #{multi_scale_block.1} parent=11 // pred_region
        _
      $region16: #{multi_scale_block.1} parent=11 // pred_fallthru
        _
      // Predicated region
      $region17: #{multi_scale_block.1} parent=11 // pred_check
        %p363 = pneg %p88
      $region18: #{multi_scale_block.1} parent=11 // pred_check_branch
        %365 = sbr.rel (%p363) target = $region20
      $region19: #{multi_scale_block.1} parent=11 // pred_region
        _
      $region20: #{multi_scale_block.1} parent=11 // pred_fallthru
        _
      // Predicated region
      $region21: #{multi_scale_block.1} parent=11 // pred_check
        %p366 = pneg %p109
      $region22: #{multi_scale_block.1} parent=11 // pred_check_branch
        %368 = sbr.rel (%p366) target = $region24
      $region23: #{multi_scale_block.1} parent=11 // pred_region
        _
      $region24: #{multi_scale_block.1} parent=11 // pred_fallthru
        _
      // Predicated region
      $region25: #{multi_scale_block.1} parent=11 // pred_check
        %p369 = pneg %p130
      $region26: #{multi_scale_block.1} parent=11 // pred_check_branch
        %371 = sbr.rel (%p369) target = $region28
      $region27: #{multi_scale_block.1} parent=11 // pred_region
        _
      $region28: #{multi_scale_block.1} parent=11 // pred_fallthru
        _
      // Predicated region
      $region29: #{multi_scale_block.1} parent=11 // pred_check
        %p372 = pneg %p151
      $region30: #{multi_scale_block.1} parent=11 // pred_check_branch
        %374 = sbr.rel (%p372) target = $region32
      $region31: #{multi_scale_block.1} parent=11 // pred_region
        _
      $region32: #{multi_scale_block.1} parent=11 // pred_fallthru
        _
      // Predicated region
      $region33: #{multi_scale_block.1} parent=11 // pred_check
        %p375 = pneg %p172
      $region34: #{multi_scale_block.1} parent=11 // pred_check_branch
        %377 = sbr.rel (%p375) target = $region36
      $region35: #{multi_scale_block.1} parent=11 // pred_region
        _
      $region36: #{multi_scale_block.1} parent=11 // pred_fallthru
        _
      // Predicated region
      $region37: #{multi_scale_block.1} parent=11 // pred_check
        %p378 = pneg %p193
      $region38: #{multi_scale_block.1} parent=11 // pred_check_branch
        %380 = sbr.rel (%p378) target = $region40
      $region39: #{multi_scale_block.1} parent=11 // pred_region
        _
      $region40: #{multi_scale_block.1} parent=11 // pred_fallthru
        _
      // Predicated region
      $region41: #{multi_scale_block.1} parent=11 // pred_check
        %p381 = pneg %p214
      $region42: #{multi_scale_block.1} parent=11 // pred_check_branch
        %383 = sbr.rel (%p381) target = $region44
      $region43: #{multi_scale_block.1} parent=11 // pred_region
        _
      $region44: #{multi_scale_block.1} parent=11 // pred_fallthru
        _
      // Predicated region
      $region45: #{multi_scale_block.1} parent=11 // pred_check
        %p384 = pneg %p235
      $region46: #{multi_scale_block.1} parent=11 // pred_check_branch
        %386 = sbr.rel (%p384) target = $region48
      $region47: #{multi_scale_block.1} parent=11 // pred_region
        _
      $region48: #{multi_scale_block.1} parent=11 // pred_fallthru
        _
      // Predicated region
      $region49: #{multi_scale_block.1} parent=11 // pred_check
        %p387 = pneg %p256
      $region50: #{multi_scale_block.1} parent=11 // pred_check_branch
        %389 = sbr.rel (%p387) target = $region52
      $region51: #{multi_scale_block.1} parent=11 // pred_region
        _
      $region52: #{multi_scale_block.1} parent=11 // pred_fallthru
        _
      // Predicated region
      $region53: #{multi_scale_block.1} parent=11 // pred_check
        %p390 = pneg %p277
      $region54: #{multi_scale_block.1} parent=11 // pred_check_branch
        %392 = sbr.rel (%p390) target = $region56
      $region55: #{multi_scale_block.1} parent=11 // pred_region
        _
      $region56: #{multi_scale_block.1} parent=11 // pred_fallthru
        _
      // Predicated region
      $region57: #{multi_scale_block.1} parent=11 // pred_check
        %p393 = pneg %p298
      $region58: #{multi_scale_block.1} parent=11 // pred_check_branch
        %395 = sbr.rel (%p393) target = $region60
      $region59: #{multi_scale_block.1} parent=11 // pred_region
        _
      $region60: #{multi_scale_block.1} parent=11 // pred_fallthru
        _
      // Predicated region
      $region61: #{multi_scale_block.1} parent=11 // pred_check
        %p396 = pneg %p319
      $region62: #{multi_scale_block.1} parent=11 // pred_check_branch
        %398 = sbr.rel (%p396) target = $region64
      $region63: #{multi_scale_block.1} parent=11 // pred_region
        _
      $region64: #{multi_scale_block.1} parent=11 // pred_fallthru
        _
    $region12: #{multi_scale_block.1} parent=5 // pred_fallthru
      _
    %p399 = scmp.lt.s32.totalorder %s20, 2
    // Predicated region
    $region65: #{multi_scale_block.1} parent=5 // pred_check
      %p400 = pneg %p399
    $region66: #{multi_scale_block.1} parent=5 // pred_check_branch
      %402 = sbr.rel (%p400) target = $region68
    $region67: #{multi_scale_block.1} parent=5 // pred_region
      // Predicated region
      $region69: #{multi_scale_block.1} parent=67 // pred_check
        %p403 = pneg %p40
      $region70: #{multi_scale_block.1} parent=67 // pred_check_branch
        %405 = sbr.rel (%p403) target = $region72
      $region71: #{multi_scale_block.1} parent=67 // pred_region
        %p406 = scmp.lt.s32.totalorder %s20, 1
        %s407 = scalar_select %p406, %s20, 1
        %s408 = smul.addr %s407, 16
        %s409 = smul.addr %s408, 8
        %s410 = scalar_lea.vmem %s0, %s409
      $region72: #{multi_scale_block.1} parent=67 // pred_fallthru
        _
    $region68: #{multi_scale_block.1} parent=5 // pred_fallthru
      _
    %p411 = scmp.le.s32.totalorder 1, %s20
    %p412 = scmp.lt.s32.totalorder %s20, 3
    %p413 = pnand %p411, %p412
    %p414 = pneg %p413
    // Predicated region
    $region73: #{multi_scale_block.1} parent=5 // pred_check
      _
    $region74: #{multi_scale_block.1} parent=5 // pred_check_branch
      %416 = sbr.rel (%p413) target = $region76
    $region75: #{multi_scale_block.1} parent=5 // pred_region
      %s417 = ssub.s32 %s20, 1
      %p418 = scmp.lt.s32.totalorder %s25, 1
      %s419 = scalar_select %p418, %s25, 1
      %s420 = smul.addr %s419, 16
      %s421 = smul.addr %s420, 8
      %s422 = scalar_lea.vmem %s0, %s421
      %p423 = pneg %p46
      %p424 = pneg %p43
      %p425 = pneg %p67
      %p426 = pneg %p64
      %p427 = pneg %p88
      %p428 = pneg %p85
      %p429 = pneg %p109
      %p430 = pneg %p106
      %p431 = pneg %p130
      %p432 = pneg %p127
      %p433 = pneg %p151
      %p434 = pneg %p148
      %p435 = pneg %p172
      %p436 = pneg %p169
      %p437 = pneg %p193
      %p438 = pneg %p190
      %p439 = pneg %p214
      %p440 = pneg %p211
      %p441 = pneg %p235
      %p442 = pneg %p232
      %p443 = pneg %p256
      %p444 = pneg %p253
      %p445 = pneg %p277
      %p446 = pneg %p274
      %p447 = pneg %p298
      %p448 = pneg %p295
      %p449 = pneg %p319
      %p450 = pneg %p316
      %p451 = pneg %p345
      %p452 = pneg %p342
      %p453 = scmp.lt.s32.totalorder %s25, 1
      %s454 = scalar_select %p453, %s25, 1
      %s455 = smul.addr %s454, 16
      %s456 = smul.addr %s455, 8
      %s457 = scalar_lea.vmem %s14, %s456
      %p458 = scmp.lt.s32.totalorder %s25, 1
      %s459 = scalar_select %p458, %s25, 1
      %s460 = smul.addr %s459, 16
      %s461 = smul.addr %s460, 8
      %s462 = scalar_lea.vmem %s0, %s461
      %p463 = scmp.lt.s32.totalorder %s25, 1
      %s464 = scalar_select %p463, %s25, 1
      %s465 = smul.addr %s464, 16
      %s466 = smul.addr %s465, 8
      %s467 = scalar_lea.vmem %s14, %s466
      %v469 = vld [vmem:[%s462] sm:$0xff]
      %v470 = vld [vmem:[%s462 + $0x8] sm:$0xff]
      %v471 = vld [vmem:[%s462 + $0x10] sm:$0xff]
      %v472 = vld [vmem:[%s462 + $0x18] sm:$0xff]
      %v473 = vld [vmem:[%s462 + $0x20] sm:$0xff]
      %v474 = vld [vmem:[%s462 + $0x28] sm:$0xff]
      %v475 = vld [vmem:[%s462 + $0x30] sm:$0xff]
      %v476 = vld [vmem:[%s462 + $0x38] sm:$0xff]
      %v477 = vld [vmem:[%s462 + $0x40] sm:$0xff]
      %v478 = vld [vmem:[%s462 + $0x48] sm:$0xff]
      %v479 = vld [vmem:[%s462 + $0x50] sm:$0xff]
      %v480 = vld [vmem:[%s462 + $0x58] sm:$0xff]
      %v481 = vld [vmem:[%s462 + $0x60] sm:$0xff]
      %v482 = vld [vmem:[%s462 + $0x68] sm:$0xff]
      %v483 = vld [vmem:[%s462 + $0x70] sm:$0xff]
      %v484 = vld [vmem:[%s462 + $0x78] sm:$0xff]
      %v485 = vpack.c.bf16 %v470, %v469
      %v486 = vpack.c.bf16 %v472, %v471
      %v487 = vpack.c.bf16 %v474, %v473
      %v488 = vpack.c.bf16 %v476, %v475
      %v489 = vpack.c.bf16 %v478, %v477
      %v490 = vpack.c.bf16 %v480, %v479
      %v491 = vpack.c.bf16 %v482, %v481
      %v492 = vpack.c.bf16 %v484, %v483
      %v493 = vld [vmem:[%s1] sm:$0xff]
      %v494 = vld [vmem:[%s1 + $0x8] sm:$0xff]
      %v495 = vld [vmem:[%s1 + $0x10] sm:$0xff]
      %v496 = vld [vmem:[%s1 + $0x18] sm:$0xff]
      %v497 = vld [vmem:[%s1 + $0x20] sm:$0xff]
      %v498 = vld [vmem:[%s1 + $0x28] sm:$0xff]
      %v499 = vld [vmem:[%s1 + $0x30] sm:$0xff]
      %v500 = vld [vmem:[%s1 + $0x38] sm:$0xff]
      %v509 = vunpack.c.l.b16 %v493
      %v510 = vunpack.c.h.b16 %v493
      %v511 = vunpack.c.l.b16 %v494
      %v512 = vunpack.c.h.b16 %v494
      %v513 = vunpack.c.l.b16 %v495
      %v514 = vunpack.c.h.b16 %v495
      %v515 = vunpack.c.l.b16 %v496
      %v516 = vunpack.c.h.b16 %v496
      %v517 = vunpack.c.l.b16 %v497
      %v518 = vunpack.c.h.b16 %v497
      %v519 = vunpack.c.l.b16 %v498
      %v520 = vunpack.c.h.b16 %v498
      %v521 = vunpack.c.l.b16 %v499
      %v522 = vunpack.c.h.b16 %v499
      %v523 = vunpack.c.l.b16 %v500
      %v524 = vunpack.c.h.b16 %v500
      %v525 = vpack.c.b16 %v513, %v509
      %v526 = vpack.c.b16 %v514, %v510
      %v527 = vpack.c.b16 %v515, %v511
      %v528 = vpack.c.b16 %v516, %v512
      %v529 = vpack.c.b16 %v521, %v517
      %v530 = vpack.c.b16 %v522, %v518
      %v531 = vpack.c.b16 %v523, %v519
      %v532 = vpack.c.b16 %v524, %v520
      %vm541 = vcmask 261120
      %v543 = vsel %vm541, %v485, 0
      %v546 = vsel %vm541, %v486, 0
      %v549 = vsel %vm541, %v487, 0
      %v552 = vsel %vm541, %v488, 0
      %v555 = vsel %vm541, %v489, 0
      %v558 = vsel %vm541, %v490, 0
      %v561 = vsel %vm541, %v491, 0
      %v564 = vsel %vm541, %v492, 0
      %566 = vmatpush.bf16.msra.mxu0 0
      %567 = vmatpush.bf16.msra.mxu0 0
      %568 = vmatpush.bf16.msra.mxu0 0
      %569 = vmatpush.bf16.msra.mxu0 0
      %570 = vmatpush.bf16.msra.mxu0 0
      %571 = vmatpush.bf16.msra.mxu0 0
      %572 = vmatpush.bf16.msra.mxu0 %v529
      %573 = vmatpush.bf16.msra.mxu0 %v525
      %574 = vmatmul.bf16.gmra.mxu0 %v543
      %v575 = vpop.f32.mrf.mxu0
      %v576 = vadd.f32 0.0, %v575
      %v577 = vpop.f32.mrf.mxu0
      %v578 = vadd.f32 0.0, %v577
      %579 = vmatmul.bf16.gmra.mxu0 %v546
      %v580 = vpop.f32.mrf.mxu0
      %v581 = vadd.f32 0.0, %v580
      %v582 = vpop.f32.mrf.mxu0
      %v583 = vadd.f32 0.0, %v582
      %584 = vmatmul.bf16.gmra.mxu0 %v549
      %v585 = vpop.f32.mrf.mxu0
      %v586 = vadd.f32 0.0, %v585
      %v587 = vpop.f32.mrf.mxu0
      %v588 = vadd.f32 0.0, %v587
      %589 = vmatmul.bf16.gmra.mxu0 %v552
      %v590 = vpop.f32.mrf.mxu0
      %v591 = vadd.f32 0.0, %v590
      %v592 = vpop.f32.mrf.mxu0
      %v593 = vadd.f32 0.0, %v592
      %594 = vmatmul.bf16.gmra.mxu0 %v555
      %v595 = vpop.f32.mrf.mxu0
      %v596 = vadd.f32 0.0, %v595
      %v597 = vpop.f32.mrf.mxu0
      %v598 = vadd.f32 0.0, %v597
      %599 = vmatmul.bf16.gmra.mxu0 %v558
      %v600 = vpop.f32.mrf.mxu0
      %v601 = vadd.f32 0.0, %v600
      %v602 = vpop.f32.mrf.mxu0
      %v603 = vadd.f32 0.0, %v602
      %604 = vmatmul.bf16.gmra.mxu0 %v561
      %v605 = vpop.f32.mrf.mxu0
      %v606 = vadd.f32 0.0, %v605
      %v607 = vpop.f32.mrf.mxu0
      %v608 = vadd.f32 0.0, %v607
      %609 = vmatmul.bf16.gmra.mxu0 %v564
      %v610 = vpop.f32.mrf.mxu0
      %v611 = vadd.f32 0.0, %v610
      %v612 = vpop.f32.mrf.mxu0
      %v613 = vadd.f32 0.0, %v612
      %614 = vdwg.mxu0
      %615 = vmatpush.bf16.msra.mxu0 0
      %616 = vmatpush.bf16.msra.mxu0 0
      %617 = vmatpush.bf16.msra.mxu0 0
      %618 = vmatpush.bf16.msra.mxu0 0
      %619 = vmatpush.bf16.msra.mxu0 0
      %620 = vmatpush.bf16.msra.mxu0 0
      %621 = vmatpush.bf16.msra.mxu0 %v530
      %622 = vmatpush.bf16.msra.mxu0 %v526
      %623 = vmatmul.bf16.gmra.mxu0 %v543
      %v624 = vpop.f32.mrf.mxu0
      %v625 = vadd.f32 0.0, %v624
      %v626 = vpop.f32.mrf.mxu0
      %v627 = vadd.f32 0.0, %v626
      %628 = vmatmul.bf16.gmra.mxu0 %v546
      %v629 = vpop.f32.mrf.mxu0
      %v630 = vadd.f32 0.0, %v629
      %v631 = vpop.f32.mrf.mxu0
      %v632 = vadd.f32 0.0, %v631
      %633 = vmatmul.bf16.gmra.mxu0 %v549
      %v634 = vpop.f32.mrf.mxu0
      %v635 = vadd.f32 0.0, %v634
      %v636 = vpop.f32.mrf.mxu0
      %v637 = vadd.f32 0.0, %v636
      %638 = vmatmul.bf16.gmra.mxu0 %v552
      %v639 = vpop.f32.mrf.mxu0
      %v640 = vadd.f32 0.0, %v639
      %v641 = vpop.f32.mrf.mxu0
      %v642 = vadd.f32 0.0, %v641
      %643 = vmatmul.bf16.gmra.mxu0 %v555
      %v644 = vpop.f32.mrf.mxu0
      %v645 = vadd.f32 0.0, %v644
      %v646 = vpop.f32.mrf.mxu0
      %v647 = vadd.f32 0.0, %v646
      %648 = vmatmul.bf16.gmra.mxu0 %v558
      %v649 = vpop.f32.mrf.mxu0
      %v650 = vadd.f32 0.0, %v649
      %v651 = vpop.f32.mrf.mxu0
      %v652 = vadd.f32 0.0, %v651
      %653 = vmatmul.bf16.gmra.mxu0 %v561
      %v654 = vpop.f32.mrf.mxu0
      %v655 = vadd.f32 0.0, %v654
      %v656 = vpop.f32.mrf.mxu0
      %v657 = vadd.f32 0.0, %v656
      %658 = vmatmul.bf16.gmra.mxu0 %v564
      %v659 = vpop.f32.mrf.mxu0
      %v660 = vadd.f32 0.0, %v659
      %v661 = vpop.f32.mrf.mxu0
      %v662 = vadd.f32 0.0, %v661
      %663 = vdwg.mxu0
      %664 = vmatpush.bf16.msra.mxu0 0
      %665 = vmatpush.bf16.msra.mxu0 0
      %666 = vmatpush.bf16.msra.mxu0 0
      %667 = vmatpush.bf16.msra.mxu0 0
      %668 = vmatpush.bf16.msra.mxu0 0
      %669 = vmatpush.bf16.msra.mxu0 0
      %670 = vmatpush.bf16.msra.mxu0 %v531
      %671 = vmatpush.bf16.msra.mxu0 %v527
      %672 = vmatmul.bf16.gmra.mxu0 %v543
      %v673 = vpop.f32.mrf.mxu0
      %v674 = vadd.f32 0.0, %v673
      %v675 = vpop.f32.mrf.mxu0
      %v676 = vadd.f32 0.0, %v675
      %677 = vmatmul.bf16.gmra.mxu0 %v546
      %v678 = vpop.f32.mrf.mxu0
      %v679 = vadd.f32 0.0, %v678
      %v680 = vpop.f32.mrf.mxu0
      %v681 = vadd.f32 0.0, %v680
      %682 = vmatmul.bf16.gmra.mxu0 %v549
      %v683 = vpop.f32.mrf.mxu0
      %v684 = vadd.f32 0.0, %v683
      %v685 = vpop.f32.mrf.mxu0
      %v686 = vadd.f32 0.0, %v685
      %687 = vmatmul.bf16.gmra.mxu0 %v552
      %v688 = vpop.f32.mrf.mxu0
      %v689 = vadd.f32 0.0, %v688
      %v690 = vpop.f32.mrf.mxu0
      %v691 = vadd.f32 0.0, %v690
      %692 = vmatmul.bf16.gmra.mxu0 %v555
      %v693 = vpop.f32.mrf.mxu0
      %v694 = vadd.f32 0.0, %v693
      %v695 = vpop.f32.mrf.mxu0
      %v696 = vadd.f32 0.0, %v695
      %697 = vmatmul.bf16.gmra.mxu0 %v558
      %v698 = vpop.f32.mrf.mxu0
      %v699 = vadd.f32 0.0, %v698
      %v700 = vpop.f32.mrf.mxu0
      %v701 = vadd.f32 0.0, %v700
      %702 = vmatmul.bf16.gmra.mxu0 %v561
      %v703 = vpop.f32.mrf.mxu0
      %v704 = vadd.f32 0.0, %v703
      %v705 = vpop.f32.mrf.mxu0
      %v706 = vadd.f32 0.0, %v705
      %707 = vmatmul.bf16.gmra.mxu0 %v564
      %v708 = vpop.f32.mrf.mxu0
      %v709 = vadd.f32 0.0, %v708
      %v710 = vpop.f32.mrf.mxu0
      %v711 = vadd.f32 0.0, %v710
      %712 = vdwg.mxu0
      %713 = vmatpush.bf16.msra.mxu0 0
      %714 = vmatpush.bf16.msra.mxu0 0
      %715 = vmatpush.bf16.msra.mxu0 0
      %716 = vmatpush.bf16.msra.mxu0 0
      %717 = vmatpush.bf16.msra.mxu0 0
      %718 = vmatpush.bf16.msra.mxu0 0
      %719 = vmatpush.bf16.msra.mxu0 %v532
      %720 = vmatpush.bf16.msra.mxu0 %v528
      %721 = vmatmul.bf16.gmra.mxu0 %v543
      %v722 = vpop.f32.mrf.mxu0
      %v723 = vadd.f32 0.0, %v722
      %v724 = vpop.f32.mrf.mxu0
      %v725 = vadd.f32 0.0, %v724
      %726 = vmatmul.bf16.gmra.mxu0 %v546
      %v727 = vpop.f32.mrf.mxu0
      %v728 = vadd.f32 0.0, %v727
      %v729 = vpop.f32.mrf.mxu0
      %v730 = vadd.f32 0.0, %v729
      %731 = vmatmul.bf16.gmra.mxu0 %v549
      %v732 = vpop.f32.mrf.mxu0
      %v733 = vadd.f32 0.0, %v732
      %v734 = vpop.f32.mrf.mxu0
      %v735 = vadd.f32 0.0, %v734
      %736 = vmatmul.bf16.gmra.mxu0 %v552
      %v737 = vpop.f32.mrf.mxu0
      %v738 = vadd.f32 0.0, %v737
      %v739 = vpop.f32.mrf.mxu0
      %v740 = vadd.f32 0.0, %v739
      %741 = vmatmul.bf16.gmra.mxu0 %v555
      %v742 = vpop.f32.mrf.mxu0
      %v743 = vadd.f32 0.0, %v742
      %v744 = vpop.f32.mrf.mxu0
      %v745 = vadd.f32 0.0, %v744
      %746 = vmatmul.bf16.gmra.mxu0 %v558
      %v747 = vpop.f32.mrf.mxu0
      %v748 = vadd.f32 0.0, %v747
      %v749 = vpop.f32.mrf.mxu0
      %v750 = vadd.f32 0.0, %v749
      %751 = vmatmul.bf16.gmra.mxu0 %v561
      %v752 = vpop.f32.mrf.mxu0
      %v753 = vadd.f32 0.0, %v752
      %v754 = vpop.f32.mrf.mxu0
      %v755 = vadd.f32 0.0, %v754
      %756 = vmatmul.bf16.gmra.mxu0 %v564
      %v757 = vpop.f32.mrf.mxu0
      %v758 = vadd.f32 0.0, %v757
      %v759 = vpop.f32.mrf.mxu0
      %v760 = vadd.f32 0.0, %v759
      %761 = vdwg.mxu0
      %v762 = vmax.f32 %v576, %v625
      %v763 = vmax.f32 %v762, %v674
      %v764 = vmax.f32 %v763, %v723
      %765 = vmax.xlane.f32.xlu0 %v764
      %v766 = vpop.xlane.xlu0 %765
      %v767 = vmax.f32 %v578, %v627
      %v768 = vmax.f32 %v767, %v676
      %v769 = vmax.f32 %v768, %v725
      %770 = vmax.xlane.f32.xlu0 %v769
      %v771 = vpop.xlane.xlu0 %770
      %v772 = vmax.f32 %v581, %v630
      %v773 = vmax.f32 %v772, %v679
      %v774 = vmax.f32 %v773, %v728
      %775 = vmax.xlane.f32.xlu0 %v774
      %v776 = vpop.xlane.xlu0 %775
      %v777 = vmax.f32 %v583, %v632
      %v778 = vmax.f32 %v777, %v681
      %v779 = vmax.f32 %v778, %v730
      %780 = vmax.xlane.f32.xlu0 %v779
      %v781 = vpop.xlane.xlu0 %780
      %v782 = vmax.f32 %v586, %v635
      %v783 = vmax.f32 %v782, %v684
      %v784 = vmax.f32 %v783, %v733
      %785 = vmax.xlane.f32.xlu0 %v784
      %v786 = vpop.xlane.xlu0 %785
      %v787 = vmax.f32 %v588, %v637
      %v788 = vmax.f32 %v787, %v686
      %v789 = vmax.f32 %v788, %v735
      %790 = vmax.xlane.f32.xlu0 %v789
      %v791 = vpop.xlane.xlu0 %790
      %v792 = vmax.f32 %v591, %v640
      %v793 = vmax.f32 %v792, %v689
      %v794 = vmax.f32 %v793, %v738
      %795 = vmax.xlane.f32.xlu0 %v794
      %v796 = vpop.xlane.xlu0 %795
      %v797 = vmax.f32 %v593, %v642
      %v798 = vmax.f32 %v797, %v691
      %v799 = vmax.f32 %v798, %v740
      %800 = vmax.xlane.f32.xlu0 %v799
      %v801 = vpop.xlane.xlu0 %800
      %v802 = vmax.f32 %v596, %v645
      %v803 = vmax.f32 %v802, %v694
      %v804 = vmax.f32 %v803, %v743
      %805 = vmax.xlane.f32.xlu0 %v804
      %v806 = vpop.xlane.xlu0 %805
      %v807 = vmax.f32 %v598, %v647
      %v808 = vmax.f32 %v807, %v696
      %v809 = vmax.f32 %v808, %v745
      %810 = vmax.xlane.f32.xlu0 %v809
      %v811 = vpop.xlane.xlu0 %810
      %v812 = vmax.f32 %v601, %v650
      %v813 = vmax.f32 %v812, %v699
      %v814 = vmax.f32 %v813, %v748
      %815 = vmax.xlane.f32.xlu0 %v814
      %v816 = vpop.xlane.xlu0 %815
      %v817 = vmax.f32 %v603, %v652
      %v818 = vmax.f32 %v817, %v701
      %v819 = vmax.f32 %v818, %v750
      %820 = vmax.xlane.f32.xlu0 %v819
      %v821 = vpop.xlane.xlu0 %820
      %v822 = vmax.f32 %v606, %v655
      %v823 = vmax.f32 %v822, %v704
      %v824 = vmax.f32 %v823, %v753
      %825 = vmax.xlane.f32.xlu0 %v824
      %v826 = vpop.xlane.xlu0 %825
      %v827 = vmax.f32 %v608, %v657
      %v828 = vmax.f32 %v827, %v706
      %v829 = vmax.f32 %v828, %v755
      %830 = vmax.xlane.f32.xlu0 %v829
      %v831 = vpop.xlane.xlu0 %830
      %v832 = vmax.f32 %v611, %v660
      %v833 = vmax.f32 %v832, %v709
      %v834 = vmax.f32 %v833, %v758
      %835 = vmax.xlane.f32.xlu0 %v834
      %v836 = vpop.xlane.xlu0 %835
      %v837 = vmax.f32 %v613, %v662
      %v838 = vmax.f32 %v837, %v711
      %v839 = vmax.f32 %v838, %v760
      %840 = vmax.xlane.f32.xlu0 %v839
      %v841 = vpop.xlane.xlu0 %840
      %v842 = vsub.f32 %v576, %v766
      %v843 = vsub.f32 %v625, %v766
      %v844 = vsub.f32 %v674, %v766
      %v845 = vsub.f32 %v723, %v766
      %v846 = vsub.f32 %v578, %v771
      %v847 = vsub.f32 %v627, %v771
      %v848 = vsub.f32 %v676, %v771
      %v849 = vsub.f32 %v725, %v771
      %v850 = vsub.f32 %v581, %v776
      %v851 = vsub.f32 %v630, %v776
      %v852 = vsub.f32 %v679, %v776
      %v853 = vsub.f32 %v728, %v776
      %v854 = vsub.f32 %v583, %v781
      %v855 = vsub.f32 %v632, %v781
      %v856 = vsub.f32 %v681, %v781
      %v857 = vsub.f32 %v730, %v781
      %v858 = vsub.f32 %v586, %v786
      %v859 = vsub.f32 %v635, %v786
      %v860 = vsub.f32 %v684, %v786
      %v861 = vsub.f32 %v733, %v786
      %v862 = vsub.f32 %v588, %v791
      %v863 = vsub.f32 %v637, %v791
      %v864 = vsub.f32 %v686, %v791
      %v865 = vsub.f32 %v735, %v791
      %v866 = vsub.f32 %v591, %v796
      %v867 = vsub.f32 %v640, %v796
      %v868 = vsub.f32 %v689, %v796
      %v869 = vsub.f32 %v738, %v796
      %v870 = vsub.f32 %v593, %v801
      %v871 = vsub.f32 %v642, %v801
      %v872 = vsub.f32 %v691, %v801
      %v873 = vsub.f32 %v740, %v801
      %v874 = vsub.f32 %v596, %v806
      %v875 = vsub.f32 %v645, %v806
      %v876 = vsub.f32 %v694, %v806
      %v877 = vsub.f32 %v743, %v806
      %v878 = vsub.f32 %v598, %v811
      %v879 = vsub.f32 %v647, %v811
      %v880 = vsub.f32 %v696, %v811
      %v881 = vsub.f32 %v745, %v811
      %v882 = vsub.f32 %v601, %v816
      %v883 = vsub.f32 %v650, %v816
      %v884 = vsub.f32 %v699, %v816
      %v885 = vsub.f32 %v748, %v816
      %v886 = vsub.f32 %v603, %v821
      %v887 = vsub.f32 %v652, %v821
      %v888 = vsub.f32 %v701, %v821
      %v889 = vsub.f32 %v750, %v821
      %v890 = vsub.f32 %v606, %v826
      %v891 = vsub.f32 %v655, %v826
      %v892 = vsub.f32 %v704, %v826
      %v893 = vsub.f32 %v753, %v826
      %v894 = vsub.f32 %v608, %v831
      %v895 = vsub.f32 %v657, %v831
      %v896 = vsub.f32 %v706, %v831
      %v897 = vsub.f32 %v755, %v831
      %v898 = vsub.f32 %v611, %v836
      %v899 = vsub.f32 %v660, %v836
      %v900 = vsub.f32 %v709, %v836
      %v901 = vsub.f32 %v758, %v836
      %v902 = vsub.f32 %v613, %v841
      %v903 = vsub.f32 %v662, %v841
      %v904 = vsub.f32 %v711, %v841
      %v905 = vsub.f32 %v760, %v841
      %v906 = vmul.f32 %v842, 1.442695
      %v907 = vpow.pop %v906
      %v908 = vmul.f32 %v843, 1.442695
      %v909 = vpow.pop %v908
      %v910 = vmul.f32 %v844, 1.442695
      %v911 = vpow.pop %v910
      %v912 = vmul.f32 %v845, 1.442695
      %v913 = vpow.pop %v912
      %v914 = vmul.f32 %v846, 1.442695
      %v915 = vpow.pop %v914
      %v916 = vmul.f32 %v847, 1.442695
      %v917 = vpow.pop %v916
      %v918 = vmul.f32 %v848, 1.442695
      %v919 = vpow.pop %v918
      %v920 = vmul.f32 %v849, 1.442695
      %v921 = vpow.pop %v920
      %v922 = vmul.f32 %v850, 1.442695
      %v923 = vpow.pop %v922
      %v924 = vmul.f32 %v851, 1.442695
      %v925 = vpow.pop %v924
      %v926 = vmul.f32 %v852, 1.442695
      %v927 = vpow.pop %v926
      %v928 = vmul.f32 %v853, 1.442695
      %v929 = vpow.pop %v928
      %v930 = vmul.f32 %v854, 1.442695
      %v931 = vpow.pop %v930
      %v932 = vmul.f32 %v855, 1.442695
      %v933 = vpow.pop %v932
      %v934 = vmul.f32 %v856, 1.442695
      %v935 = vpow.pop %v934
      %v936 = vmul.f32 %v857, 1.442695
      %v937 = vpow.pop %v936
      %v938 = vmul.f32 %v858, 1.442695
      %v939 = vpow.pop %v938
      %v940 = vmul.f32 %v859, 1.442695
      %v941 = vpow.pop %v940
      %v942 = vmul.f32 %v860, 1.442695
      %v943 = vpow.pop %v942
      %v944 = vmul.f32 %v861, 1.442695
      %v945 = vpow.pop %v944
      %v946 = vmul.f32 %v862, 1.442695
      %v947 = vpow.pop %v946
      %v948 = vmul.f32 %v863, 1.442695
      %v949 = vpow.pop %v948
      %v950 = vmul.f32 %v864, 1.442695
      %v951 = vpow.pop %v950
      %v952 = vmul.f32 %v865, 1.442695
      %v953 = vpow.pop %v952
      %v954 = vmul.f32 %v866, 1.442695
      %v955 = vpow.pop %v954
      %v956 = vmul.f32 %v867, 1.442695
      %v957 = vpow.pop %v956
      %v958 = vmul.f32 %v868, 1.442695
      %v959 = vpow.pop %v958
      %v960 = vmul.f32 %v869, 1.442695
      %v961 = vpow.pop %v960
      %v962 = vmul.f32 %v870, 1.442695
      %v963 = vpow.pop %v962
      %v964 = vmul.f32 %v871, 1.442695
      %v965 = vpow.pop %v964
      %v966 = vmul.f32 %v872, 1.442695
      %v967 = vpow.pop %v966
      %v968 = vmul.f32 %v873, 1.442695
      %v969 = vpow.pop %v968
      %v970 = vmul.f32 %v874, 1.442695
      %v971 = vpow.pop %v970
      %v972 = vmul.f32 %v875, 1.442695
      %v973 = vpow.pop %v972
      %v974 = vmul.f32 %v876, 1.442695
      %v975 = vpow.pop %v974
      %v976 = vmul.f32 %v877, 1.442695
      %v977 = vpow.pop %v976
      %v978 = vmul.f32 %v878, 1.442695
      %v979 = vpow.pop %v978
      %v980 = vmul.f32 %v879, 1.442695
      %v981 = vpow.pop %v980
      %v982 = vmul.f32 %v880, 1.442695
      %v983 = vpow.pop %v982
      %v984 = vmul.f32 %v881, 1.442695
      %v985 = vpow.pop %v984
      %v986 = vmul.f32 %v882, 1.442695
      %v987 = vpow.pop %v986
      %v988 = vmul.f32 %v883, 1.442695
      %v989 = vpow.pop %v988
      %v990 = vmul.f32 %v884, 1.442695
      %v991 = vpow.pop %v990
      %v992 = vmul.f32 %v885, 1.442695
      %v993 = vpow.pop %v992
      %v994 = vmul.f32 %v886, 1.442695
      %v995 = vpow.pop %v994
      %v996 = vmul.f32 %v887, 1.442695
      %v997 = vpow.pop %v996
      %v998 = vmul.f32 %v888, 1.442695
      %v999 = vpow.pop %v998
      %v1000 = vmul.f32 %v889, 1.442695
      %v1001 = vpow.pop %v1000
      %v1002 = vmul.f32 %v890, 1.442695
      %v1003 = vpow.pop %v1002
      %v1004 = vmul.f32 %v891, 1.442695
      %v1005 = vpow.pop %v1004
      %v1006 = vmul.f32 %v892, 1.442695
      %v1007 = vpow.pop %v1006
      %v1008 = vmul.f32 %v893, 1.442695
      %v1009 = vpow.pop %v1008
      %v1010 = vmul.f32 %v894, 1.442695
      %v1011 = vpow.pop %v1010
      %v1012 = vmul.f32 %v895, 1.442695
      %v1013 = vpow.pop %v1012
      %v1014 = vmul.f32 %v896, 1.442695
      %v1015 = vpow.pop %v1014
      %v1016 = vmul.f32 %v897, 1.442695
      %v1017 = vpow.pop %v1016
      %v1018 = vmul.f32 %v898, 1.442695
      %v1019 = vpow.pop %v1018
      %v1020 = vmul.f32 %v899, 1.442695
      %v1021 = vpow.pop %v1020
      %v1022 = vmul.f32 %v900, 1.442695
      %v1023 = vpow.pop %v1022
      %v1024 = vmul.f32 %v901, 1.442695
      %v1025 = vpow.pop %v1024
      %v1026 = vmul.f32 %v902, 1.442695
      %v1027 = vpow.pop %v1026
      %v1028 = vmul.f32 %v903, 1.442695
      %v1029 = vpow.pop %v1028
      %v1030 = vmul.f32 %v904, 1.442695
      %v1031 = vpow.pop %v1030
      %v1032 = vmul.f32 %v905, 1.442695
      %v1033 = vpow.pop %v1032
      %v1034 = vadd.f32 %v907, %v909
      %v1035 = vadd.f32 %v1034, %v911
      %v1036 = vadd.f32 %v1035, %v913
      %1037 = vadd.xlane.f32.xlu0 %v1036
      %v1038 = vpop.xlane.xlu0 %1037
      %v1039 = vadd.f32 %v915, %v917
      %v1040 = vadd.f32 %v1039, %v919
      %v1041 = vadd.f32 %v1040, %v921
      %1042 = vadd.xlane.f32.xlu0 %v1041
      %v1043 = vpop.xlane.xlu0 %1042
      %v1044 = vadd.f32 %v923, %v925
      %v1045 = vadd.f32 %v1044, %v927
      %v1046 = vadd.f32 %v1045, %v929
      %1047 = vadd.xlane.f32.xlu0 %v1046
      %v1048 = vpop.xlane.xlu0 %1047
      %v1049 = vadd.f32 %v931, %v933
      %v1050 = vadd.f32 %v1049, %v935
      %v1051 = vadd.f32 %v1050, %v937
      %1052 = vadd.xlane.f32.xlu0 %v1051
      %v1053 = vpop.xlane.xlu0 %1052
      %v1054 = vadd.f32 %v939, %v941
      %v1055 = vadd.f32 %v1054, %v943
      %v1056 = vadd.f32 %v1055, %v945
      %1057 = vadd.xlane.f32.xlu0 %v1056
      %v1058 = vpop.xlane.xlu0 %1057
      %v1059 = vadd.f32 %v947, %v949
      %v1060 = vadd.f32 %v1059, %v951
      %v1061 = vadd.f32 %v1060, %v953
      %1062 = vadd.xlane.f32.xlu0 %v1061
      %v1063 = vpop.xlane.xlu0 %1062
      %v1064 = vadd.f32 %v955, %v957
      %v1065 = vadd.f32 %v1064, %v959
      %v1066 = vadd.f32 %v1065, %v961
      %1067 = vadd.xlane.f32.xlu0 %v1066
      %v1068 = vpop.xlane.xlu0 %1067
      %v1069 = vadd.f32 %v963, %v965
      %v1070 = vadd.f32 %v1069, %v967
      %v1071 = vadd.f32 %v1070, %v969
      %1072 = vadd.xlane.f32.xlu0 %v1071
      %v1073 = vpop.xlane.xlu0 %1072
      %v1074 = vadd.f32 %v971, %v973
      %v1075 = vadd.f32 %v1074, %v975
      %v1076 = vadd.f32 %v1075, %v977
      %1077 = vadd.xlane.f32.xlu0 %v1076
      %v1078 = vpop.xlane.xlu0 %1077
      %v1079 = vadd.f32 %v979, %v981
      %v1080 = vadd.f32 %v1079, %v983
      %v1081 = vadd.f32 %v1080, %v985
      %1082 = vadd.xlane.f32.xlu0 %v1081
      %v1083 = vpop.xlane.xlu0 %1082
      %v1084 = vadd.f32 %v987, %v989
      %v1085 = vadd.f32 %v1084, %v991
      %v1086 = vadd.f32 %v1085, %v993
      %1087 = vadd.xlane.f32.xlu0 %v1086
      %v1088 = vpop.xlane.xlu0 %1087
      %v1089 = vadd.f32 %v995, %v997
      %v1090 = vadd.f32 %v1089, %v999
      %v1091 = vadd.f32 %v1090, %v1001
      %1092 = vadd.xlane.f32.xlu0 %v1091
      %v1093 = vpop.xlane.xlu0 %1092
      %v1094 = vadd.f32 %v1003, %v1005
      %v1095 = vadd.f32 %v1094, %v1007
      %v1096 = vadd.f32 %v1095, %v1009
      %1097 = vadd.xlane.f32.xlu0 %v1096
      %v1098 = vpop.xlane.xlu0 %1097
      %v1099 = vadd.f32 %v1011, %v1013
      %v1100 = vadd.f32 %v1099, %v1015
      %v1101 = vadd.f32 %v1100, %v1017
      %1102 = vadd.xlane.f32.xlu0 %v1101
      %v1103 = vpop.xlane.xlu0 %1102
      %v1104 = vadd.f32 %v1019, %v1021
      %v1105 = vadd.f32 %v1104, %v1023
      %v1106 = vadd.f32 %v1105, %v1025
      %1107 = vadd.xlane.f32.xlu0 %v1106
      %v1108 = vpop.xlane.xlu0 %1107
      %v1109 = vadd.f32 %v1027, %v1029
      %v1110 = vadd.f32 %v1109, %v1031
      %v1111 = vadd.f32 %v1110, %v1033
      %1112 = vadd.xlane.f32.xlu0 %v1111
      %v1113 = vpop.xlane.xlu0 %1112
      %v1114 = vpack.c.bf16 %v915, %v907
      %v1115 = vpack.c.bf16 %v917, %v909
      %v1116 = vpack.c.bf16 %v919, %v911
      %v1117 = vpack.c.bf16 %v921, %v913
      %v1118 = vpack.c.bf16 %v931, %v923
      %v1119 = vpack.c.bf16 %v933, %v925
      %v1120 = vpack.c.bf16 %v935, %v927
      %v1121 = vpack.c.bf16 %v937, %v929
      %v1122 = vpack.c.bf16 %v947, %v939
      %v1123 = vpack.c.bf16 %v949, %v941
      %v1124 = vpack.c.bf16 %v951, %v943
      %v1125 = vpack.c.bf16 %v953, %v945
      %v1126 = vpack.c.bf16 %v963, %v955
      %v1127 = vpack.c.bf16 %v965, %v957
      %v1128 = vpack.c.bf16 %v967, %v959
      %v1129 = vpack.c.bf16 %v969, %v961
      %v1130 = vpack.c.bf16 %v979, %v971
      %v1131 = vpack.c.bf16 %v981, %v973
      %v1132 = vpack.c.bf16 %v983, %v975
      %v1133 = vpack.c.bf16 %v985, %v977
      %v1134 = vpack.c.bf16 %v995, %v987
      %v1135 = vpack.c.bf16 %v997, %v989
      %v1136 = vpack.c.bf16 %v999, %v991
      %v1137 = vpack.c.bf16 %v1001, %v993
      %v1138 = vpack.c.bf16 %v1011, %v1003
      %v1139 = vpack.c.bf16 %v1013, %v1005
      %v1140 = vpack.c.bf16 %v1015, %v1007
      %v1141 = vpack.c.bf16 %v1017, %v1009
      %v1142 = vpack.c.bf16 %v1027, %v1019
      %v1143 = vpack.c.bf16 %v1029, %v1021
      %v1144 = vpack.c.bf16 %v1031, %v1023
      %v1145 = vpack.c.bf16 %v1033, %v1025
      %v1146 = vld [vmem:[%s2] sm:$0xf]
      %v1147 = vld [vmem:[%s2 + $0x4] sm:$0xf]
      %v1148 = vld [vmem:[%s2 + $0x8] sm:$0xf]
      %v1149 = vld [vmem:[%s2 + $0xc] sm:$0xf]
      %v1150 = vld [vmem:[%s2 + $0x10] sm:$0xf]
      %v1151 = vld [vmem:[%s2 + $0x14] sm:$0xf]
      %v1152 = vld [vmem:[%s2 + $0x18] sm:$0xf]
      %v1153 = vld [vmem:[%s2 + $0x1c] sm:$0xf]
      %v1154 = vld [vmem:[%s2 + $0x20] sm:$0xf]
      %v1155 = vld [vmem:[%s2 + $0x24] sm:$0xf]
      %v1156 = vld [vmem:[%s2 + $0x28] sm:$0xf]
      %v1157 = vld [vmem:[%s2 + $0x2c] sm:$0xf]
      %v1158 = vld [vmem:[%s2 + $0x30] sm:$0xf]
      %v1159 = vld [vmem:[%s2 + $0x34] sm:$0xf]
      %v1160 = vld [vmem:[%s2 + $0x38] sm:$0xf]
      %v1161 = vld [vmem:[%s2 + $0x3c] sm:$0xf]
      %v1162 = vld [vmem:[%s2 + $0x40] sm:$0xf]
      %v1163 = vld [vmem:[%s2 + $0x44] sm:$0xf]
      %v1164 = vld [vmem:[%s2 + $0x48] sm:$0xf]
      %v1165 = vld [vmem:[%s2 + $0x4c] sm:$0xf]
      %v1166 = vld [vmem:[%s2 + $0x50] sm:$0xf]
      %v1167 = vld [vmem:[%s2 + $0x54] sm:$0xf]
      %v1168 = vld [vmem:[%s2 + $0x58] sm:$0xf]
      %v1169 = vld [vmem:[%s2 + $0x5c] sm:$0xf]
      %v1170 = vld [vmem:[%s2 + $0x60] sm:$0xf]
      %v1171 = vld [vmem:[%s2 + $0x64] sm:$0xf]
      %v1172 = vld [vmem:[%s2 + $0x68] sm:$0xf]
      %v1173 = vld [vmem:[%s2 + $0x6c] sm:$0xf]
      %v1174 = vld [vmem:[%s2 + $0x70] sm:$0xf]
      %v1175 = vld [vmem:[%s2 + $0x74] sm:$0xf]
      %v1176 = vld [vmem:[%s2 + $0x78] sm:$0xf]
      %v1177 = vld [vmem:[%s2 + $0x7c] sm:$0xf]
      %v1178 = vld [vmem:[%s2 + $0x80] sm:$0xf]
      %v1179 = vld [vmem:[%s2 + $0x84] sm:$0xf]
      %v1180 = vld [vmem:[%s2 + $0x88] sm:$0xf]
      %v1181 = vld [vmem:[%s2 + $0x8c] sm:$0xf]
      %v1182 = vld [vmem:[%s2 + $0x90] sm:$0xf]
      %v1183 = vld [vmem:[%s2 + $0x94] sm:$0xf]
      %v1184 = vld [vmem:[%s2 + $0x98] sm:$0xf]
      %v1185 = vld [vmem:[%s2 + $0x9c] sm:$0xf]
      %v1186 = vld [vmem:[%s2 + $0xa0] sm:$0xf]
      %v1187 = vld [vmem:[%s2 + $0xa4] sm:$0xf]
      %v1188 = vld [vmem:[%s2 + $0xa8] sm:$0xf]
      %v1189 = vld [vmem:[%s2 + $0xac] sm:$0xf]
      %v1190 = vld [vmem:[%s2 + $0xb0] sm:$0xf]
      %v1191 = vld [vmem:[%s2 + $0xb4] sm:$0xf]
      %v1192 = vld [vmem:[%s2 + $0xb8] sm:$0xf]
      %v1193 = vld [vmem:[%s2 + $0xbc] sm:$0xf]
      %v1194 = vld [vmem:[%s2 + $0xc0] sm:$0xf]
      %v1195 = vld [vmem:[%s2 + $0xc4] sm:$0xf]
      %v1196 = vld [vmem:[%s2 + $0xc8] sm:$0xf]
      %v1197 = vld [vmem:[%s2 + $0xcc] sm:$0xf]
      %v1198 = vld [vmem:[%s2 + $0xd0] sm:$0xf]
      %v1199 = vld [vmem:[%s2 + $0xd4] sm:$0xf]
      %v1200 = vld [vmem:[%s2 + $0xd8] sm:$0xf]
      %v1201 = vld [vmem:[%s2 + $0xdc] sm:$0xf]
      %v1202 = vld [vmem:[%s2 + $0xe0] sm:$0xf]
      %v1203 = vld [vmem:[%s2 + $0xe4] sm:$0xf]
      %v1204 = vld [vmem:[%s2 + $0xe8] sm:$0xf]
      %v1205 = vld [vmem:[%s2 + $0xec] sm:$0xf]
      %v1206 = vld [vmem:[%s2 + $0xf0] sm:$0xf]
      %v1207 = vld [vmem:[%s2 + $0xf4] sm:$0xf]
      %v1208 = vld [vmem:[%s2 + $0xf8] sm:$0xf]
      %v1209 = vld [vmem:[%s2 + $0xfc] sm:$0xf]
      %v1274 = vunpack.c.l.b16 %v1146
      %v1275 = vunpack.c.l.b16 %v1147
      %v1276 = vunpack.c.l.b16 %v1148
      %v1277 = vunpack.c.l.b16 %v1149
      %v1278 = vunpack.c.l.b16 %v1150
      %v1279 = vunpack.c.l.b16 %v1151
      %v1280 = vunpack.c.l.b16 %v1152
      %v1281 = vunpack.c.l.b16 %v1153
      %v1282 = vunpack.c.l.b16 %v1154
      %v1283 = vunpack.c.l.b16 %v1155
      %v1284 = vunpack.c.l.b16 %v1156
      %v1285 = vunpack.c.l.b16 %v1157
      %v1286 = vunpack.c.l.b16 %v1158
      %v1287 = vunpack.c.l.b16 %v1159
      %v1288 = vunpack.c.l.b16 %v1160
      %v1289 = vunpack.c.l.b16 %v1161
      %v1290 = vunpack.c.l.b16 %v1162
      %v1291 = vunpack.c.l.b16 %v1163
      %v1292 = vunpack.c.l.b16 %v1164
      %v1293 = vunpack.c.l.b16 %v1165
      %v1294 = vunpack.c.l.b16 %v1166
      %v1295 = vunpack.c.l.b16 %v1167
      %v1296 = vunpack.c.l.b16 %v1168
      %v1297 = vunpack.c.l.b16 %v1169
      %v1298 = vunpack.c.l.b16 %v1170
      %v1299 = vunpack.c.l.b16 %v1171
      %v1300 = vunpack.c.l.b16 %v1172
      %v1301 = vunpack.c.l.b16 %v1173
      %v1302 = vunpack.c.l.b16 %v1174
      %v1303 = vunpack.c.l.b16 %v1175
      %v1304 = vunpack.c.l.b16 %v1176
      %v1305 = vunpack.c.l.b16 %v1177
      %v1306 = vunpack.c.l.b16 %v1178
      %v1307 = vunpack.c.l.b16 %v1179
      %v1308 = vunpack.c.l.b16 %v1180
      %v1309 = vunpack.c.l.b16 %v1181
      %v1310 = vunpack.c.l.b16 %v1182
      %v1311 = vunpack.c.l.b16 %v1183
      %v1312 = vunpack.c.l.b16 %v1184
      %v1313 = vunpack.c.l.b16 %v1185
      %v1314 = vunpack.c.l.b16 %v1186
      %v1315 = vunpack.c.l.b16 %v1187
      %v1316 = vunpack.c.l.b16 %v1188
      %v1317 = vunpack.c.l.b16 %v1189
      %v1318 = vunpack.c.l.b16 %v1190
      %v1319 = vunpack.c.l.b16 %v1191
      %v1320 = vunpack.c.l.b16 %v1192
      %v1321 = vunpack.c.l.b16 %v1193
      %v1322 = vunpack.c.l.b16 %v1194
      %v1323 = vunpack.c.l.b16 %v1195
      %v1324 = vunpack.c.l.b16 %v1196
      %v1325 = vunpack.c.l.b16 %v1197
      %v1326 = vunpack.c.l.b16 %v1198
      %v1327 = vunpack.c.l.b16 %v1199
      %v1328 = vunpack.c.l.b16 %v1200
      %v1329 = vunpack.c.l.b16 %v1201
      %v1330 = vunpack.c.l.b16 %v1202
      %v1331 = vunpack.c.l.b16 %v1203
      %v1332 = vunpack.c.l.b16 %v1204
      %v1333 = vunpack.c.l.b16 %v1205
      %v1334 = vunpack.c.l.b16 %v1206
      %v1335 = vunpack.c.l.b16 %v1207
      %v1336 = vunpack.c.l.b16 %v1208
      %v1337 = vunpack.c.l.b16 %v1209
      %v1338 = vpack.c.b16 %v1275, %v1274
      %v1339 = vpack.c.b16 %v1277, %v1276
      %v1340 = vpack.c.b16 %v1279, %v1278
      %v1341 = vpack.c.b16 %v1281, %v1280
      %v1342 = vpack.c.b16 %v1283, %v1282
      %v1343 = vpack.c.b16 %v1285, %v1284
      %v1344 = vpack.c.b16 %v1287, %v1286
      %v1345 = vpack.c.b16 %v1289, %v1288
      %v1346 = vpack.c.b16 %v1291, %v1290
      %v1347 = vpack.c.b16 %v1293, %v1292
      %v1348 = vpack.c.b16 %v1295, %v1294
      %v1349 = vpack.c.b16 %v1297, %v1296
      %v1350 = vpack.c.b16 %v1299, %v1298
      %v1351 = vpack.c.b16 %v1301, %v1300
      %v1352 = vpack.c.b16 %v1303, %v1302
      %v1353 = vpack.c.b16 %v1305, %v1304
      %v1354 = vpack.c.b16 %v1307, %v1306
      %v1355 = vpack.c.b16 %v1309, %v1308
      %v1356 = vpack.c.b16 %v1311, %v1310
      %v1357 = vpack.c.b16 %v1313, %v1312
      %v1358 = vpack.c.b16 %v1315, %v1314
      %v1359 = vpack.c.b16 %v1317, %v1316
      %v1360 = vpack.c.b16 %v1319, %v1318
      %v1361 = vpack.c.b16 %v1321, %v1320
      %v1362 = vpack.c.b16 %v1323, %v1322
      %v1363 = vpack.c.b16 %v1325, %v1324
      %v1364 = vpack.c.b16 %v1327, %v1326
      %v1365 = vpack.c.b16 %v1329, %v1328
      %v1366 = vpack.c.b16 %v1331, %v1330
      %v1367 = vpack.c.b16 %v1333, %v1332
      %v1368 = vpack.c.b16 %v1335, %v1334
      %v1369 = vpack.c.b16 %v1337, %v1336
      %1402 = vmatpush.bf16.msra.mxu0 %v1345
      %1403 = vmatpush.bf16.msra.mxu0 %v1344
      %1404 = vmatpush.bf16.msra.mxu0 %v1343
      %1405 = vmatpush.bf16.msra.mxu0 %v1342
      %1406 = vmatpush.bf16.msra.mxu0 %v1341
      %1407 = vmatpush.bf16.msra.mxu0 %v1340
      %1408 = vmatpush.bf16.msra.mxu0 %v1339
      %1409 = vmatpush.bf16.msra.mxu0 %v1338
      %1410 = vmatmul.bf16.gmra.mxu0 %v1114
      %v1411 = vpop.f32.mrf.mxu0
      %v1412 = vadd.f32 0.0, %v1411
      %v1413 = vpop.f32.mrf.mxu0
      %v1414 = vadd.f32 0.0, %v1413
      %1415 = vmatmul.bf16.gmra.mxu0 %v1118
      %v1416 = vpop.f32.mrf.mxu0
      %v1417 = vadd.f32 0.0, %v1416
      %v1418 = vpop.f32.mrf.mxu0
      %v1419 = vadd.f32 0.0, %v1418
      %1420 = vmatmul.bf16.gmra.mxu0 %v1122
      %v1421 = vpop.f32.mrf.mxu0
      %v1422 = vadd.f32 0.0, %v1421
      %v1423 = vpop.f32.mrf.mxu0
      %v1424 = vadd.f32 0.0, %v1423
      %1425 = vmatmul.bf16.gmra.mxu0 %v1126
      %v1426 = vpop.f32.mrf.mxu0
      %v1427 = vadd.f32 0.0, %v1426
      %v1428 = vpop.f32.mrf.mxu0
      %v1429 = vadd.f32 0.0, %v1428
      %1430 = vmatmul.bf16.gmra.mxu0 %v1130
      %v1431 = vpop.f32.mrf.mxu0
      %v1432 = vadd.f32 0.0, %v1431
      %v1433 = vpop.f32.mrf.mxu0
      %v1434 = vadd.f32 0.0, %v1433
      %1435 = vmatmul.bf16.gmra.mxu0 %v1134
      %v1436 = vpop.f32.mrf.mxu0
      %v1437 = vadd.f32 0.0, %v1436
      %v1438 = vpop.f32.mrf.mxu0
      %v1439 = vadd.f32 0.0, %v1438
      %1440 = vmatmul.bf16.gmra.mxu0 %v1138
      %v1441 = vpop.f32.mrf.mxu0
      %v1442 = vadd.f32 0.0, %v1441
      %v1443 = vpop.f32.mrf.mxu0
      %v1444 = vadd.f32 0.0, %v1443
      %1445 = vmatmul.bf16.gmra.mxu0 %v1142
      %v1446 = vpop.f32.mrf.mxu0
      %v1447 = vadd.f32 0.0, %v1446
      %v1448 = vpop.f32.mrf.mxu0
      %v1449 = vadd.f32 0.0, %v1448
      %1450 = vdwg.mxu0
      %1451 = vmatpush.bf16.msra.mxu0 %v1353
      %1452 = vmatpush.bf16.msra.mxu0 %v1352
      %1453 = vmatpush.bf16.msra.mxu0 %v1351
      %1454 = vmatpush.bf16.msra.mxu0 %v1350
      %1455 = vmatpush.bf16.msra.mxu0 %v1349
      %1456 = vmatpush.bf16.msra.mxu0 %v1348
      %1457 = vmatpush.bf16.msra.mxu0 %v1347
      %1458 = vmatpush.bf16.msra.mxu0 %v1346
      %1459 = vmatmul.bf16.gmra.mxu0 %v1115
      %v1460 = vpop.f32.mrf.mxu0
      %v1461 = vadd.f32 %v1412, %v1460
      %v1462 = vpop.f32.mrf.mxu0
      %v1463 = vadd.f32 %v1414, %v1462
      %1464 = vmatmul.bf16.gmra.mxu0 %v1119
      %v1465 = vpop.f32.mrf.mxu0
      %v1466 = vadd.f32 %v1417, %v1465
      %v1467 = vpop.f32.mrf.mxu0
      %v1468 = vadd.f32 %v1419, %v1467
      %1469 = vmatmul.bf16.gmra.mxu0 %v1123
      %v1470 = vpop.f32.mrf.mxu0
      %v1471 = vadd.f32 %v1422, %v1470
      %v1472 = vpop.f32.mrf.mxu0
      %v1473 = vadd.f32 %v1424, %v1472
      %1474 = vmatmul.bf16.gmra.mxu0 %v1127
      %v1475 = vpop.f32.mrf.mxu0
      %v1476 = vadd.f32 %v1427, %v1475
      %v1477 = vpop.f32.mrf.mxu0
      %v1478 = vadd.f32 %v1429, %v1477
      %1479 = vmatmul.bf16.gmra.mxu0 %v1131
      %v1480 = vpop.f32.mrf.mxu0
      %v1481 = vadd.f32 %v1432, %v1480
      %v1482 = vpop.f32.mrf.mxu0
      %v1483 = vadd.f32 %v1434, %v1482
      %1484 = vmatmul.bf16.gmra.mxu0 %v1135
      %v1485 = vpop.f32.mrf.mxu0
      %v1486 = vadd.f32 %v1437, %v1485
      %v1487 = vpop.f32.mrf.mxu0
      %v1488 = vadd.f32 %v1439, %v1487
      %1489 = vmatmul.bf16.gmra.mxu0 %v1139
      %v1490 = vpop.f32.mrf.mxu0
      %v1491 = vadd.f32 %v1442, %v1490
      %v1492 = vpop.f32.mrf.mxu0
      %v1493 = vadd.f32 %v1444, %v1492
      %1494 = vmatmul.bf16.gmra.mxu0 %v1143
      %v1495 = vpop.f32.mrf.mxu0
      %v1496 = vadd.f32 %v1447, %v1495
      %v1497 = vpop.f32.mrf.mxu0
      %v1498 = vadd.f32 %v1449, %v1497
      %1499 = vdwg.mxu0
      %1500 = vmatpush.bf16.msra.mxu0 %v1361
      %1501 = vmatpush.bf16.msra.mxu0 %v1360
      %1502 = vmatpush.bf16.msra.mxu0 %v1359
      %1503 = vmatpush.bf16.msra.mxu0 %v1358
      %1504 = vmatpush.bf16.msra.mxu0 %v1357
      %1505 = vmatpush.bf16.msra.mxu0 %v1356
      %1506 = vmatpush.bf16.msra.mxu0 %v1355
      %1507 = vmatpush.bf16.msra.mxu0 %v1354
      %1508 = vmatmul.bf16.gmra.mxu0 %v1116
      %v1509 = vpop.f32.mrf.mxu0
      %v1510 = vadd.f32 %v1461, %v1509
      %v1511 = vpop.f32.mrf.mxu0
      %v1512 = vadd.f32 %v1463, %v1511
      %1513 = vmatmul.bf16.gmra.mxu0 %v1120
      %v1514 = vpop.f32.mrf.mxu0
      %v1515 = vadd.f32 %v1466, %v1514
      %v1516 = vpop.f32.mrf.mxu0
      %v1517 = vadd.f32 %v1468, %v1516
      %1518 = vmatmul.bf16.gmra.mxu0 %v1124
      %v1519 = vpop.f32.mrf.mxu0
      %v1520 = vadd.f32 %v1471, %v1519
      %v1521 = vpop.f32.mrf.mxu0
      %v1522 = vadd.f32 %v1473, %v1521
      %1523 = vmatmul.bf16.gmra.mxu0 %v1128
      %v1524 = vpop.f32.mrf.mxu0
      %v1525 = vadd.f32 %v1476, %v1524
      %v1526 = vpop.f32.mrf.mxu0
      %v1527 = vadd.f32 %v1478, %v1526
      %1528 = vmatmul.bf16.gmra.mxu0 %v1132
      %v1529 = vpop.f32.mrf.mxu0
      %v1530 = vadd.f32 %v1481, %v1529
      %v1531 = vpop.f32.mrf.mxu0
      %v1532 = vadd.f32 %v1483, %v1531
      %1533 = vmatmul.bf16.gmra.mxu0 %v1136
      %v1534 = vpop.f32.mrf.mxu0
      %v1535 = vadd.f32 %v1486, %v1534
      %v1536 = vpop.f32.mrf.mxu0
      %v1537 = vadd.f32 %v1488, %v1536
      %1538 = vmatmul.bf16.gmra.mxu0 %v1140
      %v1539 = vpop.f32.mrf.mxu0
      %v1540 = vadd.f32 %v1491, %v1539
      %v1541 = vpop.f32.mrf.mxu0
      %v1542 = vadd.f32 %v1493, %v1541
      %1543 = vmatmul.bf16.gmra.mxu0 %v1144
      %v1544 = vpop.f32.mrf.mxu0
      %v1545 = vadd.f32 %v1496, %v1544
      %v1546 = vpop.f32.mrf.mxu0
      %v1547 = vadd.f32 %v1498, %v1546
      %1548 = vdwg.mxu0
      %1549 = vmatpush.bf16.msra.mxu0 %v1369
      %1550 = vmatpush.bf16.msra.mxu0 %v1368
      %1551 = vmatpush.bf16.msra.mxu0 %v1367
      %1552 = vmatpush.bf16.msra.mxu0 %v1366
      %1553 = vmatpush.bf16.msra.mxu0 %v1365
      %1554 = vmatpush.bf16.msra.mxu0 %v1364
      %1555 = vmatpush.bf16.msra.mxu0 %v1363
      %1556 = vmatpush.bf16.msra.mxu0 %v1362
      %1557 = vmatmul.bf16.gmra.mxu0 %v1117
      %v1558 = vpop.f32.mrf.mxu0
      %v1559 = vadd.f32 %v1510, %v1558
      %v1560 = vpop.f32.mrf.mxu0
      %v1561 = vadd.f32 %v1512, %v1560
      %1562 = vmatmul.bf16.gmra.mxu0 %v1121
      %v1563 = vpop.f32.mrf.mxu0
      %v1564 = vadd.f32 %v1515, %v1563
      %v1565 = vpop.f32.mrf.mxu0
      %v1566 = vadd.f32 %v1517, %v1565
      %1567 = vmatmul.bf16.gmra.mxu0 %v1125
      %v1568 = vpop.f32.mrf.mxu0
      %v1569 = vadd.f32 %v1520, %v1568
      %v1570 = vpop.f32.mrf.mxu0
      %v1571 = vadd.f32 %v1522, %v1570
      %1572 = vmatmul.bf16.gmra.mxu0 %v1129
      %v1573 = vpop.f32.mrf.mxu0
      %v1574 = vadd.f32 %v1525, %v1573
      %v1575 = vpop.f32.mrf.mxu0
      %v1576 = vadd.f32 %v1527, %v1575
      %1577 = vmatmul.bf16.gmra.mxu0 %v1133
      %v1578 = vpop.f32.mrf.mxu0
      %v1579 = vadd.f32 %v1530, %v1578
      %v1580 = vpop.f32.mrf.mxu0
      %v1581 = vadd.f32 %v1532, %v1580
      %1582 = vmatmul.bf16.gmra.mxu0 %v1137
      %v1583 = vpop.f32.mrf.mxu0
      %v1584 = vadd.f32 %v1535, %v1583
      %v1585 = vpop.f32.mrf.mxu0
      %v1586 = vadd.f32 %v1537, %v1585
      %1587 = vmatmul.bf16.gmra.mxu0 %v1141
      %v1588 = vpop.f32.mrf.mxu0
      %v1589 = vadd.f32 %v1540, %v1588
      %v1590 = vpop.f32.mrf.mxu0
      %v1591 = vadd.f32 %v1542, %v1590
      %1592 = vmatmul.bf16.gmra.mxu0 %v1145
      %v1593 = vpop.f32.mrf.mxu0
      %v1594 = vadd.f32 %v1545, %v1593
      %v1595 = vpop.f32.mrf.mxu0
      %v1596 = vadd.f32 %v1547, %v1595
      %1597 = vdwg.mxu0
      %v1598 = vrcp.pop %v1038
      %v1599 = vrcp.pop %v1043
      %v1600 = vrcp.pop %v1048
      %v1601 = vrcp.pop %v1053
      %v1602 = vrcp.pop %v1058
      %v1603 = vrcp.pop %v1063
      %v1604 = vrcp.pop %v1068
      %v1605 = vrcp.pop %v1073
      %v1606 = vrcp.pop %v1078
      %v1607 = vrcp.pop %v1083
      %v1608 = vrcp.pop %v1088
      %v1609 = vrcp.pop %v1093
      %v1610 = vrcp.pop %v1098
      %v1611 = vrcp.pop %v1103
      %v1612 = vrcp.pop %v1108
      %v1613 = vrcp.pop %v1113
      %v1614 = vmul.f32 %v1559, %v1598
      %v1615 = vmul.f32 %v1561, %v1599
      %v1616 = vmul.f32 %v1564, %v1600
      %v1617 = vmul.f32 %v1566, %v1601
      %v1618 = vmul.f32 %v1569, %v1602
      %v1619 = vmul.f32 %v1571, %v1603
      %v1620 = vmul.f32 %v1574, %v1604
      %v1621 = vmul.f32 %v1576, %v1605
      %v1622 = vmul.f32 %v1579, %v1606
      %v1623 = vmul.f32 %v1581, %v1607
      %v1624 = vmul.f32 %v1584, %v1608
      %v1625 = vmul.f32 %v1586, %v1609
      %v1626 = vmul.f32 %v1589, %v1610
      %v1627 = vmul.f32 %v1591, %v1611
      %v1628 = vmul.f32 %v1594, %v1612
      %v1629 = vmul.f32 %v1596, %v1613
      %v1630 = vsel %vm541, %v1614, 0.0
      %1631 = vadd.xlane.f32.xlu0 %v1630
      %v1632 = vpop.xlane.xlu0 %1631
      %v1633 = vsel %vm541, %v1615, 0.0
      %1634 = vadd.xlane.f32.xlu0 %v1633
      %v1635 = vpop.xlane.xlu0 %1634
      %v1636 = vsel %vm541, %v1616, 0.0
      %1637 = vadd.xlane.f32.xlu0 %v1636
      %v1638 = vpop.xlane.xlu0 %1637
      %v1639 = vsel %vm541, %v1617, 0.0
      %1640 = vadd.xlane.f32.xlu0 %v1639
      %v1641 = vpop.xlane.xlu0 %1640
      %v1642 = vsel %vm541, %v1618, 0.0
      %1643 = vadd.xlane.f32.xlu0 %v1642
      %v1644 = vpop.xlane.xlu0 %1643
      %v1645 = vsel %vm541, %v1619, 0.0
      %1646 = vadd.xlane.f32.xlu0 %v1645
      %v1647 = vpop.xlane.xlu0 %1646
      %v1648 = vsel %vm541, %v1620, 0.0
      %1649 = vadd.xlane.f32.xlu0 %v1648
      %v1650 = vpop.xlane.xlu0 %1649
      %v1651 = vsel %vm541, %v1621, 0.0
      %1652 = vadd.xlane.f32.xlu0 %v1651
      %v1653 = vpop.xlane.xlu0 %1652
      %v1654 = vsel %vm541, %v1622, 0.0
      %1655 = vadd.xlane.f32.xlu0 %v1654
      %v1656 = vpop.xlane.xlu0 %1655
      %v1657 = vsel %vm541, %v1623, 0.0
      %1658 = vadd.xlane.f32.xlu0 %v1657
      %v1659 = vpop.xlane.xlu0 %1658
      %v1660 = vsel %vm541, %v1624, 0.0
      %1661 = vadd.xlane.f32.xlu0 %v1660
      %v1662 = vpop.xlane.xlu0 %1661
      %v1663 = vsel %vm541, %v1625, 0.0
      %1664 = vadd.xlane.f32.xlu0 %v1663
      %v1665 = vpop.xlane.xlu0 %1664
      %v1666 = vsel %vm541, %v1626, 0.0
      %1667 = vadd.xlane.f32.xlu0 %v1666
      %v1668 = vpop.xlane.xlu0 %1667
      %v1669 = vsel %vm541, %v1627, 0.0
      %1670 = vadd.xlane.f32.xlu0 %v1669
      %v1671 = vpop.xlane.xlu0 %1670
      %v1672 = vsel %vm541, %v1628, 0.0
      %1673 = vadd.xlane.f32.xlu0 %v1672
      %v1674 = vpop.xlane.xlu0 %1673
      %v1675 = vsel %vm541, %v1629, 0.0
      %1676 = vadd.xlane.f32.xlu0 %v1675
      %v1677 = vpop.xlane.xlu0 %1676
      %v1678 = vrcp.pop 32.0
      %v1679 = vmul.f32 32.0, %v1678
      %v1680 = vsub.f32 1.0, %v1679
      %v1681 = vmul.f32 %v1678, %v1680
      %v1682 = vadd.f32 %v1678, %v1681
      %vm1683 = vweird.f32 %v1678
      %v1684 = vsel %vm1683, %v1678, %v1682
      %v1685 = vmul.f32 %v1632, %v1684
      %v1686 = vmul.f32 %v1635, %v1684
      %v1687 = vmul.f32 %v1638, %v1684
      %v1688 = vmul.f32 %v1641, %v1684
      %v1689 = vmul.f32 %v1644, %v1684
      %v1690 = vmul.f32 %v1647, %v1684
      %v1691 = vmul.f32 %v1650, %v1684
      %v1692 = vmul.f32 %v1653, %v1684
      %v1693 = vmul.f32 %v1656, %v1684
      %v1694 = vmul.f32 %v1659, %v1684
      %v1695 = vmul.f32 %v1662, %v1684
      %v1696 = vmul.f32 %v1665, %v1684
      %v1697 = vmul.f32 %v1668, %v1684
      %v1698 = vmul.f32 %v1671, %v1684
      %v1699 = vmul.f32 %v1674, %v1684
      %v1700 = vmul.f32 %v1677, %v1684
      %v1701 = vsub.f32 %v1614, %v1685
      %v1702 = vsub.f32 %v1615, %v1686
      %v1703 = vsub.f32 %v1616, %v1687
      %v1704 = vsub.f32 %v1617, %v1688
      %v1705 = vsub.f32 %v1618, %v1689
      %v1706 = vsub.f32 %v1619, %v1690
      %v1707 = vsub.f32 %v1620, %v1691
      %v1708 = vsub.f32 %v1621, %v1692
      %v1709 = vsub.f32 %v1622, %v1693
      %v1710 = vsub.f32 %v1623, %v1694
      %v1711 = vsub.f32 %v1624, %v1695
      %v1712 = vsub.f32 %v1625, %v1696
      %v1713 = vsub.f32 %v1626, %v1697
      %v1714 = vsub.f32 %v1627, %v1698
      %v1715 = vsub.f32 %v1628, %v1699
      %v1716 = vsub.f32 %v1629, %v1700
      %v1717 = vmul.f32 %v1701, %v1701
      %v1718 = vmul.f32 %v1702, %v1702
      %v1719 = vmul.f32 %v1703, %v1703
      %v1720 = vmul.f32 %v1704, %v1704
      %v1721 = vmul.f32 %v1705, %v1705
      %v1722 = vmul.f32 %v1706, %v1706
      %v1723 = vmul.f32 %v1707, %v1707
      %v1724 = vmul.f32 %v1708, %v1708
      %v1725 = vmul.f32 %v1709, %v1709
      %v1726 = vmul.f32 %v1710, %v1710
      %v1727 = vmul.f32 %v1711, %v1711
      %v1728 = vmul.f32 %v1712, %v1712
      %v1729 = vmul.f32 %v1713, %v1713
      %v1730 = vmul.f32 %v1714, %v1714
      %v1731 = vmul.f32 %v1715, %v1715
      %v1732 = vmul.f32 %v1716, %v1716
      %v1733 = vsel %vm541, %v1717, 0.0
      %1734 = vadd.xlane.f32.xlu0 %v1733
      %v1735 = vpop.xlane.xlu0 %1734
      %v1736 = vsel %vm541, %v1718, 0.0
      %1737 = vadd.xlane.f32.xlu0 %v1736
      %v1738 = vpop.xlane.xlu0 %1737
      %v1739 = vsel %vm541, %v1719, 0.0
      %1740 = vadd.xlane.f32.xlu0 %v1739
      %v1741 = vpop.xlane.xlu0 %1740
      %v1742 = vsel %vm541, %v1720, 0.0
      %1743 = vadd.xlane.f32.xlu0 %v1742
      %v1744 = vpop.xlane.xlu0 %1743
      %v1745 = vsel %vm541, %v1721, 0.0
      %1746 = vadd.xlane.f32.xlu0 %v1745
      %v1747 = vpop.xlane.xlu0 %1746
      %v1748 = vsel %vm541, %v1722, 0.0
      %1749 = vadd.xlane.f32.xlu0 %v1748
      %v1750 = vpop.xlane.xlu0 %1749
      %v1751 = vsel %vm541, %v1723, 0.0
      %1752 = vadd.xlane.f32.xlu0 %v1751
      %v1753 = vpop.xlane.xlu0 %1752
      %v1754 = vsel %vm541, %v1724, 0.0
      %1755 = vadd.xlane.f32.xlu0 %v1754
      %v1756 = vpop.xlane.xlu0 %1755
      %v1757 = vsel %vm541, %v1725, 0.0
      %1758 = vadd.xlane.f32.xlu0 %v1757
      %v1759 = vpop.xlane.xlu0 %1758
      %v1760 = vsel %vm541, %v1726, 0.0
      %1761 = vadd.xlane.f32.xlu0 %v1760
      %v1762 = vpop.xlane.xlu0 %1761
      %v1763 = vsel %vm541, %v1727, 0.0
      %1764 = vadd.xlane.f32.xlu0 %v1763
      %v1765 = vpop.xlane.xlu0 %1764
      %v1766 = vsel %vm541, %v1728, 0.0
      %1767 = vadd.xlane.f32.xlu0 %v1766
      %v1768 = vpop.xlane.xlu0 %1767
      %v1769 = vsel %vm541, %v1729, 0.0
      %1770 = vadd.xlane.f32.xlu0 %v1769
      %v1771 = vpop.xlane.xlu0 %1770
      %v1772 = vsel %vm541, %v1730, 0.0
      %1773 = vadd.xlane.f32.xlu0 %v1772
      %v1774 = vpop.xlane.xlu0 %1773
      %v1775 = vsel %vm541, %v1731, 0.0
      %1776 = vadd.xlane.f32.xlu0 %v1775
      %v1777 = vpop.xlane.xlu0 %1776
      %v1778 = vsel %vm541, %v1732, 0.0
      %1779 = vadd.xlane.f32.xlu0 %v1778
      %v1780 = vpop.xlane.xlu0 %1779
      %v1781 = vmul.f32 %v1735, %v1684
      %v1782 = vmul.f32 %v1738, %v1684
      %v1783 = vmul.f32 %v1741, %v1684
      %v1784 = vmul.f32 %v1744, %v1684
      %v1785 = vmul.f32 %v1747, %v1684
      %v1786 = vmul.f32 %v1750, %v1684
      %v1787 = vmul.f32 %v1753, %v1684
      %v1788 = vmul.f32 %v1756, %v1684
      %v1789 = vmul.f32 %v1759, %v1684
      %v1790 = vmul.f32 %v1762, %v1684
      %v1791 = vmul.f32 %v1765, %v1684
      %v1792 = vmul.f32 %v1768, %v1684
      %v1793 = vmul.f32 %v1771, %v1684
      %v1794 = vmul.f32 %v1774, %v1684
      %v1795 = vmul.f32 %v1777, %v1684
      %v1796 = vmul.f32 %v1780, %v1684
      %v1797 = vadd.f32 %v1781, 1e-05
      %v1798 = vadd.f32 %v1782, 1e-05
      %v1799 = vadd.f32 %v1783, 1e-05
      %v1800 = vadd.f32 %v1784, 1e-05
      %v1801 = vadd.f32 %v1785, 1e-05
      %v1802 = vadd.f32 %v1786, 1e-05
      %v1803 = vadd.f32 %v1787, 1e-05
      %v1804 = vadd.f32 %v1788, 1e-05
      %v1805 = vadd.f32 %v1789, 1e-05
      %v1806 = vadd.f32 %v1790, 1e-05
      %v1807 = vadd.f32 %v1791, 1e-05
      %v1808 = vadd.f32 %v1792, 1e-05
      %v1809 = vadd.f32 %v1793, 1e-05
      %v1810 = vadd.f32 %v1794, 1e-05
      %v1811 = vadd.f32 %v1795, 1e-05
      %v1812 = vadd.f32 %v1796, 1e-05
      %v1813 = vrsqrt.pop %v1797
      %v1814 = vmul.f32 %v1813, %v1797
      %v1815 = vmul.f32 %v1814, %v1813
      %v1816 = vmul.f32 0.5, %v1815
      %v1817 = vsub.f32 1.5, %v1816
      %v1818 = vmul.f32 %v1813, %v1817
      %vm1819 = vweird.f32 %v1797
      %vm1820 = vweird.f32 %v1813
      %vm1821 = vmor %vm1819, %vm1820
      %v1822 = vsel %vm1821, %v1813, %v1818
      %v1823 = vrsqrt.pop %v1798
      %v1824 = vmul.f32 %v1823, %v1798
      %v1825 = vmul.f32 %v1824, %v1823
      %v1826 = vmul.f32 0.5, %v1825
      %v1827 = vsub.f32 1.5, %v1826
      %v1828 = vmul.f32 %v1823, %v1827
      %vm1829 = vweird.f32 %v1798
      %vm1830 = vweird.f32 %v1823
      %vm1831 = vmor %vm1829, %vm1830
      %v1832 = vsel %vm1831, %v1823, %v1828
      %v1833 = vrsqrt.pop %v1799
      %v1834 = vmul.f32 %v1833, %v1799
      %v1835 = vmul.f32 %v1834, %v1833
      %v1836 = vmul.f32 0.5, %v1835
      %v1837 = vsub.f32 1.5, %v1836
      %v1838 = vmul.f32 %v1833, %v1837
      %vm1839 = vweird.f32 %v1799
      %vm1840 = vweird.f32 %v1833
      %vm1841 = vmor %vm1839, %vm1840
      %v1842 = vsel %vm1841, %v1833, %v1838
      %v1843 = vrsqrt.pop %v1800
      %v1844 = vmul.f32 %v1843, %v1800
      %v1845 = vmul.f32 %v1844, %v1843
      %v1846 = vmul.f32 0.5, %v1845
      %v1847 = vsub.f32 1.5, %v1846
      %v1848 = vmul.f32 %v1843, %v1847
      %vm1849 = vweird.f32 %v1800
      %vm1850 = vweird.f32 %v1843
      %vm1851 = vmor %vm1849, %vm1850
      %v1852 = vsel %vm1851, %v1843, %v1848
      %v1853 = vrsqrt.pop %v1801
      %v1854 = vmul.f32 %v1853, %v1801
      %v1855 = vmul.f32 %v1854, %v1853
      %v1856 = vmul.f32 0.5, %v1855
      %v1857 = vsub.f32 1.5, %v1856
      %v1858 = vmul.f32 %v1853, %v1857
      %vm1859 = vweird.f32 %v1801
      %vm1860 = vweird.f32 %v1853
      %vm1861 = vmor %vm1859, %vm1860
      %v1862 = vsel %vm1861, %v1853, %v1858
      %v1863 = vrsqrt.pop %v1802
      %v1864 = vmul.f32 %v1863, %v1802
      %v1865 = vmul.f32 %v1864, %v1863
      %v1866 = vmul.f32 0.5, %v1865
      %v1867 = vsub.f32 1.5, %v1866
      %v1868 = vmul.f32 %v1863, %v1867
      %vm1869 = vweird.f32 %v1802
      %vm1870 = vweird.f32 %v1863
      %vm1871 = vmor %vm1869, %vm1870
      %v1872 = vsel %vm1871, %v1863, %v1868
      %v1873 = vrsqrt.pop %v1803
      %v1874 = vmul.f32 %v1873, %v1803
      %v1875 = vmul.f32 %v1874, %v1873
      %v1876 = vmul.f32 0.5, %v1875
      %v1877 = vsub.f32 1.5, %v1876
      %v1878 = vmul.f32 %v1873, %v1877
      %vm1879 = vweird.f32 %v1803
      %vm1880 = vweird.f32 %v1873
      %vm1881 = vmor %vm1879, %vm1880
      %v1882 = vsel %vm1881, %v1873, %v1878
      %v1883 = vrsqrt.pop %v1804
      %v1884 = vmul.f32 %v1883, %v1804
      %v1885 = vmul.f32 %v1884, %v1883
      %v1886 = vmul.f32 0.5, %v1885
      %v1887 = vsub.f32 1.5, %v1886
      %v1888 = vmul.f32 %v1883, %v1887
      %vm1889 = vweird.f32 %v1804
      %vm1890 = vweird.f32 %v1883
      %vm1891 = vmor %vm1889, %vm1890
      %v1892 = vsel %vm1891, %v1883, %v1888
      %v1893 = vrsqrt.pop %v1805
      %v1894 = vmul.f32 %v1893, %v1805
      %v1895 = vmul.f32 %v1894, %v1893
      %v1896 = vmul.f32 0.5, %v1895
      %v1897 = vsub.f32 1.5, %v1896
      %v1898 = vmul.f32 %v1893, %v1897
      %vm1899 = vweird.f32 %v1805
      %vm1900 = vweird.f32 %v1893
      %vm1901 = vmor %vm1899, %vm1900
      %v1902 = vsel %vm1901, %v1893, %v1898
      %v1903 = vrsqrt.pop %v1806
      %v1904 = vmul.f32 %v1903, %v1806
      %v1905 = vmul.f32 %v1904, %v1903
      %v1906 = vmul.f32 0.5, %v1905
      %v1907 = vsub.f32 1.5, %v1906
      %v1908 = vmul.f32 %v1903, %v1907
      %vm1909 = vweird.f32 %v1806
      %vm1910 = vweird.f32 %v1903
      %vm1911 = vmor %vm1909, %vm1910
      %v1912 = vsel %vm1911, %v1903, %v1908
      %v1913 = vrsqrt.pop %v1807
      %v1914 = vmul.f32 %v1913, %v1807
      %v1915 = vmul.f32 %v1914, %v1913
      %v1916 = vmul.f32 0.5, %v1915
      %v1917 = vsub.f32 1.5, %v1916
      %v1918 = vmul.f32 %v1913, %v1917
      %vm1919 = vweird.f32 %v1807
      %vm1920 = vweird.f32 %v1913
      %vm1921 = vmor %vm1919, %vm1920
      %v1922 = vsel %vm1921, %v1913, %v1918
      %v1923 = vrsqrt.pop %v1808
      %v1924 = vmul.f32 %v1923, %v1808
      %v1925 = vmul.f32 %v1924, %v1923
      %v1926 = vmul.f32 0.5, %v1925
      %v1927 = vsub.f32 1.5, %v1926
      %v1928 = vmul.f32 %v1923, %v1927
      %vm1929 = vweird.f32 %v1808
      %vm1930 = vweird.f32 %v1923
      %vm1931 = vmor %vm1929, %vm1930
      %v1932 = vsel %vm1931, %v1923, %v1928
      %v1933 = vrsqrt.pop %v1809
      %v1934 = vmul.f32 %v1933, %v1809
      %v1935 = vmul.f32 %v1934, %v1933
      %v1936 = vmul.f32 0.5, %v1935
      %v1937 = vsub.f32 1.5, %v1936
      %v1938 = vmul.f32 %v1933, %v1937
      %vm1939 = vweird.f32 %v1809
      %vm1940 = vweird.f32 %v1933
      %vm1941 = vmor %vm1939, %vm1940
      %v1942 = vsel %vm1941, %v1933, %v1938
      %v1943 = vrsqrt.pop %v1810
      %v1944 = vmul.f32 %v1943, %v1810
      %v1945 = vmul.f32 %v1944, %v1943
      %v1946 = vmul.f32 0.5, %v1945
      %v1947 = vsub.f32 1.5, %v1946
      %v1948 = vmul.f32 %v1943, %v1947
      %vm1949 = vweird.f32 %v1810
      %vm1950 = vweird.f32 %v1943
      %vm1951 = vmor %vm1949, %vm1950
      %v1952 = vsel %vm1951, %v1943, %v1948
      %v1953 = vrsqrt.pop %v1811
      %v1954 = vmul.f32 %v1953, %v1811
      %v1955 = vmul.f32 %v1954, %v1953
      %v1956 = vmul.f32 0.5, %v1955
      %v1957 = vsub.f32 1.5, %v1956
      %v1958 = vmul.f32 %v1953, %v1957
      %vm1959 = vweird.f32 %v1811
      %vm1960 = vweird.f32 %v1953
      %vm1961 = vmor %vm1959, %vm1960
      %v1962 = vsel %vm1961, %v1953, %v1958
      %v1963 = vrsqrt.pop %v1812
      %v1964 = vmul.f32 %v1963, %v1812
      %v1965 = vmul.f32 %v1964, %v1963
      %v1966 = vmul.f32 0.5, %v1965
      %v1967 = vsub.f32 1.5, %v1966
      %v1968 = vmul.f32 %v1963, %v1967
      %vm1969 = vweird.f32 %v1812
      %vm1970 = vweird.f32 %v1963
      %vm1971 = vmor %vm1969, %vm1970
      %v1972 = vsel %vm1971, %v1963, %v1968
      %v1973 = vmul.f32 %v1701, %v1822
      %v1974 = vmul.f32 %v1702, %v1832
      %v1975 = vmul.f32 %v1703, %v1842
      %v1976 = vmul.f32 %v1704, %v1852
      %v1977 = vmul.f32 %v1705, %v1862
      %v1978 = vmul.f32 %v1706, %v1872
      %v1979 = vmul.f32 %v1707, %v1882
      %v1980 = vmul.f32 %v1708, %v1892
      %v1981 = vmul.f32 %v1709, %v1902
      %v1982 = vmul.f32 %v1710, %v1912
      %v1983 = vmul.f32 %v1711, %v1922
      %v1984 = vmul.f32 %v1712, %v1932
      %v1985 = vmul.f32 %v1713, %v1942
      %v1986 = vmul.f32 %v1714, %v1952
      %v1987 = vmul.f32 %v1715, %v1962
      %v1988 = vmul.f32 %v1716, %v1972
      %v1989 = vld [vmem:[%s3] sm:$0x1]
      %v1991 = vperm.slane %v1989, 0
      %v1993 = vmul.f32 %v1973, %v1991
      %v1994 = vmul.f32 %v1974, %v1991
      %v1995 = vmul.f32 %v1975, %v1991
      %v1996 = vmul.f32 %v1976, %v1991
      %v1997 = vmul.f32 %v1977, %v1991
      %v1998 = vmul.f32 %v1978, %v1991
      %v1999 = vmul.f32 %v1979, %v1991
      %v2000 = vmul.f32 %v1980, %v1991
      %v2001 = vmul.f32 %v1981, %v1991
      %v2002 = vmul.f32 %v1982, %v1991
      %v2003 = vmul.f32 %v1983, %v1991
      %v2004 = vmul.f32 %v1984, %v1991
      %v2005 = vmul.f32 %v1985, %v1991
      %v2006 = vmul.f32 %v1986, %v1991
      %v2007 = vmul.f32 %v1987, %v1991
      %v2008 = vmul.f32 %v1988, %v1991
      %v2009 = vld [vmem:[%s4] sm:$0x1]
      %v2011 = vperm.slane %v2009, 0
      %v2013 = vadd.f32 %v1993, %v2011
      %v2014 = vadd.f32 %v1994, %v2011
      %v2015 = vadd.f32 %v1995, %v2011
      %v2016 = vadd.f32 %v1996, %v2011
      %v2017 = vadd.f32 %v1997, %v2011
      %v2018 = vadd.f32 %v1998, %v2011
      %v2019 = vadd.f32 %v1999, %v2011
      %v2020 = vadd.f32 %v2000, %v2011
      %v2021 = vadd.f32 %v2001, %v2011
      %v2022 = vadd.f32 %v2002, %v2011
      %v2023 = vadd.f32 %v2003, %v2011
      %v2024 = vadd.f32 %v2004, %v2011
      %v2025 = vadd.f32 %v2005, %v2011
      %v2026 = vadd.f32 %v2006, %v2011
      %v2027 = vadd.f32 %v2007, %v2011
      %v2028 = vadd.f32 %v2008, %v2011
      %v2029 = vmul.f32 %v2013, 0.5
      %v2030 = vmul.f32 %v2014, 0.5
      %v2031 = vmul.f32 %v2015, 0.5
      %v2032 = vmul.f32 %v2016, 0.5
      %v2033 = vmul.f32 %v2017, 0.5
      %v2034 = vmul.f32 %v2018, 0.5
      %v2035 = vmul.f32 %v2019, 0.5
      %v2036 = vmul.f32 %v2020, 0.5
      %v2037 = vmul.f32 %v2021, 0.5
      %v2038 = vmul.f32 %v2022, 0.5
      %v2039 = vmul.f32 %v2023, 0.5
      %v2040 = vmul.f32 %v2024, 0.5
      %v2041 = vmul.f32 %v2025, 0.5
      %v2042 = vmul.f32 %v2026, 0.5
      %v2043 = vmul.f32 %v2027, 0.5
      %v2044 = vmul.f32 %v2028, 0.5
      %v2045 = vrcp.pop 1.4142135
      %v2046 = vmul.f32 1.4142135, %v2045
      %v2047 = vsub.f32 1.0, %v2046
      %v2048 = vmul.f32 %v2045, %v2047
      %v2049 = vadd.f32 %v2045, %v2048
      %vm2050 = vweird.f32 %v2045
      %v2051 = vsel %vm2050, %v2045, %v2049
      %v2052 = vmul.f32 %v2013, %v2051
      %v2053 = vmul.f32 %v2014, %v2051
      %v2054 = vmul.f32 %v2015, %v2051
      %v2055 = vmul.f32 %v2016, %v2051
      %v2056 = vmul.f32 %v2017, %v2051
      %v2057 = vmul.f32 %v2018, %v2051
      %v2058 = vmul.f32 %v2019, %v2051
      %v2059 = vmul.f32 %v2020, %v2051
      %v2060 = vmul.f32 %v2021, %v2051
      %v2061 = vmul.f32 %v2022, %v2051
      %v2062 = vmul.f32 %v2023, %v2051
      %v2063 = vmul.f32 %v2024, %v2051
      %v2064 = vmul.f32 %v2025, %v2051
      %v2065 = vmul.f32 %v2026, %v2051
      %v2066 = vmul.f32 %v2027, %v2051
      %v2067 = vmul.f32 %v2028, %v2051
      %v2068 = vmul.f32 %v2052, %v2052
      %v2069 = vmin.f32 16.0, %v2068
      %v2070 = vmul.f32 %v2069, 2.1237322e-06
      %v2071 = vadd.f32 %v2070, 0.00028619796
      %v2072 = vmul.f32 %v2069, %v2071
      %v2073 = vadd.f32 %v2072, 0.0036580483
      %v2074 = vmul.f32 %v2069, %v2073
      %v2075 = vadd.f32 %v2074, 0.05243302
      %v2076 = vmul.f32 %v2069, %v2075
      %v2077 = vadd.f32 %v2076, 0.18741608
      %v2078 = vmul.f32 %v2069, %v2077
      %v2079 = vadd.f32 %v2078, 1.1283791
      %v2080 = vmul.f32 %v2052, %v2079
      %v2081 = vmul.f32 %v2069, 3.8918573e-05
      %v2082 = vadd.f32 %v2081, 0.001143296
      %v2083 = vmul.f32 %v2069, %v2082
      %v2084 = vadd.f32 %v2083, 0.014752088
      %v2085 = vmul.f32 %v2069, %v2084
      %v2086 = vadd.f32 %v2085, 0.112945676
      %v2087 = vmul.f32 %v2069, %v2086
      %v2088 = vadd.f32 %v2087, 0.4994258
      %v2089 = vmul.f32 %v2069, %v2088
      %v2090 = vadd.f32 %v2089, 1.0
      %v2091 = vrcp.pop %v2090
      %v2092 = vmul.f32 %v2090, %v2091
      %v2093 = vsub.f32 1.0, %v2092
      %v2094 = vmul.f32 %v2091, %v2093
      %v2095 = vadd.f32 %v2091, %v2094
      %vm2096 = vweird.f32 %v2090
      %vm2097 = vweird.f32 %v2091
      %vm2098 = vmor %vm2096, %vm2097
      %v2099 = vsel %vm2098, %v2091, %v2095
      %v2100 = vand.u32 2147483647, %v2090
      %vm2101 = vcmp.eq.f32.partialorder %v2100, 8.507059e+37
      %v2102 = vand.u32 %v2090, 2147483648
      %v2103 = vor.u32 1.1754944e-38, %v2102
      %v2104 = vsel %vm2101, %v2103, %v2099
      %v2105 = vmul.f32 %v2080, %v2104
      %v2106 = vmin.f32 %v2105, 1.0
      %v2107 = vmax.f32 %v2106, -1.0
      %v2108 = vmul.f32 %v2053, %v2053
      %v2109 = vmin.f32 16.0, %v2108
      %v2110 = vmul.f32 %v2109, 2.1237322e-06
      %v2111 = vadd.f32 %v2110, 0.00028619796
      %v2112 = vmul.f32 %v2109, %v2111
      %v2113 = vadd.f32 %v2112, 0.0036580483
      %v2114 = vmul.f32 %v2109, %v2113
      %v2115 = vadd.f32 %v2114, 0.05243302
      %v2116 = vmul.f32 %v2109, %v2115
      %v2117 = vadd.f32 %v2116, 0.18741608
      %v2118 = vmul.f32 %v2109, %v2117
      %v2119 = vadd.f32 %v2118, 1.1283791
      %v2120 = vmul.f32 %v2053, %v2119
      %v2121 = vmul.f32 %v2109, 3.8918573e-05
      %v2122 = vadd.f32 %v2121, 0.001143296
      %v2123 = vmul.f32 %v2109, %v2122
      %v2124 = vadd.f32 %v2123, 0.014752088
      %v2125 = vmul.f32 %v2109, %v2124
      %v2126 = vadd.f32 %v2125, 0.112945676
      %v2127 = vmul.f32 %v2109, %v2126
      %v2128 = vadd.f32 %v2127, 0.4994258
      %v2129 = vmul.f32 %v2109, %v2128
      %v2130 = vadd.f32 %v2129, 1.0
      %v2131 = vrcp.pop %v2130
      %v2132 = vmul.f32 %v2130, %v2131
      %v2133 = vsub.f32 1.0, %v2132
      %v2134 = vmul.f32 %v2131, %v2133
      %v2135 = vadd.f32 %v2131, %v2134
      %vm2136 = vweird.f32 %v2130
      %vm2137 = vweird.f32 %v2131
      %vm2138 = vmor %vm2136, %vm2137
      %v2139 = vsel %vm2138, %v2131, %v2135
      %v2140 = vand.u32 2147483647, %v2130
      %vm2141 = vcmp.eq.f32.partialorder %v2140, 8.507059e+37
      %v2142 = vand.u32 %v2130, 2147483648
      %v2143 = vor.u32 1.1754944e-38, %v2142
      %v2144 = vsel %vm2141, %v2143, %v2139
      %v2145 = vmul.f32 %v2120, %v2144
      %v2146 = vmin.f32 %v2145, 1.0
      %v2147 = vmax.f32 %v2146, -1.0
      %v2148 = vmul.f32 %v2054, %v2054
      %v2149 = vmin.f32 16.0, %v2148
      %v2150 = vmul.f32 %v2149, 2.1237322e-06
      %v2151 = vadd.f32 %v2150, 0.00028619796
      %v2152 = vmul.f32 %v2149, %v2151
      %v2153 = vadd.f32 %v2152, 0.0036580483
      %v2154 = vmul.f32 %v2149, %v2153
      %v2155 = vadd.f32 %v2154, 0.05243302
      %v2156 = vmul.f32 %v2149, %v2155
      %v2157 = vadd.f32 %v2156, 0.18741608
      %v2158 = vmul.f32 %v2149, %v2157
      %v2159 = vadd.f32 %v2158, 1.1283791
      %v2160 = vmul.f32 %v2054, %v2159
      %v2161 = vmul.f32 %v2149, 3.8918573e-05
      %v2162 = vadd.f32 %v2161, 0.001143296
      %v2163 = vmul.f32 %v2149, %v2162
      %v2164 = vadd.f32 %v2163, 0.014752088
      %v2165 = vmul.f32 %v2149, %v2164
      %v2166 = vadd.f32 %v2165, 0.112945676
      %v2167 = vmul.f32 %v2149, %v2166
      %v2168 = vadd.f32 %v2167, 0.4994258
      %v2169 = vmul.f32 %v2149, %v2168
      %v2170 = vadd.f32 %v2169, 1.0
      %v2171 = vrcp.pop %v2170
      %v2172 = vmul.f32 %v2170, %v2171
      %v2173 = vsub.f32 1.0, %v2172
      %v2174 = vmul.f32 %v2171, %v2173
      %v2175 = vadd.f32 %v2171, %v2174
      %vm2176 = vweird.f32 %v2170
      %vm2177 = vweird.f32 %v2171
      %vm2178 = vmor %vm2176, %vm2177
      %v2179 = vsel %vm2178, %v2171, %v2175
      %v2180 = vand.u32 2147483647, %v2170
      %vm2181 = vcmp.eq.f32.partialorder %v2180, 8.507059e+37
      %v2182 = vand.u32 %v2170, 2147483648
      %v2183 = vor.u32 1.1754944e-38, %v2182
      %v2184 = vsel %vm2181, %v2183, %v2179
      %v2185 = vmul.f32 %v2160, %v2184
      %v2186 = vmin.f32 %v2185, 1.0
      %v2187 = vmax.f32 %v2186, -1.0
      %v2188 = vmul.f32 %v2055, %v2055
      %v2189 = vmin.f32 16.0, %v2188
      %v2190 = vmul.f32 %v2189, 2.1237322e-06
      %v2191 = vadd.f32 %v2190, 0.00028619796
      %v2192 = vmul.f32 %v2189, %v2191
      %v2193 = vadd.f32 %v2192, 0.0036580483
      %v2194 = vmul.f32 %v2189, %v2193
      %v2195 = vadd.f32 %v2194, 0.05243302
      %v2196 = vmul.f32 %v2189, %v2195
      %v2197 = vadd.f32 %v2196, 0.18741608
      %v2198 = vmul.f32 %v2189, %v2197
      %v2199 = vadd.f32 %v2198, 1.1283791
      %v2200 = vmul.f32 %v2055, %v2199
      %v2201 = vmul.f32 %v2189, 3.8918573e-05
      %v2202 = vadd.f32 %v2201, 0.001143296
      %v2203 = vmul.f32 %v2189, %v2202
      %v2204 = vadd.f32 %v2203, 0.014752088
      %v2205 = vmul.f32 %v2189, %v2204
      %v2206 = vadd.f32 %v2205, 0.112945676
      %v2207 = vmul.f32 %v2189, %v2206
      %v2208 = vadd.f32 %v2207, 0.4994258
      %v2209 = vmul.f32 %v2189, %v2208
      %v2210 = vadd.f32 %v2209, 1.0
      %v2211 = vrcp.pop %v2210
      %v2212 = vmul.f32 %v2210, %v2211
      %v2213 = vsub.f32 1.0, %v2212
      %v2214 = vmul.f32 %v2211, %v2213
      %v2215 = vadd.f32 %v2211, %v2214
      %vm2216 = vweird.f32 %v2210
      %vm2217 = vweird.f32 %v2211
      %vm2218 = vmor %vm2216, %vm2217
      %v2219 = vsel %vm2218, %v2211, %v2215
      %v2220 = vand.u32 2147483647, %v2210
      %vm2221 = vcmp.eq.f32.partialorder %v2220, 8.507059e+37
      %v2222 = vand.u32 %v2210, 2147483648
      %v2223 = vor.u32 1.1754944e-38, %v2222
      %v2224 = vsel %vm2221, %v2223, %v2219
      %v2225 = vmul.f32 %v2200, %v2224
      %v2226 = vmin.f32 %v2225, 1.0
      %v2227 = vmax.f32 %v2226, -1.0
      %v2228 = vmul.f32 %v2056, %v2056
      %v2229 = vmin.f32 16.0, %v2228
      %v2230 = vmul.f32 %v2229, 2.1237322e-06
      %v2231 = vadd.f32 %v2230, 0.00028619796
      %v2232 = vmul.f32 %v2229, %v2231
      %v2233 = vadd.f32 %v2232, 0.0036580483
      %v2234 = vmul.f32 %v2229, %v2233
      %v2235 = vadd.f32 %v2234, 0.05243302
      %v2236 = vmul.f32 %v2229, %v2235
      %v2237 = vadd.f32 %v2236, 0.18741608
      %v2238 = vmul.f32 %v2229, %v2237
      %v2239 = vadd.f32 %v2238, 1.1283791
      %v2240 = vmul.f32 %v2056, %v2239
      %v2241 = vmul.f32 %v2229, 3.8918573e-05
      %v2242 = vadd.f32 %v2241, 0.001143296
      %v2243 = vmul.f32 %v2229, %v2242
      %v2244 = vadd.f32 %v2243, 0.014752088
      %v2245 = vmul.f32 %v2229, %v2244
      %v2246 = vadd.f32 %v2245, 0.112945676
      %v2247 = vmul.f32 %v2229, %v2246
      %v2248 = vadd.f32 %v2247, 0.4994258
      %v2249 = vmul.f32 %v2229, %v2248
      %v2250 = vadd.f32 %v2249, 1.0
      %v2251 = vrcp.pop %v2250
      %v2252 = vmul.f32 %v2250, %v2251
      %v2253 = vsub.f32 1.0, %v2252
      %v2254 = vmul.f32 %v2251, %v2253
      %v2255 = vadd.f32 %v2251, %v2254
      %vm2256 = vweird.f32 %v2250
      %vm2257 = vweird.f32 %v2251
      %vm2258 = vmor %vm2256, %vm2257
      %v2259 = vsel %vm2258, %v2251, %v2255
      %v2260 = vand.u32 2147483647, %v2250
      %vm2261 = vcmp.eq.f32.partialorder %v2260, 8.507059e+37
      %v2262 = vand.u32 %v2250, 2147483648
      %v2263 = vor.u32 1.1754944e-38, %v2262
      %v2264 = vsel %vm2261, %v2263, %v2259
      %v2265 = vmul.f32 %v2240, %v2264
      %v2266 = vmin.f32 %v2265, 1.0
      %v2267 = vmax.f32 %v2266, -1.0
      %v2268 = vmul.f32 %v2057, %v2057
      %v2269 = vmin.f32 16.0, %v2268
      %v2270 = vmul.f32 %v2269, 2.1237322e-06
      %v2271 = vadd.f32 %v2270, 0.00028619796
      %v2272 = vmul.f32 %v2269, %v2271
      %v2273 = vadd.f32 %v2272, 0.0036580483
      %v2274 = vmul.f32 %v2269, %v2273
      %v2275 = vadd.f32 %v2274, 0.05243302
      %v2276 = vmul.f32 %v2269, %v2275
      %v2277 = vadd.f32 %v2276, 0.18741608
      %v2278 = vmul.f32 %v2269, %v2277
      %v2279 = vadd.f32 %v2278, 1.1283791
      %v2280 = vmul.f32 %v2057, %v2279
      %v2281 = vmul.f32 %v2269, 3.8918573e-05
      %v2282 = vadd.f32 %v2281, 0.001143296
      %v2283 = vmul.f32 %v2269, %v2282
      %v2284 = vadd.f32 %v2283, 0.014752088
      %v2285 = vmul.f32 %v2269, %v2284
      %v2286 = vadd.f32 %v2285, 0.112945676
      %v2287 = vmul.f32 %v2269, %v2286
      %v2288 = vadd.f32 %v2287, 0.4994258
      %v2289 = vmul.f32 %v2269, %v2288
      %v2290 = vadd.f32 %v2289, 1.0
      %v2291 = vrcp.pop %v2290
      %v2292 = vmul.f32 %v2290, %v2291
      %v2293 = vsub.f32 1.0, %v2292
      %v2294 = vmul.f32 %v2291, %v2293
      %v2295 = vadd.f32 %v2291, %v2294
      %vm2296 = vweird.f32 %v2290
      %vm2297 = vweird.f32 %v2291
      %vm2298 = vmor %vm2296, %vm2297
      %v2299 = vsel %vm2298, %v2291, %v2295
      %v2300 = vand.u32 2147483647, %v2290
      %vm2301 = vcmp.eq.f32.partialorder %v2300, 8.507059e+37
      %v2302 = vand.u32 %v2290, 2147483648
      %v2303 = vor.u32 1.1754944e-38, %v2302
      %v2304 = vsel %vm2301, %v2303, %v2299
      %v2305 = vmul.f32 %v2280, %v2304
      %v2306 = vmin.f32 %v2305, 1.0
      %v2307 = vmax.f32 %v2306, -1.0
      %v2308 = vmul.f32 %v2058, %v2058
      %v2309 = vmin.f32 16.0, %v2308
      %v2310 = vmul.f32 %v2309, 2.1237322e-06
      %v2311 = vadd.f32 %v2310, 0.00028619796
      %v2312 = vmul.f32 %v2309, %v2311
      %v2313 = vadd.f32 %v2312, 0.0036580483
      %v2314 = vmul.f32 %v2309, %v2313
      %v2315 = vadd.f32 %v2314, 0.05243302
      %v2316 = vmul.f32 %v2309, %v2315
      %v2317 = vadd.f32 %v2316, 0.18741608
      %v2318 = vmul.f32 %v2309, %v2317
      %v2319 = vadd.f32 %v2318, 1.1283791
      %v2320 = vmul.f32 %v2058, %v2319
      %v2321 = vmul.f32 %v2309, 3.8918573e-05
      %v2322 = vadd.f32 %v2321, 0.001143296
      %v2323 = vmul.f32 %v2309, %v2322
      %v2324 = vadd.f32 %v2323, 0.014752088
      %v2325 = vmul.f32 %v2309, %v2324
      %v2326 = vadd.f32 %v2325, 0.112945676
      %v2327 = vmul.f32 %v2309, %v2326
      %v2328 = vadd.f32 %v2327, 0.4994258
      %v2329 = vmul.f32 %v2309, %v2328
      %v2330 = vadd.f32 %v2329, 1.0
      %v2331 = vrcp.pop %v2330
      %v2332 = vmul.f32 %v2330, %v2331
      %v2333 = vsub.f32 1.0, %v2332
      %v2334 = vmul.f32 %v2331, %v2333
      %v2335 = vadd.f32 %v2331, %v2334
      %vm2336 = vweird.f32 %v2330
      %vm2337 = vweird.f32 %v2331
      %vm2338 = vmor %vm2336, %vm2337
      %v2339 = vsel %vm2338, %v2331, %v2335
      %v2340 = vand.u32 2147483647, %v2330
      %vm2341 = vcmp.eq.f32.partialorder %v2340, 8.507059e+37
      %v2342 = vand.u32 %v2330, 2147483648
      %v2343 = vor.u32 1.1754944e-38, %v2342
      %v2344 = vsel %vm2341, %v2343, %v2339
      %v2345 = vmul.f32 %v2320, %v2344
      %v2346 = vmin.f32 %v2345, 1.0
      %v2347 = vmax.f32 %v2346, -1.0
      %v2348 = vmul.f32 %v2059, %v2059
      %v2349 = vmin.f32 16.0, %v2348
      %v2350 = vmul.f32 %v2349, 2.1237322e-06
      %v2351 = vadd.f32 %v2350, 0.00028619796
      %v2352 = vmul.f32 %v2349, %v2351
      %v2353 = vadd.f32 %v2352, 0.0036580483
      %v2354 = vmul.f32 %v2349, %v2353
      %v2355 = vadd.f32 %v2354, 0.05243302
      %v2356 = vmul.f32 %v2349, %v2355
      %v2357 = vadd.f32 %v2356, 0.18741608
      %v2358 = vmul.f32 %v2349, %v2357
      %v2359 = vadd.f32 %v2358, 1.1283791
      %v2360 = vmul.f32 %v2059, %v2359
      %v2361 = vmul.f32 %v2349, 3.8918573e-05
      %v2362 = vadd.f32 %v2361, 0.001143296
      %v2363 = vmul.f32 %v2349, %v2362
      %v2364 = vadd.f32 %v2363, 0.014752088
      %v2365 = vmul.f32 %v2349, %v2364
      %v2366 = vadd.f32 %v2365, 0.112945676
      %v2367 = vmul.f32 %v2349, %v2366
      %v2368 = vadd.f32 %v2367, 0.4994258
      %v2369 = vmul.f32 %v2349, %v2368
      %v2370 = vadd.f32 %v2369, 1.0
      %v2371 = vrcp.pop %v2370
      %v2372 = vmul.f32 %v2370, %v2371
      %v2373 = vsub.f32 1.0, %v2372
      %v2374 = vmul.f32 %v2371, %v2373
      %v2375 = vadd.f32 %v2371, %v2374
      %vm2376 = vweird.f32 %v2370
      %vm2377 = vweird.f32 %v2371
      %vm2378 = vmor %vm2376, %vm2377
      %v2379 = vsel %vm2378, %v2371, %v2375
      %v2380 = vand.u32 2147483647, %v2370
      %vm2381 = vcmp.eq.f32.partialorder %v2380, 8.507059e+37
      %v2382 = vand.u32 %v2370, 2147483648
      %v2383 = vor.u32 1.1754944e-38, %v2382
      %v2384 = vsel %vm2381, %v2383, %v2379
      %v2385 = vmul.f32 %v2360, %v2384
      %v2386 = vmin.f32 %v2385, 1.0
      %v2387 = vmax.f32 %v2386, -1.0
      %v2388 = vmul.f32 %v2060, %v2060
      %v2389 = vmin.f32 16.0, %v2388
      %v2390 = vmul.f32 %v2389, 2.1237322e-06
      %v2391 = vadd.f32 %v2390, 0.00028619796
      %v2392 = vmul.f32 %v2389, %v2391
      %v2393 = vadd.f32 %v2392, 0.0036580483
      %v2394 = vmul.f32 %v2389, %v2393
      %v2395 = vadd.f32 %v2394, 0.05243302
      %v2396 = vmul.f32 %v2389, %v2395
      %v2397 = vadd.f32 %v2396, 0.18741608
      %v2398 = vmul.f32 %v2389, %v2397
      %v2399 = vadd.f32 %v2398, 1.1283791
      %v2400 = vmul.f32 %v2060, %v2399
      %v2401 = vmul.f32 %v2389, 3.8918573e-05
      %v2402 = vadd.f32 %v2401, 0.001143296
      %v2403 = vmul.f32 %v2389, %v2402
      %v2404 = vadd.f32 %v2403, 0.014752088
      %v2405 = vmul.f32 %v2389, %v2404
      %v2406 = vadd.f32 %v2405, 0.112945676
      %v2407 = vmul.f32 %v2389, %v2406
      %v2408 = vadd.f32 %v2407, 0.4994258
      %v2409 = vmul.f32 %v2389, %v2408
      %v2410 = vadd.f32 %v2409, 1.0
      %v2411 = vrcp.pop %v2410
      %v2412 = vmul.f32 %v2410, %v2411
      %v2413 = vsub.f32 1.0, %v2412
      %v2414 = vmul.f32 %v2411, %v2413
      %v2415 = vadd.f32 %v2411, %v2414
      %vm2416 = vweird.f32 %v2410
      %vm2417 = vweird.f32 %v2411
      %vm2418 = vmor %vm2416, %vm2417
      %v2419 = vsel %vm2418, %v2411, %v2415
      %v2420 = vand.u32 2147483647, %v2410
      %vm2421 = vcmp.eq.f32.partialorder %v2420, 8.507059e+37
      %v2422 = vand.u32 %v2410, 2147483648
      %v2423 = vor.u32 1.1754944e-38, %v2422
      %v2424 = vsel %vm2421, %v2423, %v2419
      %v2425 = vmul.f32 %v2400, %v2424
      %v2426 = vmin.f32 %v2425, 1.0
      %v2427 = vmax.f32 %v2426, -1.0
      %v2428 = vmul.f32 %v2061, %v2061
      %v2429 = vmin.f32 16.0, %v2428
      %v2430 = vmul.f32 %v2429, 2.1237322e-06
      %v2431 = vadd.f32 %v2430, 0.00028619796
      %v2432 = vmul.f32 %v2429, %v2431
      %v2433 = vadd.f32 %v2432, 0.0036580483
      %v2434 = vmul.f32 %v2429, %v2433
      %v2435 = vadd.f32 %v2434, 0.05243302
      %v2436 = vmul.f32 %v2429, %v2435
      %v2437 = vadd.f32 %v2436, 0.18741608
      %v2438 = vmul.f32 %v2429, %v2437
      %v2439 = vadd.f32 %v2438, 1.1283791
      %v2440 = vmul.f32 %v2061, %v2439
      %v2441 = vmul.f32 %v2429, 3.8918573e-05
      %v2442 = vadd.f32 %v2441, 0.001143296
      %v2443 = vmul.f32 %v2429, %v2442
      %v2444 = vadd.f32 %v2443, 0.014752088
      %v2445 = vmul.f32 %v2429, %v2444
      %v2446 = vadd.f32 %v2445, 0.112945676
      %v2447 = vmul.f32 %v2429, %v2446
      %v2448 = vadd.f32 %v2447, 0.4994258
      %v2449 = vmul.f32 %v2429, %v2448
      %v2450 = vadd.f32 %v2449, 1.0
      %v2451 = vrcp.pop %v2450
      %v2452 = vmul.f32 %v2450, %v2451
      %v2453 = vsub.f32 1.0, %v2452
      %v2454 = vmul.f32 %v2451, %v2453
      %v2455 = vadd.f32 %v2451, %v2454
      %vm2456 = vweird.f32 %v2450
      %vm2457 = vweird.f32 %v2451
      %vm2458 = vmor %vm2456, %vm2457
      %v2459 = vsel %vm2458, %v2451, %v2455
      %v2460 = vand.u32 2147483647, %v2450
      %vm2461 = vcmp.eq.f32.partialorder %v2460, 8.507059e+37
      %v2462 = vand.u32 %v2450, 2147483648
      %v2463 = vor.u32 1.1754944e-38, %v2462
      %v2464 = vsel %vm2461, %v2463, %v2459
      %v2465 = vmul.f32 %v2440, %v2464
      %v2466 = vmin.f32 %v2465, 1.0
      %v2467 = vmax.f32 %v2466, -1.0
      %v2468 = vmul.f32 %v2062, %v2062
      %v2469 = vmin.f32 16.0, %v2468
      %v2470 = vmul.f32 %v2469, 2.1237322e-06
      %v2471 = vadd.f32 %v2470, 0.00028619796
      %v2472 = vmul.f32 %v2469, %v2471
      %v2473 = vadd.f32 %v2472, 0.0036580483
      %v2474 = vmul.f32 %v2469, %v2473
      %v2475 = vadd.f32 %v2474, 0.05243302
      %v2476 = vmul.f32 %v2469, %v2475
      %v2477 = vadd.f32 %v2476, 0.18741608
      %v2478 = vmul.f32 %v2469, %v2477
      %v2479 = vadd.f32 %v2478, 1.1283791
      %v2480 = vmul.f32 %v2062, %v2479
      %v2481 = vmul.f32 %v2469, 3.8918573e-05
      %v2482 = vadd.f32 %v2481, 0.001143296
      %v2483 = vmul.f32 %v2469, %v2482
      %v2484 = vadd.f32 %v2483, 0.014752088
      %v2485 = vmul.f32 %v2469, %v2484
      %v2486 = vadd.f32 %v2485, 0.112945676
      %v2487 = vmul.f32 %v2469, %v2486
      %v2488 = vadd.f32 %v2487, 0.4994258
      %v2489 = vmul.f32 %v2469, %v2488
      %v2490 = vadd.f32 %v2489, 1.0
      %v2491 = vrcp.pop %v2490
      %v2492 = vmul.f32 %v2490, %v2491
      %v2493 = vsub.f32 1.0, %v2492
      %v2494 = vmul.f32 %v2491, %v2493
      %v2495 = vadd.f32 %v2491, %v2494
      %vm2496 = vweird.f32 %v2490
      %vm2497 = vweird.f32 %v2491
      %vm2498 = vmor %vm2496, %vm2497
      %v2499 = vsel %vm2498, %v2491, %v2495
      %v2500 = vand.u32 2147483647, %v2490
      %vm2501 = vcmp.eq.f32.partialorder %v2500, 8.507059e+37
      %v2502 = vand.u32 %v2490, 2147483648
      %v2503 = vor.u32 1.1754944e-38, %v2502
      %v2504 = vsel %vm2501, %v2503, %v2499
      %v2505 = vmul.f32 %v2480, %v2504
      %v2506 = vmin.f32 %v2505, 1.0
      %v2507 = vmax.f32 %v2506, -1.0
      %v2508 = vmul.f32 %v2063, %v2063
      %v2509 = vmin.f32 16.0, %v2508
      %v2510 = vmul.f32 %v2509, 2.1237322e-06
      %v2511 = vadd.f32 %v2510, 0.00028619796
      %v2512 = vmul.f32 %v2509, %v2511
      %v2513 = vadd.f32 %v2512, 0.0036580483
      %v2514 = vmul.f32 %v2509, %v2513
      %v2515 = vadd.f32 %v2514, 0.05243302
      %v2516 = vmul.f32 %v2509, %v2515
      %v2517 = vadd.f32 %v2516, 0.18741608
      %v2518 = vmul.f32 %v2509, %v2517
      %v2519 = vadd.f32 %v2518, 1.1283791
      %v2520 = vmul.f32 %v2063, %v2519
      %v2521 = vmul.f32 %v2509, 3.8918573e-05
      %v2522 = vadd.f32 %v2521, 0.001143296
      %v2523 = vmul.f32 %v2509, %v2522
      %v2524 = vadd.f32 %v2523, 0.014752088
      %v2525 = vmul.f32 %v2509, %v2524
      %v2526 = vadd.f32 %v2525, 0.112945676
      %v2527 = vmul.f32 %v2509, %v2526
      %v2528 = vadd.f32 %v2527, 0.4994258
      %v2529 = vmul.f32 %v2509, %v2528
      %v2530 = vadd.f32 %v2529, 1.0
      %v2531 = vrcp.pop %v2530
      %v2532 = vmul.f32 %v2530, %v2531
      %v2533 = vsub.f32 1.0, %v2532
      %v2534 = vmul.f32 %v2531, %v2533
      %v2535 = vadd.f32 %v2531, %v2534
      %vm2536 = vweird.f32 %v2530
      %vm2537 = vweird.f32 %v2531
      %vm2538 = vmor %vm2536, %vm2537
      %v2539 = vsel %vm2538, %v2531, %v2535
      %v2540 = vand.u32 2147483647, %v2530
      %vm2541 = vcmp.eq.f32.partialorder %v2540, 8.507059e+37
      %v2542 = vand.u32 %v2530, 2147483648
      %v2543 = vor.u32 1.1754944e-38, %v2542
      %v2544 = vsel %vm2541, %v2543, %v2539
      %v2545 = vmul.f32 %v2520, %v2544
      %v2546 = vmin.f32 %v2545, 1.0
      %v2547 = vmax.f32 %v2546, -1.0
      %v2548 = vmul.f32 %v2064, %v2064
      %v2549 = vmin.f32 16.0, %v2548
      %v2550 = vmul.f32 %v2549, 2.1237322e-06
      %v2551 = vadd.f32 %v2550, 0.00028619796
      %v2552 = vmul.f32 %v2549, %v2551
      %v2553 = vadd.f32 %v2552, 0.0036580483
      %v2554 = vmul.f32 %v2549, %v2553
      %v2555 = vadd.f32 %v2554, 0.05243302
      %v2556 = vmul.f32 %v2549, %v2555
      %v2557 = vadd.f32 %v2556, 0.18741608
      %v2558 = vmul.f32 %v2549, %v2557
      %v2559 = vadd.f32 %v2558, 1.1283791
      %v2560 = vmul.f32 %v2064, %v2559
      %v2561 = vmul.f32 %v2549, 3.8918573e-05
      %v2562 = vadd.f32 %v2561, 0.001143296
      %v2563 = vmul.f32 %v2549, %v2562
      %v2564 = vadd.f32 %v2563, 0.014752088
      %v2565 = vmul.f32 %v2549, %v2564
      %v2566 = vadd.f32 %v2565, 0.112945676
      %v2567 = vmul.f32 %v2549, %v2566
      %v2568 = vadd.f32 %v2567, 0.4994258
      %v2569 = vmul.f32 %v2549, %v2568
      %v2570 = vadd.f32 %v2569, 1.0
      %v2571 = vrcp.pop %v2570
      %v2572 = vmul.f32 %v2570, %v2571
      %v2573 = vsub.f32 1.0, %v2572
      %v2574 = vmul.f32 %v2571, %v2573
      %v2575 = vadd.f32 %v2571, %v2574
      %vm2576 = vweird.f32 %v2570
      %vm2577 = vweird.f32 %v2571
      %vm2578 = vmor %vm2576, %vm2577
      %v2579 = vsel %vm2578, %v2571, %v2575
      %v2580 = vand.u32 2147483647, %v2570
      %vm2581 = vcmp.eq.f32.partialorder %v2580, 8.507059e+37
      %v2582 = vand.u32 %v2570, 2147483648
      %v2583 = vor.u32 1.1754944e-38, %v2582
      %v2584 = vsel %vm2581, %v2583, %v2579
      %v2585 = vmul.f32 %v2560, %v2584
      %v2586 = vmin.f32 %v2585, 1.0
      %v2587 = vmax.f32 %v2586, -1.0
      %v2588 = vmul.f32 %v2065, %v2065
      %v2589 = vmin.f32 16.0, %v2588
      %v2590 = vmul.f32 %v2589, 2.1237322e-06
      %v2591 = vadd.f32 %v2590, 0.00028619796
      %v2592 = vmul.f32 %v2589, %v2591
      %v2593 = vadd.f32 %v2592, 0.0036580483
      %v2594 = vmul.f32 %v2589, %v2593
      %v2595 = vadd.f32 %v2594, 0.05243302
      %v2596 = vmul.f32 %v2589, %v2595
      %v2597 = vadd.f32 %v2596, 0.18741608
      %v2598 = vmul.f32 %v2589, %v2597
      %v2599 = vadd.f32 %v2598, 1.1283791
      %v2600 = vmul.f32 %v2065, %v2599
      %v2601 = vmul.f32 %v2589, 3.8918573e-05
      %v2602 = vadd.f32 %v2601, 0.001143296
      %v2603 = vmul.f32 %v2589, %v2602
      %v2604 = vadd.f32 %v2603, 0.014752088
      %v2605 = vmul.f32 %v2589, %v2604
      %v2606 = vadd.f32 %v2605, 0.112945676
      %v2607 = vmul.f32 %v2589, %v2606
      %v2608 = vadd.f32 %v2607, 0.4994258
      %v2609 = vmul.f32 %v2589, %v2608
      %v2610 = vadd.f32 %v2609, 1.0
      %v2611 = vrcp.pop %v2610
      %v2612 = vmul.f32 %v2610, %v2611
      %v2613 = vsub.f32 1.0, %v2612
      %v2614 = vmul.f32 %v2611, %v2613
      %v2615 = vadd.f32 %v2611, %v2614
      %vm2616 = vweird.f32 %v2610
      %vm2617 = vweird.f32 %v2611
      %vm2618 = vmor %vm2616, %vm2617
      %v2619 = vsel %vm2618, %v2611, %v2615
      %v2620 = vand.u32 2147483647, %v2610
      %vm2621 = vcmp.eq.f32.partialorder %v2620, 8.507059e+37
      %v2622 = vand.u32 %v2610, 2147483648
      %v2623 = vor.u32 1.1754944e-38, %v2622
      %v2624 = vsel %vm2621, %v2623, %v2619
      %v2625 = vmul.f32 %v2600, %v2624
      %v2626 = vmin.f32 %v2625, 1.0
      %v2627 = vmax.f32 %v2626, -1.0
      %v2628 = vmul.f32 %v2066, %v2066
      %v2629 = vmin.f32 16.0, %v2628
      %v2630 = vmul.f32 %v2629, 2.1237322e-06
      %v2631 = vadd.f32 %v2630, 0.00028619796
      %v2632 = vmul.f32 %v2629, %v2631
      %v2633 = vadd.f32 %v2632, 0.0036580483
      %v2634 = vmul.f32 %v2629, %v2633
      %v2635 = vadd.f32 %v2634, 0.05243302
      %v2636 = vmul.f32 %v2629, %v2635
      %v2637 = vadd.f32 %v2636, 0.18741608
      %v2638 = vmul.f32 %v2629, %v2637
      %v2639 = vadd.f32 %v2638, 1.1283791
      %v2640 = vmul.f32 %v2066, %v2639
      %v2641 = vmul.f32 %v2629, 3.8918573e-05
      %v2642 = vadd.f32 %v2641, 0.001143296
      %v2643 = vmul.f32 %v2629, %v2642
      %v2644 = vadd.f32 %v2643, 0.014752088
      %v2645 = vmul.f32 %v2629, %v2644
      %v2646 = vadd.f32 %v2645, 0.112945676
      %v2647 = vmul.f32 %v2629, %v2646
      %v2648 = vadd.f32 %v2647, 0.4994258
      %v2649 = vmul.f32 %v2629, %v2648
      %v2650 = vadd.f32 %v2649, 1.0
      %v2651 = vrcp.pop %v2650
      %v2652 = vmul.f32 %v2650, %v2651
      %v2653 = vsub.f32 1.0, %v2652
      %v2654 = vmul.f32 %v2651, %v2653
      %v2655 = vadd.f32 %v2651, %v2654
      %vm2656 = vweird.f32 %v2650
      %vm2657 = vweird.f32 %v2651
      %vm2658 = vmor %vm2656, %vm2657
      %v2659 = vsel %vm2658, %v2651, %v2655
      %v2660 = vand.u32 2147483647, %v2650
      %vm2661 = vcmp.eq.f32.partialorder %v2660, 8.507059e+37
      %v2662 = vand.u32 %v2650, 2147483648
      %v2663 = vor.u32 1.1754944e-38, %v2662
      %v2664 = vsel %vm2661, %v2663, %v2659
      %v2665 = vmul.f32 %v2640, %v2664
      %v2666 = vmin.f32 %v2665, 1.0
      %v2667 = vmax.f32 %v2666, -1.0
      %v2668 = vmul.f32 %v2067, %v2067
      %v2669 = vmin.f32 16.0, %v2668
      %v2670 = vmul.f32 %v2669, 2.1237322e-06
      %v2671 = vadd.f32 %v2670, 0.00028619796
      %v2672 = vmul.f32 %v2669, %v2671
      %v2673 = vadd.f32 %v2672, 0.0036580483
      %v2674 = vmul.f32 %v2669, %v2673
      %v2675 = vadd.f32 %v2674, 0.05243302
      %v2676 = vmul.f32 %v2669, %v2675
      %v2677 = vadd.f32 %v2676, 0.18741608
      %v2678 = vmul.f32 %v2669, %v2677
      %v2679 = vadd.f32 %v2678, 1.1283791
      %v2680 = vmul.f32 %v2067, %v2679
      %v2681 = vmul.f32 %v2669, 3.8918573e-05
      %v2682 = vadd.f32 %v2681, 0.001143296
      %v2683 = vmul.f32 %v2669, %v2682
      %v2684 = vadd.f32 %v2683, 0.014752088
      %v2685 = vmul.f32 %v2669, %v2684
      %v2686 = vadd.f32 %v2685, 0.112945676
      %v2687 = vmul.f32 %v2669, %v2686
      %v2688 = vadd.f32 %v2687, 0.4994258
      %v2689 = vmul.f32 %v2669, %v2688
      %v2690 = vadd.f32 %v2689, 1.0
      %v2691 = vrcp.pop %v2690
      %v2692 = vmul.f32 %v2690, %v2691
      %v2693 = vsub.f32 1.0, %v2692
      %v2694 = vmul.f32 %v2691, %v2693
      %v2695 = vadd.f32 %v2691, %v2694
      %vm2696 = vweird.f32 %v2690
      %vm2697 = vweird.f32 %v2691
      %vm2698 = vmor %vm2696, %vm2697
      %v2699 = vsel %vm2698, %v2691, %v2695
      %v2700 = vand.u32 2147483647, %v2690
      %vm2701 = vcmp.eq.f32.partialorder %v2700, 8.507059e+37
      %v2702 = vand.u32 %v2690, 2147483648
      %v2703 = vor.u32 1.1754944e-38, %v2702
      %v2704 = vsel %vm2701, %v2703, %v2699
      %v2705 = vmul.f32 %v2680, %v2704
      %v2706 = vmin.f32 %v2705, 1.0
      %v2707 = vmax.f32 %v2706, -1.0
      %v2708 = vadd.f32 %v2107, 1.0
      %v2709 = vadd.f32 %v2147, 1.0
      %v2710 = vadd.f32 %v2187, 1.0
      %v2711 = vadd.f32 %v2227, 1.0
      %v2712 = vadd.f32 %v2267, 1.0
      %v2713 = vadd.f32 %v2307, 1.0
      %v2714 = vadd.f32 %v2347, 1.0
      %v2715 = vadd.f32 %v2387, 1.0
      %v2716 = vadd.f32 %v2427, 1.0
      %v2717 = vadd.f32 %v2467, 1.0
      %v2718 = vadd.f32 %v2507, 1.0
      %v2719 = vadd.f32 %v2547, 1.0
      %v2720 = vadd.f32 %v2587, 1.0
      %v2721 = vadd.f32 %v2627, 1.0
      %v2722 = vadd.f32 %v2667, 1.0
      %v2723 = vadd.f32 %v2707, 1.0
      %v2724 = vmul.f32 %v2029, %v2708
      %v2725 = vmul.f32 %v2030, %v2709
      %v2726 = vmul.f32 %v2031, %v2710
      %v2727 = vmul.f32 %v2032, %v2711
      %v2728 = vmul.f32 %v2033, %v2712
      %v2729 = vmul.f32 %v2034, %v2713
      %v2730 = vmul.f32 %v2035, %v2714
      %v2731 = vmul.f32 %v2036, %v2715
      %v2732 = vmul.f32 %v2037, %v2716
      %v2733 = vmul.f32 %v2038, %v2717
      %v2734 = vmul.f32 %v2039, %v2718
      %v2735 = vmul.f32 %v2040, %v2719
      %v2736 = vmul.f32 %v2041, %v2720
      %v2737 = vmul.f32 %v2042, %v2721
      %v2738 = vmul.f32 %v2043, %v2722
      %v2739 = vmul.f32 %v2044, %v2723
      %v2740 = vadd.f32 %v2724, %v469
      %v2741 = vadd.f32 %v2725, %v470
      %v2742 = vadd.f32 %v2726, %v471
      %v2743 = vadd.f32 %v2727, %v472
      %v2744 = vadd.f32 %v2728, %v473
      %v2745 = vadd.f32 %v2729, %v474
      %v2746 = vadd.f32 %v2730, %v475
      %v2747 = vadd.f32 %v2731, %v476
      %v2748 = vadd.f32 %v2732, %v477
      %v2749 = vadd.f32 %v2733, %v478
      %v2750 = vadd.f32 %v2734, %v479
      %v2751 = vadd.f32 %v2735, %v480
      %v2752 = vadd.f32 %v2736, %v481
      %v2753 = vadd.f32 %v2737, %v482
      %v2754 = vadd.f32 %v2738, %v483
      %v2755 = vadd.f32 %v2739, %v484
      %v2756 = vld [vmem:[%s5] sm:$0xff]
      %v2757 = vld [vmem:[%s5 + $0x8] sm:$0xff]
      %v2758 = vld [vmem:[%s5 + $0x10] sm:$0xff]
      %v2759 = vld [vmem:[%s5 + $0x18] sm:$0xff]
      %v2761 = vsel %vm541, %v2740, 0
      %v2764 = vsel %vm541, %v2741, 0
      %v2767 = vsel %vm541, %v2742, 0
      %v2770 = vsel %vm541, %v2743, 0
      %v2773 = vsel %vm541, %v2744, 0
      %v2776 = vsel %vm541, %v2745, 0
      %v2779 = vsel %vm541, %v2746, 0
      %v2782 = vsel %vm541, %v2747, 0
      %v2785 = vsel %vm541, %v2748, 0
      %v2788 = vsel %vm541, %v2749, 0
      %v2791 = vsel %vm541, %v2750, 0
      %v2794 = vsel %vm541, %v2751, 0
      %v2797 = vsel %vm541, %v2752, 0
      %v2800 = vsel %vm541, %v2753, 0
      %v2803 = vsel %vm541, %v2754, 0
      %v2806 = vsel %vm541, %v2755, 0
      %2808 = vmatpush.msra.mxu0 0.0
      %2809 = vmatpush.msra.mxu0 0.0
      %2810 = vmatpush.msra.mxu0 0.0
      %2811 = vmatpush.msra.mxu0 0.0
      %2812 = vmatpush.msra.mxu0 0.0
      %2813 = vmatpush.msra.mxu0 0.0
      %2814 = vmatpush.msra.mxu0 0.0
      %2815 = vmatpush.msra.mxu0 0.0
      %2816 = vmatpush.msra.mxu0 0.0
      %2817 = vmatpush.msra.mxu0 0.0
      %2818 = vmatpush.msra.mxu0 0.0
      %2819 = vmatpush.msra.mxu0 0.0
      %2820 = vmatpush.msra.mxu0 %v2759
      %2821 = vmatpush.msra.mxu0 %v2758
      %2822 = vmatpush.msra.mxu0 %v2757
      %2823 = vmatpush.msra.mxu0 %v2756
      %2824 = vmatmul.f32.gmra.mxu0 %v2761
      %v2825 = vpop.f32.mrf.mxu0
      %v2826 = vadd.f32 0.0, %v2825
      %2827 = vmatmul.f32.gmra.mxu0 %v2764
      %v2828 = vpop.f32.mrf.mxu0
      %v2829 = vadd.f32 0.0, %v2828
      %2830 = vmatmul.f32.gmra.mxu0 %v2767
      %v2831 = vpop.f32.mrf.mxu0
      %v2832 = vadd.f32 0.0, %v2831
      %2833 = vmatmul.f32.gmra.mxu0 %v2770
      %v2834 = vpop.f32.mrf.mxu0
      %v2835 = vadd.f32 0.0, %v2834
      %2836 = vmatmul.f32.gmra.mxu0 %v2773
      %v2837 = vpop.f32.mrf.mxu0
      %v2838 = vadd.f32 0.0, %v2837
      %2839 = vmatmul.f32.gmra.mxu0 %v2776
      %v2840 = vpop.f32.mrf.mxu0
      %v2841 = vadd.f32 0.0, %v2840
      %2842 = vmatmul.f32.gmra.mxu0 %v2779
      %v2843 = vpop.f32.mrf.mxu0
      %v2844 = vadd.f32 0.0, %v2843
      %2845 = vmatmul.f32.gmra.mxu0 %v2782
      %v2846 = vpop.f32.mrf.mxu0
      %v2847 = vadd.f32 0.0, %v2846
      %2848 = vmatmul.f32.gmra.mxu0 %v2785
      %v2849 = vpop.f32.mrf.mxu0
      %v2850 = vadd.f32 0.0, %v2849
      %2851 = vmatmul.f32.gmra.mxu0 %v2788
      %v2852 = vpop.f32.mrf.mxu0
      %v2853 = vadd.f32 0.0, %v2852
      %2854 = vmatmul.f32.gmra.mxu0 %v2791
      %v2855 = vpop.f32.mrf.mxu0
      %v2856 = vadd.f32 0.0, %v2855
      %2857 = vmatmul.f32.gmra.mxu0 %v2794
      %v2858 = vpop.f32.mrf.mxu0
      %v2859 = vadd.f32 0.0, %v2858
      %2860 = vmatmul.f32.gmra.mxu0 %v2797
      %v2861 = vpop.f32.mrf.mxu0
      %v2862 = vadd.f32 0.0, %v2861
      %2863 = vmatmul.f32.gmra.mxu0 %v2800
      %v2864 = vpop.f32.mrf.mxu0
      %v2865 = vadd.f32 0.0, %v2864
      %2866 = vmatmul.f32.gmra.mxu0 %v2803
      %v2867 = vpop.f32.mrf.mxu0
      %v2868 = vadd.f32 0.0, %v2867
      %2869 = vmatmul.f32.gmra.mxu0 %v2806
      %v2870 = vpop.f32.mrf.mxu0
      %v2871 = vadd.f32 0.0, %v2870
      %2872 = vdwg.mxu0
      %vm2873 = vcmask 523264
      %2874 = vst.msk [vmem:[#allocation2] sm:$0xff] %vm2873, 0.0
      %2875 = vst.msk [vmem:[#allocation2 + $0x8] sm:$0xff] %vm2873, 0.0
      %2876 = vst.msk [vmem:[#allocation2 + $0x10] sm:$0xff] %vm2873, 0.0
      %2877 = vst.msk [vmem:[#allocation2 + $0x18] sm:$0xff] %vm2873, %v2826
      %2878 = vst.msk [vmem:[#allocation2 + $0x20] sm:$0xff] %vm2873, %v2829
      %2879 = vst.msk [vmem:[#allocation2 + $0x28] sm:$0xff] %vm2873, %v2832
      %2880 = vst.msk [vmem:[#allocation2 + $0x30] sm:$0xff] %vm2873, %v2835
      %2881 = vst.msk [vmem:[#allocation2 + $0x38] sm:$0xff] %vm2873, %v2838
      %2882 = vst.msk [vmem:[#allocation2 + $0x40] sm:$0xff] %vm2873, %v2841
      %2883 = vst.msk [vmem:[#allocation2 + $0x48] sm:$0xff] %vm2873, %v2844
      %2884 = vst.msk [vmem:[#allocation2 + $0x50] sm:$0xff] %vm2873, %v2847
      %2885 = vst.msk [vmem:[#allocation2 + $0x58] sm:$0xff] %vm2873, %v2850
      %2886 = vst.msk [vmem:[#allocation2 + $0x60] sm:$0xff] %vm2873, %v2853
      %2887 = vst.msk [vmem:[#allocation2 + $0x68] sm:$0xff] %vm2873, %v2856
      %2888 = vst.msk [vmem:[#allocation2 + $0x70] sm:$0xff] %vm2873, %v2859
      %2889 = vst.msk [vmem:[#allocation2 + $0x78] sm:$0xff] %vm2873, %v2862
      %2890 = vst.msk [vmem:[#allocation2 + $0x80] sm:$0xff] %vm2873, %v2865
      %2891 = vst.msk [vmem:[#allocation2 + $0x88] sm:$0xff] %vm2873, %v2868
      %2892 = vst.msk [vmem:[#allocation2 + $0x90] sm:$0xff] %vm2873, %v2871
      %v2893 = vld [vmem:[%s6] sm:$0xf]
      %v2894 = vld [vmem:[#allocation2] sm:$0xff]
      %v2895 = vld [vmem:[#allocation2 + $0x8] sm:$0xff]
      %v2896 = vld [vmem:[#allocation2 + $0x10] sm:$0xff]
      %v2897 = vld [vmem:[#allocation2 + $0x18] sm:$0xff]
      %v2898 = vld [vmem:[#allocation2 + $0x20] sm:$0xff]
      %v2899 = vld [vmem:[#allocation2 + $0x28] sm:$0xff]
      %v2900 = vld [vmem:[#allocation2 + $0x30] sm:$0xff]
      %v2901 = vld [vmem:[#allocation2 + $0x38] sm:$0xff]
      %v2902 = vld [vmem:[#allocation2 + $0x40] sm:$0xff]
      %v2903 = vld [vmem:[#allocation2 + $0x48] sm:$0xff]
      %v2904 = vld [vmem:[#allocation2 + $0x50] sm:$0xff]
      %v2905 = vld [vmem:[#allocation2 + $0x58] sm:$0xff]
      %v2906 = vld [vmem:[#allocation2 + $0x60] sm:$0xff]
      %v2907 = vld [vmem:[#allocation2 + $0x68] sm:$0xff]
      %v2908 = vld [vmem:[#allocation2 + $0x70] sm:$0xff]
      %v2909 = vld [vmem:[#allocation2 + $0x78] sm:$0xff]
      %v2910 = vperm.slane %v2893, 0
      %v2911 = vmul.f32 %v2894, %v2910
      %v2912 = vmul.f32 %v2895, %v2910
      %v2913 = vmul.f32 %v2896, %v2910
      %v2914 = vmul.f32 %v2897, %v2910
      %v2915 = vmul.f32 %v2898, %v2910
      %v2916 = vmul.f32 %v2899, %v2910
      %v2917 = vmul.f32 %v2900, %v2910
      %v2918 = vmul.f32 %v2901, %v2910
      %v2919 = vmul.f32 %v2902, %v2910
      %v2920 = vmul.f32 %v2903, %v2910
      %v2921 = vmul.f32 %v2904, %v2910
      %v2922 = vmul.f32 %v2905, %v2910
      %v2923 = vmul.f32 %v2906, %v2910
      %v2924 = vmul.f32 %v2907, %v2910
      %v2925 = vmul.f32 %v2908, %v2910
      %v2926 = vmul.f32 %v2909, %v2910
      %v2927 = vld [vmem:[#allocation2 + $0x80] sm:$0xff]
      %v2928 = vperm.slane %v2893, 1
      %v2929 = vmul.f32 %v2895, %v2928
      %v2930 = vmul.f32 %v2896, %v2928
      %v2931 = vmul.f32 %v2897, %v2928
      %v2932 = vmul.f32 %v2898, %v2928
      %v2933 = vmul.f32 %v2899, %v2928
      %v2934 = vmul.f32 %v2900, %v2928
      %v2935 = vmul.f32 %v2901, %v2928
      %v2936 = vmul.f32 %v2902, %v2928
      %v2937 = vmul.f32 %v2903, %v2928
      %v2938 = vmul.f32 %v2904, %v2928
      %v2939 = vmul.f32 %v2905, %v2928
      %v2940 = vmul.f32 %v2906, %v2928
      %v2941 = vmul.f32 %v2907, %v2928
      %v2942 = vmul.f32 %v2908, %v2928
      %v2943 = vmul.f32 %v2909, %v2928
      %v2944 = vmul.f32 %v2927, %v2928
      %v2945 = vadd.f32 %v2911, %v2929
      %v2946 = vadd.f32 %v2912, %v2930
      %v2947 = vadd.f32 %v2913, %v2931
      %v2948 = vadd.f32 %v2914, %v2932
      %v2949 = vadd.f32 %v2915, %v2933
      %v2950 = vadd.f32 %v2916, %v2934
      %v2951 = vadd.f32 %v2917, %v2935
      %v2952 = vadd.f32 %v2918, %v2936
      %v2953 = vadd.f32 %v2919, %v2937
      %v2954 = vadd.f32 %v2920, %v2938
      %v2955 = vadd.f32 %v2921, %v2939
      %v2956 = vadd.f32 %v2922, %v2940
      %v2957 = vadd.f32 %v2923, %v2941
      %v2958 = vadd.f32 %v2924, %v2942
      %v2959 = vadd.f32 %v2925, %v2943
      %v2960 = vadd.f32 %v2926, %v2944
      %v2961 = vld [vmem:[#allocation2 + $0x88] sm:$0xff]
      %v2962 = vperm.slane %v2893, 2
      %v2963 = vmul.f32 %v2896, %v2962
      %v2964 = vmul.f32 %v2897, %v2962
      %v2965 = vmul.f32 %v2898, %v2962
      %v2966 = vmul.f32 %v2899, %v2962
      %v2967 = vmul.f32 %v2900, %v2962
      %v2968 = vmul.f32 %v2901, %v2962
      %v2969 = vmul.f32 %v2902, %v2962
      %v2970 = vmul.f32 %v2903, %v2962
      %v2971 = vmul.f32 %v2904, %v2962
      %v2972 = vmul.f32 %v2905, %v2962
      %v2973 = vmul.f32 %v2906, %v2962
      %v2974 = vmul.f32 %v2907, %v2962
      %v2975 = vmul.f32 %v2908, %v2962
      %v2976 = vmul.f32 %v2909, %v2962
      %v2977 = vmul.f32 %v2927, %v2962
      %v2978 = vmul.f32 %v2961, %v2962
      %v2979 = vadd.f32 %v2945, %v2963
      %v2980 = vadd.f32 %v2946, %v2964
      %v2981 = vadd.f32 %v2947, %v2965
      %v2982 = vadd.f32 %v2948, %v2966
      %v2983 = vadd.f32 %v2949, %v2967
      %v2984 = vadd.f32 %v2950, %v2968
      %v2985 = vadd.f32 %v2951, %v2969
      %v2986 = vadd.f32 %v2952, %v2970
      %v2987 = vadd.f32 %v2953, %v2971
      %v2988 = vadd.f32 %v2954, %v2972
      %v2989 = vadd.f32 %v2955, %v2973
      %v2990 = vadd.f32 %v2956, %v2974
      %v2991 = vadd.f32 %v2957, %v2975
      %v2992 = vadd.f32 %v2958, %v2976
      %v2993 = vadd.f32 %v2959, %v2977
      %v2994 = vadd.f32 %v2960, %v2978
      %v2995 = vld [vmem:[#allocation2 + $0x90] sm:$0xff]
      %v2996 = vperm.slane %v2893, 3
      %v2997 = vmul.f32 %v2897, %v2996
      %v2998 = vmul.f32 %v2898, %v2996
      %v2999 = vmul.f32 %v2899, %v2996
      %v3000 = vmul.f32 %v2900, %v2996
      %v3001 = vmul.f32 %v2901, %v2996
      %v3002 = vmul.f32 %v2902, %v2996
      %v3003 = vmul.f32 %v2903, %v2996
      %v3004 = vmul.f32 %v2904, %v2996
      %v3005 = vmul.f32 %v2905, %v2996
      %v3006 = vmul.f32 %v2906, %v2996
      %v3007 = vmul.f32 %v2907, %v2996
      %v3008 = vmul.f32 %v2908, %v2996
      %v3009 = vmul.f32 %v2909, %v2996
      %v3010 = vmul.f32 %v2927, %v2996
      %v3011 = vmul.f32 %v2961, %v2996
      %v3012 = vmul.f32 %v2995, %v2996
      %v3013 = vadd.f32 %v2979, %v2997
      %v3014 = vadd.f32 %v2980, %v2998
      %v3015 = vadd.f32 %v2981, %v2999
      %v3016 = vadd.f32 %v2982, %v3000
      %v3017 = vadd.f32 %v2983, %v3001
      %v3018 = vadd.f32 %v2984, %v3002
      %v3019 = vadd.f32 %v2985, %v3003
      %v3020 = vadd.f32 %v2986, %v3004
      %v3021 = vadd.f32 %v2987, %v3005
      %v3022 = vadd.f32 %v2988, %v3006
      %v3023 = vadd.f32 %v2989, %v3007
      %v3024 = vadd.f32 %v2990, %v3008
      %v3025 = vadd.f32 %v2991, %v3009
      %v3026 = vadd.f32 %v2992, %v3010
      %v3027 = vadd.f32 %v2993, %v3011
      %v3028 = vadd.f32 %v2994, %v3012
      %v3029 = vld [vmem:[%s7] sm:$0x1]
      %v3031 = vperm.slane %v3029, 0
      %v3033 = vadd.f32 %v3013, %v3031
      %v3034 = vadd.f32 %v3014, %v3031
      %v3035 = vadd.f32 %v3015, %v3031
      %v3036 = vadd.f32 %v3016, %v3031
      %v3037 = vadd.f32 %v3017, %v3031
      %v3038 = vadd.f32 %v3018, %v3031
      %v3039 = vadd.f32 %v3019, %v3031
      %v3040 = vadd.f32 %v3020, %v3031
      %v3041 = vadd.f32 %v3021, %v3031
      %v3042 = vadd.f32 %v3022, %v3031
      %v3043 = vadd.f32 %v3023, %v3031
      %v3044 = vadd.f32 %v3024, %v3031
      %v3045 = vadd.f32 %v3025, %v3031
      %v3046 = vadd.f32 %v3026, %v3031
      %v3047 = vadd.f32 %v3027, %v3031
      %v3048 = vadd.f32 %v3028, %v3031
      %v3049 = vsub.f32 0.0, %v3033
      %v3050 = vsub.f32 0.0, %v3034
      %v3051 = vsub.f32 0.0, %v3035
      %v3052 = vsub.f32 0.0, %v3036
      %v3053 = vsub.f32 0.0, %v3037
      %v3054 = vsub.f32 0.0, %v3038
      %v3055 = vsub.f32 0.0, %v3039
      %v3056 = vsub.f32 0.0, %v3040
      %v3057 = vsub.f32 0.0, %v3041
      %v3058 = vsub.f32 0.0, %v3042
      %v3059 = vsub.f32 0.0, %v3043
      %v3060 = vsub.f32 0.0, %v3044
      %v3061 = vsub.f32 0.0, %v3045
      %v3062 = vsub.f32 0.0, %v3046
      %v3063 = vsub.f32 0.0, %v3047
      %v3064 = vsub.f32 0.0, %v3048
      %v3065 = vmul.f32 %v3049, 1.442695
      %v3066 = vpow.pop %v3065
      %v3067 = vmul.f32 %v3050, 1.442695
      %v3068 = vpow.pop %v3067
      %v3069 = vmul.f32 %v3051, 1.442695
      %v3070 = vpow.pop %v3069
      %v3071 = vmul.f32 %v3052, 1.442695
      %v3072 = vpow.pop %v3071
      %v3073 = vmul.f32 %v3053, 1.442695
      %v3074 = vpow.pop %v3073
      %v3075 = vmul.f32 %v3054, 1.442695
      %v3076 = vpow.pop %v3075
      %v3077 = vmul.f32 %v3055, 1.442695
      %v3078 = vpow.pop %v3077
      %v3079 = vmul.f32 %v3056, 1.442695
      %v3080 = vpow.pop %v3079
      %v3081 = vmul.f32 %v3057, 1.442695
      %v3082 = vpow.pop %v3081
      %v3083 = vmul.f32 %v3058, 1.442695
      %v3084 = vpow.pop %v3083
      %v3085 = vmul.f32 %v3059, 1.442695
      %v3086 = vpow.pop %v3085
      %v3087 = vmul.f32 %v3060, 1.442695
      %v3088 = vpow.pop %v3087
      %v3089 = vmul.f32 %v3061, 1.442695
      %v3090 = vpow.pop %v3089
      %v3091 = vmul.f32 %v3062, 1.442695
      %v3092 = vpow.pop %v3091
      %v3093 = vmul.f32 %v3063, 1.442695
      %v3094 = vpow.pop %v3093
      %v3095 = vmul.f32 %v3064, 1.442695
      %v3096 = vpow.pop %v3095
      %v3097 = vadd.f32 %v3066, 1.0
      %v3098 = vadd.f32 %v3068, 1.0
      %v3099 = vadd.f32 %v3070, 1.0
      %v3100 = vadd.f32 %v3072, 1.0
      %v3101 = vadd.f32 %v3074, 1.0
      %v3102 = vadd.f32 %v3076, 1.0
      %v3103 = vadd.f32 %v3078, 1.0
      %v3104 = vadd.f32 %v3080, 1.0
      %v3105 = vadd.f32 %v3082, 1.0
      %v3106 = vadd.f32 %v3084, 1.0
      %v3107 = vadd.f32 %v3086, 1.0
      %v3108 = vadd.f32 %v3088, 1.0
      %v3109 = vadd.f32 %v3090, 1.0
      %v3110 = vadd.f32 %v3092, 1.0
      %v3111 = vadd.f32 %v3094, 1.0
      %v3112 = vadd.f32 %v3096, 1.0
      %v3113 = vrcp.pop %v3097
      %v3114 = vrcp.pop %v3098
      %v3115 = vrcp.pop %v3099
      %v3116 = vrcp.pop %v3100
      %v3117 = vrcp.pop %v3101
      %v3118 = vrcp.pop %v3102
      %v3119 = vrcp.pop %v3103
      %v3120 = vrcp.pop %v3104
      %v3121 = vrcp.pop %v3105
      %v3122 = vrcp.pop %v3106
      %v3123 = vrcp.pop %v3107
      %v3124 = vrcp.pop %v3108
      %v3125 = vrcp.pop %v3109
      %v3126 = vrcp.pop %v3110
      %v3127 = vrcp.pop %v3111
      %v3128 = vrcp.pop %v3112
      %v3129 = vmul.f32 %v3033, %v3113
      %v3130 = vmul.f32 %v3034, %v3114
      %v3131 = vmul.f32 %v3035, %v3115
      %v3132 = vmul.f32 %v3036, %v3116
      %v3133 = vmul.f32 %v3037, %v3117
      %v3134 = vmul.f32 %v3038, %v3118
      %v3135 = vmul.f32 %v3039, %v3119
      %v3136 = vmul.f32 %v3040, %v3120
      %v3137 = vmul.f32 %v3041, %v3121
      %v3138 = vmul.f32 %v3042, %v3122
      %v3139 = vmul.f32 %v3043, %v3123
      %v3140 = vmul.f32 %v3044, %v3124
      %v3141 = vmul.f32 %v3045, %v3125
      %v3142 = vmul.f32 %v3046, %v3126
      %v3143 = vmul.f32 %v3047, %v3127
      %v3144 = vmul.f32 %v3048, %v3128
      %v3145 = vld [vmem:[%s8] sm:$0xff]
      %v3146 = vld [vmem:[%s8 + $0x8] sm:$0xff]
      %v3147 = vld [vmem:[%s8 + $0x10] sm:$0xff]
      %v3148 = vld [vmem:[%s8 + $0x18] sm:$0xff]
      %v3149 = vld [vmem:[%s8 + $0x20] sm:$0xff]
      %v3150 = vld [vmem:[%s8 + $0x28] sm:$0xff]
      %v3151 = vld [vmem:[%s8 + $0x30] sm:$0xff]
      %v3152 = vld [vmem:[%s8 + $0x38] sm:$0xff]
      %v3154 = vsel %vm2873, %v3129, 0
      %v3157 = vsel %vm2873, %v3130, 0
      %v3160 = vsel %vm2873, %v3131, 0
      %v3163 = vsel %vm2873, %v3132, 0
      %v3166 = vsel %vm2873, %v3133, 0
      %v3169 = vsel %vm2873, %v3134, 0
      %v3172 = vsel %vm2873, %v3135, 0
      %v3175 = vsel %vm2873, %v3136, 0
      %v3178 = vsel %vm2873, %v3137, 0
      %v3181 = vsel %vm2873, %v3138, 0
      %v3184 = vsel %vm2873, %v3139, 0
      %v3187 = vsel %vm2873, %v3140, 0
      %v3190 = vsel %vm2873, %v3141, 0
      %v3193 = vsel %vm2873, %v3142, 0
      %v3196 = vsel %vm2873, %v3143, 0
      %v3199 = vsel %vm2873, %v3144, 0
      %3201 = vmatpush.msra.mxu0 0.0
      %3202 = vmatpush.msra.mxu0 0.0
      %3203 = vmatpush.msra.mxu0 0.0
      %3204 = vmatpush.msra.mxu0 0.0
      %3205 = vmatpush.msra.mxu0 0.0
      %3206 = vmatpush.msra.mxu0 0.0
      %3207 = vmatpush.msra.mxu0 0.0
      %3208 = vmatpush.msra.mxu0 0.0
      %3209 = vmatpush.msra.mxu0 %v3152
      %3210 = vmatpush.msra.mxu0 %v3151
      %3211 = vmatpush.msra.mxu0 %v3150
      %3212 = vmatpush.msra.mxu0 %v3149
      %3213 = vmatpush.msra.mxu0 %v3148
      %3214 = vmatpush.msra.mxu0 %v3147
      %3215 = vmatpush.msra.mxu0 %v3146
      %3216 = vmatpush.msra.mxu0 %v3145
      %3217 = vmatmul.f32.gmra.mxu0 %v3154
      %v3218 = vpop.f32.mrf.mxu0
      %v3219 = vadd.f32 0.0, %v3218
      %3220 = vmatmul.f32.gmra.mxu0 %v3157
      %v3221 = vpop.f32.mrf.mxu0
      %v3222 = vadd.f32 0.0, %v3221
      %3223 = vmatmul.f32.gmra.mxu0 %v3160
      %v3224 = vpop.f32.mrf.mxu0
      %v3225 = vadd.f32 0.0, %v3224
      %3226 = vmatmul.f32.gmra.mxu0 %v3163
      %v3227 = vpop.f32.mrf.mxu0
      %v3228 = vadd.f32 0.0, %v3227
      %3229 = vmatmul.f32.gmra.mxu0 %v3166
      %v3230 = vpop.f32.mrf.mxu0
      %v3231 = vadd.f32 0.0, %v3230
      %3232 = vmatmul.f32.gmra.mxu0 %v3169
      %v3233 = vpop.f32.mrf.mxu0
      %v3234 = vadd.f32 0.0, %v3233
      %3235 = vmatmul.f32.gmra.mxu0 %v3172
      %v3236 = vpop.f32.mrf.mxu0
      %v3237 = vadd.f32 0.0, %v3236
      %3238 = vmatmul.f32.gmra.mxu0 %v3175
      %v3239 = vpop.f32.mrf.mxu0
      %v3240 = vadd.f32 0.0, %v3239
      %3241 = vmatmul.f32.gmra.mxu0 %v3178
      %v3242 = vpop.f32.mrf.mxu0
      %v3243 = vadd.f32 0.0, %v3242
      %3244 = vmatmul.f32.gmra.mxu0 %v3181
      %v3245 = vpop.f32.mrf.mxu0
      %v3246 = vadd.f32 0.0, %v3245
      %3247 = vmatmul.f32.gmra.mxu0 %v3184
      %v3248 = vpop.f32.mrf.mxu0
      %v3249 = vadd.f32 0.0, %v3248
      %3250 = vmatmul.f32.gmra.mxu0 %v3187
      %v3251 = vpop.f32.mrf.mxu0
      %v3252 = vadd.f32 0.0, %v3251
      %3253 = vmatmul.f32.gmra.mxu0 %v3190
      %v3254 = vpop.f32.mrf.mxu0
      %v3255 = vadd.f32 0.0, %v3254
      %3256 = vmatmul.f32.gmra.mxu0 %v3193
      %v3257 = vpop.f32.mrf.mxu0
      %v3258 = vadd.f32 0.0, %v3257
      %3259 = vmatmul.f32.gmra.mxu0 %v3196
      %v3260 = vpop.f32.mrf.mxu0
      %v3261 = vadd.f32 0.0, %v3260
      %3262 = vmatmul.f32.gmra.mxu0 %v3199
      %v3263 = vpop.f32.mrf.mxu0
      %v3264 = vadd.f32 0.0, %v3263
      %3265 = vdwg.mxu0
      %v3266 = vld [vmem:[%s9] sm:$0x3]
      %v3267 = vld [vmem:[%s10] sm:$0x1]
      %v3269 = vperm.slane %v3267, 0
      %vm3271 = vcmask 15360
      %v3273 = vsel %vm3271, %v3219, 0
      %v3276 = vsel %vm3271, %v3222, 0
      %v3279 = vsel %vm3271, %v3225, 0
      %v3282 = vsel %vm3271, %v3228, 0
      %v3285 = vsel %vm3271, %v3231, 0
      %v3288 = vsel %vm3271, %v3234, 0
      %v3291 = vsel %vm3271, %v3237, 0
      %v3294 = vsel %vm3271, %v3240, 0
      %v3297 = vsel %vm3271, %v3243, 0
      %v3300 = vsel %vm3271, %v3246, 0
      %v3303 = vsel %vm3271, %v3249, 0
      %v3306 = vsel %vm3271, %v3252, 0
      %v3309 = vsel %vm3271, %v3255, 0
      %v3312 = vsel %vm3271, %v3258, 0
      %v3315 = vsel %vm3271, %v3261, 0
      %v3318 = vsel %vm3271, %v3264, 0
      %vm3320 = vcmask 1041408
      %v3322 = vsel %vm3320, %v3266, 0
      %3324 = vmatpush.msra.mxu0 0.0
      %3325 = vmatpush.msra.mxu0 0.0
      %3326 = vmatpush.msra.mxu0 0.0
      %3327 = vmatpush.msra.mxu0 0.0
      %3328 = vmatpush.msra.mxu0 0.0
      %3329 = vmatpush.msra.mxu0 0.0
      %3330 = vmatpush.msra.mxu0 0.0
      %3331 = vmatpush.msra.mxu0 0.0
      %3332 = vmatpush.msra.mxu0 0.0
      %3333 = vmatpush.msra.mxu0 0.0
      %3334 = vmatpush.msra.mxu0 0.0
      %3335 = vmatpush.msra.mxu0 0.0
      %3336 = vmatpush.msra.mxu0 0.0
      %3337 = vmatpush.msra.mxu0 0.0
      %3338 = vmatpush.msra.mxu0 0.0
      %3339 = vmatpush.msra.mxu0 %v3322
      %3340 = vmatmul.f32.gmra.mxu0 %v3273
      %v3341 = vpop.f32.mrf.mxu0
      %v3342 = vadd.f32 %v3269, %v3341
      %3343 = vmatmul.f32.gmra.mxu0 %v3276
      %v3344 = vpop.f32.mrf.mxu0
      %v3345 = vadd.f32 %v3269, %v3344
      %3346 = vmatmul.f32.gmra.mxu0 %v3279
      %v3347 = vpop.f32.mrf.mxu0
      %v3348 = vadd.f32 %v3269, %v3347
      %3349 = vmatmul.f32.gmra.mxu0 %v3282
      %v3350 = vpop.f32.mrf.mxu0
      %v3351 = vadd.f32 %v3269, %v3350
      %3352 = vmatmul.f32.gmra.mxu0 %v3285
      %v3353 = vpop.f32.mrf.mxu0
      %v3354 = vadd.f32 %v3269, %v3353
      %3355 = vmatmul.f32.gmra.mxu0 %v3288
      %v3356 = vpop.f32.mrf.mxu0
      %v3357 = vadd.f32 %v3269, %v3356
      %3358 = vmatmul.f32.gmra.mxu0 %v3291
      %v3359 = vpop.f32.mrf.mxu0
      %v3360 = vadd.f32 %v3269, %v3359
      %3361 = vmatmul.f32.gmra.mxu0 %v3294
      %v3362 = vpop.f32.mrf.mxu0
      %v3363 = vadd.f32 %v3269, %v3362
      %3364 = vmatmul.f32.gmra.mxu0 %v3297
      %v3365 = vpop.f32.mrf.mxu0
      %v3366 = vadd.f32 %v3269, %v3365
      %3367 = vmatmul.f32.gmra.mxu0 %v3300
      %v3368 = vpop.f32.mrf.mxu0
      %v3369 = vadd.f32 %v3269, %v3368
      %3370 = vmatmul.f32.gmra.mxu0 %v3303
      %v3371 = vpop.f32.mrf.mxu0
      %v3372 = vadd.f32 %v3269, %v3371
      %3373 = vmatmul.f32.gmra.mxu0 %v3306
      %v3374 = vpop.f32.mrf.mxu0
      %v3375 = vadd.f32 %v3269, %v3374
      %3376 = vmatmul.f32.gmra.mxu0 %v3309
      %v3377 = vpop.f32.mrf.mxu0
      %v3378 = vadd.f32 %v3269, %v3377
      %3379 = vmatmul.f32.gmra.mxu0 %v3312
      %v3380 = vpop.f32.mrf.mxu0
      %v3381 = vadd.f32 %v3269, %v3380
      %3382 = vmatmul.f32.gmra.mxu0 %v3315
      %v3383 = vpop.f32.mrf.mxu0
      %v3384 = vadd.f32 %v3269, %v3383
      %3385 = vmatmul.f32.gmra.mxu0 %v3318
      %v3386 = vpop.f32.mrf.mxu0
      %v3387 = vadd.f32 %v3269, %v3386
      %3388 = vdwg.mxu0
      %v3389 = vmax.f32 %v3342, 0.0
      %v3390 = vmax.f32 %v3345, 0.0
      %v3391 = vmax.f32 %v3348, 0.0
      %v3392 = vmax.f32 %v3351, 0.0
      %v3393 = vmax.f32 %v3354, 0.0
      %v3394 = vmax.f32 %v3357, 0.0
      %v3395 = vmax.f32 %v3360, 0.0
      %v3396 = vmax.f32 %v3363, 0.0
      %v3397 = vmax.f32 %v3366, 0.0
      %v3398 = vmax.f32 %v3369, 0.0
      %v3399 = vmax.f32 %v3372, 0.0
      %v3400 = vmax.f32 %v3375, 0.0
      %v3401 = vmax.f32 %v3378, 0.0
      %v3402 = vmax.f32 %v3381, 0.0
      %v3403 = vmax.f32 %v3384, 0.0
      %v3404 = vmax.f32 %v3387, 0.0
      %v3405 = vand.u32 2147483647, %v3342
      %v3406 = vand.u32 2147483647, %v3345
      %v3407 = vand.u32 2147483647, %v3348
      %v3408 = vand.u32 2147483647, %v3351
      %v3409 = vand.u32 2147483647, %v3354
      %v3410 = vand.u32 2147483647, %v3357
      %v3411 = vand.u32 2147483647, %v3360
      %v3412 = vand.u32 2147483647, %v3363
      %v3413 = vand.u32 2147483647, %v3366
      %v3414 = vand.u32 2147483647, %v3369
      %v3415 = vand.u32 2147483647, %v3372
      %v3416 = vand.u32 2147483647, %v3375
      %v3417 = vand.u32 2147483647, %v3378
      %v3418 = vand.u32 2147483647, %v3381
      %v3419 = vand.u32 2147483647, %v3384
      %v3420 = vand.u32 2147483647, %v3387
      %v3421 = vsub.f32 0.0, %v3405
      %v3422 = vsub.f32 0.0, %v3406
      %v3423 = vsub.f32 0.0, %v3407
      %v3424 = vsub.f32 0.0, %v3408
      %v3425 = vsub.f32 0.0, %v3409
      %v3426 = vsub.f32 0.0, %v3410
      %v3427 = vsub.f32 0.0, %v3411
      %v3428 = vsub.f32 0.0, %v3412
      %v3429 = vsub.f32 0.0, %v3413
      %v3430 = vsub.f32 0.0, %v3414
      %v3431 = vsub.f32 0.0, %v3415
      %v3432 = vsub.f32 0.0, %v3416
      %v3433 = vsub.f32 0.0, %v3417
      %v3434 = vsub.f32 0.0, %v3418
      %v3435 = vsub.f32 0.0, %v3419
      %v3436 = vsub.f32 0.0, %v3420
      %v3437 = vmul.f32 %v3421, 1.442695
      %v3438 = vpow.pop %v3437
      %v3439 = vmul.f32 %v3422, 1.442695
      %v3440 = vpow.pop %v3439
      %v3441 = vmul.f32 %v3423, 1.442695
      %v3442 = vpow.pop %v3441
      %v3443 = vmul.f32 %v3424, 1.442695
      %v3444 = vpow.pop %v3443
      %v3445 = vmul.f32 %v3425, 1.442695
      %v3446 = vpow.pop %v3445
      %v3447 = vmul.f32 %v3426, 1.442695
      %v3448 = vpow.pop %v3447
      %v3449 = vmul.f32 %v3427, 1.442695
      %v3450 = vpow.pop %v3449
      %v3451 = vmul.f32 %v3428, 1.442695
      %v3452 = vpow.pop %v3451
      %v3453 = vmul.f32 %v3429, 1.442695
      %v3454 = vpow.pop %v3453
      %v3455 = vmul.f32 %v3430, 1.442695
      %v3456 = vpow.pop %v3455
      %v3457 = vmul.f32 %v3431, 1.442695
      %v3458 = vpow.pop %v3457
      %v3459 = vmul.f32 %v3432, 1.442695
      %v3460 = vpow.pop %v3459
      %v3461 = vmul.f32 %v3433, 1.442695
      %v3462 = vpow.pop %v3461
      %v3463 = vmul.f32 %v3434, 1.442695
      %v3464 = vpow.pop %v3463
      %v3465 = vmul.f32 %v3435, 1.442695
      %v3466 = vpow.pop %v3465
      %v3467 = vmul.f32 %v3436, 1.442695
      %v3468 = vpow.pop %v3467
      %v3469 = vadd.f32 %v3438, 1.0
      %v3470 = vadd.f32 %v3440, 1.0
      %v3471 = vadd.f32 %v3442, 1.0
      %v3472 = vadd.f32 %v3444, 1.0
      %v3473 = vadd.f32 %v3446, 1.0
      %v3474 = vadd.f32 %v3448, 1.0
      %v3475 = vadd.f32 %v3450, 1.0
      %v3476 = vadd.f32 %v3452, 1.0
      %v3477 = vadd.f32 %v3454, 1.0
      %v3478 = vadd.f32 %v3456, 1.0
      %v3479 = vadd.f32 %v3458, 1.0
      %v3480 = vadd.f32 %v3460, 1.0
      %v3481 = vadd.f32 %v3462, 1.0
      %v3482 = vadd.f32 %v3464, 1.0
      %v3483 = vadd.f32 %v3466, 1.0
      %v3484 = vadd.f32 %v3468, 1.0
      %v3485 = vlog2.pop %v3469
      %v3486 = vmul.f32 %v3485, 0.6931472
      %v3487 = vlog2.pop %v3470
      %v3488 = vmul.f32 %v3487, 0.6931472
      %v3489 = vlog2.pop %v3471
      %v3490 = vmul.f32 %v3489, 0.6931472
      %v3491 = vlog2.pop %v3472
      %v3492 = vmul.f32 %v3491, 0.6931472
      %v3493 = vlog2.pop %v3473
      %v3494 = vmul.f32 %v3493, 0.6931472
      %v3495 = vlog2.pop %v3474
      %v3496 = vmul.f32 %v3495, 0.6931472
      %v3497 = vlog2.pop %v3475
      %v3498 = vmul.f32 %v3497, 0.6931472
      %v3499 = vlog2.pop %v3476
      %v3500 = vmul.f32 %v3499, 0.6931472
      %v3501 = vlog2.pop %v3477
      %v3502 = vmul.f32 %v3501, 0.6931472
      %v3503 = vlog2.pop %v3478
      %v3504 = vmul.f32 %v3503, 0.6931472
      %v3505 = vlog2.pop %v3479
      %v3506 = vmul.f32 %v3505, 0.6931472
      %v3507 = vlog2.pop %v3480
      %v3508 = vmul.f32 %v3507, 0.6931472
      %v3509 = vlog2.pop %v3481
      %v3510 = vmul.f32 %v3509, 0.6931472
      %v3511 = vlog2.pop %v3482
      %v3512 = vmul.f32 %v3511, 0.6931472
      %v3513 = vlog2.pop %v3483
      %v3514 = vmul.f32 %v3513, 0.6931472
      %v3515 = vlog2.pop %v3484
      %v3516 = vmul.f32 %v3515, 0.6931472
      %v3517 = vadd.f32 %v3389, %v3486
      %v3518 = vadd.f32 %v3390, %v3488
      %v3519 = vadd.f32 %v3391, %v3490
      %v3520 = vadd.f32 %v3392, %v3492
      %v3521 = vadd.f32 %v3393, %v3494
      %v3522 = vadd.f32 %v3394, %v3496
      %v3523 = vadd.f32 %v3395, %v3498
      %v3524 = vadd.f32 %v3396, %v3500
      %v3525 = vadd.f32 %v3397, %v3502
      %v3526 = vadd.f32 %v3398, %v3504
      %v3527 = vadd.f32 %v3399, %v3506
      %v3528 = vadd.f32 %v3400, %v3508
      %v3529 = vadd.f32 %v3401, %v3510
      %v3530 = vadd.f32 %v3402, %v3512
      %v3531 = vadd.f32 %v3403, %v3514
      %v3532 = vadd.f32 %v3404, %v3516
      %v3533 = vld [vmem:[%s11] sm:$0xff]
      %v3534 = vmul.f32 %v3533, 1.442695
      %v3535 = vpow.pop %v3534
      %v3536 = vsub.f32 0.0, %v3535
      %v3553 = vrot.slane %v3517, 1
      %v3554 = vrot.slane %v3517, 2
      %v3555 = vrot.slane %v3517, 3
      %v3556 = vrot.slane %v3517, 4
      %v3557 = vrot.slane %v3517, 5
      %v3558 = vrot.slane %v3517, 6
      %v3559 = vrot.slane %v3517, 7
      %v3560 = vrot.slane %v3518, 1
      %v3561 = vrot.slane %v3518, 2
      %v3562 = vrot.slane %v3518, 3
      %v3563 = vrot.slane %v3518, 4
      %v3564 = vrot.slane %v3518, 5
      %v3565 = vrot.slane %v3518, 6
      %v3566 = vrot.slane %v3518, 7
      %v3567 = vrot.slane %v3519, 1
      %v3568 = vrot.slane %v3519, 2
      %v3569 = vrot.slane %v3519, 3
      %v3570 = vrot.slane %v3519, 4
      %v3571 = vrot.slane %v3519, 5
      %v3572 = vrot.slane %v3519, 6
      %v3573 = vrot.slane %v3519, 7
      %v3574 = vrot.slane %v3520, 1
      %v3575 = vrot.slane %v3520, 2
      %v3576 = vrot.slane %v3520, 3
      %v3577 = vrot.slane %v3520, 4
      %v3578 = vrot.slane %v3520, 5
      %v3579 = vrot.slane %v3520, 6
      %v3580 = vrot.slane %v3520, 7
      %v3581 = vrot.slane %v3521, 1
      %v3582 = vrot.slane %v3521, 2
      %v3583 = vrot.slane %v3521, 3
      %v3584 = vrot.slane %v3521, 4
      %v3585 = vrot.slane %v3521, 5
      %v3586 = vrot.slane %v3521, 6
      %v3587 = vrot.slane %v3521, 7
      %v3588 = vrot.slane %v3522, 1
      %v3589 = vrot.slane %v3522, 2
      %v3590 = vrot.slane %v3522, 3
      %v3591 = vrot.slane %v3522, 4
      %v3592 = vrot.slane %v3522, 5
      %v3593 = vrot.slane %v3522, 6
      %v3594 = vrot.slane %v3522, 7
      %v3595 = vrot.slane %v3523, 1
      %v3596 = vrot.slane %v3523, 2
      %v3597 = vrot.slane %v3523, 3
      %v3598 = vrot.slane %v3523, 4
      %v3599 = vrot.slane %v3523, 5
      %v3600 = vrot.slane %v3523, 6
      %v3601 = vrot.slane %v3523, 7
      %v3602 = vrot.slane %v3524, 1
      %v3603 = vrot.slane %v3524, 2
      %v3604 = vrot.slane %v3524, 3
      %v3605 = vrot.slane %v3524, 4
      %v3606 = vrot.slane %v3524, 5
      %v3607 = vrot.slane %v3524, 6
      %v3608 = vrot.slane %v3524, 7
      %v3609 = vrot.slane %v3525, 1
      %v3610 = vrot.slane %v3525, 2
      %v3611 = vrot.slane %v3525, 3
      %v3612 = vrot.slane %v3525, 4
      %v3613 = vrot.slane %v3525, 5
      %v3614 = vrot.slane %v3525, 6
      %v3615 = vrot.slane %v3525, 7
      %v3616 = vrot.slane %v3526, 1
      %v3617 = vrot.slane %v3526, 2
      %v3618 = vrot.slane %v3526, 3
      %v3619 = vrot.slane %v3526, 4
      %v3620 = vrot.slane %v3526, 5
      %v3621 = vrot.slane %v3526, 6
      %v3622 = vrot.slane %v3526, 7
      %v3623 = vrot.slane %v3527, 1
      %v3624 = vrot.slane %v3527, 2
      %v3625 = vrot.slane %v3527, 3
      %v3626 = vrot.slane %v3527, 4
      %v3627 = vrot.slane %v3527, 5
      %v3628 = vrot.slane %v3527, 6
      %v3629 = vrot.slane %v3527, 7
      %v3630 = vrot.slane %v3528, 1
      %v3631 = vrot.slane %v3528, 2
      %v3632 = vrot.slane %v3528, 3
      %v3633 = vrot.slane %v3528, 4
      %v3634 = vrot.slane %v3528, 5
      %v3635 = vrot.slane %v3528, 6
      %v3636 = vrot.slane %v3528, 7
      %v3637 = vrot.slane %v3529, 1
      %v3638 = vrot.slane %v3529, 2
      %v3639 = vrot.slane %v3529, 3
      %v3640 = vrot.slane %v3529, 4
      %v3641 = vrot.slane %v3529, 5
      %v3642 = vrot.slane %v3529, 6
      %v3643 = vrot.slane %v3529, 7
      %v3644 = vrot.slane %v3530, 1
      %v3645 = vrot.slane %v3530, 2
      %v3646 = vrot.slane %v3530, 3
      %v3647 = vrot.slane %v3530, 4
      %v3648 = vrot.slane %v3530, 5
      %v3649 = vrot.slane %v3530, 6
      %v3650 = vrot.slane %v3530, 7
      %v3651 = vrot.slane %v3531, 1
      %v3652 = vrot.slane %v3531, 2
      %v3653 = vrot.slane %v3531, 3
      %v3654 = vrot.slane %v3531, 4
      %v3655 = vrot.slane %v3531, 5
      %v3656 = vrot.slane %v3531, 6
      %v3657 = vrot.slane %v3531, 7
      %v3658 = vrot.slane %v3532, 1
      %v3659 = vrot.slane %v3532, 2
      %v3660 = vrot.slane %v3532, 3
      %v3661 = vrot.slane %v3532, 4
      %v3662 = vrot.slane %v3532, 5
      %v3663 = vrot.slane %v3532, 6
      %v3664 = vrot.slane %v3532, 7
      %v3665 = vperm.slane %v3517, 0
      %v3666 = vperm.slane %v3553, 0
      %v3667 = vperm.slane %v3554, 0
      %v3668 = vperm.slane %v3555, 0
      %v3669 = vperm.slane %v3556, 0
      %v3670 = vperm.slane %v3557, 0
      %v3671 = vperm.slane %v3558, 0
      %v3672 = vperm.slane %v3559, 0
      %v3673 = vperm.slane %v3518, 0
      %v3674 = vperm.slane %v3560, 0
      %v3675 = vperm.slane %v3561, 0
      %v3676 = vperm.slane %v3562, 0
      %v3677 = vperm.slane %v3563, 0
      %v3678 = vperm.slane %v3564, 0
      %v3679 = vperm.slane %v3565, 0
      %v3680 = vperm.slane %v3566, 0
      %v3681 = vperm.slane %v3519, 0
      %v3682 = vperm.slane %v3567, 0
      %v3683 = vperm.slane %v3568, 0
      %v3684 = vperm.slane %v3569, 0
      %v3685 = vperm.slane %v3570, 0
      %v3686 = vperm.slane %v3571, 0
      %v3687 = vperm.slane %v3572, 0
      %v3688 = vperm.slane %v3573, 0
      %v3689 = vperm.slane %v3520, 0
      %v3690 = vperm.slane %v3574, 0
      %v3691 = vperm.slane %v3575, 0
      %v3692 = vperm.slane %v3576, 0
      %v3693 = vperm.slane %v3577, 0
      %v3694 = vperm.slane %v3578, 0
      %v3695 = vperm.slane %v3579, 0
      %v3696 = vperm.slane %v3580, 0
      %v3697 = vperm.slane %v3521, 0
      %v3698 = vperm.slane %v3581, 0
      %v3699 = vperm.slane %v3582, 0
      %v3700 = vperm.slane %v3583, 0
      %v3701 = vperm.slane %v3584, 0
      %v3702 = vperm.slane %v3585, 0
      %v3703 = vperm.slane %v3586, 0
      %v3704 = vperm.slane %v3587, 0
      %v3705 = vperm.slane %v3522, 0
      %v3706 = vperm.slane %v3588, 0
      %v3707 = vperm.slane %v3589, 0
      %v3708 = vperm.slane %v3590, 0
      %v3709 = vperm.slane %v3591, 0
      %v3710 = vperm.slane %v3592, 0
      %v3711 = vperm.slane %v3593, 0
      %v3712 = vperm.slane %v3594, 0
      %v3713 = vperm.slane %v3523, 0
      %v3714 = vperm.slane %v3595, 0
      %v3715 = vperm.slane %v3596, 0
      %v3716 = vperm.slane %v3597, 0
      %v3717 = vperm.slane %v3598, 0
      %v3718 = vperm.slane %v3599, 0
      %v3719 = vperm.slane %v3600, 0
      %v3720 = vperm.slane %v3601, 0
      %v3721 = vperm.slane %v3524, 0
      %v3722 = vperm.slane %v3602, 0
      %v3723 = vperm.slane %v3603, 0
      %v3724 = vperm.slane %v3604, 0
      %v3725 = vperm.slane %v3605, 0
      %v3726 = vperm.slane %v3606, 0
      %v3727 = vperm.slane %v3607, 0
      %v3728 = vperm.slane %v3608, 0
      %v3729 = vperm.slane %v3525, 0
      %v3730 = vperm.slane %v3609, 0
      %v3731 = vperm.slane %v3610, 0
      %v3732 = vperm.slane %v3611, 0
      %v3733 = vperm.slane %v3612, 0
      %v3734 = vperm.slane %v3613, 0
      %v3735 = vperm.slane %v3614, 0
      %v3736 = vperm.slane %v3615, 0
      %v3737 = vperm.slane %v3526, 0
      %v3738 = vperm.slane %v3616, 0
      %v3739 = vperm.slane %v3617, 0
      %v3740 = vperm.slane %v3618, 0
      %v3741 = vperm.slane %v3619, 0
      %v3742 = vperm.slane %v3620, 0
      %v3743 = vperm.slane %v3621, 0
      %v3744 = vperm.slane %v3622, 0
      %v3745 = vperm.slane %v3527, 0
      %v3746 = vperm.slane %v3623, 0
      %v3747 = vperm.slane %v3624, 0
      %v3748 = vperm.slane %v3625, 0
      %v3749 = vperm.slane %v3626, 0
      %v3750 = vperm.slane %v3627, 0
      %v3751 = vperm.slane %v3628, 0
      %v3752 = vperm.slane %v3629, 0
      %v3753 = vperm.slane %v3528, 0
      %v3754 = vperm.slane %v3630, 0
      %v3755 = vperm.slane %v3631, 0
      %v3756 = vperm.slane %v3632, 0
      %v3757 = vperm.slane %v3633, 0
      %v3758 = vperm.slane %v3634, 0
      %v3759 = vperm.slane %v3635, 0
      %v3760 = vperm.slane %v3636, 0
      %v3761 = vperm.slane %v3529, 0
      %v3762 = vperm.slane %v3637, 0
      %v3763 = vperm.slane %v3638, 0
      %v3764 = vperm.slane %v3639, 0
      %v3765 = vperm.slane %v3640, 0
      %v3766 = vperm.slane %v3641, 0
      %v3767 = vperm.slane %v3642, 0
      %v3768 = vperm.slane %v3643, 0
      %v3769 = vperm.slane %v3530, 0
      %v3770 = vperm.slane %v3644, 0
      %v3771 = vperm.slane %v3645, 0
      %v3772 = vperm.slane %v3646, 0
      %v3773 = vperm.slane %v3647, 0
      %v3774 = vperm.slane %v3648, 0
      %v3775 = vperm.slane %v3649, 0
      %v3776 = vperm.slane %v3650, 0
      %v3777 = vperm.slane %v3531, 0
      %v3778 = vperm.slane %v3651, 0
      %v3779 = vperm.slane %v3652, 0
      %v3780 = vperm.slane %v3653, 0
      %v3781 = vperm.slane %v3654, 0
      %v3782 = vperm.slane %v3655, 0
      %v3783 = vperm.slane %v3656, 0
      %v3784 = vperm.slane %v3657, 0
      %v3785 = vperm.slane %v3532, 0
      %v3786 = vperm.slane %v3658, 0
      %v3787 = vperm.slane %v3659, 0
      %v3788 = vperm.slane %v3660, 0
      %v3789 = vperm.slane %v3661, 0
      %v3790 = vperm.slane %v3662, 0
      %v3791 = vperm.slane %v3663, 0
      %v3792 = vperm.slane %v3664, 0
      %v3921 = vmul.f32 %v3665, %v3536
      %v3922 = vmul.f32 %v3666, %v3536
      %v3923 = vmul.f32 %v3667, %v3536
      %v3924 = vmul.f32 %v3668, %v3536
      %v3925 = vmul.f32 %v3669, %v3536
      %v3926 = vmul.f32 %v3670, %v3536
      %v3927 = vmul.f32 %v3671, %v3536
      %v3928 = vmul.f32 %v3672, %v3536
      %v3929 = vmul.f32 %v3673, %v3536
      %v3930 = vmul.f32 %v3674, %v3536
      %v3931 = vmul.f32 %v3675, %v3536
      %v3932 = vmul.f32 %v3676, %v3536
      %v3933 = vmul.f32 %v3677, %v3536
      %v3934 = vmul.f32 %v3678, %v3536
      %v3935 = vmul.f32 %v3679, %v3536
      %v3936 = vmul.f32 %v3680, %v3536
      %v3937 = vmul.f32 %v3681, %v3536
      %v3938 = vmul.f32 %v3682, %v3536
      %v3939 = vmul.f32 %v3683, %v3536
      %v3940 = vmul.f32 %v3684, %v3536
      %v3941 = vmul.f32 %v3685, %v3536
      %v3942 = vmul.f32 %v3686, %v3536
      %v3943 = vmul.f32 %v3687, %v3536
      %v3944 = vmul.f32 %v3688, %v3536
      %v3945 = vmul.f32 %v3689, %v3536
      %v3946 = vmul.f32 %v3690, %v3536
      %v3947 = vmul.f32 %v3691, %v3536
      %v3948 = vmul.f32 %v3692, %v3536
      %v3949 = vmul.f32 %v3693, %v3536
      %v3950 = vmul.f32 %v3694, %v3536
      %v3951 = vmul.f32 %v3695, %v3536
      %v3952 = vmul.f32 %v3696, %v3536
      %v3953 = vmul.f32 %v3697, %v3536
      %v3954 = vmul.f32 %v3698, %v3536
      %v3955 = vmul.f32 %v3699, %v3536
      %v3956 = vmul.f32 %v3700, %v3536
      %v3957 = vmul.f32 %v3701, %v3536
      %v3958 = vmul.f32 %v3702, %v3536
      %v3959 = vmul.f32 %v3703, %v3536
      %v3960 = vmul.f32 %v3704, %v3536
      %v3961 = vmul.f32 %v3705, %v3536
      %v3962 = vmul.f32 %v3706, %v3536
      %v3963 = vmul.f32 %v3707, %v3536
      %v3964 = vmul.f32 %v3708, %v3536
      %v3965 = vmul.f32 %v3709, %v3536
      %v3966 = vmul.f32 %v3710, %v3536
      %v3967 = vmul.f32 %v3711, %v3536
      %v3968 = vmul.f32 %v3712, %v3536
      %v3969 = vmul.f32 %v3713, %v3536
      %v3970 = vmul.f32 %v3714, %v3536
      %v3971 = vmul.f32 %v3715, %v3536
      %v3972 = vmul.f32 %v3716, %v3536
      %v3973 = vmul.f32 %v3717, %v3536
      %v3974 = vmul.f32 %v3718, %v3536
      %v3975 = vmul.f32 %v3719, %v3536
      %v3976 = vmul.f32 %v3720, %v3536
      %v3977 = vmul.f32 %v3721, %v3536
      %v3978 = vmul.f32 %v3722, %v3536
      %v3979 = vmul.f32 %v3723, %v3536
      %v3980 = vmul.f32 %v3724, %v3536
      %v3981 = vmul.f32 %v3725, %v3536
      %v3982 = vmul.f32 %v3726, %v3536
      %v3983 = vmul.f32 %v3727, %v3536
      %v3984 = vmul.f32 %v3728, %v3536
      %v3985 = vmul.f32 %v3729, %v3536
      %v3986 = vmul.f32 %v3730, %v3536
      %v3987 = vmul.f32 %v3731, %v3536
      %v3988 = vmul.f32 %v3732, %v3536
      %v3989 = vmul.f32 %v3733, %v3536
      %v3990 = vmul.f32 %v3734, %v3536
      %v3991 = vmul.f32 %v3735, %v3536
      %v3992 = vmul.f32 %v3736, %v3536
      %v3993 = vmul.f32 %v3737, %v3536
      %v3994 = vmul.f32 %v3738, %v3536
      %v3995 = vmul.f32 %v3739, %v3536
      %v3996 = vmul.f32 %v3740, %v3536
      %v3997 = vmul.f32 %v3741, %v3536
      %v3998 = vmul.f32 %v3742, %v3536
      %v3999 = vmul.f32 %v3743, %v3536
      %v4000 = vmul.f32 %v3744, %v3536
      %v4001 = vmul.f32 %v3745, %v3536
      %v4002 = vmul.f32 %v3746, %v3536
      %v4003 = vmul.f32 %v3747, %v3536
      %v4004 = vmul.f32 %v3748, %v3536
      %v4005 = vmul.f32 %v3749, %v3536
      %v4006 = vmul.f32 %v3750, %v3536
      %v4007 = vmul.f32 %v3751, %v3536
      %v4008 = vmul.f32 %v3752, %v3536
      %v4009 = vmul.f32 %v3753, %v3536
      %v4010 = vmul.f32 %v3754, %v3536
      %v4011 = vmul.f32 %v3755, %v3536
      %v4012 = vmul.f32 %v3756, %v3536
      %v4013 = vmul.f32 %v3757, %v3536
      %v4014 = vmul.f32 %v3758, %v3536
      %v4015 = vmul.f32 %v3759, %v3536
      %v4016 = vmul.f32 %v3760, %v3536
      %v4017 = vmul.f32 %v3761, %v3536
      %v4018 = vmul.f32 %v3762, %v3536
      %v4019 = vmul.f32 %v3763, %v3536
      %v4020 = vmul.f32 %v3764, %v3536
      %v4021 = vmul.f32 %v3765, %v3536
      %v4022 = vmul.f32 %v3766, %v3536
      %v4023 = vmul.f32 %v3767, %v3536
      %v4024 = vmul.f32 %v3768, %v3536
      %v4025 = vmul.f32 %v3769, %v3536
      %v4026 = vmul.f32 %v3770, %v3536
      %v4027 = vmul.f32 %v3771, %v3536
      %v4028 = vmul.f32 %v3772, %v3536
      %v4029 = vmul.f32 %v3773, %v3536
      %v4030 = vmul.f32 %v3774, %v3536
      %v4031 = vmul.f32 %v3775, %v3536
      %v4032 = vmul.f32 %v3776, %v3536
      %v4033 = vmul.f32 %v3777, %v3536
      %v4034 = vmul.f32 %v3778, %v3536
      %v4035 = vmul.f32 %v3779, %v3536
      %v4036 = vmul.f32 %v3780, %v3536
      %v4037 = vmul.f32 %v3781, %v3536
      %v4038 = vmul.f32 %v3782, %v3536
      %v4039 = vmul.f32 %v3783, %v3536
      %v4040 = vmul.f32 %v3784, %v3536
      %v4041 = vmul.f32 %v3785, %v3536
      %v4042 = vmul.f32 %v3786, %v3536
      %v4043 = vmul.f32 %v3787, %v3536
      %v4044 = vmul.f32 %v3788, %v3536
      %v4045 = vmul.f32 %v3789, %v3536
      %v4046 = vmul.f32 %v3790, %v3536
      %v4047 = vmul.f32 %v3791, %v3536
      %v4048 = vmul.f32 %v3792, %v3536
      %v4049 = vmul.f32 %v3921, 1.442695
      %v4050 = vpow.pop %v4049
      %v4051 = vmul.f32 %v3922, 1.442695
      %v4052 = vpow.pop %v4051
      %v4053 = vmul.f32 %v3923, 1.442695
      %v4054 = vpow.pop %v4053
      %v4055 = vmul.f32 %v3924, 1.442695
      %v4056 = vpow.pop %v4055
      %v4057 = vmul.f32 %v3925, 1.442695
      %v4058 = vpow.pop %v4057
      %v4059 = vmul.f32 %v3926, 1.442695
      %v4060 = vpow.pop %v4059
      %v4061 = vmul.f32 %v3927, 1.442695
      %v4062 = vpow.pop %v4061
      %v4063 = vmul.f32 %v3928, 1.442695
      %v4064 = vpow.pop %v4063
      %v4065 = vmul.f32 %v3929, 1.442695
      %v4066 = vpow.pop %v4065
      %v4067 = vmul.f32 %v3930, 1.442695
      %v4068 = vpow.pop %v4067
      %v4069 = vmul.f32 %v3931, 1.442695
      %v4070 = vpow.pop %v4069
      %v4071 = vmul.f32 %v3932, 1.442695
      %v4072 = vpow.pop %v4071
      %v4073 = vmul.f32 %v3933, 1.442695
      %v4074 = vpow.pop %v4073
      %v4075 = vmul.f32 %v3934, 1.442695
      %v4076 = vpow.pop %v4075
      %v4077 = vmul.f32 %v3935, 1.442695
      %v4078 = vpow.pop %v4077
      %v4079 = vmul.f32 %v3936, 1.442695
      %v4080 = vpow.pop %v4079
      %v4081 = vmul.f32 %v3937, 1.442695
      %v4082 = vpow.pop %v4081
      %v4083 = vmul.f32 %v3938, 1.442695
      %v4084 = vpow.pop %v4083
      %v4085 = vmul.f32 %v3939, 1.442695
      %v4086 = vpow.pop %v4085
      %v4087 = vmul.f32 %v3940, 1.442695
      %v4088 = vpow.pop %v4087
      %v4089 = vmul.f32 %v3941, 1.442695
      %v4090 = vpow.pop %v4089
      %v4091 = vmul.f32 %v3942, 1.442695
      %v4092 = vpow.pop %v4091
      %v4093 = vmul.f32 %v3943, 1.442695
      %v4094 = vpow.pop %v4093
      %v4095 = vmul.f32 %v3944, 1.442695
      %v4096 = vpow.pop %v4095
      %v4097 = vmul.f32 %v3945, 1.442695
      %v4098 = vpow.pop %v4097
      %v4099 = vmul.f32 %v3946, 1.442695
      %v4100 = vpow.pop %v4099
      %v4101 = vmul.f32 %v3947, 1.442695
      %v4102 = vpow.pop %v4101
      %v4103 = vmul.f32 %v3948, 1.442695
      %v4104 = vpow.pop %v4103
      %v4105 = vmul.f32 %v3949, 1.442695
      %v4106 = vpow.pop %v4105
      %v4107 = vmul.f32 %v3950, 1.442695
      %v4108 = vpow.pop %v4107
      %v4109 = vmul.f32 %v3951, 1.442695
      %v4110 = vpow.pop %v4109
      %v4111 = vmul.f32 %v3952, 1.442695
      %v4112 = vpow.pop %v4111
      %v4113 = vmul.f32 %v3953, 1.442695
      %v4114 = vpow.pop %v4113
      %v4115 = vmul.f32 %v3954, 1.442695
      %v4116 = vpow.pop %v4115
      %v4117 = vmul.f32 %v3955, 1.442695
      %v4118 = vpow.pop %v4117
      %v4119 = vmul.f32 %v3956, 1.442695
      %v4120 = vpow.pop %v4119
      %v4121 = vmul.f32 %v3957, 1.442695
      %v4122 = vpow.pop %v4121
      %v4123 = vmul.f32 %v3958, 1.442695
      %v4124 = vpow.pop %v4123
      %v4125 = vmul.f32 %v3959, 1.442695
      %v4126 = vpow.pop %v4125
      %v4127 = vmul.f32 %v3960, 1.442695
      %v4128 = vpow.pop %v4127
      %v4129 = vmul.f32 %v3961, 1.442695
      %v4130 = vpow.pop %v4129
      %v4131 = vmul.f32 %v3962, 1.442695
      %v4132 = vpow.pop %v4131
      %v4133 = vmul.f32 %v3963, 1.442695
      %v4134 = vpow.pop %v4133
      %v4135 = vmul.f32 %v3964, 1.442695
      %v4136 = vpow.pop %v4135
      %v4137 = vmul.f32 %v3965, 1.442695
      %v4138 = vpow.pop %v4137
      %v4139 = vmul.f32 %v3966, 1.442695
      %v4140 = vpow.pop %v4139
      %v4141 = vmul.f32 %v3967, 1.442695
      %v4142 = vpow.pop %v4141
      %v4143 = vmul.f32 %v3968, 1.442695
      %v4144 = vpow.pop %v4143
      %v4145 = vmul.f32 %v3969, 1.442695
      %v4146 = vpow.pop %v4145
      %v4147 = vmul.f32 %v3970, 1.442695
      %v4148 = vpow.pop %v4147
      %v4149 = vmul.f32 %v3971, 1.442695
      %v4150 = vpow.pop %v4149
      %v4151 = vmul.f32 %v3972, 1.442695
      %v4152 = vpow.pop %v4151
      %v4153 = vmul.f32 %v3973, 1.442695
      %v4154 = vpow.pop %v4153
      %v4155 = vmul.f32 %v3974, 1.442695
      %v4156 = vpow.pop %v4155
      %v4157 = vmul.f32 %v3975, 1.442695
      %v4158 = vpow.pop %v4157
      %v4159 = vmul.f32 %v3976, 1.442695
      %v4160 = vpow.pop %v4159
      %v4161 = vmul.f32 %v3977, 1.442695
      %v4162 = vpow.pop %v4161
      %v4163 = vmul.f32 %v3978, 1.442695
      %v4164 = vpow.pop %v4163
      %v4165 = vmul.f32 %v3979, 1.442695
      %v4166 = vpow.pop %v4165
      %v4167 = vmul.f32 %v3980, 1.442695
      %v4168 = vpow.pop %v4167
      %v4169 = vmul.f32 %v3981, 1.442695
      %v4170 = vpow.pop %v4169
      %v4171 = vmul.f32 %v3982, 1.442695
      %v4172 = vpow.pop %v4171
      %v4173 = vmul.f32 %v3983, 1.442695
      %v4174 = vpow.pop %v4173
      %v4175 = vmul.f32 %v3984, 1.442695
      %v4176 = vpow.pop %v4175
      %v4177 = vmul.f32 %v3985, 1.442695
      %v4178 = vpow.pop %v4177
      %v4179 = vmul.f32 %v3986, 1.442695
      %v4180 = vpow.pop %v4179
      %v4181 = vmul.f32 %v3987, 1.442695
      %v4182 = vpow.pop %v4181
      %v4183 = vmul.f32 %v3988, 1.442695
      %v4184 = vpow.pop %v4183
      %v4185 = vmul.f32 %v3989, 1.442695
      %v4186 = vpow.pop %v4185
      %v4187 = vmul.f32 %v3990, 1.442695
      %v4188 = vpow.pop %v4187
      %v4189 = vmul.f32 %v3991, 1.442695
      %v4190 = vpow.pop %v4189
      %v4191 = vmul.f32 %v3992, 1.442695
      %v4192 = vpow.pop %v4191
      %v4193 = vmul.f32 %v3993, 1.442695
      %v4194 = vpow.pop %v4193
      %v4195 = vmul.f32 %v3994, 1.442695
      %v4196 = vpow.pop %v4195
      %v4197 = vmul.f32 %v3995, 1.442695
      %v4198 = vpow.pop %v4197
      %v4199 = vmul.f32 %v3996, 1.442695
      %v4200 = vpow.pop %v4199
      %v4201 = vmul.f32 %v3997, 1.442695
      %v4202 = vpow.pop %v4201
      %v4203 = vmul.f32 %v3998, 1.442695
      %v4204 = vpow.pop %v4203
      %v4205 = vmul.f32 %v3999, 1.442695
      %v4206 = vpow.pop %v4205
      %v4207 = vmul.f32 %v4000, 1.442695
      %v4208 = vpow.pop %v4207
      %v4209 = vmul.f32 %v4001, 1.442695
      %v4210 = vpow.pop %v4209
      %v4211 = vmul.f32 %v4002, 1.442695
      %v4212 = vpow.pop %v4211
      %v4213 = vmul.f32 %v4003, 1.442695
      %v4214 = vpow.pop %v4213
      %v4215 = vmul.f32 %v4004, 1.442695
      %v4216 = vpow.pop %v4215
      %v4217 = vmul.f32 %v4005, 1.442695
      %v4218 = vpow.pop %v4217
      %v4219 = vmul.f32 %v4006, 1.442695
      %v4220 = vpow.pop %v4219
      %v4221 = vmul.f32 %v4007, 1.442695
      %v4222 = vpow.pop %v4221
      %v4223 = vmul.f32 %v4008, 1.442695
      %v4224 = vpow.pop %v4223
      %v4225 = vmul.f32 %v4009, 1.442695
      %v4226 = vpow.pop %v4225
      %v4227 = vmul.f32 %v4010, 1.442695
      %v4228 = vpow.pop %v4227
      %v4229 = vmul.f32 %v4011, 1.442695
      %v4230 = vpow.pop %v4229
      %v4231 = vmul.f32 %v4012, 1.442695
      %v4232 = vpow.pop %v4231
      %v4233 = vmul.f32 %v4013, 1.442695
      %v4234 = vpow.pop %v4233
      %v4235 = vmul.f32 %v4014, 1.442695
      %v4236 = vpow.pop %v4235
      %v4237 = vmul.f32 %v4015, 1.442695
      %v4238 = vpow.pop %v4237
      %v4239 = vmul.f32 %v4016, 1.442695
      %v4240 = vpow.pop %v4239
      %v4241 = vmul.f32 %v4017, 1.442695
      %v4242 = vpow.pop %v4241
      %v4243 = vmul.f32 %v4018, 1.442695
      %v4244 = vpow.pop %v4243
      %v4245 = vmul.f32 %v4019, 1.442695
      %v4246 = vpow.pop %v4245
      %v4247 = vmul.f32 %v4020, 1.442695
      %v4248 = vpow.pop %v4247
      %v4249 = vmul.f32 %v4021, 1.442695
      %v4250 = vpow.pop %v4249
      %v4251 = vmul.f32 %v4022, 1.442695
      %v4252 = vpow.pop %v4251
      %v4253 = vmul.f32 %v4023, 1.442695
      %v4254 = vpow.pop %v4253
      %v4255 = vmul.f32 %v4024, 1.442695
      %v4256 = vpow.pop %v4255
      %v4257 = vmul.f32 %v4025, 1.442695
      %v4258 = vpow.pop %v4257
      %v4259 = vmul.f32 %v4026, 1.442695
      %v4260 = vpow.pop %v4259
      %v4261 = vmul.f32 %v4027, 1.442695
      %v4262 = vpow.pop %v4261
      %v4263 = vmul.f32 %v4028, 1.442695
      %v4264 = vpow.pop %v4263
      %v4265 = vmul.f32 %v4029, 1.442695
      %v4266 = vpow.pop %v4265
      %v4267 = vmul.f32 %v4030, 1.442695
      %v4268 = vpow.pop %v4267
      %v4269 = vmul.f32 %v4031, 1.442695
      %v4270 = vpow.pop %v4269
      %v4271 = vmul.f32 %v4032, 1.442695
      %v4272 = vpow.pop %v4271
      %v4273 = vmul.f32 %v4033, 1.442695
      %v4274 = vpow.pop %v4273
      %v4275 = vmul.f32 %v4034, 1.442695
      %v4276 = vpow.pop %v4275
      %v4277 = vmul.f32 %v4035, 1.442695
      %v4278 = vpow.pop %v4277
      %v4279 = vmul.f32 %v4036, 1.442695
      %v4280 = vpow.pop %v4279
      %v4281 = vmul.f32 %v4037, 1.442695
      %v4282 = vpow.pop %v4281
      %v4283 = vmul.f32 %v4038, 1.442695
      %v4284 = vpow.pop %v4283
      %v4285 = vmul.f32 %v4039, 1.442695
      %v4286 = vpow.pop %v4285
      %v4287 = vmul.f32 %v4040, 1.442695
      %v4288 = vpow.pop %v4287
      %v4289 = vmul.f32 %v4041, 1.442695
      %v4290 = vpow.pop %v4289
      %v4291 = vmul.f32 %v4042, 1.442695
      %v4292 = vpow.pop %v4291
      %v4293 = vmul.f32 %v4043, 1.442695
      %v4294 = vpow.pop %v4293
      %v4295 = vmul.f32 %v4044, 1.442695
      %v4296 = vpow.pop %v4295
      %v4297 = vmul.f32 %v4045, 1.442695
      %v4298 = vpow.pop %v4297
      %v4299 = vmul.f32 %v4046, 1.442695
      %v4300 = vpow.pop %v4299
      %v4301 = vmul.f32 %v4047, 1.442695
      %v4302 = vpow.pop %v4301
      %v4303 = vmul.f32 %v4048, 1.442695
      %v4304 = vpow.pop %v4303
      %v4305 = vmul.f32 %v3517, %v3129
      %v4306 = vmul.f32 %v3518, %v3130
      %v4307 = vmul.f32 %v3519, %v3131
      %v4308 = vmul.f32 %v3520, %v3132
      %v4309 = vmul.f32 %v3521, %v3133
      %v4310 = vmul.f32 %v3522, %v3134
      %v4311 = vmul.f32 %v3523, %v3135
      %v4312 = vmul.f32 %v3524, %v3136
      %v4313 = vmul.f32 %v3525, %v3137
      %v4314 = vmul.f32 %v3526, %v3138
      %v4315 = vmul.f32 %v3527, %v3139
      %v4316 = vmul.f32 %v3528, %v3140
      %v4317 = vmul.f32 %v3529, %v3141
      %v4318 = vmul.f32 %v3530, %v3142
      %v4319 = vmul.f32 %v3531, %v3143
      %v4320 = vmul.f32 %v3532, %v3144
      %v4337 = vrot.slane %v4305, 1
      %v4338 = vrot.slane %v4305, 2
      %v4339 = vrot.slane %v4305, 3
      %v4340 = vrot.slane %v4305, 4
      %v4341 = vrot.slane %v4305, 5
      %v4342 = vrot.slane %v4305, 6
      %v4343 = vrot.slane %v4305, 7
      %v4344 = vrot.slane %v4306, 1
      %v4345 = vrot.slane %v4306, 2
      %v4346 = vrot.slane %v4306, 3
      %v4347 = vrot.slane %v4306, 4
      %v4348 = vrot.slane %v4306, 5
      %v4349 = vrot.slane %v4306, 6
      %v4350 = vrot.slane %v4306, 7
      %v4351 = vrot.slane %v4307, 1
      %v4352 = vrot.slane %v4307, 2
      %v4353 = vrot.slane %v4307, 3
      %v4354 = vrot.slane %v4307, 4
      %v4355 = vrot.slane %v4307, 5
      %v4356 = vrot.slane %v4307, 6
      %v4357 = vrot.slane %v4307, 7
      %v4358 = vrot.slane %v4308, 1
      %v4359 = vrot.slane %v4308, 2
      %v4360 = vrot.slane %v4308, 3
      %v4361 = vrot.slane %v4308, 4
      %v4362 = vrot.slane %v4308, 5
      %v4363 = vrot.slane %v4308, 6
      %v4364 = vrot.slane %v4308, 7
      %v4365 = vrot.slane %v4309, 1
      %v4366 = vrot.slane %v4309, 2
      %v4367 = vrot.slane %v4309, 3
      %v4368 = vrot.slane %v4309, 4
      %v4369 = vrot.slane %v4309, 5
      %v4370 = vrot.slane %v4309, 6
      %v4371 = vrot.slane %v4309, 7
      %v4372 = vrot.slane %v4310, 1
      %v4373 = vrot.slane %v4310, 2
      %v4374 = vrot.slane %v4310, 3
      %v4375 = vrot.slane %v4310, 4
      %v4376 = vrot.slane %v4310, 5
      %v4377 = vrot.slane %v4310, 6
      %v4378 = vrot.slane %v4310, 7
      %v4379 = vrot.slane %v4311, 1
      %v4380 = vrot.slane %v4311, 2
      %v4381 = vrot.slane %v4311, 3
      %v4382 = vrot.slane %v4311, 4
      %v4383 = vrot.slane %v4311, 5
      %v4384 = vrot.slane %v4311, 6
      %v4385 = vrot.slane %v4311, 7
      %v4386 = vrot.slane %v4312, 1
      %v4387 = vrot.slane %v4312, 2
      %v4388 = vrot.slane %v4312, 3
      %v4389 = vrot.slane %v4312, 4
      %v4390 = vrot.slane %v4312, 5
      %v4391 = vrot.slane %v4312, 6
      %v4392 = vrot.slane %v4312, 7
      %v4393 = vrot.slane %v4313, 1
      %v4394 = vrot.slane %v4313, 2
      %v4395 = vrot.slane %v4313, 3
      %v4396 = vrot.slane %v4313, 4
      %v4397 = vrot.slane %v4313, 5
      %v4398 = vrot.slane %v4313, 6
      %v4399 = vrot.slane %v4313, 7
      %v4400 = vrot.slane %v4314, 1
      %v4401 = vrot.slane %v4314, 2
      %v4402 = vrot.slane %v4314, 3
      %v4403 = vrot.slane %v4314, 4
      %v4404 = vrot.slane %v4314, 5
      %v4405 = vrot.slane %v4314, 6
      %v4406 = vrot.slane %v4314, 7
      %v4407 = vrot.slane %v4315, 1
      %v4408 = vrot.slane %v4315, 2
      %v4409 = vrot.slane %v4315, 3
      %v4410 = vrot.slane %v4315, 4
      %v4411 = vrot.slane %v4315, 5
      %v4412 = vrot.slane %v4315, 6
      %v4413 = vrot.slane %v4315, 7
      %v4414 = vrot.slane %v4316, 1
      %v4415 = vrot.slane %v4316, 2
      %v4416 = vrot.slane %v4316, 3
      %v4417 = vrot.slane %v4316, 4
      %v4418 = vrot.slane %v4316, 5
      %v4419 = vrot.slane %v4316, 6
      %v4420 = vrot.slane %v4316, 7
      %v4421 = vrot.slane %v4317, 1
      %v4422 = vrot.slane %v4317, 2
      %v4423 = vrot.slane %v4317, 3
      %v4424 = vrot.slane %v4317, 4
      %v4425 = vrot.slane %v4317, 5
      %v4426 = vrot.slane %v4317, 6
      %v4427 = vrot.slane %v4317, 7
      %v4428 = vrot.slane %v4318, 1
      %v4429 = vrot.slane %v4318, 2
      %v4430 = vrot.slane %v4318, 3
      %v4431 = vrot.slane %v4318, 4
      %v4432 = vrot.slane %v4318, 5
      %v4433 = vrot.slane %v4318, 6
      %v4434 = vrot.slane %v4318, 7
      %v4435 = vrot.slane %v4319, 1
      %v4436 = vrot.slane %v4319, 2
      %v4437 = vrot.slane %v4319, 3
      %v4438 = vrot.slane %v4319, 4
      %v4439 = vrot.slane %v4319, 5
      %v4440 = vrot.slane %v4319, 6
      %v4441 = vrot.slane %v4319, 7
      %v4442 = vrot.slane %v4320, 1
      %v4443 = vrot.slane %v4320, 2
      %v4444 = vrot.slane %v4320, 3
      %v4445 = vrot.slane %v4320, 4
      %v4446 = vrot.slane %v4320, 5
      %v4447 = vrot.slane %v4320, 6
      %v4448 = vrot.slane %v4320, 7
      %v4449 = vperm.slane %v3219, 0
      %v4450 = vlaneseq
      %v4451 = vshrl.u32 %v4450, 7
      %v4452 = vadd.s32 %v4451, 2
      %4453 = vset.pattern.permute.xlu0 %v4452
      %4454 = vperm.xlu0 %4453, %v4449
      %v4455 = vpop.permute.xlu0 %4454
      %v4456 = vperm.slane %v3219, 1
      %v4457 = vlaneseq
      %v4458 = vshrl.u32 %v4457, 7
      %v4459 = vadd.s32 %v4458, 2
      %4460 = vset.pattern.permute.xlu0 %v4459
      %4461 = vperm.xlu0 %4460, %v4456
      %v4462 = vpop.permute.xlu0 %4461
      %v4463 = vperm.slane %v3219, 2
      %v4464 = vlaneseq
      %v4465 = vshrl.u32 %v4464, 7
      %v4466 = vadd.s32 %v4465, 2
      %4467 = vset.pattern.permute.xlu0 %v4466
      %4468 = vperm.xlu0 %4467, %v4463
      %v4469 = vpop.permute.xlu0 %4468
      %v4470 = vperm.slane %v3219, 3
      %v4471 = vlaneseq
      %v4472 = vshrl.u32 %v4471, 7
      %v4473 = vadd.s32 %v4472, 2
      %4474 = vset.pattern.permute.xlu0 %v4473
      %4475 = vperm.xlu0 %4474, %v4470
      %v4476 = vpop.permute.xlu0 %4475
      %v4477 = vperm.slane %v3219, 4
      %v4478 = vlaneseq
      %v4479 = vshrl.u32 %v4478, 7
      %v4480 = vadd.s32 %v4479, 2
      %4481 = vset.pattern.permute.xlu0 %v4480
      %4482 = vperm.xlu0 %4481, %v4477
      %v4483 = vpop.permute.xlu0 %4482
      %v4484 = vperm.slane %v3219, 5
      %v4485 = vlaneseq
      %v4486 = vshrl.u32 %v4485, 7
      %v4487 = vadd.s32 %v4486, 2
      %4488 = vset.pattern.permute.xlu0 %v4487
      %4489 = vperm.xlu0 %4488, %v4484
      %v4490 = vpop.permute.xlu0 %4489
      %v4491 = vperm.slane %v3219, 6
      %v4492 = vlaneseq
      %v4493 = vshrl.u32 %v4492, 7
      %v4494 = vadd.s32 %v4493, 2
      %4495 = vset.pattern.permute.xlu0 %v4494
      %4496 = vperm.xlu0 %4495, %v4491
      %v4497 = vpop.permute.xlu0 %4496
      %v4498 = vperm.slane %v3219, 7
      %v4499 = vlaneseq
      %v4500 = vshrl.u32 %v4499, 7
      %v4501 = vadd.s32 %v4500, 2
      %4502 = vset.pattern.permute.xlu0 %v4501
      %4503 = vperm.xlu0 %4502, %v4498
      %v4504 = vpop.permute.xlu0 %4503
      %v4505 = vperm.slane %v3222, 0
      %v4506 = vlaneseq
      %v4507 = vshrl.u32 %v4506, 7
      %v4508 = vadd.s32 %v4507, 2
      %4509 = vset.pattern.permute.xlu0 %v4508
      %4510 = vperm.xlu0 %4509, %v4505
      %v4511 = vpop.permute.xlu0 %4510
      %v4512 = vperm.slane %v3222, 1
      %v4513 = vlaneseq
      %v4514 = vshrl.u32 %v4513, 7
      %v4515 = vadd.s32 %v4514, 2
      %4516 = vset.pattern.permute.xlu0 %v4515
      %4517 = vperm.xlu0 %4516, %v4512
      %v4518 = vpop.permute.xlu0 %4517
      %v4519 = vperm.slane %v3222, 2
      %v4520 = vlaneseq
      %v4521 = vshrl.u32 %v4520, 7
      %v4522 = vadd.s32 %v4521, 2
      %4523 = vset.pattern.permute.xlu0 %v4522
      %4524 = vperm.xlu0 %4523, %v4519
      %v4525 = vpop.permute.xlu0 %4524
      %v4526 = vperm.slane %v3222, 3
      %v4527 = vlaneseq
      %v4528 = vshrl.u32 %v4527, 7
      %v4529 = vadd.s32 %v4528, 2
      %4530 = vset.pattern.permute.xlu0 %v4529
      %4531 = vperm.xlu0 %4530, %v4526
      %v4532 = vpop.permute.xlu0 %4531
      %v4533 = vperm.slane %v3222, 4
      %v4534 = vlaneseq
      %v4535 = vshrl.u32 %v4534, 7
      %v4536 = vadd.s32 %v4535, 2
      %4537 = vset.pattern.permute.xlu0 %v4536
      %4538 = vperm.xlu0 %4537, %v4533
      %v4539 = vpop.permute.xlu0 %4538
      %v4540 = vperm.slane %v3222, 5
      %v4541 = vlaneseq
      %v4542 = vshrl.u32 %v4541, 7
      %v4543 = vadd.s32 %v4542, 2
      %4544 = vset.pattern.permute.xlu0 %v4543
      %4545 = vperm.xlu0 %4544, %v4540
      %v4546 = vpop.permute.xlu0 %4545
      %v4547 = vperm.slane %v3222, 6
      %v4548 = vlaneseq
      %v4549 = vshrl.u32 %v4548, 7
      %v4550 = vadd.s32 %v4549, 2
      %4551 = vset.pattern.permute.xlu0 %v4550
      %4552 = vperm.xlu0 %4551, %v4547
      %v4553 = vpop.permute.xlu0 %4552
      %v4554 = vperm.slane %v3222, 7
      %v4555 = vlaneseq
      %v4556 = vshrl.u32 %v4555, 7
      %v4557 = vadd.s32 %v4556, 2
      %4558 = vset.pattern.permute.xlu0 %v4557
      %4559 = vperm.xlu0 %4558, %v4554
      %v4560 = vpop.permute.xlu0 %4559
      %v4561 = vperm.slane %v3225, 0
      %v4562 = vlaneseq
      %v4563 = vshrl.u32 %v4562, 7
      %v4564 = vadd.s32 %v4563, 2
      %4565 = vset.pattern.permute.xlu0 %v4564
      %4566 = vperm.xlu0 %4565, %v4561
      %v4567 = vpop.permute.xlu0 %4566
      %v4568 = vperm.slane %v3225, 1
      %v4569 = vlaneseq
      %v4570 = vshrl.u32 %v4569, 7
      %v4571 = vadd.s32 %v4570, 2
      %4572 = vset.pattern.permute.xlu0 %v4571
      %4573 = vperm.xlu0 %4572, %v4568
      %v4574 = vpop.permute.xlu0 %4573
      %v4575 = vperm.slane %v3225, 2
      %v4576 = vlaneseq
      %v4577 = vshrl.u32 %v4576, 7
      %v4578 = vadd.s32 %v4577, 2
      %4579 = vset.pattern.permute.xlu0 %v4578
      %4580 = vperm.xlu0 %4579, %v4575
      %v4581 = vpop.permute.xlu0 %4580
      %v4582 = vperm.slane %v3225, 3
      %v4583 = vlaneseq
      %v4584 = vshrl.u32 %v4583, 7
      %v4585 = vadd.s32 %v4584, 2
      %4586 = vset.pattern.permute.xlu0 %v4585
      %4587 = vperm.xlu0 %4586, %v4582
      %v4588 = vpop.permute.xlu0 %4587
      %v4589 = vperm.slane %v3225, 4
      %v4590 = vlaneseq
      %v4591 = vshrl.u32 %v4590, 7
      %v4592 = vadd.s32 %v4591, 2
      %4593 = vset.pattern.permute.xlu0 %v4592
      %4594 = vperm.xlu0 %4593, %v4589
      %v4595 = vpop.permute.xlu0 %4594
      %v4596 = vperm.slane %v3225, 5
      %v4597 = vlaneseq
      %v4598 = vshrl.u32 %v4597, 7
      %v4599 = vadd.s32 %v4598, 2
      %4600 = vset.pattern.permute.xlu0 %v4599
      %4601 = vperm.xlu0 %4600, %v4596
      %v4602 = vpop.permute.xlu0 %4601
      %v4603 = vperm.slane %v3225, 6
      %v4604 = vlaneseq
      %v4605 = vshrl.u32 %v4604, 7
      %v4606 = vadd.s32 %v4605, 2
      %4607 = vset.pattern.permute.xlu0 %v4606
      %4608 = vperm.xlu0 %4607, %v4603
      %v4609 = vpop.permute.xlu0 %4608
      %v4610 = vperm.slane %v3225, 7
      %v4611 = vlaneseq
      %v4612 = vshrl.u32 %v4611, 7
      %v4613 = vadd.s32 %v4612, 2
      %4614 = vset.pattern.permute.xlu0 %v4613
      %4615 = vperm.xlu0 %4614, %v4610
      %v4616 = vpop.permute.xlu0 %4615
      %v4617 = vperm.slane %v3228, 0
      %v4618 = vlaneseq
      %v4619 = vshrl.u32 %v4618, 7
      %v4620 = vadd.s32 %v4619, 2
      %4621 = vset.pattern.permute.xlu0 %v4620
      %4622 = vperm.xlu0 %4621, %v4617
      %v4623 = vpop.permute.xlu0 %4622
      %v4624 = vperm.slane %v3228, 1
      %v4625 = vlaneseq
      %v4626 = vshrl.u32 %v4625, 7
      %v4627 = vadd.s32 %v4626, 2
      %4628 = vset.pattern.permute.xlu0 %v4627
      %4629 = vperm.xlu0 %4628, %v4624
      %v4630 = vpop.permute.xlu0 %4629
      %v4631 = vperm.slane %v3228, 2
      %v4632 = vlaneseq
      %v4633 = vshrl.u32 %v4632, 7
      %v4634 = vadd.s32 %v4633, 2
      %4635 = vset.pattern.permute.xlu0 %v4634
      %4636 = vperm.xlu0 %4635, %v4631
      %v4637 = vpop.permute.xlu0 %4636
      %v4638 = vperm.slane %v3228, 3
      %v4639 = vlaneseq
      %v4640 = vshrl.u32 %v4639, 7
      %v4641 = vadd.s32 %v4640, 2
      %4642 = vset.pattern.permute.xlu0 %v4641
      %4643 = vperm.xlu0 %4642, %v4638
      %v4644 = vpop.permute.xlu0 %4643
      %v4645 = vperm.slane %v3228, 4
      %v4646 = vlaneseq
      %v4647 = vshrl.u32 %v4646, 7
      %v4648 = vadd.s32 %v4647, 2
      %4649 = vset.pattern.permute.xlu0 %v4648
      %4650 = vperm.xlu0 %4649, %v4645
      %v4651 = vpop.permute.xlu0 %4650
      %v4652 = vperm.slane %v3228, 5
      %v4653 = vlaneseq
      %v4654 = vshrl.u32 %v4653, 7
      %v4655 = vadd.s32 %v4654, 2
      %4656 = vset.pattern.permute.xlu0 %v4655
      %4657 = vperm.xlu0 %4656, %v4652
      %v4658 = vpop.permute.xlu0 %4657
      %v4659 = vperm.slane %v3228, 6
      %v4660 = vlaneseq
      %v4661 = vshrl.u32 %v4660, 7
      %v4662 = vadd.s32 %v4661, 2
      %4663 = vset.pattern.permute.xlu0 %v4662
      %4664 = vperm.xlu0 %4663, %v4659
      %v4665 = vpop.permute.xlu0 %4664
      %v4666 = vperm.slane %v3228, 7
      %v4667 = vlaneseq
      %v4668 = vshrl.u32 %v4667, 7
      %v4669 = vadd.s32 %v4668, 2
      %4670 = vset.pattern.permute.xlu0 %v4669
      %4671 = vperm.xlu0 %4670, %v4666
      %v4672 = vpop.permute.xlu0 %4671
      %v4673 = vperm.slane %v3231, 0
      %v4674 = vlaneseq
      %v4675 = vshrl.u32 %v4674, 7
      %v4676 = vadd.s32 %v4675, 2
      %4677 = vset.pattern.permute.xlu0 %v4676
      %4678 = vperm.xlu0 %4677, %v4673
      %v4679 = vpop.permute.xlu0 %4678
      %v4680 = vperm.slane %v3231, 1
      %v4681 = vlaneseq
      %v4682 = vshrl.u32 %v4681, 7
      %v4683 = vadd.s32 %v4682, 2
      %4684 = vset.pattern.permute.xlu0 %v4683
      %4685 = vperm.xlu0 %4684, %v4680
      %v4686 = vpop.permute.xlu0 %4685
      %v4687 = vperm.slane %v3231, 2
      %v4688 = vlaneseq
      %v4689 = vshrl.u32 %v4688, 7
      %v4690 = vadd.s32 %v4689, 2
      %4691 = vset.pattern.permute.xlu0 %v4690
      %4692 = vperm.xlu0 %4691, %v4687
      %v4693 = vpop.permute.xlu0 %4692
      %v4694 = vperm.slane %v3231, 3
      %v4695 = vlaneseq
      %v4696 = vshrl.u32 %v4695, 7
      %v4697 = vadd.s32 %v4696, 2
      %4698 = vset.pattern.permute.xlu0 %v4697
      %4699 = vperm.xlu0 %4698, %v4694
      %v4700 = vpop.permute.xlu0 %4699
      %v4701 = vperm.slane %v3231, 4
      %v4702 = vlaneseq
      %v4703 = vshrl.u32 %v4702, 7
      %v4704 = vadd.s32 %v4703, 2
      %4705 = vset.pattern.permute.xlu0 %v4704
      %4706 = vperm.xlu0 %4705, %v4701
      %v4707 = vpop.permute.xlu0 %4706
      %v4708 = vperm.slane %v3231, 5
      %v4709 = vlaneseq
      %v4710 = vshrl.u32 %v4709, 7
      %v4711 = vadd.s32 %v4710, 2
      %4712 = vset.pattern.permute.xlu0 %v4711
      %4713 = vperm.xlu0 %4712, %v4708
      %v4714 = vpop.permute.xlu0 %4713
      %v4715 = vperm.slane %v3231, 6
      %v4716 = vlaneseq
      %v4717 = vshrl.u32 %v4716, 7
      %v4718 = vadd.s32 %v4717, 2
      %4719 = vset.pattern.permute.xlu0 %v4718
      %4720 = vperm.xlu0 %4719, %v4715
      %v4721 = vpop.permute.xlu0 %4720
      %v4722 = vperm.slane %v3231, 7
      %v4723 = vlaneseq
      %v4724 = vshrl.u32 %v4723, 7
      %v4725 = vadd.s32 %v4724, 2
      %4726 = vset.pattern.permute.xlu0 %v4725
      %4727 = vperm.xlu0 %4726, %v4722
      %v4728 = vpop.permute.xlu0 %4727
      %v4729 = vperm.slane %v3234, 0
      %v4730 = vlaneseq
      %v4731 = vshrl.u32 %v4730, 7
      %v4732 = vadd.s32 %v4731, 2
      %4733 = vset.pattern.permute.xlu0 %v4732
      %4734 = vperm.xlu0 %4733, %v4729
      %v4735 = vpop.permute.xlu0 %4734
      %v4736 = vperm.slane %v3234, 1
      %v4737 = vlaneseq
      %v4738 = vshrl.u32 %v4737, 7
      %v4739 = vadd.s32 %v4738, 2
      %4740 = vset.pattern.permute.xlu0 %v4739
      %4741 = vperm.xlu0 %4740, %v4736
      %v4742 = vpop.permute.xlu0 %4741
      %v4743 = vperm.slane %v3234, 2
      %v4744 = vlaneseq
      %v4745 = vshrl.u32 %v4744, 7
      %v4746 = vadd.s32 %v4745, 2
      %4747 = vset.pattern.permute.xlu0 %v4746
      %4748 = vperm.xlu0 %4747, %v4743
      %v4749 = vpop.permute.xlu0 %4748
      %v4750 = vperm.slane %v3234, 3
      %v4751 = vlaneseq
      %v4752 = vshrl.u32 %v4751, 7
      %v4753 = vadd.s32 %v4752, 2
      %4754 = vset.pattern.permute.xlu0 %v4753
      %4755 = vperm.xlu0 %4754, %v4750
      %v4756 = vpop.permute.xlu0 %4755
      %v4757 = vperm.slane %v3234, 4
      %v4758 = vlaneseq
      %v4759 = vshrl.u32 %v4758, 7
      %v4760 = vadd.s32 %v4759, 2
      %4761 = vset.pattern.permute.xlu0 %v4760
      %4762 = vperm.xlu0 %4761, %v4757
      %v4763 = vpop.permute.xlu0 %4762
      %v4764 = vperm.slane %v3234, 5
      %v4765 = vlaneseq
      %v4766 = vshrl.u32 %v4765, 7
      %v4767 = vadd.s32 %v4766, 2
      %4768 = vset.pattern.permute.xlu0 %v4767
      %4769 = vperm.xlu0 %4768, %v4764
      %v4770 = vpop.permute.xlu0 %4769
      %v4771 = vperm.slane %v3234, 6
      %v4772 = vlaneseq
      %v4773 = vshrl.u32 %v4772, 7
      %v4774 = vadd.s32 %v4773, 2
      %4775 = vset.pattern.permute.xlu0 %v4774
      %4776 = vperm.xlu0 %4775, %v4771
      %v4777 = vpop.permute.xlu0 %4776
      %v4778 = vperm.slane %v3234, 7
      %v4779 = vlaneseq
      %v4780 = vshrl.u32 %v4779, 7
      %v4781 = vadd.s32 %v4780, 2
      %4782 = vset.pattern.permute.xlu0 %v4781
      %4783 = vperm.xlu0 %4782, %v4778
      %v4784 = vpop.permute.xlu0 %4783
      %v4785 = vperm.slane %v3237, 0
      %v4786 = vlaneseq
      %v4787 = vshrl.u32 %v4786, 7
      %v4788 = vadd.s32 %v4787, 2
      %4789 = vset.pattern.permute.xlu0 %v4788
      %4790 = vperm.xlu0 %4789, %v4785
      %v4791 = vpop.permute.xlu0 %4790
      %v4792 = vperm.slane %v3237, 1
      %v4793 = vlaneseq
      %v4794 = vshrl.u32 %v4793, 7
      %v4795 = vadd.s32 %v4794, 2
      %4796 = vset.pattern.permute.xlu0 %v4795
      %4797 = vperm.xlu0 %4796, %v4792
      %v4798 = vpop.permute.xlu0 %4797
      %v4799 = vperm.slane %v3237, 2
      %v4800 = vlaneseq
      %v4801 = vshrl.u32 %v4800, 7
      %v4802 = vadd.s32 %v4801, 2
      %4803 = vset.pattern.permute.xlu0 %v4802
      %4804 = vperm.xlu0 %4803, %v4799
      %v4805 = vpop.permute.xlu0 %4804
      %v4806 = vperm.slane %v3237, 3
      %v4807 = vlaneseq
      %v4808 = vshrl.u32 %v4807, 7
      %v4809 = vadd.s32 %v4808, 2
      %4810 = vset.pattern.permute.xlu0 %v4809
      %4811 = vperm.xlu0 %4810, %v4806
      %v4812 = vpop.permute.xlu0 %4811
      %v4813 = vperm.slane %v3237, 4
      %v4814 = vlaneseq
      %v4815 = vshrl.u32 %v4814, 7
      %v4816 = vadd.s32 %v4815, 2
      %4817 = vset.pattern.permute.xlu0 %v4816
      %4818 = vperm.xlu0 %4817, %v4813
      %v4819 = vpop.permute.xlu0 %4818
      %v4820 = vperm.slane %v3237, 5
      %v4821 = vlaneseq
      %v4822 = vshrl.u32 %v4821, 7
      %v4823 = vadd.s32 %v4822, 2
      %4824 = vset.pattern.permute.xlu0 %v4823
      %4825 = vperm.xlu0 %4824, %v4820
      %v4826 = vpop.permute.xlu0 %4825
      %v4827 = vperm.slane %v3237, 6
      %v4828 = vlaneseq
      %v4829 = vshrl.u32 %v4828, 7
      %v4830 = vadd.s32 %v4829, 2
      %4831 = vset.pattern.permute.xlu0 %v4830
      %4832 = vperm.xlu0 %4831, %v4827
      %v4833 = vpop.permute.xlu0 %4832
      %v4834 = vperm.slane %v3237, 7
      %v4835 = vlaneseq
      %v4836 = vshrl.u32 %v4835, 7
      %v4837 = vadd.s32 %v4836, 2
      %4838 = vset.pattern.permute.xlu0 %v4837
      %4839 = vperm.xlu0 %4838, %v4834
      %v4840 = vpop.permute.xlu0 %4839
      %v4841 = vperm.slane %v3240, 0
      %v4842 = vlaneseq
      %v4843 = vshrl.u32 %v4842, 7
      %v4844 = vadd.s32 %v4843, 2
      %4845 = vset.pattern.permute.xlu0 %v4844
      %4846 = vperm.xlu0 %4845, %v4841
      %v4847 = vpop.permute.xlu0 %4846
      %v4848 = vperm.slane %v3240, 1
      %v4849 = vlaneseq
      %v4850 = vshrl.u32 %v4849, 7
      %v4851 = vadd.s32 %v4850, 2
      %4852 = vset.pattern.permute.xlu0 %v4851
      %4853 = vperm.xlu0 %4852, %v4848
      %v4854 = vpop.permute.xlu0 %4853
      %v4855 = vperm.slane %v3240, 2
      %v4856 = vlaneseq
      %v4857 = vshrl.u32 %v4856, 7
      %v4858 = vadd.s32 %v4857, 2
      %4859 = vset.pattern.permute.xlu0 %v4858
      %4860 = vperm.xlu0 %4859, %v4855
      %v4861 = vpop.permute.xlu0 %4860
      %v4862 = vperm.slane %v3240, 3
      %v4863 = vlaneseq
      %v4864 = vshrl.u32 %v4863, 7
      %v4865 = vadd.s32 %v4864, 2
      %4866 = vset.pattern.permute.xlu0 %v4865
      %4867 = vperm.xlu0 %4866, %v4862
      %v4868 = vpop.permute.xlu0 %4867
      %v4869 = vperm.slane %v3240, 4
      %v4870 = vlaneseq
      %v4871 = vshrl.u32 %v4870, 7
      %v4872 = vadd.s32 %v4871, 2
      %4873 = vset.pattern.permute.xlu0 %v4872
      %4874 = vperm.xlu0 %4873, %v4869
      %v4875 = vpop.permute.xlu0 %4874
      %v4876 = vperm.slane %v3240, 5
      %v4877 = vlaneseq
      %v4878 = vshrl.u32 %v4877, 7
      %v4879 = vadd.s32 %v4878, 2
      %4880 = vset.pattern.permute.xlu0 %v4879
      %4881 = vperm.xlu0 %4880, %v4876
      %v4882 = vpop.permute.xlu0 %4881
      %v4883 = vperm.slane %v3240, 6
      %v4884 = vlaneseq
      %v4885 = vshrl.u32 %v4884, 7
      %v4886 = vadd.s32 %v4885, 2
      %4887 = vset.pattern.permute.xlu0 %v4886
      %4888 = vperm.xlu0 %4887, %v4883
      %v4889 = vpop.permute.xlu0 %4888
      %v4890 = vperm.slane %v3240, 7
      %v4891 = vlaneseq
      %v4892 = vshrl.u32 %v4891, 7
      %v4893 = vadd.s32 %v4892, 2
      %4894 = vset.pattern.permute.xlu0 %v4893
      %4895 = vperm.xlu0 %4894, %v4890
      %v4896 = vpop.permute.xlu0 %4895
      %v4897 = vperm.slane %v3243, 0
      %v4898 = vlaneseq
      %v4899 = vshrl.u32 %v4898, 7
      %v4900 = vadd.s32 %v4899, 2
      %4901 = vset.pattern.permute.xlu0 %v4900
      %4902 = vperm.xlu0 %4901, %v4897
      %v4903 = vpop.permute.xlu0 %4902
      %v4904 = vperm.slane %v3243, 1
      %v4905 = vlaneseq
      %v4906 = vshrl.u32 %v4905, 7
      %v4907 = vadd.s32 %v4906, 2
      %4908 = vset.pattern.permute.xlu0 %v4907
      %4909 = vperm.xlu0 %4908, %v4904
      %v4910 = vpop.permute.xlu0 %4909
      %v4911 = vperm.slane %v3243, 2
      %v4912 = vlaneseq
      %v4913 = vshrl.u32 %v4912, 7
      %v4914 = vadd.s32 %v4913, 2
      %4915 = vset.pattern.permute.xlu0 %v4914
      %4916 = vperm.xlu0 %4915, %v4911
      %v4917 = vpop.permute.xlu0 %4916
      %v4918 = vperm.slane %v3243, 3
      %v4919 = vlaneseq
      %v4920 = vshrl.u32 %v4919, 7
      %v4921 = vadd.s32 %v4920, 2
      %4922 = vset.pattern.permute.xlu0 %v4921
      %4923 = vperm.xlu0 %4922, %v4918
      %v4924 = vpop.permute.xlu0 %4923
      %v4925 = vperm.slane %v3243, 4
      %v4926 = vlaneseq
      %v4927 = vshrl.u32 %v4926, 7
      %v4928 = vadd.s32 %v4927, 2
      %4929 = vset.pattern.permute.xlu0 %v4928
      %4930 = vperm.xlu0 %4929, %v4925
      %v4931 = vpop.permute.xlu0 %4930
      %v4932 = vperm.slane %v3243, 5
      %v4933 = vlaneseq
      %v4934 = vshrl.u32 %v4933, 7
      %v4935 = vadd.s32 %v4934, 2
      %4936 = vset.pattern.permute.xlu0 %v4935
      %4937 = vperm.xlu0 %4936, %v4932
      %v4938 = vpop.permute.xlu0 %4937
      %v4939 = vperm.slane %v3243, 6
      %v4940 = vlaneseq
      %v4941 = vshrl.u32 %v4940, 7
      %v4942 = vadd.s32 %v4941, 2
      %4943 = vset.pattern.permute.xlu0 %v4942
      %4944 = vperm.xlu0 %4943, %v4939
      %v4945 = vpop.permute.xlu0 %4944
      %v4946 = vperm.slane %v3243, 7
      %v4947 = vlaneseq
      %v4948 = vshrl.u32 %v4947, 7
      %v4949 = vadd.s32 %v4948, 2
      %4950 = vset.pattern.permute.xlu0 %v4949
      %4951 = vperm.xlu0 %4950, %v4946
      %v4952 = vpop.permute.xlu0 %4951
      %v4953 = vperm.slane %v3246, 0
      %v4954 = vlaneseq
      %v4955 = vshrl.u32 %v4954, 7
      %v4956 = vadd.s32 %v4955, 2
      %4957 = vset.pattern.permute.xlu0 %v4956
      %4958 = vperm.xlu0 %4957, %v4953
      %v4959 = vpop.permute.xlu0 %4958
      %v4960 = vperm.slane %v3246, 1
      %v4961 = vlaneseq
      %v4962 = vshrl.u32 %v4961, 7
      %v4963 = vadd.s32 %v4962, 2
      %4964 = vset.pattern.permute.xlu0 %v4963
      %4965 = vperm.xlu0 %4964, %v4960
      %v4966 = vpop.permute.xlu0 %4965
      %v4967 = vperm.slane %v3246, 2
      %v4968 = vlaneseq
      %v4969 = vshrl.u32 %v4968, 7
      %v4970 = vadd.s32 %v4969, 2
      %4971 = vset.pattern.permute.xlu0 %v4970
      %4972 = vperm.xlu0 %4971, %v4967
      %v4973 = vpop.permute.xlu0 %4972
      %v4974 = vperm.slane %v3246, 3
      %v4975 = vlaneseq
      %v4976 = vshrl.u32 %v4975, 7
      %v4977 = vadd.s32 %v4976, 2
      %4978 = vset.pattern.permute.xlu0 %v4977
      %4979 = vperm.xlu0 %4978, %v4974
      %v4980 = vpop.permute.xlu0 %4979
      %v4981 = vperm.slane %v3246, 4
      %v4982 = vlaneseq
      %v4983 = vshrl.u32 %v4982, 7
      %v4984 = vadd.s32 %v4983, 2
      %4985 = vset.pattern.permute.xlu0 %v4984
      %4986 = vperm.xlu0 %4985, %v4981
      %v4987 = vpop.permute.xlu0 %4986
      %v4988 = vperm.slane %v3246, 5
      %v4989 = vlaneseq
      %v4990 = vshrl.u32 %v4989, 7
      %v4991 = vadd.s32 %v4990, 2
      %4992 = vset.pattern.permute.xlu0 %v4991
      %4993 = vperm.xlu0 %4992, %v4988
      %v4994 = vpop.permute.xlu0 %4993
      %v4995 = vperm.slane %v3246, 6
      %v4996 = vlaneseq
      %v4997 = vshrl.u32 %v4996, 7
      %v4998 = vadd.s32 %v4997, 2
      %4999 = vset.pattern.permute.xlu0 %v4998
      %5000 = vperm.xlu0 %4999, %v4995
      %v5001 = vpop.permute.xlu0 %5000
      %v5002 = vperm.slane %v3246, 7
      %v5003 = vlaneseq
      %v5004 = vshrl.u32 %v5003, 7
      %v5005 = vadd.s32 %v5004, 2
      %5006 = vset.pattern.permute.xlu0 %v5005
      %5007 = vperm.xlu0 %5006, %v5002
      %v5008 = vpop.permute.xlu0 %5007
      %v5009 = vperm.slane %v3249, 0
      %v5010 = vlaneseq
      %v5011 = vshrl.u32 %v5010, 7
      %v5012 = vadd.s32 %v5011, 2
      %5013 = vset.pattern.permute.xlu0 %v5012
      %5014 = vperm.xlu0 %5013, %v5009
      %v5015 = vpop.permute.xlu0 %5014
      %v5016 = vperm.slane %v3249, 1
      %v5017 = vlaneseq
      %v5018 = vshrl.u32 %v5017, 7
      %v5019 = vadd.s32 %v5018, 2
      %5020 = vset.pattern.permute.xlu0 %v5019
      %5021 = vperm.xlu0 %5020, %v5016
      %v5022 = vpop.permute.xlu0 %5021
      %v5023 = vperm.slane %v3249, 2
      %v5024 = vlaneseq
      %v5025 = vshrl.u32 %v5024, 7
      %v5026 = vadd.s32 %v5025, 2
      %5027 = vset.pattern.permute.xlu0 %v5026
      %5028 = vperm.xlu0 %5027, %v5023
      %v5029 = vpop.permute.xlu0 %5028
      %v5030 = vperm.slane %v3249, 3
      %v5031 = vlaneseq
      %v5032 = vshrl.u32 %v5031, 7
      %v5033 = vadd.s32 %v5032, 2
      %5034 = vset.pattern.permute.xlu0 %v5033
      %5035 = vperm.xlu0 %5034, %v5030
      %v5036 = vpop.permute.xlu0 %5035
      %v5037 = vperm.slane %v3249, 4
      %v5038 = vlaneseq
      %v5039 = vshrl.u32 %v5038, 7
      %v5040 = vadd.s32 %v5039, 2
      %5041 = vset.pattern.permute.xlu0 %v5040
      %5042 = vperm.xlu0 %5041, %v5037
      %v5043 = vpop.permute.xlu0 %5042
      %v5044 = vperm.slane %v3249, 5
      %v5045 = vlaneseq
      %v5046 = vshrl.u32 %v5045, 7
      %v5047 = vadd.s32 %v5046, 2
      %5048 = vset.pattern.permute.xlu0 %v5047
      %5049 = vperm.xlu0 %5048, %v5044
      %v5050 = vpop.permute.xlu0 %5049
      %v5051 = vperm.slane %v3249, 6
      %v5052 = vlaneseq
      %v5053 = vshrl.u32 %v5052, 7
      %v5054 = vadd.s32 %v5053, 2
      %5055 = vset.pattern.permute.xlu0 %v5054
      %5056 = vperm.xlu0 %5055, %v5051
      %v5057 = vpop.permute.xlu0 %5056
      %v5058 = vperm.slane %v3249, 7
      %v5059 = vlaneseq
      %v5060 = vshrl.u32 %v5059, 7
      %v5061 = vadd.s32 %v5060, 2
      %5062 = vset.pattern.permute.xlu0 %v5061
      %5063 = vperm.xlu0 %5062, %v5058
      %v5064 = vpop.permute.xlu0 %5063
      %v5065 = vperm.slane %v3252, 0
      %v5066 = vlaneseq
      %v5067 = vshrl.u32 %v5066, 7
      %v5068 = vadd.s32 %v5067, 2
      %5069 = vset.pattern.permute.xlu0 %v5068
      %5070 = vperm.xlu0 %5069, %v5065
      %v5071 = vpop.permute.xlu0 %5070
      %v5072 = vperm.slane %v3252, 1
      %v5073 = vlaneseq
      %v5074 = vshrl.u32 %v5073, 7
      %v5075 = vadd.s32 %v5074, 2
      %5076 = vset.pattern.permute.xlu0 %v5075
      %5077 = vperm.xlu0 %5076, %v5072
      %v5078 = vpop.permute.xlu0 %5077
      %v5079 = vperm.slane %v3252, 2
      %v5080 = vlaneseq
      %v5081 = vshrl.u32 %v5080, 7
      %v5082 = vadd.s32 %v5081, 2
      %5083 = vset.pattern.permute.xlu0 %v5082
      %5084 = vperm.xlu0 %5083, %v5079
      %v5085 = vpop.permute.xlu0 %5084
      %v5086 = vperm.slane %v3252, 3
      %v5087 = vlaneseq
      %v5088 = vshrl.u32 %v5087, 7
      %v5089 = vadd.s32 %v5088, 2
      %5090 = vset.pattern.permute.xlu0 %v5089
      %5091 = vperm.xlu0 %5090, %v5086
      %v5092 = vpop.permute.xlu0 %5091
      %v5093 = vperm.slane %v3252, 4
      %v5094 = vlaneseq
      %v5095 = vshrl.u32 %v5094, 7
      %v5096 = vadd.s32 %v5095, 2
      %5097 = vset.pattern.permute.xlu0 %v5096
      %5098 = vperm.xlu0 %5097, %v5093
      %v5099 = vpop.permute.xlu0 %5098
      %v5100 = vperm.slane %v3252, 5
      %v5101 = vlaneseq
      %v5102 = vshrl.u32 %v5101, 7
      %v5103 = vadd.s32 %v5102, 2
      %5104 = vset.pattern.permute.xlu0 %v5103
      %5105 = vperm.xlu0 %5104, %v5100
      %v5106 = vpop.permute.xlu0 %5105
      %v5107 = vperm.slane %v3252, 6
      %v5108 = vlaneseq
      %v5109 = vshrl.u32 %v5108, 7
      %v5110 = vadd.s32 %v5109, 2
      %5111 = vset.pattern.permute.xlu0 %v5110
      %5112 = vperm.xlu0 %5111, %v5107
      %v5113 = vpop.permute.xlu0 %5112
      %v5114 = vperm.slane %v3252, 7
      %v5115 = vlaneseq
      %v5116 = vshrl.u32 %v5115, 7
      %v5117 = vadd.s32 %v5116, 2
      %5118 = vset.pattern.permute.xlu0 %v5117
      %5119 = vperm.xlu0 %5118, %v5114
      %v5120 = vpop.permute.xlu0 %5119
      %v5121 = vperm.slane %v3255, 0
      %v5122 = vlaneseq
      %v5123 = vshrl.u32 %v5122, 7
      %v5124 = vadd.s32 %v5123, 2
      %5125 = vset.pattern.permute.xlu0 %v5124
      %5126 = vperm.xlu0 %5125, %v5121
      %v5127 = vpop.permute.xlu0 %5126
      %v5128 = vperm.slane %v3255, 1
      %v5129 = vlaneseq
      %v5130 = vshrl.u32 %v5129, 7
      %v5131 = vadd.s32 %v5130, 2
      %5132 = vset.pattern.permute.xlu0 %v5131
      %5133 = vperm.xlu0 %5132, %v5128
      %v5134 = vpop.permute.xlu0 %5133
      %v5135 = vperm.slane %v3255, 2
      %v5136 = vlaneseq
      %v5137 = vshrl.u32 %v5136, 7
      %v5138 = vadd.s32 %v5137, 2
      %5139 = vset.pattern.permute.xlu0 %v5138
      %5140 = vperm.xlu0 %5139, %v5135
      %v5141 = vpop.permute.xlu0 %5140
      %v5142 = vperm.slane %v3255, 3
      %v5143 = vlaneseq
      %v5144 = vshrl.u32 %v5143, 7
      %v5145 = vadd.s32 %v5144, 2
      %5146 = vset.pattern.permute.xlu0 %v5145
      %5147 = vperm.xlu0 %5146, %v5142
      %v5148 = vpop.permute.xlu0 %5147
      %v5149 = vperm.slane %v3255, 4
      %v5150 = vlaneseq
      %v5151 = vshrl.u32 %v5150, 7
      %v5152 = vadd.s32 %v5151, 2
      %5153 = vset.pattern.permute.xlu0 %v5152
      %5154 = vperm.xlu0 %5153, %v5149
      %v5155 = vpop.permute.xlu0 %5154
      %v5156 = vperm.slane %v3255, 5
      %v5157 = vlaneseq
      %v5158 = vshrl.u32 %v5157, 7
      %v5159 = vadd.s32 %v5158, 2
      %5160 = vset.pattern.permute.xlu0 %v5159
      %5161 = vperm.xlu0 %5160, %v5156
      %v5162 = vpop.permute.xlu0 %5161
      %v5163 = vperm.slane %v3255, 6
      %v5164 = vlaneseq
      %v5165 = vshrl.u32 %v5164, 7
      %v5166 = vadd.s32 %v5165, 2
      %5167 = vset.pattern.permute.xlu0 %v5166
      %5168 = vperm.xlu0 %5167, %v5163
      %v5169 = vpop.permute.xlu0 %5168
      %v5170 = vperm.slane %v3255, 7
      %v5171 = vlaneseq
      %v5172 = vshrl.u32 %v5171, 7
      %v5173 = vadd.s32 %v5172, 2
      %5174 = vset.pattern.permute.xlu0 %v5173
      %5175 = vperm.xlu0 %5174, %v5170
      %v5176 = vpop.permute.xlu0 %5175
      %v5177 = vperm.slane %v3258, 0
      %v5178 = vlaneseq
      %v5179 = vshrl.u32 %v5178, 7
      %v5180 = vadd.s32 %v5179, 2
      %5181 = vset.pattern.permute.xlu0 %v5180
      %5182 = vperm.xlu0 %5181, %v5177
      %v5183 = vpop.permute.xlu0 %5182
      %v5184 = vperm.slane %v3258, 1
      %v5185 = vlaneseq
      %v5186 = vshrl.u32 %v5185, 7
      %v5187 = vadd.s32 %v5186, 2
      %5188 = vset.pattern.permute.xlu0 %v5187
      %5189 = vperm.xlu0 %5188, %v5184
      %v5190 = vpop.permute.xlu0 %5189
      %v5191 = vperm.slane %v3258, 2
      %v5192 = vlaneseq
      %v5193 = vshrl.u32 %v5192, 7
      %v5194 = vadd.s32 %v5193, 2
      %5195 = vset.pattern.permute.xlu0 %v5194
      %5196 = vperm.xlu0 %5195, %v5191
      %v5197 = vpop.permute.xlu0 %5196
      %v5198 = vperm.slane %v3258, 3
      %v5199 = vlaneseq
      %v5200 = vshrl.u32 %v5199, 7
      %v5201 = vadd.s32 %v5200, 2
      %5202 = vset.pattern.permute.xlu0 %v5201
      %5203 = vperm.xlu0 %5202, %v5198
      %v5204 = vpop.permute.xlu0 %5203
      %v5205 = vperm.slane %v3258, 4
      %v5206 = vlaneseq
      %v5207 = vshrl.u32 %v5206, 7
      %v5208 = vadd.s32 %v5207, 2
      %5209 = vset.pattern.permute.xlu0 %v5208
      %5210 = vperm.xlu0 %5209, %v5205
      %v5211 = vpop.permute.xlu0 %5210
      %v5212 = vperm.slane %v3258, 5
      %v5213 = vlaneseq
      %v5214 = vshrl.u32 %v5213, 7
      %v5215 = vadd.s32 %v5214, 2
      %5216 = vset.pattern.permute.xlu0 %v5215
      %5217 = vperm.xlu0 %5216, %v5212
      %v5218 = vpop.permute.xlu0 %5217
      %v5219 = vperm.slane %v3258, 6
      %v5220 = vlaneseq
      %v5221 = vshrl.u32 %v5220, 7
      %v5222 = vadd.s32 %v5221, 2
      %5223 = vset.pattern.permute.xlu0 %v5222
      %5224 = vperm.xlu0 %5223, %v5219
      %v5225 = vpop.permute.xlu0 %5224
      %v5226 = vperm.slane %v3258, 7
      %v5227 = vlaneseq
      %v5228 = vshrl.u32 %v5227, 7
      %v5229 = vadd.s32 %v5228, 2
      %5230 = vset.pattern.permute.xlu0 %v5229
      %5231 = vperm.xlu0 %5230, %v5226
      %v5232 = vpop.permute.xlu0 %5231
      %v5233 = vperm.slane %v3261, 0
      %v5234 = vlaneseq
      %v5235 = vshrl.u32 %v5234, 7
      %v5236 = vadd.s32 %v5235, 2
      %5237 = vset.pattern.permute.xlu0 %v5236
      %5238 = vperm.xlu0 %5237, %v5233
      %v5239 = vpop.permute.xlu0 %5238
      %v5240 = vperm.slane %v3261, 1
      %v5241 = vlaneseq
      %v5242 = vshrl.u32 %v5241, 7
      %v5243 = vadd.s32 %v5242, 2
      %5244 = vset.pattern.permute.xlu0 %v5243
      %5245 = vperm.xlu0 %5244, %v5240
      %v5246 = vpop.permute.xlu0 %5245
      %v5247 = vperm.slane %v3261, 2
      %v5248 = vlaneseq
      %v5249 = vshrl.u32 %v5248, 7
      %v5250 = vadd.s32 %v5249, 2
      %5251 = vset.pattern.permute.xlu0 %v5250
      %5252 = vperm.xlu0 %5251, %v5247
      %v5253 = vpop.permute.xlu0 %5252
      %v5254 = vperm.slane %v3261, 3
      %v5255 = vlaneseq
      %v5256 = vshrl.u32 %v5255, 7
      %v5257 = vadd.s32 %v5256, 2
      %5258 = vset.pattern.permute.xlu0 %v5257
      %5259 = vperm.xlu0 %5258, %v5254
      %v5260 = vpop.permute.xlu0 %5259
      %v5261 = vperm.slane %v3261, 4
      %v5262 = vlaneseq
      %v5263 = vshrl.u32 %v5262, 7
      %v5264 = vadd.s32 %v5263, 2
      %5265 = vset.pattern.permute.xlu0 %v5264
      %5266 = vperm.xlu0 %5265, %v5261
      %v5267 = vpop.permute.xlu0 %5266
      %v5268 = vperm.slane %v3261, 5
      %v5269 = vlaneseq
      %v5270 = vshrl.u32 %v5269, 7
      %v5271 = vadd.s32 %v5270, 2
      %5272 = vset.pattern.permute.xlu0 %v5271
      %5273 = vperm.xlu0 %5272, %v5268
      %v5274 = vpop.permute.xlu0 %5273
      %v5275 = vperm.slane %v3261, 6
      %v5276 = vlaneseq
      %v5277 = vshrl.u32 %v5276, 7
      %v5278 = vadd.s32 %v5277, 2
      %5279 = vset.pattern.permute.xlu0 %v5278
      %5280 = vperm.xlu0 %5279, %v5275
      %v5281 = vpop.permute.xlu0 %5280
      %v5282 = vperm.slane %v3261, 7
      %v5283 = vlaneseq
      %v5284 = vshrl.u32 %v5283, 7
      %v5285 = vadd.s32 %v5284, 2
      %5286 = vset.pattern.permute.xlu0 %v5285
      %5287 = vperm.xlu0 %5286, %v5282
      %v5288 = vpop.permute.xlu0 %5287
      %v5289 = vperm.slane %v3264, 0
      %v5290 = vlaneseq
      %v5291 = vshrl.u32 %v5290, 7
      %v5292 = vadd.s32 %v5291, 2
      %5293 = vset.pattern.permute.xlu0 %v5292
      %5294 = vperm.xlu0 %5293, %v5289
      %v5295 = vpop.permute.xlu0 %5294
      %v5296 = vperm.slane %v3264, 1
      %v5297 = vlaneseq
      %v5298 = vshrl.u32 %v5297, 7
      %v5299 = vadd.s32 %v5298, 2
      %5300 = vset.pattern.permute.xlu0 %v5299
      %5301 = vperm.xlu0 %5300, %v5296
      %v5302 = vpop.permute.xlu0 %5301
      %v5303 = vperm.slane %v3264, 2
      %v5304 = vlaneseq
      %v5305 = vshrl.u32 %v5304, 7
      %v5306 = vadd.s32 %v5305, 2
      %5307 = vset.pattern.permute.xlu0 %v5306
      %5308 = vperm.xlu0 %5307, %v5303
      %v5309 = vpop.permute.xlu0 %5308
      %v5310 = vperm.slane %v3264, 3
      %v5311 = vlaneseq
      %v5312 = vshrl.u32 %v5311, 7
      %v5313 = vadd.s32 %v5312, 2
      %5314 = vset.pattern.permute.xlu0 %v5313
      %5315 = vperm.xlu0 %5314, %v5310
      %v5316 = vpop.permute.xlu0 %5315
      %v5317 = vperm.slane %v3264, 4
      %v5318 = vlaneseq
      %v5319 = vshrl.u32 %v5318, 7
      %v5320 = vadd.s32 %v5319, 2
      %5321 = vset.pattern.permute.xlu0 %v5320
      %5322 = vperm.xlu0 %5321, %v5317
      %v5323 = vpop.permute.xlu0 %5322
      %v5324 = vperm.slane %v3264, 5
      %v5325 = vlaneseq
      %v5326 = vshrl.u32 %v5325, 7
      %v5327 = vadd.s32 %v5326, 2
      %5328 = vset.pattern.permute.xlu0 %v5327
      %5329 = vperm.xlu0 %5328, %v5324
      %v5330 = vpop.permute.xlu0 %5329
      %v5331 = vperm.slane %v3264, 6
      %v5332 = vlaneseq
      %v5333 = vshrl.u32 %v5332, 7
      %v5334 = vadd.s32 %v5333, 2
      %5335 = vset.pattern.permute.xlu0 %v5334
      %5336 = vperm.xlu0 %5335, %v5331
      %v5337 = vpop.permute.xlu0 %5336
      %v5338 = vperm.slane %v3264, 7
      %v5339 = vlaneseq
      %v5340 = vshrl.u32 %v5339, 7
      %v5341 = vadd.s32 %v5340, 2
      %5342 = vset.pattern.permute.xlu0 %v5341
      %5343 = vperm.xlu0 %5342, %v5338
      %v5344 = vpop.permute.xlu0 %5343
      %v5345 = vperm.slane %v4305, 0
      %v5346 = vperm.slane %v4337, 0
      %v5347 = vperm.slane %v4338, 0
      %v5348 = vperm.slane %v4339, 0
      %v5349 = vperm.slane %v4340, 0
      %v5350 = vperm.slane %v4341, 0
      %v5351 = vperm.slane %v4342, 0
      %v5352 = vperm.slane %v4343, 0
      %v5353 = vperm.slane %v4306, 0
      %v5354 = vperm.slane %v4344, 0
      %v5355 = vperm.slane %v4345, 0
      %v5356 = vperm.slane %v4346, 0
      %v5357 = vperm.slane %v4347, 0
      %v5358 = vperm.slane %v4348, 0
      %v5359 = vperm.slane %v4349, 0
      %v5360 = vperm.slane %v4350, 0
      %v5361 = vperm.slane %v4307, 0
      %v5362 = vperm.slane %v4351, 0
      %v5363 = vperm.slane %v4352, 0
      %v5364 = vperm.slane %v4353, 0
      %v5365 = vperm.slane %v4354, 0
      %v5366 = vperm.slane %v4355, 0
      %v5367 = vperm.slane %v4356, 0
      %v5368 = vperm.slane %v4357, 0
      %v5369 = vperm.slane %v4308, 0
      %v5370 = vperm.slane %v4358, 0
      %v5371 = vperm.slane %v4359, 0
      %v5372 = vperm.slane %v4360, 0
      %v5373 = vperm.slane %v4361, 0
      %v5374 = vperm.slane %v4362, 0
      %v5375 = vperm.slane %v4363, 0
      %v5376 = vperm.slane %v4364, 0
      %v5377 = vperm.slane %v4309, 0
      %v5378 = vperm.slane %v4365, 0
      %v5379 = vperm.slane %v4366, 0
      %v5380 = vperm.slane %v4367, 0
      %v5381 = vperm.slane %v4368, 0
      %v5382 = vperm.slane %v4369, 0
      %v5383 = vperm.slane %v4370, 0
      %v5384 = vperm.slane %v4371, 0
      %v5385 = vperm.slane %v4310, 0
      %v5386 = vperm.slane %v4372, 0
      %v5387 = vperm.slane %v4373, 0
      %v5388 = vperm.slane %v4374, 0
      %v5389 = vperm.slane %v4375, 0
      %v5390 = vperm.slane %v4376, 0
      %v5391 = vperm.slane %v4377, 0
      %v5392 = vperm.slane %v4378, 0
      %v5393 = vperm.slane %v4311, 0
      %v5394 = vperm.slane %v4379, 0
      %v5395 = vperm.slane %v4380, 0
      %v5396 = vperm.slane %v4381, 0
      %v5397 = vperm.slane %v4382, 0
      %v5398 = vperm.slane %v4383, 0
      %v5399 = vperm.slane %v4384, 0
      %v5400 = vperm.slane %v4385, 0
      %v5401 = vperm.slane %v4312, 0
      %v5402 = vperm.slane %v4386, 0
      %v5403 = vperm.slane %v4387, 0
      %v5404 = vperm.slane %v4388, 0
      %v5405 = vperm.slane %v4389, 0
      %v5406 = vperm.slane %v4390, 0
      %v5407 = vperm.slane %v4391, 0
      %v5408 = vperm.slane %v4392, 0
      %v5409 = vperm.slane %v4313, 0
      %v5410 = vperm.slane %v4393, 0
      %v5411 = vperm.slane %v4394, 0
      %v5412 = vperm.slane %v4395, 0
      %v5413 = vperm.slane %v4396, 0
      %v5414 = vperm.slane %v4397, 0
      %v5415 = vperm.slane %v4398, 0
      %v5416 = vperm.slane %v4399, 0
      %v5417 = vperm.slane %v4314, 0
      %v5418 = vperm.slane %v4400, 0
      %v5419 = vperm.slane %v4401, 0
      %v5420 = vperm.slane %v4402, 0
      %v5421 = vperm.slane %v4403, 0
      %v5422 = vperm.slane %v4404, 0
      %v5423 = vperm.slane %v4405, 0
      %v5424 = vperm.slane %v4406, 0
      %v5425 = vperm.slane %v4315, 0
      %v5426 = vperm.slane %v4407, 0
      %v5427 = vperm.slane %v4408, 0
      %v5428 = vperm.slane %v4409, 0
      %v5429 = vperm.slane %v4410, 0
      %v5430 = vperm.slane %v4411, 0
      %v5431 = vperm.slane %v4412, 0
      %v5432 = vperm.slane %v4413, 0
      %v5433 = vperm.slane %v4316, 0
      %v5434 = vperm.slane %v4414, 0
      %v5435 = vperm.slane %v4415, 0
      %v5436 = vperm.slane %v4416, 0
      %v5437 = vperm.slane %v4417, 0
      %v5438 = vperm.slane %v4418, 0
      %v5439 = vperm.slane %v4419, 0
      %v5440 = vperm.slane %v4420, 0
      %v5441 = vperm.slane %v4317, 0
      %v5442 = vperm.slane %v4421, 0
      %v5443 = vperm.slane %v4422, 0
      %v5444 = vperm.slane %v4423, 0
      %v5445 = vperm.slane %v4424, 0
      %v5446 = vperm.slane %v4425, 0
      %v5447 = vperm.slane %v4426, 0
      %v5448 = vperm.slane %v4427, 0
      %v5449 = vperm.slane %v4318, 0
      %v5450 = vperm.slane %v4428, 0
      %v5451 = vperm.slane %v4429, 0
      %v5452 = vperm.slane %v4430, 0
      %v5453 = vperm.slane %v4431, 0
      %v5454 = vperm.slane %v4432, 0
      %v5455 = vperm.slane %v4433, 0
      %v5456 = vperm.slane %v4434, 0
      %v5457 = vperm.slane %v4319, 0
      %v5458 = vperm.slane %v4435, 0
      %v5459 = vperm.slane %v4436, 0
      %v5460 = vperm.slane %v4437, 0
      %v5461 = vperm.slane %v4438, 0
      %v5462 = vperm.slane %v4439, 0
      %v5463 = vperm.slane %v4440, 0
      %v5464 = vperm.slane %v4441, 0
      %v5465 = vperm.slane %v4320, 0
      %v5466 = vperm.slane %v4442, 0
      %v5467 = vperm.slane %v4443, 0
      %v5468 = vperm.slane %v4444, 0
      %v5469 = vperm.slane %v4445, 0
      %v5470 = vperm.slane %v4446, 0
      %v5471 = vperm.slane %v4447, 0
      %v5472 = vperm.slane %v4448, 0
      %v5601 = vmul.f32 %v5345, %v4455
      %v5602 = vmul.f32 %v5346, %v4462
      %v5603 = vmul.f32 %v5347, %v4469
      %v5604 = vmul.f32 %v5348, %v4476
      %v5605 = vmul.f32 %v5349, %v4483
      %v5606 = vmul.f32 %v5350, %v4490
      %v5607 = vmul.f32 %v5351, %v4497
      %v5608 = vmul.f32 %v5352, %v4504
      %v5609 = vmul.f32 %v5353, %v4511
      %v5610 = vmul.f32 %v5354, %v4518
      %v5611 = vmul.f32 %v5355, %v4525
      %v5612 = vmul.f32 %v5356, %v4532
      %v5613 = vmul.f32 %v5357, %v4539
      %v5614 = vmul.f32 %v5358, %v4546
      %v5615 = vmul.f32 %v5359, %v4553
      %v5616 = vmul.f32 %v5360, %v4560
      %v5617 = vmul.f32 %v5361, %v4567
      %v5618 = vmul.f32 %v5362, %v4574
      %v5619 = vmul.f32 %v5363, %v4581
      %v5620 = vmul.f32 %v5364, %v4588
      %v5621 = vmul.f32 %v5365, %v4595
      %v5622 = vmul.f32 %v5366, %v4602
      %v5623 = vmul.f32 %v5367, %v4609
      %v5624 = vmul.f32 %v5368, %v4616
      %v5625 = vmul.f32 %v5369, %v4623
      %v5626 = vmul.f32 %v5370, %v4630
      %v5627 = vmul.f32 %v5371, %v4637
      %v5628 = vmul.f32 %v5372, %v4644
      %v5629 = vmul.f32 %v5373, %v4651
      %v5630 = vmul.f32 %v5374, %v4658
      %v5631 = vmul.f32 %v5375, %v4665
      %v5632 = vmul.f32 %v5376, %v4672
      %v5633 = vmul.f32 %v5377, %v4679
      %v5634 = vmul.f32 %v5378, %v4686
      %v5635 = vmul.f32 %v5379, %v4693
      %v5636 = vmul.f32 %v5380, %v4700
      %v5637 = vmul.f32 %v5381, %v4707
      %v5638 = vmul.f32 %v5382, %v4714
      %v5639 = vmul.f32 %v5383, %v4721
      %v5640 = vmul.f32 %v5384, %v4728
      %v5641 = vmul.f32 %v5385, %v4735
      %v5642 = vmul.f32 %v5386, %v4742
      %v5643 = vmul.f32 %v5387, %v4749
      %v5644 = vmul.f32 %v5388, %v4756
      %v5645 = vmul.f32 %v5389, %v4763
      %v5646 = vmul.f32 %v5390, %v4770
      %v5647 = vmul.f32 %v5391, %v4777
      %v5648 = vmul.f32 %v5392, %v4784
      %v5649 = vmul.f32 %v5393, %v4791
      %v5650 = vmul.f32 %v5394, %v4798
      %v5651 = vmul.f32 %v5395, %v4805
      %v5652 = vmul.f32 %v5396, %v4812
      %v5653 = vmul.f32 %v5397, %v4819
      %v5654 = vmul.f32 %v5398, %v4826
      %v5655 = vmul.f32 %v5399, %v4833
      %v5656 = vmul.f32 %v5400, %v4840
      %v5657 = vmul.f32 %v5401, %v4847
      %v5658 = vmul.f32 %v5402, %v4854
      %v5659 = vmul.f32 %v5403, %v4861
      %v5660 = vmul.f32 %v5404, %v4868
      %v5661 = vmul.f32 %v5405, %v4875
      %v5662 = vmul.f32 %v5406, %v4882
      %v5663 = vmul.f32 %v5407, %v4889
      %v5664 = vmul.f32 %v5408, %v4896
      %v5665 = vmul.f32 %v5409, %v4903
      %v5666 = vmul.f32 %v5410, %v4910
      %v5667 = vmul.f32 %v5411, %v4917
      %v5668 = vmul.f32 %v5412, %v4924
      %v5669 = vmul.f32 %v5413, %v4931
      %v5670 = vmul.f32 %v5414, %v4938
      %v5671 = vmul.f32 %v5415, %v4945
      %v5672 = vmul.f32 %v5416, %v4952
      %v5673 = vmul.f32 %v5417, %v4959
      %v5674 = vmul.f32 %v5418, %v4966
      %v5675 = vmul.f32 %v5419, %v4973
      %v5676 = vmul.f32 %v5420, %v4980
      %v5677 = vmul.f32 %v5421, %v4987
      %v5678 = vmul.f32 %v5422, %v4994
      %v5679 = vmul.f32 %v5423, %v5001
      %v5680 = vmul.f32 %v5424, %v5008
      %v5681 = vmul.f32 %v5425, %v5015
      %v5682 = vmul.f32 %v5426, %v5022
      %v5683 = vmul.f32 %v5427, %v5029
      %v5684 = vmul.f32 %v5428, %v5036
      %v5685 = vmul.f32 %v5429, %v5043
      %v5686 = vmul.f32 %v5430, %v5050
      %v5687 = vmul.f32 %v5431, %v5057
      %v5688 = vmul.f32 %v5432, %v5064
      %v5689 = vmul.f32 %v5433, %v5071
      %v5690 = vmul.f32 %v5434, %v5078
      %v5691 = vmul.f32 %v5435, %v5085
      %v5692 = vmul.f32 %v5436, %v5092
      %v5693 = vmul.f32 %v5437, %v5099
      %v5694 = vmul.f32 %v5438, %v5106
      %v5695 = vmul.f32 %v5439, %v5113
      %v5696 = vmul.f32 %v5440, %v5120
      %v5697 = vmul.f32 %v5441, %v5127
      %v5698 = vmul.f32 %v5442, %v5134
      %v5699 = vmul.f32 %v5443, %v5141
      %v5700 = vmul.f32 %v5444, %v5148
      %v5701 = vmul.f32 %v5445, %v5155
      %v5702 = vmul.f32 %v5446, %v5162
      %v5703 = vmul.f32 %v5447, %v5169
      %v5704 = vmul.f32 %v5448, %v5176
      %v5705 = vmul.f32 %v5449, %v5183
      %v5706 = vmul.f32 %v5450, %v5190
      %v5707 = vmul.f32 %v5451, %v5197
      %v5708 = vmul.f32 %v5452, %v5204
      %v5709 = vmul.f32 %v5453, %v5211
      %v5710 = vmul.f32 %v5454, %v5218
      %v5711 = vmul.f32 %v5455, %v5225
      %v5712 = vmul.f32 %v5456, %v5232
      %v5713 = vmul.f32 %v5457, %v5239
      %v5714 = vmul.f32 %v5458, %v5246
      %v5715 = vmul.f32 %v5459, %v5253
      %v5716 = vmul.f32 %v5460, %v5260
      %v5717 = vmul.f32 %v5461, %v5267
      %v5718 = vmul.f32 %v5462, %v5274
      %v5719 = vmul.f32 %v5463, %v5281
      %v5720 = vmul.f32 %v5464, %v5288
      %v5721 = vmul.f32 %v5465, %v5295
      %v5722 = vmul.f32 %v5466, %v5302
      %v5723 = vmul.f32 %v5467, %v5309
      %v5724 = vmul.f32 %v5468, %v5316
      %v5725 = vmul.f32 %v5469, %v5323
      %v5726 = vmul.f32 %v5470, %v5330
      %v5727 = vmul.f32 %v5471, %v5337
      %v5728 = vmul.f32 %v5472, %v5344
      %v5729 = vsub.f32 0.0, %v2826
      %v5730 = vsub.f32 0.0, %v2829
      %v5731 = vsub.f32 0.0, %v2832
      %v5732 = vsub.f32 0.0, %v2835
      %v5733 = vsub.f32 0.0, %v2838
      %v5734 = vsub.f32 0.0, %v2841
      %v5735 = vsub.f32 0.0, %v2844
      %v5736 = vsub.f32 0.0, %v2847
      %v5737 = vsub.f32 0.0, %v2850
      %v5738 = vsub.f32 0.0, %v2853
      %v5739 = vsub.f32 0.0, %v2856
      %v5740 = vsub.f32 0.0, %v2859
      %v5741 = vsub.f32 0.0, %v2862
      %v5742 = vsub.f32 0.0, %v2865
      %v5743 = vsub.f32 0.0, %v2868
      %v5744 = vsub.f32 0.0, %v2871
      %v5745 = vmul.f32 %v5729, 1.442695
      %v5746 = vpow.pop %v5745
      %v5747 = vmul.f32 %v5730, 1.442695
      %v5748 = vpow.pop %v5747
      %v5749 = vmul.f32 %v5731, 1.442695
      %v5750 = vpow.pop %v5749
      %v5751 = vmul.f32 %v5732, 1.442695
      %v5752 = vpow.pop %v5751
      %v5753 = vmul.f32 %v5733, 1.442695
      %v5754 = vpow.pop %v5753
      %v5755 = vmul.f32 %v5734, 1.442695
      %v5756 = vpow.pop %v5755
      %v5757 = vmul.f32 %v5735, 1.442695
      %v5758 = vpow.pop %v5757
      %v5759 = vmul.f32 %v5736, 1.442695
      %v5760 = vpow.pop %v5759
      %v5761 = vmul.f32 %v5737, 1.442695
      %v5762 = vpow.pop %v5761
      %v5763 = vmul.f32 %v5738, 1.442695
      %v5764 = vpow.pop %v5763
      %v5765 = vmul.f32 %v5739, 1.442695
      %v5766 = vpow.pop %v5765
      %v5767 = vmul.f32 %v5740, 1.442695
      %v5768 = vpow.pop %v5767
      %v5769 = vmul.f32 %v5741, 1.442695
      %v5770 = vpow.pop %v5769
      %v5771 = vmul.f32 %v5742, 1.442695
      %v5772 = vpow.pop %v5771
      %v5773 = vmul.f32 %v5743, 1.442695
      %v5774 = vpow.pop %v5773
      %v5775 = vmul.f32 %v5744, 1.442695
      %v5776 = vpow.pop %v5775
      %v5777 = vadd.f32 %v5746, 1.0
      %v5778 = vadd.f32 %v5748, 1.0
      %v5779 = vadd.f32 %v5750, 1.0
      %v5780 = vadd.f32 %v5752, 1.0
      %v5781 = vadd.f32 %v5754, 1.0
      %v5782 = vadd.f32 %v5756, 1.0
      %v5783 = vadd.f32 %v5758, 1.0
      %v5784 = vadd.f32 %v5760, 1.0
      %v5785 = vadd.f32 %v5762, 1.0
      %v5786 = vadd.f32 %v5764, 1.0
      %v5787 = vadd.f32 %v5766, 1.0
      %v5788 = vadd.f32 %v5768, 1.0
      %v5789 = vadd.f32 %v5770, 1.0
      %v5790 = vadd.f32 %v5772, 1.0
      %v5791 = vadd.f32 %v5774, 1.0
      %v5792 = vadd.f32 %v5776, 1.0
      %v5793 = vrcp.pop %v5777
      %v5794 = vrcp.pop %v5778
      %v5795 = vrcp.pop %v5779
      %v5796 = vrcp.pop %v5780
      %v5797 = vrcp.pop %v5781
      %v5798 = vrcp.pop %v5782
      %v5799 = vrcp.pop %v5783
      %v5800 = vrcp.pop %v5784
      %v5801 = vrcp.pop %v5785
      %v5802 = vrcp.pop %v5786
      %v5803 = vrcp.pop %v5787
      %v5804 = vrcp.pop %v5788
      %v5805 = vrcp.pop %v5789
      %v5806 = vrcp.pop %v5790
      %v5807 = vrcp.pop %v5791
      %v5808 = vrcp.pop %v5792
      %v5809 = vmul.f32 %v2826, %v5793
      %v5810 = vmul.f32 %v2829, %v5794
      %v5811 = vmul.f32 %v2832, %v5795
      %v5812 = vmul.f32 %v2835, %v5796
      %v5813 = vmul.f32 %v2838, %v5797
      %v5814 = vmul.f32 %v2841, %v5798
      %v5815 = vmul.f32 %v2844, %v5799
      %v5816 = vmul.f32 %v2847, %v5800
      %v5817 = vmul.f32 %v2850, %v5801
      %v5818 = vmul.f32 %v2853, %v5802
      %v5819 = vmul.f32 %v2856, %v5803
      %v5820 = vmul.f32 %v2859, %v5804
      %v5821 = vmul.f32 %v2862, %v5805
      %v5822 = vmul.f32 %v2865, %v5806
      %v5823 = vmul.f32 %v2868, %v5807
      %v5824 = vmul.f32 %v2871, %v5808
      %v5825 = vld [vmem:[%s12] sm:$0x1]
      %v5826 = vld [vmem:[%s13] sm:$0xff]
      %v5827 = vld [vmem:[%s13 + $0x8] sm:$0xff]
      %v5828 = vld [vmem:[%s13 + $0x10] sm:$0xff]
      %v5829 = vld [vmem:[%s13 + $0x18] sm:$0xff]
      %v5830 = vld [vmem:[%s13 + $0x20] sm:$0xff]
      %v5831 = vld [vmem:[%s13 + $0x28] sm:$0xff]
      %v5832 = vld [vmem:[%s13 + $0x30] sm:$0xff]
      %v5833 = vld [vmem:[%s13 + $0x38] sm:$0xff]
      %v5834 = vmul.f32 %v4050, 0.0
      %v5835 = vmul.f32 %v4052, 0.0
      %v5836 = vmul.f32 %v4054, 0.0
      %v5837 = vmul.f32 %v4056, 0.0
      %v5838 = vmul.f32 %v4058, 0.0
      %v5839 = vmul.f32 %v4060, 0.0
      %v5840 = vmul.f32 %v4062, 0.0
      %v5841 = vmul.f32 %v4064, 0.0
      %v5842 = vadd.f32 %v5834, %v5601
      %v5843 = vadd.f32 %v5835, %v5602
      %v5844 = vadd.f32 %v5836, %v5603
      %v5845 = vadd.f32 %v5837, %v5604
      %v5846 = vadd.f32 %v5838, %v5605
      %v5847 = vadd.f32 %v5839, %v5606
      %v5848 = vadd.f32 %v5840, %v5607
      %v5849 = vadd.f32 %v5841, %v5608
      %v5850 = vlaneseq
      %v5851 = vshrl.u32 %v5850, 7
      %v5852 = vadd.s32 %v5851, 10
      %5853 = vset.pattern.permute.xlu0 %v5852
      %5854 = vperm.xlu0 %5853, %v4449
      %v5855 = vpop.permute.xlu0 %5854
      %v5856 = vlaneseq
      %v5857 = vshrl.u32 %v5856, 7
      %v5858 = vadd.s32 %v5857, 10
      %5859 = vset.pattern.permute.xlu0 %v5858
      %5860 = vperm.xlu0 %5859, %v4456
      %v5861 = vpop.permute.xlu0 %5860
      %v5862 = vlaneseq
      %v5863 = vshrl.u32 %v5862, 7
      %v5864 = vadd.s32 %v5863, 10
      %5865 = vset.pattern.permute.xlu0 %v5864
      %5866 = vperm.xlu0 %5865, %v4463
      %v5867 = vpop.permute.xlu0 %5866
      %v5868 = vlaneseq
      %v5869 = vshrl.u32 %v5868, 7
      %v5870 = vadd.s32 %v5869, 10
      %5871 = vset.pattern.permute.xlu0 %v5870
      %5872 = vperm.xlu0 %5871, %v4470
      %v5873 = vpop.permute.xlu0 %5872
      %v5874 = vlaneseq
      %v5875 = vshrl.u32 %v5874, 7
      %v5876 = vadd.s32 %v5875, 10
      %5877 = vset.pattern.permute.xlu0 %v5876
      %5878 = vperm.xlu0 %5877, %v4477
      %v5879 = vpop.permute.xlu0 %5878
      %v5880 = vlaneseq
      %v5881 = vshrl.u32 %v5880, 7
      %v5882 = vadd.s32 %v5881, 10
      %5883 = vset.pattern.permute.xlu0 %v5882
      %5884 = vperm.xlu0 %5883, %v4484
      %v5885 = vpop.permute.xlu0 %5884
      %v5886 = vlaneseq
      %v5887 = vshrl.u32 %v5886, 7
      %v5888 = vadd.s32 %v5887, 10
      %5889 = vset.pattern.permute.xlu0 %v5888
      %5890 = vperm.xlu0 %5889, %v4491
      %v5891 = vpop.permute.xlu0 %5890
      %v5892 = vlaneseq
      %v5893 = vshrl.u32 %v5892, 7
      %v5894 = vadd.s32 %v5893, 10
      %5895 = vset.pattern.permute.xlu0 %v5894
      %5896 = vperm.xlu0 %5895, %v4498
      %v5897 = vpop.permute.xlu0 %5896
      %v5898 = vmul.f32 %v5842, %v5855
      %v5899 = vmul.f32 %v5843, %v5861
      %v5900 = vmul.f32 %v5844, %v5867
      %v5901 = vmul.f32 %v5845, %v5873
      %v5902 = vmul.f32 %v5846, %v5879
      %v5903 = vmul.f32 %v5847, %v5885
      %v5904 = vmul.f32 %v5848, %v5891
      %v5905 = vmul.f32 %v5849, %v5897
      %v5906 = vsel %vm2873, %v5898, 0.0
      %v5907 = vrot.slane %v5906, 4
      %v5908 = vadd.f32 %v5906, %v5907
      %v5909 = vrot.slane %v5908, 2
      %v5910 = vadd.f32 %v5908, %v5909
      %v5911 = vrot.slane %v5910, 1
      %v5912 = vadd.f32 %v5910, %v5911
      %v5913 = vsel %vm2873, %v5899, 0.0
      %v5914 = vrot.slane %v5913, 4
      %v5915 = vadd.f32 %v5913, %v5914
      %v5916 = vrot.slane %v5915, 2
      %v5917 = vadd.f32 %v5915, %v5916
      %v5918 = vrot.slane %v5917, 1
      %v5919 = vadd.f32 %v5917, %v5918
      %v5920 = vsel %vm2873, %v5900, 0.0
      %v5921 = vrot.slane %v5920, 4
      %v5922 = vadd.f32 %v5920, %v5921
      %v5923 = vrot.slane %v5922, 2
      %v5924 = vadd.f32 %v5922, %v5923
      %v5925 = vrot.slane %v5924, 1
      %v5926 = vadd.f32 %v5924, %v5925
      %v5927 = vsel %vm2873, %v5901, 0.0
      %v5928 = vrot.slane %v5927, 4
      %v5929 = vadd.f32 %v5927, %v5928
      %v5930 = vrot.slane %v5929, 2
      %v5931 = vadd.f32 %v5929, %v5930
      %v5932 = vrot.slane %v5931, 1
      %v5933 = vadd.f32 %v5931, %v5932
      %v5934 = vsel %vm2873, %v5902, 0.0
      %v5935 = vrot.slane %v5934, 4
      %v5936 = vadd.f32 %v5934, %v5935
      %v5937 = vrot.slane %v5936, 2
      %v5938 = vadd.f32 %v5936, %v5937
      %v5939 = vrot.slane %v5938, 1
      %v5940 = vadd.f32 %v5938, %v5939
      %v5941 = vsel %vm2873, %v5903, 0.0
      %v5942 = vrot.slane %v5941, 4
      %v5943 = vadd.f32 %v5941, %v5942
      %v5944 = vrot.slane %v5943, 2
      %v5945 = vadd.f32 %v5943, %v5944
      %v5946 = vrot.slane %v5945, 1
      %v5947 = vadd.f32 %v5945, %v5946
      %v5948 = vsel %vm2873, %v5904, 0.0
      %v5949 = vrot.slane %v5948, 4
      %v5950 = vadd.f32 %v5948, %v5949
      %v5951 = vrot.slane %v5950, 2
      %v5952 = vadd.f32 %v5950, %v5951
      %v5953 = vrot.slane %v5952, 1
      %v5954 = vadd.f32 %v5952, %v5953
      %v5955 = vsel %vm2873, %v5905, 0.0
      %v5956 = vrot.slane %v5955, 4
      %v5957 = vadd.f32 %v5955, %v5956
      %v5958 = vrot.slane %v5957, 2
      %v5959 = vadd.f32 %v5957, %v5958
      %v5960 = vrot.slane %v5959, 1
      %v5961 = vadd.f32 %v5959, %v5960
      %v5963 = vperm.slane %v5825, 0
      %v5965 = vmul.f32 %v3129, %v5963
      %v5967 = vrot.slane %v5965, 1
      %v5968 = vrot.slane %v5965, 2
      %v5969 = vrot.slane %v5965, 3
      %v5970 = vrot.slane %v5965, 4
      %v5971 = vrot.slane %v5965, 5
      %v5972 = vrot.slane %v5965, 6
      %v5973 = vrot.slane %v5965, 7
      %v5982 = vadd.f32 %v5912, %v5965
      %v5983 = vadd.f32 %v5919, %v5967
      %v5984 = vadd.f32 %v5926, %v5968
      %v5985 = vadd.f32 %v5933, %v5969
      %v5986 = vadd.f32 %v5940, %v5970
      %v5987 = vadd.f32 %v5947, %v5971
      %v5988 = vadd.f32 %v5954, %v5972
      %v5989 = vadd.f32 %v5961, %v5973
      %v5991 = vrot.slane %v5809, 1
      %v5992 = vrot.slane %v5809, 2
      %v5993 = vrot.slane %v5809, 3
      %v5994 = vrot.slane %v5809, 4
      %v5995 = vrot.slane %v5809, 5
      %v5996 = vrot.slane %v5809, 6
      %v5997 = vrot.slane %v5809, 7
      %5998 = vrot.lane.b32.xlu0 %v5809, 64
      %v5999 = vpop.permute.xlu0 %5998
      %6000 = vrot.lane.b32.xlu0 %v5991, 64
      %v6001 = vpop.permute.xlu0 %6000
      %6002 = vrot.lane.b32.xlu0 %v5992, 64
      %v6003 = vpop.permute.xlu0 %6002
      %6004 = vrot.lane.b32.xlu0 %v5993, 64
      %v6005 = vpop.permute.xlu0 %6004
      %6006 = vrot.lane.b32.xlu0 %v5994, 64
      %v6007 = vpop.permute.xlu0 %6006
      %6008 = vrot.lane.b32.xlu0 %v5995, 64
      %v6009 = vpop.permute.xlu0 %6008
      %6010 = vrot.lane.b32.xlu0 %v5996, 64
      %v6011 = vpop.permute.xlu0 %6010
      %6012 = vrot.lane.b32.xlu0 %v5997, 64
      %v6013 = vpop.permute.xlu0 %6012
      %v6022 = vmul.f32 %v5982, %v5999
      %v6023 = vmul.f32 %v5983, %v6001
      %v6024 = vmul.f32 %v5984, %v6003
      %v6025 = vmul.f32 %v5985, %v6005
      %v6026 = vmul.f32 %v5986, %v6007
      %v6027 = vmul.f32 %v5987, %v6009
      %v6028 = vmul.f32 %v5988, %v6011
      %v6029 = vmul.f32 %v5989, %v6013
      %v6038 = vrot.slane %v6023, 7
      %vm6039 = vcmask 1041409
      %v6040 = vsel %vm6039, %v6038, %v6022
      %v6041 = vrot.slane %v6024, 6
      %vm6042 = vcmask 1042434
      %v6043 = vsel %vm6042, %v6041, %v6040
      %v6044 = vrot.slane %v6025, 5
      %vm6045 = vcmask 1043459
      %v6046 = vsel %vm6045, %v6044, %v6043
      %v6047 = vrot.slane %v6026, 4
      %vm6048 = vcmask 1044484
      %v6049 = vsel %vm6048, %v6047, %v6046
      %v6050 = vrot.slane %v6027, 3
      %vm6051 = vcmask 1045509
      %v6052 = vsel %vm6051, %v6050, %v6049
      %v6053 = vrot.slane %v6028, 2
      %vm6054 = vcmask 1046534
      %v6055 = vsel %vm6054, %v6053, %v6052
      %v6056 = vrot.slane %v6029, 1
      %vm6057 = vcmask 1047559
      %v6058 = vsel %vm6057, %v6056, %v6055
      %v6059 = vsel %vm2873, %v6058, 0
      %6061 = vmatpush.msra.mxu0 0.0
      %6062 = vmatpush.msra.mxu0 0.0
      %6063 = vmatpush.msra.mxu0 0.0
      %6064 = vmatpush.msra.mxu0 0.0
      %6065 = vmatpush.msra.mxu0 0.0
      %6066 = vmatpush.msra.mxu0 0.0
      %6067 = vmatpush.msra.mxu0 0.0
      %6068 = vmatpush.msra.mxu0 0.0
      %6069 = vmatpush.msra.mxu0 %v5833
      %6070 = vmatpush.msra.mxu0 %v5832
      %6071 = vmatpush.msra.mxu0 %v5831
      %6072 = vmatpush.msra.mxu0 %v5830
      %6073 = vmatpush.msra.mxu0 %v5829
      %6074 = vmatpush.msra.mxu0 %v5828
      %6075 = vmatpush.msra.mxu0 %v5827
      %6076 = vmatpush.msra.mxu0 %v5826
      %6077 = vmatmul.f32.gmra.mxu0 %v6059
      %v6078 = vpop.f32.mrf.mxu0
      %v6079 = vadd.f32 0.0, %v6078
      %6080 = vdwg.mxu0
      %6081 = vst.msk [vmem:[%s467] sm:$0xff] %vm541, %v6079
      %v6082 = vmul.f32 %v4066, %v5842
      %v6083 = vmul.f32 %v4068, %v5843
      %v6084 = vmul.f32 %v4070, %v5844
      %v6085 = vmul.f32 %v4072, %v5845
      %v6086 = vmul.f32 %v4074, %v5846
      %v6087 = vmul.f32 %v4076, %v5847
      %v6088 = vmul.f32 %v4078, %v5848
      %v6089 = vmul.f32 %v4080, %v5849
      %v6090 = vadd.f32 %v6082, %v5609
      %v6091 = vadd.f32 %v6083, %v5610
      %v6092 = vadd.f32 %v6084, %v5611
      %v6093 = vadd.f32 %v6085, %v5612
      %v6094 = vadd.f32 %v6086, %v5613
      %v6095 = vadd.f32 %v6087, %v5614
      %v6096 = vadd.f32 %v6088, %v5615
      %v6097 = vadd.f32 %v6089, %v5616
      %v6098 = vlaneseq
      %v6099 = vshrl.u32 %v6098, 7
      %v6100 = vadd.s32 %v6099, 10
      %6101 = vset.pattern.permute.xlu0 %v6100
      %6102 = vperm.xlu0 %6101, %v4505
      %v6103 = vpop.permute.xlu0 %6102
      %v6104 = vlaneseq
      %v6105 = vshrl.u32 %v6104, 7
      %v6106 = vadd.s32 %v6105, 10
      %6107 = vset.pattern.permute.xlu0 %v6106
      %6108 = vperm.xlu0 %6107, %v4512
      %v6109 = vpop.permute.xlu0 %6108
      %v6110 = vlaneseq
      %v6111 = vshrl.u32 %v6110, 7
      %v6112 = vadd.s32 %v6111, 10
      %6113 = vset.pattern.permute.xlu0 %v6112
      %6114 = vperm.xlu0 %6113, %v4519
      %v6115 = vpop.permute.xlu0 %6114
      %v6116 = vlaneseq
      %v6117 = vshrl.u32 %v6116, 7
      %v6118 = vadd.s32 %v6117, 10
      %6119 = vset.pattern.permute.xlu0 %v6118
      %6120 = vperm.xlu0 %6119, %v4526
      %v6121 = vpop.permute.xlu0 %6120
      %v6122 = vlaneseq
      %v6123 = vshrl.u32 %v6122, 7
      %v6124 = vadd.s32 %v6123, 10
      %6125 = vset.pattern.permute.xlu0 %v6124
      %6126 = vperm.xlu0 %6125, %v4533
      %v6127 = vpop.permute.xlu0 %6126
      %v6128 = vlaneseq
      %v6129 = vshrl.u32 %v6128, 7
      %v6130 = vadd.s32 %v6129, 10
      %6131 = vset.pattern.permute.xlu0 %v6130
      %6132 = vperm.xlu0 %6131, %v4540
      %v6133 = vpop.permute.xlu0 %6132
      %v6134 = vlaneseq
      %v6135 = vshrl.u32 %v6134, 7
      %v6136 = vadd.s32 %v6135, 10
      %6137 = vset.pattern.permute.xlu0 %v6136
      %6138 = vperm.xlu0 %6137, %v4547
      %v6139 = vpop.permute.xlu0 %6138
      %v6140 = vlaneseq
      %v6141 = vshrl.u32 %v6140, 7
      %v6142 = vadd.s32 %v6141, 10
      %6143 = vset.pattern.permute.xlu0 %v6142
      %6144 = vperm.xlu0 %6143, %v4554
      %v6145 = vpop.permute.xlu0 %6144
      %v6146 = vmul.f32 %v6090, %v6103
      %v6147 = vmul.f32 %v6091, %v6109
      %v6148 = vmul.f32 %v6092, %v6115
      %v6149 = vmul.f32 %v6093, %v6121
      %v6150 = vmul.f32 %v6094, %v6127
      %v6151 = vmul.f32 %v6095, %v6133
      %v6152 = vmul.f32 %v6096, %v6139
      %v6153 = vmul.f32 %v6097, %v6145
      %v6154 = vsel %vm2873, %v6146, 0.0
      %v6155 = vrot.slane %v6154, 4
      %v6156 = vadd.f32 %v6154, %v6155
      %v6157 = vrot.slane %v6156, 2
      %v6158 = vadd.f32 %v6156, %v6157
      %v6159 = vrot.slane %v6158, 1
      %v6160 = vadd.f32 %v6158, %v6159
      %v6161 = vsel %vm2873, %v6147, 0.0
      %v6162 = vrot.slane %v6161, 4
      %v6163 = vadd.f32 %v6161, %v6162
      %v6164 = vrot.slane %v6163, 2
      %v6165 = vadd.f32 %v6163, %v6164
      %v6166 = vrot.slane %v6165, 1
      %v6167 = vadd.f32 %v6165, %v6166
      %v6168 = vsel %vm2873, %v6148, 0.0
      %v6169 = vrot.slane %v6168, 4
      %v6170 = vadd.f32 %v6168, %v6169
      %v6171 = vrot.slane %v6170, 2
      %v6172 = vadd.f32 %v6170, %v6171
      %v6173 = vrot.slane %v6172, 1
      %v6174 = vadd.f32 %v6172, %v6173
      %v6175 = vsel %vm2873, %v6149, 0.0
      %v6176 = vrot.slane %v6175, 4
      %v6177 = vadd.f32 %v6175, %v6176
      %v6178 = vrot.slane %v6177, 2
      %v6179 = vadd.f32 %v6177, %v6178
      %v6180 = vrot.slane %v6179, 1
      %v6181 = vadd.f32 %v6179, %v6180
      %v6182 = vsel %vm2873, %v6150, 0.0
      %v6183 = vrot.slane %v6182, 4
      %v6184 = vadd.f32 %v6182, %v6183
      %v6185 = vrot.slane %v6184, 2
      %v6186 = vadd.f32 %v6184, %v6185
      %v6187 = vrot.slane %v6186, 1
      %v6188 = vadd.f32 %v6186, %v6187
      %v6189 = vsel %vm2873, %v6151, 0.0
      %v6190 = vrot.slane %v6189, 4
      %v6191 = vadd.f32 %v6189, %v6190
      %v6192 = vrot.slane %v6191, 2
      %v6193 = vadd.f32 %v6191, %v6192
      %v6194 = vrot.slane %v6193, 1
      %v6195 = vadd.f32 %v6193, %v6194
      %v6196 = vsel %vm2873, %v6152, 0.0
      %v6197 = vrot.slane %v6196, 4
      %v6198 = vadd.f32 %v6196, %v6197
      %v6199 = vrot.slane %v6198, 2
      %v6200 = vadd.f32 %v6198, %v6199
      %v6201 = vrot.slane %v6200, 1
      %v6202 = vadd.f32 %v6200, %v6201
      %v6203 = vsel %vm2873, %v6153, 0.0
      %v6204 = vrot.slane %v6203, 4
      %v6205 = vadd.f32 %v6203, %v6204
      %v6206 = vrot.slane %v6205, 2
      %v6207 = vadd.f32 %v6205, %v6206
      %v6208 = vrot.slane %v6207, 1
      %v6209 = vadd.f32 %v6207, %v6208
      %v6210 = vmul.f32 %v3130, %v5963
      %v6212 = vrot.slane %v6210, 1
      %v6213 = vrot.slane %v6210, 2
      %v6214 = vrot.slane %v6210, 3
      %v6215 = vrot.slane %v6210, 4
      %v6216 = vrot.slane %v6210, 5
      %v6217 = vrot.slane %v6210, 6
      %v6218 = vrot.slane %v6210, 7
      %v6227 = vadd.f32 %v6160, %v6210
      %v6228 = vadd.f32 %v6167, %v6212
      %v6229 = vadd.f32 %v6174, %v6213
      %v6230 = vadd.f32 %v6181, %v6214
      %v6231 = vadd.f32 %v6188, %v6215
      %v6232 = vadd.f32 %v6195, %v6216
      %v6233 = vadd.f32 %v6202, %v6217
      %v6234 = vadd.f32 %v6209, %v6218
      %v6236 = vrot.slane %v5810, 1
      %v6237 = vrot.slane %v5810, 2
      %v6238 = vrot.slane %v5810, 3
      %v6239 = vrot.slane %v5810, 4
      %v6240 = vrot.slane %v5810, 5
      %v6241 = vrot.slane %v5810, 6
      %v6242 = vrot.slane %v5810, 7
      %6243 = vrot.lane.b32.xlu0 %v5810, 64
      %v6244 = vpop.permute.xlu0 %6243
      %6245 = vrot.lane.b32.xlu0 %v6236, 64
      %v6246 = vpop.permute.xlu0 %6245
      %6247 = vrot.lane.b32.xlu0 %v6237, 64
      %v6248 = vpop.permute.xlu0 %6247
      %6249 = vrot.lane.b32.xlu0 %v6238, 64
      %v6250 = vpop.permute.xlu0 %6249
      %6251 = vrot.lane.b32.xlu0 %v6239, 64
      %v6252 = vpop.permute.xlu0 %6251
      %6253 = vrot.lane.b32.xlu0 %v6240, 64
      %v6254 = vpop.permute.xlu0 %6253
      %6255 = vrot.lane.b32.xlu0 %v6241, 64
      %v6256 = vpop.permute.xlu0 %6255
      %6257 = vrot.lane.b32.xlu0 %v6242, 64
      %v6258 = vpop.permute.xlu0 %6257
      %v6267 = vmul.f32 %v6227, %v6244
      %v6268 = vmul.f32 %v6228, %v6246
      %v6269 = vmul.f32 %v6229, %v6248
      %v6270 = vmul.f32 %v6230, %v6250
      %v6271 = vmul.f32 %v6231, %v6252
      %v6272 = vmul.f32 %v6232, %v6254
      %v6273 = vmul.f32 %v6233, %v6256
      %v6274 = vmul.f32 %v6234, %v6258
      %v6283 = vrot.slane %v6268, 7
      %v6284 = vsel %vm6039, %v6283, %v6267
      %v6285 = vrot.slane %v6269, 6
      %v6286 = vsel %vm6042, %v6285, %v6284
      %v6287 = vrot.slane %v6270, 5
      %v6288 = vsel %vm6045, %v6287, %v6286
      %v6289 = vrot.slane %v6271, 4
      %v6290 = vsel %vm6048, %v6289, %v6288
      %v6291 = vrot.slane %v6272, 3
      %v6292 = vsel %vm6051, %v6291, %v6290
      %v6293 = vrot.slane %v6273, 2
      %v6294 = vsel %vm6054, %v6293, %v6292
      %v6295 = vrot.slane %v6274, 1
      %v6296 = vsel %vm6057, %v6295, %v6294
      %v6297 = vsel %vm2873, %v6296, 0
      %6299 = vmatpush.msra.mxu0 0.0
      %6300 = vmatpush.msra.mxu0 0.0
      %6301 = vmatpush.msra.mxu0 0.0
      %6302 = vmatpush.msra.mxu0 0.0
      %6303 = vmatpush.msra.mxu0 0.0
      %6304 = vmatpush.msra.mxu0 0.0
      %6305 = vmatpush.msra.mxu0 0.0
      %6306 = vmatpush.msra.mxu0 0.0
      %6307 = vmatpush.msra.mxu0 %v5833
      %6308 = vmatpush.msra.mxu0 %v5832
      %6309 = vmatpush.msra.mxu0 %v5831
      %6310 = vmatpush.msra.mxu0 %v5830
      %6311 = vmatpush.msra.mxu0 %v5829
      %6312 = vmatpush.msra.mxu0 %v5828
      %6313 = vmatpush.msra.mxu0 %v5827
      %6314 = vmatpush.msra.mxu0 %v5826
      %6315 = vmatmul.f32.gmra.mxu0 %v6297
      %v6316 = vpop.f32.mrf.mxu0
      %v6317 = vadd.f32 0.0, %v6316
      %6318 = vdwg.mxu0
      %6319 = vst.msk [vmem:[%s467 + $0x8] sm:$0xff] %vm541, %v6317
      %v6320 = vmul.f32 %v4082, %v6090
      %v6321 = vmul.f32 %v4084, %v6091
      %v6322 = vmul.f32 %v4086, %v6092
      %v6323 = vmul.f32 %v4088, %v6093
      %v6324 = vmul.f32 %v4090, %v6094
      %v6325 = vmul.f32 %v4092, %v6095
      %v6326 = vmul.f32 %v4094, %v6096
      %v6327 = vmul.f32 %v4096, %v6097
      %v6328 = vadd.f32 %v6320, %v5617
      %v6329 = vadd.f32 %v6321, %v5618
      %v6330 = vadd.f32 %v6322, %v5619
      %v6331 = vadd.f32 %v6323, %v5620
      %v6332 = vadd.f32 %v6324, %v5621
      %v6333 = vadd.f32 %v6325, %v5622
      %v6334 = vadd.f32 %v6326, %v5623
      %v6335 = vadd.f32 %v6327, %v5624
      %v6336 = vlaneseq
      %v6337 = vshrl.u32 %v6336, 7
      %v6338 = vadd.s32 %v6337, 10
      %6339 = vset.pattern.permute.xlu0 %v6338
      %6340 = vperm.xlu0 %6339, %v4561
      %v6341 = vpop.permute.xlu0 %6340
      %v6342 = vlaneseq
      %v6343 = vshrl.u32 %v6342, 7
      %v6344 = vadd.s32 %v6343, 10
      %6345 = vset.pattern.permute.xlu0 %v6344
      %6346 = vperm.xlu0 %6345, %v4568
      %v6347 = vpop.permute.xlu0 %6346
      %v6348 = vlaneseq
      %v6349 = vshrl.u32 %v6348, 7
      %v6350 = vadd.s32 %v6349, 10
      %6351 = vset.pattern.permute.xlu0 %v6350
      %6352 = vperm.xlu0 %6351, %v4575
      %v6353 = vpop.permute.xlu0 %6352
      %v6354 = vlaneseq
      %v6355 = vshrl.u32 %v6354, 7
      %v6356 = vadd.s32 %v6355, 10
      %6357 = vset.pattern.permute.xlu0 %v6356
      %6358 = vperm.xlu0 %6357, %v4582
      %v6359 = vpop.permute.xlu0 %6358
      %v6360 = vlaneseq
      %v6361 = vshrl.u32 %v6360, 7
      %v6362 = vadd.s32 %v6361, 10
      %6363 = vset.pattern.permute.xlu0 %v6362
      %6364 = vperm.xlu0 %6363, %v4589
      %v6365 = vpop.permute.xlu0 %6364
      %v6366 = vlaneseq
      %v6367 = vshrl.u32 %v6366, 7
      %v6368 = vadd.s32 %v6367, 10
      %6369 = vset.pattern.permute.xlu0 %v6368
      %6370 = vperm.xlu0 %6369, %v4596
      %v6371 = vpop.permute.xlu0 %6370
      %v6372 = vlaneseq
      %v6373 = vshrl.u32 %v6372, 7
      %v6374 = vadd.s32 %v6373, 10
      %6375 = vset.pattern.permute.xlu0 %v6374
      %6376 = vperm.xlu0 %6375, %v4603
      %v6377 = vpop.permute.xlu0 %6376
      %v6378 = vlaneseq
      %v6379 = vshrl.u32 %v6378, 7
      %v6380 = vadd.s32 %v6379, 10
      %6381 = vset.pattern.permute.xlu0 %v6380
      %6382 = vperm.xlu0 %6381, %v4610
      %v6383 = vpop.permute.xlu0 %6382
      %v6384 = vmul.f32 %v6328, %v6341
      %v6385 = vmul.f32 %v6329, %v6347
      %v6386 = vmul.f32 %v6330, %v6353
      %v6387 = vmul.f32 %v6331, %v6359
      %v6388 = vmul.f32 %v6332, %v6365
      %v6389 = vmul.f32 %v6333, %v6371
      %v6390 = vmul.f32 %v6334, %v6377
      %v6391 = vmul.f32 %v6335, %v6383
      %v6392 = vsel %vm2873, %v6384, 0.0
      %v6393 = vrot.slane %v6392, 4
      %v6394 = vadd.f32 %v6392, %v6393
      %v6395 = vrot.slane %v6394, 2
      %v6396 = vadd.f32 %v6394, %v6395
      %v6397 = vrot.slane %v6396, 1
      %v6398 = vadd.f32 %v6396, %v6397
      %v6399 = vsel %vm2873, %v6385, 0.0
      %v6400 = vrot.slane %v6399, 4
      %v6401 = vadd.f32 %v6399, %v6400
      %v6402 = vrot.slane %v6401, 2
      %v6403 = vadd.f32 %v6401, %v6402
      %v6404 = vrot.slane %v6403, 1
      %v6405 = vadd.f32 %v6403, %v6404
      %v6406 = vsel %vm2873, %v6386, 0.0
      %v6407 = vrot.slane %v6406, 4
      %v6408 = vadd.f32 %v6406, %v6407
      %v6409 = vrot.slane %v6408, 2
      %v6410 = vadd.f32 %v6408, %v6409
      %v6411 = vrot.slane %v6410, 1
      %v6412 = vadd.f32 %v6410, %v6411
      %v6413 = vsel %vm2873, %v6387, 0.0
      %v6414 = vrot.slane %v6413, 4
      %v6415 = vadd.f32 %v6413, %v6414
      %v6416 = vrot.slane %v6415, 2
      %v6417 = vadd.f32 %v6415, %v6416
      %v6418 = vrot.slane %v6417, 1
      %v6419 = vadd.f32 %v6417, %v6418
      %v6420 = vsel %vm2873, %v6388, 0.0
      %v6421 = vrot.slane %v6420, 4
      %v6422 = vadd.f32 %v6420, %v6421
      %v6423 = vrot.slane %v6422, 2
      %v6424 = vadd.f32 %v6422, %v6423
      %v6425 = vrot.slane %v6424, 1
      %v6426 = vadd.f32 %v6424, %v6425
      %v6427 = vsel %vm2873, %v6389, 0.0
      %v6428 = vrot.slane %v6427, 4
      %v6429 = vadd.f32 %v6427, %v6428
      %v6430 = vrot.slane %v6429, 2
      %v6431 = vadd.f32 %v6429, %v6430
      %v6432 = vrot.slane %v6431, 1
      %v6433 = vadd.f32 %v6431, %v6432
      %v6434 = vsel %vm2873, %v6390, 0.0
      %v6435 = vrot.slane %v6434, 4
      %v6436 = vadd.f32 %v6434, %v6435
      %v6437 = vrot.slane %v6436, 2
      %v6438 = vadd.f32 %v6436, %v6437
      %v6439 = vrot.slane %v6438, 1
      %v6440 = vadd.f32 %v6438, %v6439
      %v6441 = vsel %vm2873, %v6391, 0.0
      %v6442 = vrot.slane %v6441, 4
      %v6443 = vadd.f32 %v6441, %v6442
      %v6444 = vrot.slane %v6443, 2
      %v6445 = vadd.f32 %v6443, %v6444
      %v6446 = vrot.slane %v6445, 1
      %v6447 = vadd.f32 %v6445, %v6446
      %v6448 = vmul.f32 %v3131, %v5963
      %v6450 = vrot.slane %v6448, 1
      %v6451 = vrot.slane %v6448, 2
      %v6452 = vrot.slane %v6448, 3
      %v6453 = vrot.slane %v6448, 4
      %v6454 = vrot.slane %v6448, 5
      %v6455 = vrot.slane %v6448, 6
      %v6456 = vrot.slane %v6448, 7
      %v6465 = vadd.f32 %v6398, %v6448
      %v6466 = vadd.f32 %v6405, %v6450
      %v6467 = vadd.f32 %v6412, %v6451
      %v6468 = vadd.f32 %v6419, %v6452
      %v6469 = vadd.f32 %v6426, %v6453
      %v6470 = vadd.f32 %v6433, %v6454
      %v6471 = vadd.f32 %v6440, %v6455
      %v6472 = vadd.f32 %v6447, %v6456
      %v6474 = vrot.slane %v5811, 1
      %v6475 = vrot.slane %v5811, 2
      %v6476 = vrot.slane %v5811, 3
      %v6477 = vrot.slane %v5811, 4
      %v6478 = vrot.slane %v5811, 5
      %v6479 = vrot.slane %v5811, 6
      %v6480 = vrot.slane %v5811, 7
      %6481 = vrot.lane.b32.xlu0 %v5811, 64
      %v6482 = vpop.permute.xlu0 %6481
      %6483 = vrot.lane.b32.xlu0 %v6474, 64
      %v6484 = vpop.permute.xlu0 %6483
      %6485 = vrot.lane.b32.xlu0 %v6475, 64
      %v6486 = vpop.permute.xlu0 %6485
      %6487 = vrot.lane.b32.xlu0 %v6476, 64
      %v6488 = vpop.permute.xlu0 %6487
      %6489 = vrot.lane.b32.xlu0 %v6477, 64
      %v6490 = vpop.permute.xlu0 %6489
      %6491 = vrot.lane.b32.xlu0 %v6478, 64
      %v6492 = vpop.permute.xlu0 %6491
      %6493 = vrot.lane.b32.xlu0 %v6479, 64
      %v6494 = vpop.permute.xlu0 %6493
      %6495 = vrot.lane.b32.xlu0 %v6480, 64
      %v6496 = vpop.permute.xlu0 %6495
      %v6505 = vmul.f32 %v6465, %v6482
      %v6506 = vmul.f32 %v6466, %v6484
      %v6507 = vmul.f32 %v6467, %v6486
      %v6508 = vmul.f32 %v6468, %v6488
      %v6509 = vmul.f32 %v6469, %v6490
      %v6510 = vmul.f32 %v6470, %v6492
      %v6511 = vmul.f32 %v6471, %v6494
      %v6512 = vmul.f32 %v6472, %v6496
      %v6521 = vrot.slane %v6506, 7
      %v6522 = vsel %vm6039, %v6521, %v6505
      %v6523 = vrot.slane %v6507, 6
      %v6524 = vsel %vm6042, %v6523, %v6522
      %v6525 = vrot.slane %v6508, 5
      %v6526 = vsel %vm6045, %v6525, %v6524
      %v6527 = vrot.slane %v6509, 4
      %v6528 = vsel %vm6048, %v6527, %v6526
      %v6529 = vrot.slane %v6510, 3
      %v6530 = vsel %vm6051, %v6529, %v6528
      %v6531 = vrot.slane %v6511, 2
      %v6532 = vsel %vm6054, %v6531, %v6530
      %v6533 = vrot.slane %v6512, 1
      %v6534 = vsel %vm6057, %v6533, %v6532
      %v6535 = vsel %vm2873, %v6534, 0
      %6537 = vmatpush.msra.mxu0 0.0
      %6538 = vmatpush.msra.mxu0 0.0
      %6539 = vmatpush.msra.mxu0 0.0
      %6540 = vmatpush.msra.mxu0 0.0
      %6541 = vmatpush.msra.mxu0 0.0
      %6542 = vmatpush.msra.mxu0 0.0
      %6543 = vmatpush.msra.mxu0 0.0
      %6544 = vmatpush.msra.mxu0 0.0
      %6545 = vmatpush.msra.mxu0 %v5833
      %6546 = vmatpush.msra.mxu0 %v5832
      %6547 = vmatpush.msra.mxu0 %v5831
      %6548 = vmatpush.msra.mxu0 %v5830
      %6549 = vmatpush.msra.mxu0 %v5829
      %6550 = vmatpush.msra.mxu0 %v5828
      %6551 = vmatpush.msra.mxu0 %v5827
      %6552 = vmatpush.msra.mxu0 %v5826
      %6553 = vmatmul.f32.gmra.mxu0 %v6535
      %v6554 = vpop.f32.mrf.mxu0
      %v6555 = vadd.f32 0.0, %v6554
      %6556 = vdwg.mxu0
      %6557 = vst.msk [vmem:[%s467 + $0x10] sm:$0xff] %vm541, %v6555
      %v6558 = vmul.f32 %v4098, %v6328
      %v6559 = vmul.f32 %v4100, %v6329
      %v6560 = vmul.f32 %v4102, %v6330
      %v6561 = vmul.f32 %v4104, %v6331
      %v6562 = vmul.f32 %v4106, %v6332
      %v6563 = vmul.f32 %v4108, %v6333
      %v6564 = vmul.f32 %v4110, %v6334
      %v6565 = vmul.f32 %v4112, %v6335
      %v6566 = vadd.f32 %v6558, %v5625
      %v6567 = vadd.f32 %v6559, %v5626
      %v6568 = vadd.f32 %v6560, %v5627
      %v6569 = vadd.f32 %v6561, %v5628
      %v6570 = vadd.f32 %v6562, %v5629
      %v6571 = vadd.f32 %v6563, %v5630
      %v6572 = vadd.f32 %v6564, %v5631
      %v6573 = vadd.f32 %v6565, %v5632
      %v6574 = vlaneseq
      %v6575 = vshrl.u32 %v6574, 7
      %v6576 = vadd.s32 %v6575, 10
      %6577 = vset.pattern.permute.xlu0 %v6576
      %6578 = vperm.xlu0 %6577, %v4617
      %v6579 = vpop.permute.xlu0 %6578
      %v6580 = vlaneseq
      %v6581 = vshrl.u32 %v6580, 7
      %v6582 = vadd.s32 %v6581, 10
      %6583 = vset.pattern.permute.xlu0 %v6582
      %6584 = vperm.xlu0 %6583, %v4624
      %v6585 = vpop.permute.xlu0 %6584
      %v6586 = vlaneseq
      %v6587 = vshrl.u32 %v6586, 7
      %v6588 = vadd.s32 %v6587, 10
      %6589 = vset.pattern.permute.xlu0 %v6588
      %6590 = vperm.xlu0 %6589, %v4631
      %v6591 = vpop.permute.xlu0 %6590
      %v6592 = vlaneseq
      %v6593 = vshrl.u32 %v6592, 7
      %v6594 = vadd.s32 %v6593, 10
      %6595 = vset.pattern.permute.xlu0 %v6594
      %6596 = vperm.xlu0 %6595, %v4638
      %v6597 = vpop.permute.xlu0 %6596
      %v6598 = vlaneseq
      %v6599 = vshrl.u32 %v6598, 7
      %v6600 = vadd.s32 %v6599, 10
      %6601 = vset.pattern.permute.xlu0 %v6600
      %6602 = vperm.xlu0 %6601, %v4645
      %v6603 = vpop.permute.xlu0 %6602
      %v6604 = vlaneseq
      %v6605 = vshrl.u32 %v6604, 7
      %v6606 = vadd.s32 %v6605, 10
      %6607 = vset.pattern.permute.xlu0 %v6606
      %6608 = vperm.xlu0 %6607, %v4652
      %v6609 = vpop.permute.xlu0 %6608
      %v6610 = vlaneseq
      %v6611 = vshrl.u32 %v6610, 7
      %v6612 = vadd.s32 %v6611, 10
      %6613 = vset.pattern.permute.xlu0 %v6612
      %6614 = vperm.xlu0 %6613, %v4659
      %v6615 = vpop.permute.xlu0 %6614
      %v6616 = vlaneseq
      %v6617 = vshrl.u32 %v6616, 7
      %v6618 = vadd.s32 %v6617, 10
      %6619 = vset.pattern.permute.xlu0 %v6618
      %6620 = vperm.xlu0 %6619, %v4666
      %v6621 = vpop.permute.xlu0 %6620
      %v6622 = vmul.f32 %v6566, %v6579
      %v6623 = vmul.f32 %v6567, %v6585
      %v6624 = vmul.f32 %v6568, %v6591
      %v6625 = vmul.f32 %v6569, %v6597
      %v6626 = vmul.f32 %v6570, %v6603
      %v6627 = vmul.f32 %v6571, %v6609
      %v6628 = vmul.f32 %v6572, %v6615
      %v6629 = vmul.f32 %v6573, %v6621
      %v6630 = vsel %vm2873, %v6622, 0.0
      %v6631 = vrot.slane %v6630, 4
      %v6632 = vadd.f32 %v6630, %v6631
      %v6633 = vrot.slane %v6632, 2
      %v6634 = vadd.f32 %v6632, %v6633
      %v6635 = vrot.slane %v6634, 1
      %v6636 = vadd.f32 %v6634, %v6635
      %v6637 = vsel %vm2873, %v6623, 0.0
      %v6638 = vrot.slane %v6637, 4
      %v6639 = vadd.f32 %v6637, %v6638
      %v6640 = vrot.slane %v6639, 2
      %v6641 = vadd.f32 %v6639, %v6640
      %v6642 = vrot.slane %v6641, 1
      %v6643 = vadd.f32 %v6641, %v6642
      %v6644 = vsel %vm2873, %v6624, 0.0
      %v6645 = vrot.slane %v6644, 4
      %v6646 = vadd.f32 %v6644, %v6645
      %v6647 = vrot.slane %v6646, 2
      %v6648 = vadd.f32 %v6646, %v6647
      %v6649 = vrot.slane %v6648, 1
      %v6650 = vadd.f32 %v6648, %v6649
      %v6651 = vsel %vm2873, %v6625, 0.0
      %v6652 = vrot.slane %v6651, 4
      %v6653 = vadd.f32 %v6651, %v6652
      %v6654 = vrot.slane %v6653, 2
      %v6655 = vadd.f32 %v6653, %v6654
      %v6656 = vrot.slane %v6655, 1
      %v6657 = vadd.f32 %v6655, %v6656
      %v6658 = vsel %vm2873, %v6626, 0.0
      %v6659 = vrot.slane %v6658, 4
      %v6660 = vadd.f32 %v6658, %v6659
      %v6661 = vrot.slane %v6660, 2
      %v6662 = vadd.f32 %v6660, %v6661
      %v6663 = vrot.slane %v6662, 1
      %v6664 = vadd.f32 %v6662, %v6663
      %v6665 = vsel %vm2873, %v6627, 0.0
      %v6666 = vrot.slane %v6665, 4
      %v6667 = vadd.f32 %v6665, %v6666
      %v6668 = vrot.slane %v6667, 2
      %v6669 = vadd.f32 %v6667, %v6668
      %v6670 = vrot.slane %v6669, 1
      %v6671 = vadd.f32 %v6669, %v6670
      %v6672 = vsel %vm2873, %v6628, 0.0
      %v6673 = vrot.slane %v6672, 4
      %v6674 = vadd.f32 %v6672, %v6673
      %v6675 = vrot.slane %v6674, 2
      %v6676 = vadd.f32 %v6674, %v6675
      %v6677 = vrot.slane %v6676, 1
      %v6678 = vadd.f32 %v6676, %v6677
      %v6679 = vsel %vm2873, %v6629, 0.0
      %v6680 = vrot.slane %v6679, 4
      %v6681 = vadd.f32 %v6679, %v6680
      %v6682 = vrot.slane %v6681, 2
      %v6683 = vadd.f32 %v6681, %v6682
      %v6684 = vrot.slane %v6683, 1
      %v6685 = vadd.f32 %v6683, %v6684
      %v6686 = vmul.f32 %v3132, %v5963
      %v6688 = vrot.slane %v6686, 1
      %v6689 = vrot.slane %v6686, 2
      %v6690 = vrot.slane %v6686, 3
      %v6691 = vrot.slane %v6686, 4
      %v6692 = vrot.slane %v6686, 5
      %v6693 = vrot.slane %v6686, 6
      %v6694 = vrot.slane %v6686, 7
      %v6703 = vadd.f32 %v6636, %v6686
      %v6704 = vadd.f32 %v6643, %v6688
      %v6705 = vadd.f32 %v6650, %v6689
      %v6706 = vadd.f32 %v6657, %v6690
      %v6707 = vadd.f32 %v6664, %v6691
      %v6708 = vadd.f32 %v6671, %v6692
      %v6709 = vadd.f32 %v6678, %v6693
      %v6710 = vadd.f32 %v6685, %v6694
      %v6712 = vrot.slane %v5812, 1
      %v6713 = vrot.slane %v5812, 2
      %v6714 = vrot.slane %v5812, 3
      %v6715 = vrot.slane %v5812, 4
      %v6716 = vrot.slane %v5812, 5
      %v6717 = vrot.slane %v5812, 6
      %v6718 = vrot.slane %v5812, 7
      %6719 = vrot.lane.b32.xlu0 %v5812, 64
      %v6720 = vpop.permute.xlu0 %6719
      %6721 = vrot.lane.b32.xlu0 %v6712, 64
      %v6722 = vpop.permute.xlu0 %6721
      %6723 = vrot.lane.b32.xlu0 %v6713, 64
      %v6724 = vpop.permute.xlu0 %6723
      %6725 = vrot.lane.b32.xlu0 %v6714, 64
      %v6726 = vpop.permute.xlu0 %6725
      %6727 = vrot.lane.b32.xlu0 %v6715, 64
      %v6728 = vpop.permute.xlu0 %6727
      %6729 = vrot.lane.b32.xlu0 %v6716, 64
      %v6730 = vpop.permute.xlu0 %6729
      %6731 = vrot.lane.b32.xlu0 %v6717, 64
      %v6732 = vpop.permute.xlu0 %6731
      %6733 = vrot.lane.b32.xlu0 %v6718, 64
      %v6734 = vpop.permute.xlu0 %6733
      %v6743 = vmul.f32 %v6703, %v6720
      %v6744 = vmul.f32 %v6704, %v6722
      %v6745 = vmul.f32 %v6705, %v6724
      %v6746 = vmul.f32 %v6706, %v6726
      %v6747 = vmul.f32 %v6707, %v6728
      %v6748 = vmul.f32 %v6708, %v6730
      %v6749 = vmul.f32 %v6709, %v6732
      %v6750 = vmul.f32 %v6710, %v6734
      %v6759 = vrot.slane %v6744, 7
      %v6760 = vsel %vm6039, %v6759, %v6743
      %v6761 = vrot.slane %v6745, 6
      %v6762 = vsel %vm6042, %v6761, %v6760
      %v6763 = vrot.slane %v6746, 5
      %v6764 = vsel %vm6045, %v6763, %v6762
      %v6765 = vrot.slane %v6747, 4
      %v6766 = vsel %vm6048, %v6765, %v6764
      %v6767 = vrot.slane %v6748, 3
      %v6768 = vsel %vm6051, %v6767, %v6766
      %v6769 = vrot.slane %v6749, 2
      %v6770 = vsel %vm6054, %v6769, %v6768
      %v6771 = vrot.slane %v6750, 1
      %v6772 = vsel %vm6057, %v6771, %v6770
      %v6773 = vsel %vm2873, %v6772, 0
      %6775 = vmatpush.msra.mxu0 0.0
      %6776 = vmatpush.msra.mxu0 0.0
      %6777 = vmatpush.msra.mxu0 0.0
      %6778 = vmatpush.msra.mxu0 0.0
      %6779 = vmatpush.msra.mxu0 0.0
      %6780 = vmatpush.msra.mxu0 0.0
      %6781 = vmatpush.msra.mxu0 0.0
      %6782 = vmatpush.msra.mxu0 0.0
      %6783 = vmatpush.msra.mxu0 %v5833
      %6784 = vmatpush.msra.mxu0 %v5832
      %6785 = vmatpush.msra.mxu0 %v5831
      %6786 = vmatpush.msra.mxu0 %v5830
      %6787 = vmatpush.msra.mxu0 %v5829
      %6788 = vmatpush.msra.mxu0 %v5828
      %6789 = vmatpush.msra.mxu0 %v5827
      %6790 = vmatpush.msra.mxu0 %v5826
      %6791 = vmatmul.f32.gmra.mxu0 %v6773
      %v6792 = vpop.f32.mrf.mxu0
      %v6793 = vadd.f32 0.0, %v6792
      %6794 = vdwg.mxu0
      %6795 = vst.msk [vmem:[%s467 + $0x18] sm:$0xff] %vm541, %v6793
      %v6796 = vmul.f32 %v4114, %v6566
      %v6797 = vmul.f32 %v4116, %v6567
      %v6798 = vmul.f32 %v4118, %v6568
      %v6799 = vmul.f32 %v4120, %v6569
      %v6800 = vmul.f32 %v4122, %v6570
      %v6801 = vmul.f32 %v4124, %v6571
      %v6802 = vmul.f32 %v4126, %v6572
      %v6803 = vmul.f32 %v4128, %v6573
      %v6804 = vadd.f32 %v6796, %v5633
      %v6805 = vadd.f32 %v6797, %v5634
      %v6806 = vadd.f32 %v6798, %v5635
      %v6807 = vadd.f32 %v6799, %v5636
      %v6808 = vadd.f32 %v6800, %v5637
      %v6809 = vadd.f32 %v6801, %v5638
      %v6810 = vadd.f32 %v6802, %v5639
      %v6811 = vadd.f32 %v6803, %v5640
      %v6812 = vlaneseq
      %v6813 = vshrl.u32 %v6812, 7
      %v6814 = vadd.s32 %v6813, 10
      %6815 = vset.pattern.permute.xlu0 %v6814
      %6816 = vperm.xlu0 %6815, %v4673
      %v6817 = vpop.permute.xlu0 %6816
      %v6818 = vlaneseq
      %v6819 = vshrl.u32 %v6818, 7
      %v6820 = vadd.s32 %v6819, 10
      %6821 = vset.pattern.permute.xlu0 %v6820
      %6822 = vperm.xlu0 %6821, %v4680
      %v6823 = vpop.permute.xlu0 %6822
      %v6824 = vlaneseq
      %v6825 = vshrl.u32 %v6824, 7
      %v6826 = vadd.s32 %v6825, 10
      %6827 = vset.pattern.permute.xlu0 %v6826
      %6828 = vperm.xlu0 %6827, %v4687
      %v6829 = vpop.permute.xlu0 %6828
      %v6830 = vlaneseq
      %v6831 = vshrl.u32 %v6830, 7
      %v6832 = vadd.s32 %v6831, 10
      %6833 = vset.pattern.permute.xlu0 %v6832
      %6834 = vperm.xlu0 %6833, %v4694
      %v6835 = vpop.permute.xlu0 %6834
      %v6836 = vlaneseq
      %v6837 = vshrl.u32 %v6836, 7
      %v6838 = vadd.s32 %v6837, 10
      %6839 = vset.pattern.permute.xlu0 %v6838
      %6840 = vperm.xlu0 %6839, %v4701
      %v6841 = vpop.permute.xlu0 %6840
      %v6842 = vlaneseq
      %v6843 = vshrl.u32 %v6842, 7
      %v6844 = vadd.s32 %v6843, 10
      %6845 = vset.pattern.permute.xlu0 %v6844
      %6846 = vperm.xlu0 %6845, %v4708
      %v6847 = vpop.permute.xlu0 %6846
      %v6848 = vlaneseq
      %v6849 = vshrl.u32 %v6848, 7
      %v6850 = vadd.s32 %v6849, 10
      %6851 = vset.pattern.permute.xlu0 %v6850
      %6852 = vperm.xlu0 %6851, %v4715
      %v6853 = vpop.permute.xlu0 %6852
      %v6854 = vlaneseq
      %v6855 = vshrl.u32 %v6854, 7
      %v6856 = vadd.s32 %v6855, 10
      %6857 = vset.pattern.permute.xlu0 %v6856
      %6858 = vperm.xlu0 %6857, %v4722
      %v6859 = vpop.permute.xlu0 %6858
      %v6860 = vmul.f32 %v6804, %v6817
      %v6861 = vmul.f32 %v6805, %v6823
      %v6862 = vmul.f32 %v6806, %v6829
      %v6863 = vmul.f32 %v6807, %v6835
      %v6864 = vmul.f32 %v6808, %v6841
      %v6865 = vmul.f32 %v6809, %v6847
      %v6866 = vmul.f32 %v6810, %v6853
      %v6867 = vmul.f32 %v6811, %v6859
      %v6868 = vsel %vm2873, %v6860, 0.0
      %v6869 = vrot.slane %v6868, 4
      %v6870 = vadd.f32 %v6868, %v6869
      %v6871 = vrot.slane %v6870, 2
      %v6872 = vadd.f32 %v6870, %v6871
      %v6873 = vrot.slane %v6872, 1
      %v6874 = vadd.f32 %v6872, %v6873
      %v6875 = vsel %vm2873, %v6861, 0.0
      %v6876 = vrot.slane %v6875, 4
      %v6877 = vadd.f32 %v6875, %v6876
      %v6878 = vrot.slane %v6877, 2
      %v6879 = vadd.f32 %v6877, %v6878
      %v6880 = vrot.slane %v6879, 1
      %v6881 = vadd.f32 %v6879, %v6880
      %v6882 = vsel %vm2873, %v6862, 0.0
      %v6883 = vrot.slane %v6882, 4
      %v6884 = vadd.f32 %v6882, %v6883
      %v6885 = vrot.slane %v6884, 2
      %v6886 = vadd.f32 %v6884, %v6885
      %v6887 = vrot.slane %v6886, 1
      %v6888 = vadd.f32 %v6886, %v6887
      %v6889 = vsel %vm2873, %v6863, 0.0
      %v6890 = vrot.slane %v6889, 4
      %v6891 = vadd.f32 %v6889, %v6890
      %v6892 = vrot.slane %v6891, 2
      %v6893 = vadd.f32 %v6891, %v6892
      %v6894 = vrot.slane %v6893, 1
      %v6895 = vadd.f32 %v6893, %v6894
      %v6896 = vsel %vm2873, %v6864, 0.0
      %v6897 = vrot.slane %v6896, 4
      %v6898 = vadd.f32 %v6896, %v6897
      %v6899 = vrot.slane %v6898, 2
      %v6900 = vadd.f32 %v6898, %v6899
      %v6901 = vrot.slane %v6900, 1
      %v6902 = vadd.f32 %v6900, %v6901
      %v6903 = vsel %vm2873, %v6865, 0.0
      %v6904 = vrot.slane %v6903, 4
      %v6905 = vadd.f32 %v6903, %v6904
      %v6906 = vrot.slane %v6905, 2
      %v6907 = vadd.f32 %v6905, %v6906
      %v6908 = vrot.slane %v6907, 1
      %v6909 = vadd.f32 %v6907, %v6908
      %v6910 = vsel %vm2873, %v6866, 0.0
      %v6911 = vrot.slane %v6910, 4
      %v6912 = vadd.f32 %v6910, %v6911
      %v6913 = vrot.slane %v6912, 2
      %v6914 = vadd.f32 %v6912, %v6913
      %v6915 = vrot.slane %v6914, 1
      %v6916 = vadd.f32 %v6914, %v6915
      %v6917 = vsel %vm2873, %v6867, 0.0
      %v6918 = vrot.slane %v6917, 4
      %v6919 = vadd.f32 %v6917, %v6918
      %v6920 = vrot.slane %v6919, 2
      %v6921 = vadd.f32 %v6919, %v6920
      %v6922 = vrot.slane %v6921, 1
      %v6923 = vadd.f32 %v6921, %v6922
      %v6924 = vmul.f32 %v3133, %v5963
      %v6926 = vrot.slane %v6924, 1
      %v6927 = vrot.slane %v6924, 2
      %v6928 = vrot.slane %v6924, 3
      %v6929 = vrot.slane %v6924, 4
      %v6930 = vrot.slane %v6924, 5
      %v6931 = vrot.slane %v6924, 6
      %v6932 = vrot.slane %v6924, 7
      %v6941 = vadd.f32 %v6874, %v6924
      %v6942 = vadd.f32 %v6881, %v6926
      %v6943 = vadd.f32 %v6888, %v6927
      %v6944 = vadd.f32 %v6895, %v6928
      %v6945 = vadd.f32 %v6902, %v6929
      %v6946 = vadd.f32 %v6909, %v6930
      %v6947 = vadd.f32 %v6916, %v6931
      %v6948 = vadd.f32 %v6923, %v6932
      %v6950 = vrot.slane %v5813, 1
      %v6951 = vrot.slane %v5813, 2
      %v6952 = vrot.slane %v5813, 3
      %v6953 = vrot.slane %v5813, 4
      %v6954 = vrot.slane %v5813, 5
      %v6955 = vrot.slane %v5813, 6
      %v6956 = vrot.slane %v5813, 7
      %6957 = vrot.lane.b32.xlu0 %v5813, 64
      %v6958 = vpop.permute.xlu0 %6957
      %6959 = vrot.lane.b32.xlu0 %v6950, 64
      %v6960 = vpop.permute.xlu0 %6959
      %6961 = vrot.lane.b32.xlu0 %v6951, 64
      %v6962 = vpop.permute.xlu0 %6961
      %6963 = vrot.lane.b32.xlu0 %v6952, 64
      %v6964 = vpop.permute.xlu0 %6963
      %6965 = vrot.lane.b32.xlu0 %v6953, 64
      %v6966 = vpop.permute.xlu0 %6965
      %6967 = vrot.lane.b32.xlu0 %v6954, 64
      %v6968 = vpop.permute.xlu0 %6967
      %6969 = vrot.lane.b32.xlu0 %v6955, 64
      %v6970 = vpop.permute.xlu0 %6969
      %6971 = vrot.lane.b32.xlu0 %v6956, 64
      %v6972 = vpop.permute.xlu0 %6971
      %v6981 = vmul.f32 %v6941, %v6958
      %v6982 = vmul.f32 %v6942, %v6960
      %v6983 = vmul.f32 %v6943, %v6962
      %v6984 = vmul.f32 %v6944, %v6964
      %v6985 = vmul.f32 %v6945, %v6966
      %v6986 = vmul.f32 %v6946, %v6968
      %v6987 = vmul.f32 %v6947, %v6970
      %v6988 = vmul.f32 %v6948, %v6972
      %v6997 = vrot.slane %v6982, 7
      %v6998 = vsel %vm6039, %v6997, %v6981
      %v6999 = vrot.slane %v6983, 6
      %v7000 = vsel %vm6042, %v6999, %v6998
      %v7001 = vrot.slane %v6984, 5
      %v7002 = vsel %vm6045, %v7001, %v7000
      %v7003 = vrot.slane %v6985, 4
      %v7004 = vsel %vm6048, %v7003, %v7002
      %v7005 = vrot.slane %v6986, 3
      %v7006 = vsel %vm6051, %v7005, %v7004
      %v7007 = vrot.slane %v6987, 2
      %v7008 = vsel %vm6054, %v7007, %v7006
      %v7009 = vrot.slane %v6988, 1
      %v7010 = vsel %vm6057, %v7009, %v7008
      %v7011 = vsel %vm2873, %v7010, 0
      %7013 = vmatpush.msra.mxu0 0.0
      %7014 = vmatpush.msra.mxu0 0.0
      %7015 = vmatpush.msra.mxu0 0.0
      %7016 = vmatpush.msra.mxu0 0.0
      %7017 = vmatpush.msra.mxu0 0.0
      %7018 = vmatpush.msra.mxu0 0.0
      %7019 = vmatpush.msra.mxu0 0.0
      %7020 = vmatpush.msra.mxu0 0.0
      %7021 = vmatpush.msra.mxu0 %v5833
      %7022 = vmatpush.msra.mxu0 %v5832
      %7023 = vmatpush.msra.mxu0 %v5831
      %7024 = vmatpush.msra.mxu0 %v5830
      %7025 = vmatpush.msra.mxu0 %v5829
      %7026 = vmatpush.msra.mxu0 %v5828
      %7027 = vmatpush.msra.mxu0 %v5827
      %7028 = vmatpush.msra.mxu0 %v5826
      %7029 = vmatmul.f32.gmra.mxu0 %v7011
      %v7030 = vpop.f32.mrf.mxu0
      %v7031 = vadd.f32 0.0, %v7030
      %7032 = vdwg.mxu0
      %7033 = vst.msk [vmem:[%s467 + $0x20] sm:$0xff] %vm541, %v7031
      %v7034 = vmul.f32 %v4130, %v6804
      %v7035 = vmul.f32 %v4132, %v6805
      %v7036 = vmul.f32 %v4134, %v6806
      %v7037 = vmul.f32 %v4136, %v6807
      %v7038 = vmul.f32 %v4138, %v6808
      %v7039 = vmul.f32 %v4140, %v6809
      %v7040 = vmul.f32 %v4142, %v6810
      %v7041 = vmul.f32 %v4144, %v6811
      %v7042 = vadd.f32 %v7034, %v5641
      %v7043 = vadd.f32 %v7035, %v5642
      %v7044 = vadd.f32 %v7036, %v5643
      %v7045 = vadd.f32 %v7037, %v5644
      %v7046 = vadd.f32 %v7038, %v5645
      %v7047 = vadd.f32 %v7039, %v5646
      %v7048 = vadd.f32 %v7040, %v5647
      %v7049 = vadd.f32 %v7041, %v5648
      %v7050 = vlaneseq
      %v7051 = vshrl.u32 %v7050, 7
      %v7052 = vadd.s32 %v7051, 10
      %7053 = vset.pattern.permute.xlu0 %v7052
      %7054 = vperm.xlu0 %7053, %v4729
      %v7055 = vpop.permute.xlu0 %7054
      %v7056 = vlaneseq
      %v7057 = vshrl.u32 %v7056, 7
      %v7058 = vadd.s32 %v7057, 10
      %7059 = vset.pattern.permute.xlu0 %v7058
      %7060 = vperm.xlu0 %7059, %v4736
      %v7061 = vpop.permute.xlu0 %7060
      %v7062 = vlaneseq
      %v7063 = vshrl.u32 %v7062, 7
      %v7064 = vadd.s32 %v7063, 10
      %7065 = vset.pattern.permute.xlu0 %v7064
      %7066 = vperm.xlu0 %7065, %v4743
      %v7067 = vpop.permute.xlu0 %7066
      %v7068 = vlaneseq
      %v7069 = vshrl.u32 %v7068, 7
      %v7070 = vadd.s32 %v7069, 10
      %7071 = vset.pattern.permute.xlu0 %v7070
      %7072 = vperm.xlu0 %7071, %v4750
      %v7073 = vpop.permute.xlu0 %7072
      %v7074 = vlaneseq
      %v7075 = vshrl.u32 %v7074, 7
      %v7076 = vadd.s32 %v7075, 10
      %7077 = vset.pattern.permute.xlu0 %v7076
      %7078 = vperm.xlu0 %7077, %v4757
      %v7079 = vpop.permute.xlu0 %7078
      %v7080 = vlaneseq
      %v7081 = vshrl.u32 %v7080, 7
      %v7082 = vadd.s32 %v7081, 10
      %7083 = vset.pattern.permute.xlu0 %v7082
      %7084 = vperm.xlu0 %7083, %v4764
      %v7085 = vpop.permute.xlu0 %7084
      %v7086 = vlaneseq
      %v7087 = vshrl.u32 %v7086, 7
      %v7088 = vadd.s32 %v7087, 10
      %7089 = vset.pattern.permute.xlu0 %v7088
      %7090 = vperm.xlu0 %7089, %v4771
      %v7091 = vpop.permute.xlu0 %7090
      %v7092 = vlaneseq
      %v7093 = vshrl.u32 %v7092, 7
      %v7094 = vadd.s32 %v7093, 10
      %7095 = vset.pattern.permute.xlu0 %v7094
      %7096 = vperm.xlu0 %7095, %v4778
      %v7097 = vpop.permute.xlu0 %7096
      %v7098 = vmul.f32 %v7042, %v7055
      %v7099 = vmul.f32 %v7043, %v7061
      %v7100 = vmul.f32 %v7044, %v7067
      %v7101 = vmul.f32 %v7045, %v7073
      %v7102 = vmul.f32 %v7046, %v7079
      %v7103 = vmul.f32 %v7047, %v7085
      %v7104 = vmul.f32 %v7048, %v7091
      %v7105 = vmul.f32 %v7049, %v7097
      %v7106 = vsel %vm2873, %v7098, 0.0
      %v7107 = vrot.slane %v7106, 4
      %v7108 = vadd.f32 %v7106, %v7107
      %v7109 = vrot.slane %v7108, 2
      %v7110 = vadd.f32 %v7108, %v7109
      %v7111 = vrot.slane %v7110, 1
      %v7112 = vadd.f32 %v7110, %v7111
      %v7113 = vsel %vm2873, %v7099, 0.0
      %v7114 = vrot.slane %v7113, 4
      %v7115 = vadd.f32 %v7113, %v7114
      %v7116 = vrot.slane %v7115, 2
      %v7117 = vadd.f32 %v7115, %v7116
      %v7118 = vrot.slane %v7117, 1
      %v7119 = vadd.f32 %v7117, %v7118
      %v7120 = vsel %vm2873, %v7100, 0.0
      %v7121 = vrot.slane %v7120, 4
      %v7122 = vadd.f32 %v7120, %v7121
      %v7123 = vrot.slane %v7122, 2
      %v7124 = vadd.f32 %v7122, %v7123
      %v7125 = vrot.slane %v7124, 1
      %v7126 = vadd.f32 %v7124, %v7125
      %v7127 = vsel %vm2873, %v7101, 0.0
      %v7128 = vrot.slane %v7127, 4
      %v7129 = vadd.f32 %v7127, %v7128
      %v7130 = vrot.slane %v7129, 2
      %v7131 = vadd.f32 %v7129, %v7130
      %v7132 = vrot.slane %v7131, 1
      %v7133 = vadd.f32 %v7131, %v7132
      %v7134 = vsel %vm2873, %v7102, 0.0
      %v7135 = vrot.slane %v7134, 4
      %v7136 = vadd.f32 %v7134, %v7135
      %v7137 = vrot.slane %v7136, 2
      %v7138 = vadd.f32 %v7136, %v7137
      %v7139 = vrot.slane %v7138, 1
      %v7140 = vadd.f32 %v7138, %v7139
      %v7141 = vsel %vm2873, %v7103, 0.0
      %v7142 = vrot.slane %v7141, 4
      %v7143 = vadd.f32 %v7141, %v7142
      %v7144 = vrot.slane %v7143, 2
      %v7145 = vadd.f32 %v7143, %v7144
      %v7146 = vrot.slane %v7145, 1
      %v7147 = vadd.f32 %v7145, %v7146
      %v7148 = vsel %vm2873, %v7104, 0.0
      %v7149 = vrot.slane %v7148, 4
      %v7150 = vadd.f32 %v7148, %v7149
      %v7151 = vrot.slane %v7150, 2
      %v7152 = vadd.f32 %v7150, %v7151
      %v7153 = vrot.slane %v7152, 1
      %v7154 = vadd.f32 %v7152, %v7153
      %v7155 = vsel %vm2873, %v7105, 0.0
      %v7156 = vrot.slane %v7155, 4
      %v7157 = vadd.f32 %v7155, %v7156
      %v7158 = vrot.slane %v7157, 2
      %v7159 = vadd.f32 %v7157, %v7158
      %v7160 = vrot.slane %v7159, 1
      %v7161 = vadd.f32 %v7159, %v7160
      %v7162 = vmul.f32 %v3134, %v5963
      %v7164 = vrot.slane %v7162, 1
      %v7165 = vrot.slane %v7162, 2
      %v7166 = vrot.slane %v7162, 3
      %v7167 = vrot.slane %v7162, 4
      %v7168 = vrot.slane %v7162, 5
      %v7169 = vrot.slane %v7162, 6
      %v7170 = vrot.slane %v7162, 7
      %v7179 = vadd.f32 %v7112, %v7162
      %v7180 = vadd.f32 %v7119, %v7164
      %v7181 = vadd.f32 %v7126, %v7165
      %v7182 = vadd.f32 %v7133, %v7166
      %v7183 = vadd.f32 %v7140, %v7167
      %v7184 = vadd.f32 %v7147, %v7168
      %v7185 = vadd.f32 %v7154, %v7169
      %v7186 = vadd.f32 %v7161, %v7170
      %v7188 = vrot.slane %v5814, 1
      %v7189 = vrot.slane %v5814, 2
      %v7190 = vrot.slane %v5814, 3
      %v7191 = vrot.slane %v5814, 4
      %v7192 = vrot.slane %v5814, 5
      %v7193 = vrot.slane %v5814, 6
      %v7194 = vrot.slane %v5814, 7
      %7195 = vrot.lane.b32.xlu0 %v5814, 64
      %v7196 = vpop.permute.xlu0 %7195
      %7197 = vrot.lane.b32.xlu0 %v7188, 64
      %v7198 = vpop.permute.xlu0 %7197
      %7199 = vrot.lane.b32.xlu0 %v7189, 64
      %v7200 = vpop.permute.xlu0 %7199
      %7201 = vrot.lane.b32.xlu0 %v7190, 64
      %v7202 = vpop.permute.xlu0 %7201
      %7203 = vrot.lane.b32.xlu0 %v7191, 64
      %v7204 = vpop.permute.xlu0 %7203
      %7205 = vrot.lane.b32.xlu0 %v7192, 64
      %v7206 = vpop.permute.xlu0 %7205
      %7207 = vrot.lane.b32.xlu0 %v7193, 64
      %v7208 = vpop.permute.xlu0 %7207
      %7209 = vrot.lane.b32.xlu0 %v7194, 64
      %v7210 = vpop.permute.xlu0 %7209
      %v7219 = vmul.f32 %v7179, %v7196
      %v7220 = vmul.f32 %v7180, %v7198
      %v7221 = vmul.f32 %v7181, %v7200
      %v7222 = vmul.f32 %v7182, %v7202
      %v7223 = vmul.f32 %v7183, %v7204
      %v7224 = vmul.f32 %v7184, %v7206
      %v7225 = vmul.f32 %v7185, %v7208
      %v7226 = vmul.f32 %v7186, %v7210
      %v7235 = vrot.slane %v7220, 7
      %v7236 = vsel %vm6039, %v7235, %v7219
      %v7237 = vrot.slane %v7221, 6
      %v7238 = vsel %vm6042, %v7237, %v7236
      %v7239 = vrot.slane %v7222, 5
      %v7240 = vsel %vm6045, %v7239, %v7238
      %v7241 = vrot.slane %v7223, 4
      %v7242 = vsel %vm6048, %v7241, %v7240
      %v7243 = vrot.slane %v7224, 3
      %v7244 = vsel %vm6051, %v7243, %v7242
      %v7245 = vrot.slane %v7225, 2
      %v7246 = vsel %vm6054, %v7245, %v7244
      %v7247 = vrot.slane %v7226, 1
      %v7248 = vsel %vm6057, %v7247, %v7246
      %v7249 = vsel %vm2873, %v7248, 0
      %7251 = vmatpush.msra.mxu0 0.0
      %7252 = vmatpush.msra.mxu0 0.0
      %7253 = vmatpush.msra.mxu0 0.0
      %7254 = vmatpush.msra.mxu0 0.0
      %7255 = vmatpush.msra.mxu0 0.0
      %7256 = vmatpush.msra.mxu0 0.0
      %7257 = vmatpush.msra.mxu0 0.0
      %7258 = vmatpush.msra.mxu0 0.0
      %7259 = vmatpush.msra.mxu0 %v5833
      %7260 = vmatpush.msra.mxu0 %v5832
      %7261 = vmatpush.msra.mxu0 %v5831
      %7262 = vmatpush.msra.mxu0 %v5830
      %7263 = vmatpush.msra.mxu0 %v5829
      %7264 = vmatpush.msra.mxu0 %v5828
      %7265 = vmatpush.msra.mxu0 %v5827
      %7266 = vmatpush.msra.mxu0 %v5826
      %7267 = vmatmul.f32.gmra.mxu0 %v7249
      %v7268 = vpop.f32.mrf.mxu0
      %v7269 = vadd.f32 0.0, %v7268
      %7270 = vdwg.mxu0
      %7271 = vst.msk [vmem:[%s467 + $0x28] sm:$0xff] %vm541, %v7269
      %v7272 = vmul.f32 %v4146, %v7042
      %v7273 = vmul.f32 %v4148, %v7043
      %v7274 = vmul.f32 %v4150, %v7044
      %v7275 = vmul.f32 %v4152, %v7045
      %v7276 = vmul.f32 %v4154, %v7046
      %v7277 = vmul.f32 %v4156, %v7047
      %v7278 = vmul.f32 %v4158, %v7048
      %v7279 = vmul.f32 %v4160, %v7049
      %v7280 = vadd.f32 %v7272, %v5649
      %v7281 = vadd.f32 %v7273, %v5650
      %v7282 = vadd.f32 %v7274, %v5651
      %v7283 = vadd.f32 %v7275, %v5652
      %v7284 = vadd.f32 %v7276, %v5653
      %v7285 = vadd.f32 %v7277, %v5654
      %v7286 = vadd.f32 %v7278, %v5655
      %v7287 = vadd.f32 %v7279, %v5656
      %v7288 = vlaneseq
      %v7289 = vshrl.u32 %v7288, 7
      %v7290 = vadd.s32 %v7289, 10
      %7291 = vset.pattern.permute.xlu0 %v7290
      %7292 = vperm.xlu0 %7291, %v4785
      %v7293 = vpop.permute.xlu0 %7292
      %v7294 = vlaneseq
      %v7295 = vshrl.u32 %v7294, 7
      %v7296 = vadd.s32 %v7295, 10
      %7297 = vset.pattern.permute.xlu0 %v7296
      %7298 = vperm.xlu0 %7297, %v4792
      %v7299 = vpop.permute.xlu0 %7298
      %v7300 = vlaneseq
      %v7301 = vshrl.u32 %v7300, 7
      %v7302 = vadd.s32 %v7301, 10
      %7303 = vset.pattern.permute.xlu0 %v7302
      %7304 = vperm.xlu0 %7303, %v4799
      %v7305 = vpop.permute.xlu0 %7304
      %v7306 = vlaneseq
      %v7307 = vshrl.u32 %v7306, 7
      %v7308 = vadd.s32 %v7307, 10
      %7309 = vset.pattern.permute.xlu0 %v7308
      %7310 = vperm.xlu0 %7309, %v4806
      %v7311 = vpop.permute.xlu0 %7310
      %v7312 = vlaneseq
      %v7313 = vshrl.u32 %v7312, 7
      %v7314 = vadd.s32 %v7313, 10
      %7315 = vset.pattern.permute.xlu0 %v7314
      %7316 = vperm.xlu0 %7315, %v4813
      %v7317 = vpop.permute.xlu0 %7316
      %v7318 = vlaneseq
      %v7319 = vshrl.u32 %v7318, 7
      %v7320 = vadd.s32 %v7319, 10
      %7321 = vset.pattern.permute.xlu0 %v7320
      %7322 = vperm.xlu0 %7321, %v4820
      %v7323 = vpop.permute.xlu0 %7322
      %v7324 = vlaneseq
      %v7325 = vshrl.u32 %v7324, 7
      %v7326 = vadd.s32 %v7325, 10
      %7327 = vset.pattern.permute.xlu0 %v7326
      %7328 = vperm.xlu0 %7327, %v4827
      %v7329 = vpop.permute.xlu0 %7328
      %v7330 = vlaneseq
      %v7331 = vshrl.u32 %v7330, 7
      %v7332 = vadd.s32 %v7331, 10
      %7333 = vset.pattern.permute.xlu0 %v7332
      %7334 = vperm.xlu0 %7333, %v4834
      %v7335 = vpop.permute.xlu0 %7334
      %v7336 = vmul.f32 %v7280, %v7293
      %v7337 = vmul.f32 %v7281, %v7299
      %v7338 = vmul.f32 %v7282, %v7305
      %v7339 = vmul.f32 %v7283, %v7311
      %v7340 = vmul.f32 %v7284, %v7317
      %v7341 = vmul.f32 %v7285, %v7323
      %v7342 = vmul.f32 %v7286, %v7329
      %v7343 = vmul.f32 %v7287, %v7335
      %v7344 = vsel %vm2873, %v7336, 0.0
      %v7345 = vrot.slane %v7344, 4
      %v7346 = vadd.f32 %v7344, %v7345
      %v7347 = vrot.slane %v7346, 2
      %v7348 = vadd.f32 %v7346, %v7347
      %v7349 = vrot.slane %v7348, 1
      %v7350 = vadd.f32 %v7348, %v7349
      %v7351 = vsel %vm2873, %v7337, 0.0
      %v7352 = vrot.slane %v7351, 4
      %v7353 = vadd.f32 %v7351, %v7352
      %v7354 = vrot.slane %v7353, 2
      %v7355 = vadd.f32 %v7353, %v7354
      %v7356 = vrot.slane %v7355, 1
      %v7357 = vadd.f32 %v7355, %v7356
      %v7358 = vsel %vm2873, %v7338, 0.0
      %v7359 = vrot.slane %v7358, 4
      %v7360 = vadd.f32 %v7358, %v7359
      %v7361 = vrot.slane %v7360, 2
      %v7362 = vadd.f32 %v7360, %v7361
      %v7363 = vrot.slane %v7362, 1
      %v7364 = vadd.f32 %v7362, %v7363
      %v7365 = vsel %vm2873, %v7339, 0.0
      %v7366 = vrot.slane %v7365, 4
      %v7367 = vadd.f32 %v7365, %v7366
      %v7368 = vrot.slane %v7367, 2
      %v7369 = vadd.f32 %v7367, %v7368
      %v7370 = vrot.slane %v7369, 1
      %v7371 = vadd.f32 %v7369, %v7370
      %v7372 = vsel %vm2873, %v7340, 0.0
      %v7373 = vrot.slane %v7372, 4
      %v7374 = vadd.f32 %v7372, %v7373
      %v7375 = vrot.slane %v7374, 2
      %v7376 = vadd.f32 %v7374, %v7375
      %v7377 = vrot.slane %v7376, 1
      %v7378 = vadd.f32 %v7376, %v7377
      %v7379 = vsel %vm2873, %v7341, 0.0
      %v7380 = vrot.slane %v7379, 4
      %v7381 = vadd.f32 %v7379, %v7380
      %v7382 = vrot.slane %v7381, 2
      %v7383 = vadd.f32 %v7381, %v7382
      %v7384 = vrot.slane %v7383, 1
      %v7385 = vadd.f32 %v7383, %v7384
      %v7386 = vsel %vm2873, %v7342, 0.0
      %v7387 = vrot.slane %v7386, 4
      %v7388 = vadd.f32 %v7386, %v7387
      %v7389 = vrot.slane %v7388, 2
      %v7390 = vadd.f32 %v7388, %v7389
      %v7391 = vrot.slane %v7390, 1
      %v7392 = vadd.f32 %v7390, %v7391
      %v7393 = vsel %vm2873, %v7343, 0.0
      %v7394 = vrot.slane %v7393, 4
      %v7395 = vadd.f32 %v7393, %v7394
      %v7396 = vrot.slane %v7395, 2
      %v7397 = vadd.f32 %v7395, %v7396
      %v7398 = vrot.slane %v7397, 1
      %v7399 = vadd.f32 %v7397, %v7398
      %v7400 = vmul.f32 %v3135, %v5963
      %v7402 = vrot.slane %v7400, 1
      %v7403 = vrot.slane %v7400, 2
      %v7404 = vrot.slane %v7400, 3
      %v7405 = vrot.slane %v7400, 4
      %v7406 = vrot.slane %v7400, 5
      %v7407 = vrot.slane %v7400, 6
      %v7408 = vrot.slane %v7400, 7
      %v7417 = vadd.f32 %v7350, %v7400
      %v7418 = vadd.f32 %v7357, %v7402
      %v7419 = vadd.f32 %v7364, %v7403
      %v7420 = vadd.f32 %v7371, %v7404
      %v7421 = vadd.f32 %v7378, %v7405
      %v7422 = vadd.f32 %v7385, %v7406
      %v7423 = vadd.f32 %v7392, %v7407
      %v7424 = vadd.f32 %v7399, %v7408
      %v7426 = vrot.slane %v5815, 1
      %v7427 = vrot.slane %v5815, 2
      %v7428 = vrot.slane %v5815, 3
      %v7429 = vrot.slane %v5815, 4
      %v7430 = vrot.slane %v5815, 5
      %v7431 = vrot.slane %v5815, 6
      %v7432 = vrot.slane %v5815, 7
      %7433 = vrot.lane.b32.xlu0 %v5815, 64
      %v7434 = vpop.permute.xlu0 %7433
      %7435 = vrot.lane.b32.xlu0 %v7426, 64
      %v7436 = vpop.permute.xlu0 %7435
      %7437 = vrot.lane.b32.xlu0 %v7427, 64
      %v7438 = vpop.permute.xlu0 %7437
      %7439 = vrot.lane.b32.xlu0 %v7428, 64
      %v7440 = vpop.permute.xlu0 %7439
      %7441 = vrot.lane.b32.xlu0 %v7429, 64
      %v7442 = vpop.permute.xlu0 %7441
      %7443 = vrot.lane.b32.xlu0 %v7430, 64
      %v7444 = vpop.permute.xlu0 %7443
      %7445 = vrot.lane.b32.xlu0 %v7431, 64
      %v7446 = vpop.permute.xlu0 %7445
      %7447 = vrot.lane.b32.xlu0 %v7432, 64
      %v7448 = vpop.permute.xlu0 %7447
      %v7457 = vmul.f32 %v7417, %v7434
      %v7458 = vmul.f32 %v7418, %v7436
      %v7459 = vmul.f32 %v7419, %v7438
      %v7460 = vmul.f32 %v7420, %v7440
      %v7461 = vmul.f32 %v7421, %v7442
      %v7462 = vmul.f32 %v7422, %v7444
      %v7463 = vmul.f32 %v7423, %v7446
      %v7464 = vmul.f32 %v7424, %v7448
      %v7473 = vrot.slane %v7458, 7
      %v7474 = vsel %vm6039, %v7473, %v7457
      %v7475 = vrot.slane %v7459, 6
      %v7476 = vsel %vm6042, %v7475, %v7474
      %v7477 = vrot.slane %v7460, 5
      %v7478 = vsel %vm6045, %v7477, %v7476
      %v7479 = vrot.slane %v7461, 4
      %v7480 = vsel %vm6048, %v7479, %v7478
      %v7481 = vrot.slane %v7462, 3
      %v7482 = vsel %vm6051, %v7481, %v7480
      %v7483 = vrot.slane %v7463, 2
      %v7484 = vsel %vm6054, %v7483, %v7482
      %v7485 = vrot.slane %v7464, 1
      %v7486 = vsel %vm6057, %v7485, %v7484
      %v7487 = vsel %vm2873, %v7486, 0
      %7489 = vmatpush.msra.mxu0 0.0
      %7490 = vmatpush.msra.mxu0 0.0
      %7491 = vmatpush.msra.mxu0 0.0
      %7492 = vmatpush.msra.mxu0 0.0
      %7493 = vmatpush.msra.mxu0 0.0
      %7494 = vmatpush.msra.mxu0 0.0
      %7495 = vmatpush.msra.mxu0 0.0
      %7496 = vmatpush.msra.mxu0 0.0
      %7497 = vmatpush.msra.mxu0 %v5833
      %7498 = vmatpush.msra.mxu0 %v5832
      %7499 = vmatpush.msra.mxu0 %v5831
      %7500 = vmatpush.msra.mxu0 %v5830
      %7501 = vmatpush.msra.mxu0 %v5829
      %7502 = vmatpush.msra.mxu0 %v5828
      %7503 = vmatpush.msra.mxu0 %v5827
      %7504 = vmatpush.msra.mxu0 %v5826
      %7505 = vmatmul.f32.gmra.mxu0 %v7487
      %v7506 = vpop.f32.mrf.mxu0
      %v7507 = vadd.f32 0.0, %v7506
      %7508 = vdwg.mxu0
      %7509 = vst.msk [vmem:[%s467 + $0x30] sm:$0xff] %vm541, %v7507
      %v7510 = vmul.f32 %v4162, %v7280
      %v7511 = vmul.f32 %v4164, %v7281
      %v7512 = vmul.f32 %v4166, %v7282
      %v7513 = vmul.f32 %v4168, %v7283
      %v7514 = vmul.f32 %v4170, %v7284
      %v7515 = vmul.f32 %v4172, %v7285
      %v7516 = vmul.f32 %v4174, %v7286
      %v7517 = vmul.f32 %v4176, %v7287
      %v7518 = vadd.f32 %v7510, %v5657
      %v7519 = vadd.f32 %v7511, %v5658
      %v7520 = vadd.f32 %v7512, %v5659
      %v7521 = vadd.f32 %v7513, %v5660
      %v7522 = vadd.f32 %v7514, %v5661
      %v7523 = vadd.f32 %v7515, %v5662
      %v7524 = vadd.f32 %v7516, %v5663
      %v7525 = vadd.f32 %v7517, %v5664
      %v7526 = vlaneseq
      %v7527 = vshrl.u32 %v7526, 7
      %v7528 = vadd.s32 %v7527, 10
      %7529 = vset.pattern.permute.xlu0 %v7528
      %7530 = vperm.xlu0 %7529, %v4841
      %v7531 = vpop.permute.xlu0 %7530
      %v7532 = vlaneseq
      %v7533 = vshrl.u32 %v7532, 7
      %v7534 = vadd.s32 %v7533, 10
      %7535 = vset.pattern.permute.xlu0 %v7534
      %7536 = vperm.xlu0 %7535, %v4848
      %v7537 = vpop.permute.xlu0 %7536
      %v7538 = vlaneseq
      %v7539 = vshrl.u32 %v7538, 7
      %v7540 = vadd.s32 %v7539, 10
      %7541 = vset.pattern.permute.xlu0 %v7540
      %7542 = vperm.xlu0 %7541, %v4855
      %v7543 = vpop.permute.xlu0 %7542
      %v7544 = vlaneseq
      %v7545 = vshrl.u32 %v7544, 7
      %v7546 = vadd.s32 %v7545, 10
      %7547 = vset.pattern.permute.xlu0 %v7546
      %7548 = vperm.xlu0 %7547, %v4862
      %v7549 = vpop.permute.xlu0 %7548
      %v7550 = vlaneseq
      %v7551 = vshrl.u32 %v7550, 7
      %v7552 = vadd.s32 %v7551, 10
      %7553 = vset.pattern.permute.xlu0 %v7552
      %7554 = vperm.xlu0 %7553, %v4869
      %v7555 = vpop.permute.xlu0 %7554
      %v7556 = vlaneseq
      %v7557 = vshrl.u32 %v7556, 7
      %v7558 = vadd.s32 %v7557, 10
      %7559 = vset.pattern.permute.xlu0 %v7558
      %7560 = vperm.xlu0 %7559, %v4876
      %v7561 = vpop.permute.xlu0 %7560
      %v7562 = vlaneseq
      %v7563 = vshrl.u32 %v7562, 7
      %v7564 = vadd.s32 %v7563, 10
      %7565 = vset.pattern.permute.xlu0 %v7564
      %7566 = vperm.xlu0 %7565, %v4883
      %v7567 = vpop.permute.xlu0 %7566
      %v7568 = vlaneseq
      %v7569 = vshrl.u32 %v7568, 7
      %v7570 = vadd.s32 %v7569, 10
      %7571 = vset.pattern.permute.xlu0 %v7570
      %7572 = vperm.xlu0 %7571, %v4890
      %v7573 = vpop.permute.xlu0 %7572
      %v7574 = vmul.f32 %v7518, %v7531
      %v7575 = vmul.f32 %v7519, %v7537
      %v7576 = vmul.f32 %v7520, %v7543
      %v7577 = vmul.f32 %v7521, %v7549
      %v7578 = vmul.f32 %v7522, %v7555
      %v7579 = vmul.f32 %v7523, %v7561
      %v7580 = vmul.f32 %v7524, %v7567
      %v7581 = vmul.f32 %v7525, %v7573
      %v7582 = vsel %vm2873, %v7574, 0.0
      %v7583 = vrot.slane %v7582, 4
      %v7584 = vadd.f32 %v7582, %v7583
      %v7585 = vrot.slane %v7584, 2
      %v7586 = vadd.f32 %v7584, %v7585
      %v7587 = vrot.slane %v7586, 1
      %v7588 = vadd.f32 %v7586, %v7587
      %v7589 = vsel %vm2873, %v7575, 0.0
      %v7590 = vrot.slane %v7589, 4
      %v7591 = vadd.f32 %v7589, %v7590
      %v7592 = vrot.slane %v7591, 2
      %v7593 = vadd.f32 %v7591, %v7592
      %v7594 = vrot.slane %v7593, 1
      %v7595 = vadd.f32 %v7593, %v7594
      %v7596 = vsel %vm2873, %v7576, 0.0
      %v7597 = vrot.slane %v7596, 4
      %v7598 = vadd.f32 %v7596, %v7597
      %v7599 = vrot.slane %v7598, 2
      %v7600 = vadd.f32 %v7598, %v7599
      %v7601 = vrot.slane %v7600, 1
      %v7602 = vadd.f32 %v7600, %v7601
      %v7603 = vsel %vm2873, %v7577, 0.0
      %v7604 = vrot.slane %v7603, 4
      %v7605 = vadd.f32 %v7603, %v7604
      %v7606 = vrot.slane %v7605, 2
      %v7607 = vadd.f32 %v7605, %v7606
      %v7608 = vrot.slane %v7607, 1
      %v7609 = vadd.f32 %v7607, %v7608
      %v7610 = vsel %vm2873, %v7578, 0.0
      %v7611 = vrot.slane %v7610, 4
      %v7612 = vadd.f32 %v7610, %v7611
      %v7613 = vrot.slane %v7612, 2
      %v7614 = vadd.f32 %v7612, %v7613
      %v7615 = vrot.slane %v7614, 1
      %v7616 = vadd.f32 %v7614, %v7615
      %v7617 = vsel %vm2873, %v7579, 0.0
      %v7618 = vrot.slane %v7617, 4
      %v7619 = vadd.f32 %v7617, %v7618
      %v7620 = vrot.slane %v7619, 2
      %v7621 = vadd.f32 %v7619, %v7620
      %v7622 = vrot.slane %v7621, 1
      %v7623 = vadd.f32 %v7621, %v7622
      %v7624 = vsel %vm2873, %v7580, 0.0
      %v7625 = vrot.slane %v7624, 4
      %v7626 = vadd.f32 %v7624, %v7625
      %v7627 = vrot.slane %v7626, 2
      %v7628 = vadd.f32 %v7626, %v7627
      %v7629 = vrot.slane %v7628, 1
      %v7630 = vadd.f32 %v7628, %v7629
      %v7631 = vsel %vm2873, %v7581, 0.0
      %v7632 = vrot.slane %v7631, 4
      %v7633 = vadd.f32 %v7631, %v7632
      %v7634 = vrot.slane %v7633, 2
      %v7635 = vadd.f32 %v7633, %v7634
      %v7636 = vrot.slane %v7635, 1
      %v7637 = vadd.f32 %v7635, %v7636
      %v7638 = vmul.f32 %v3136, %v5963
      %v7640 = vrot.slane %v7638, 1
      %v7641 = vrot.slane %v7638, 2
      %v7642 = vrot.slane %v7638, 3
      %v7643 = vrot.slane %v7638, 4
      %v7644 = vrot.slane %v7638, 5
      %v7645 = vrot.slane %v7638, 6
      %v7646 = vrot.slane %v7638, 7
      %v7655 = vadd.f32 %v7588, %v7638
      %v7656 = vadd.f32 %v7595, %v7640
      %v7657 = vadd.f32 %v7602, %v7641
      %v7658 = vadd.f32 %v7609, %v7642
      %v7659 = vadd.f32 %v7616, %v7643
      %v7660 = vadd.f32 %v7623, %v7644
      %v7661 = vadd.f32 %v7630, %v7645
      %v7662 = vadd.f32 %v7637, %v7646
      %v7664 = vrot.slane %v5816, 1
      %v7665 = vrot.slane %v5816, 2
      %v7666 = vrot.slane %v5816, 3
      %v7667 = vrot.slane %v5816, 4
      %v7668 = vrot.slane %v5816, 5
      %v7669 = vrot.slane %v5816, 6
      %v7670 = vrot.slane %v5816, 7
      %7671 = vrot.lane.b32.xlu0 %v5816, 64
      %v7672 = vpop.permute.xlu0 %7671
      %7673 = vrot.lane.b32.xlu0 %v7664, 64
      %v7674 = vpop.permute.xlu0 %7673
      %7675 = vrot.lane.b32.xlu0 %v7665, 64
      %v7676 = vpop.permute.xlu0 %7675
      %7677 = vrot.lane.b32.xlu0 %v7666, 64
      %v7678 = vpop.permute.xlu0 %7677
      %7679 = vrot.lane.b32.xlu0 %v7667, 64
      %v7680 = vpop.permute.xlu0 %7679
      %7681 = vrot.lane.b32.xlu0 %v7668, 64
      %v7682 = vpop.permute.xlu0 %7681
      %7683 = vrot.lane.b32.xlu0 %v7669, 64
      %v7684 = vpop.permute.xlu0 %7683
      %7685 = vrot.lane.b32.xlu0 %v7670, 64
      %v7686 = vpop.permute.xlu0 %7685
      %v7695 = vmul.f32 %v7655, %v7672
      %v7696 = vmul.f32 %v7656, %v7674
      %v7697 = vmul.f32 %v7657, %v7676
      %v7698 = vmul.f32 %v7658, %v7678
      %v7699 = vmul.f32 %v7659, %v7680
      %v7700 = vmul.f32 %v7660, %v7682
      %v7701 = vmul.f32 %v7661, %v7684
      %v7702 = vmul.f32 %v7662, %v7686
      %v7711 = vrot.slane %v7696, 7
      %v7712 = vsel %vm6039, %v7711, %v7695
      %v7713 = vrot.slane %v7697, 6
      %v7714 = vsel %vm6042, %v7713, %v7712
      %v7715 = vrot.slane %v7698, 5
      %v7716 = vsel %vm6045, %v7715, %v7714
      %v7717 = vrot.slane %v7699, 4
      %v7718 = vsel %vm6048, %v7717, %v7716
      %v7719 = vrot.slane %v7700, 3
      %v7720 = vsel %vm6051, %v7719, %v7718
      %v7721 = vrot.slane %v7701, 2
      %v7722 = vsel %vm6054, %v7721, %v7720
      %v7723 = vrot.slane %v7702, 1
      %v7724 = vsel %vm6057, %v7723, %v7722
      %v7725 = vsel %vm2873, %v7724, 0
      %7727 = vmatpush.msra.mxu0 0.0
      %7728 = vmatpush.msra.mxu0 0.0
      %7729 = vmatpush.msra.mxu0 0.0
      %7730 = vmatpush.msra.mxu0 0.0
      %7731 = vmatpush.msra.mxu0 0.0
      %7732 = vmatpush.msra.mxu0 0.0
      %7733 = vmatpush.msra.mxu0 0.0
      %7734 = vmatpush.msra.mxu0 0.0
      %7735 = vmatpush.msra.mxu0 %v5833
      %7736 = vmatpush.msra.mxu0 %v5832
      %7737 = vmatpush.msra.mxu0 %v5831
      %7738 = vmatpush.msra.mxu0 %v5830
      %7739 = vmatpush.msra.mxu0 %v5829
      %7740 = vmatpush.msra.mxu0 %v5828
      %7741 = vmatpush.msra.mxu0 %v5827
      %7742 = vmatpush.msra.mxu0 %v5826
      %7743 = vmatmul.f32.gmra.mxu0 %v7725
      %v7744 = vpop.f32.mrf.mxu0
      %v7745 = vadd.f32 0.0, %v7744
      %7746 = vdwg.mxu0
      %7747 = vst.msk [vmem:[%s467 + $0x38] sm:$0xff] %vm541, %v7745
      %v7748 = vmul.f32 %v4178, %v7518
      %v7749 = vmul.f32 %v4180, %v7519
      %v7750 = vmul.f32 %v4182, %v7520
      %v7751 = vmul.f32 %v4184, %v7521
      %v7752 = vmul.f32 %v4186, %v7522
      %v7753 = vmul.f32 %v4188, %v7523
      %v7754 = vmul.f32 %v4190, %v7524
      %v7755 = vmul.f32 %v4192, %v7525
      %v7756 = vadd.f32 %v7748, %v5665
      %v7757 = vadd.f32 %v7749, %v5666
      %v7758 = vadd.f32 %v7750, %v5667
      %v7759 = vadd.f32 %v7751, %v5668
      %v7760 = vadd.f32 %v7752, %v5669
      %v7761 = vadd.f32 %v7753, %v5670
      %v7762 = vadd.f32 %v7754, %v5671
      %v7763 = vadd.f32 %v7755, %v5672
      %v7764 = vlaneseq
      %v7765 = vshrl.u32 %v7764, 7
      %v7766 = vadd.s32 %v7765, 10
      %7767 = vset.pattern.permute.xlu0 %v7766
      %7768 = vperm.xlu0 %7767, %v4897
      %v7769 = vpop.permute.xlu0 %7768
      %v7770 = vlaneseq
      %v7771 = vshrl.u32 %v7770, 7
      %v7772 = vadd.s32 %v7771, 10
      %7773 = vset.pattern.permute.xlu0 %v7772
      %7774 = vperm.xlu0 %7773, %v4904
      %v7775 = vpop.permute.xlu0 %7774
      %v7776 = vlaneseq
      %v7777 = vshrl.u32 %v7776, 7
      %v7778 = vadd.s32 %v7777, 10
      %7779 = vset.pattern.permute.xlu0 %v7778
      %7780 = vperm.xlu0 %7779, %v4911
      %v7781 = vpop.permute.xlu0 %7780
      %v7782 = vlaneseq
      %v7783 = vshrl.u32 %v7782, 7
      %v7784 = vadd.s32 %v7783, 10
      %7785 = vset.pattern.permute.xlu0 %v7784
      %7786 = vperm.xlu0 %7785, %v4918
      %v7787 = vpop.permute.xlu0 %7786
      %v7788 = vlaneseq
      %v7789 = vshrl.u32 %v7788, 7
      %v7790 = vadd.s32 %v7789, 10
      %7791 = vset.pattern.permute.xlu0 %v7790
      %7792 = vperm.xlu0 %7791, %v4925
      %v7793 = vpop.permute.xlu0 %7792
      %v7794 = vlaneseq
      %v7795 = vshrl.u32 %v7794, 7
      %v7796 = vadd.s32 %v7795, 10
      %7797 = vset.pattern.permute.xlu0 %v7796
      %7798 = vperm.xlu0 %7797, %v4932
      %v7799 = vpop.permute.xlu0 %7798
      %v7800 = vlaneseq
      %v7801 = vshrl.u32 %v7800, 7
      %v7802 = vadd.s32 %v7801, 10
      %7803 = vset.pattern.permute.xlu0 %v7802
      %7804 = vperm.xlu0 %7803, %v4939
      %v7805 = vpop.permute.xlu0 %7804
      %v7806 = vlaneseq
      %v7807 = vshrl.u32 %v7806, 7
      %v7808 = vadd.s32 %v7807, 10
      %7809 = vset.pattern.permute.xlu0 %v7808
      %7810 = vperm.xlu0 %7809, %v4946
      %v7811 = vpop.permute.xlu0 %7810
      %v7812 = vmul.f32 %v7756, %v7769
      %v7813 = vmul.f32 %v7757, %v7775
      %v7814 = vmul.f32 %v7758, %v7781
      %v7815 = vmul.f32 %v7759, %v7787
      %v7816 = vmul.f32 %v7760, %v7793
      %v7817 = vmul.f32 %v7761, %v7799
      %v7818 = vmul.f32 %v7762, %v7805
      %v7819 = vmul.f32 %v7763, %v7811
      %v7820 = vsel %vm2873, %v7812, 0.0
      %v7821 = vrot.slane %v7820, 4
      %v7822 = vadd.f32 %v7820, %v7821
      %v7823 = vrot.slane %v7822, 2
      %v7824 = vadd.f32 %v7822, %v7823
      %v7825 = vrot.slane %v7824, 1
      %v7826 = vadd.f32 %v7824, %v7825
      %v7827 = vsel %vm2873, %v7813, 0.0
      %v7828 = vrot.slane %v7827, 4
      %v7829 = vadd.f32 %v7827, %v7828
      %v7830 = vrot.slane %v7829, 2
      %v7831 = vadd.f32 %v7829, %v7830
      %v7832 = vrot.slane %v7831, 1
      %v7833 = vadd.f32 %v7831, %v7832
      %v7834 = vsel %vm2873, %v7814, 0.0
      %v7835 = vrot.slane %v7834, 4
      %v7836 = vadd.f32 %v7834, %v7835
      %v7837 = vrot.slane %v7836, 2
      %v7838 = vadd.f32 %v7836, %v7837
      %v7839 = vrot.slane %v7838, 1
      %v7840 = vadd.f32 %v7838, %v7839
      %v7841 = vsel %vm2873, %v7815, 0.0
      %v7842 = vrot.slane %v7841, 4
      %v7843 = vadd.f32 %v7841, %v7842
      %v7844 = vrot.slane %v7843, 2
      %v7845 = vadd.f32 %v7843, %v7844
      %v7846 = vrot.slane %v7845, 1
      %v7847 = vadd.f32 %v7845, %v7846
      %v7848 = vsel %vm2873, %v7816, 0.0
      %v7849 = vrot.slane %v7848, 4
      %v7850 = vadd.f32 %v7848, %v7849
      %v7851 = vrot.slane %v7850, 2
      %v7852 = vadd.f32 %v7850, %v7851
      %v7853 = vrot.slane %v7852, 1
      %v7854 = vadd.f32 %v7852, %v7853
      %v7855 = vsel %vm2873, %v7817, 0.0
      %v7856 = vrot.slane %v7855, 4
      %v7857 = vadd.f32 %v7855, %v7856
      %v7858 = vrot.slane %v7857, 2
      %v7859 = vadd.f32 %v7857, %v7858
      %v7860 = vrot.slane %v7859, 1
      %v7861 = vadd.f32 %v7859, %v7860
      %v7862 = vsel %vm2873, %v7818, 0.0
      %v7863 = vrot.slane %v7862, 4
      %v7864 = vadd.f32 %v7862, %v7863
      %v7865 = vrot.slane %v7864, 2
      %v7866 = vadd.f32 %v7864, %v7865
      %v7867 = vrot.slane %v7866, 1
      %v7868 = vadd.f32 %v7866, %v7867
      %v7869 = vsel %vm2873, %v7819, 0.0
      %v7870 = vrot.slane %v7869, 4
      %v7871 = vadd.f32 %v7869, %v7870
      %v7872 = vrot.slane %v7871, 2
      %v7873 = vadd.f32 %v7871, %v7872
      %v7874 = vrot.slane %v7873, 1
      %v7875 = vadd.f32 %v7873, %v7874
      %v7876 = vmul.f32 %v3137, %v5963
      %v7878 = vrot.slane %v7876, 1
      %v7879 = vrot.slane %v7876, 2
      %v7880 = vrot.slane %v7876, 3
      %v7881 = vrot.slane %v7876, 4
      %v7882 = vrot.slane %v7876, 5
      %v7883 = vrot.slane %v7876, 6
      %v7884 = vrot.slane %v7876, 7
      %v7893 = vadd.f32 %v7826, %v7876
      %v7894 = vadd.f32 %v7833, %v7878
      %v7895 = vadd.f32 %v7840, %v7879
      %v7896 = vadd.f32 %v7847, %v7880
      %v7897 = vadd.f32 %v7854, %v7881
      %v7898 = vadd.f32 %v7861, %v7882
      %v7899 = vadd.f32 %v7868, %v7883
      %v7900 = vadd.f32 %v7875, %v7884
      %v7902 = vrot.slane %v5817, 1
      %v7903 = vrot.slane %v5817, 2
      %v7904 = vrot.slane %v5817, 3
      %v7905 = vrot.slane %v5817, 4
      %v7906 = vrot.slane %v5817, 5
      %v7907 = vrot.slane %v5817, 6
      %v7908 = vrot.slane %v5817, 7
      %7909 = vrot.lane.b32.xlu0 %v5817, 64
      %v7910 = vpop.permute.xlu0 %7909
      %7911 = vrot.lane.b32.xlu0 %v7902, 64
      %v7912 = vpop.permute.xlu0 %7911
      %7913 = vrot.lane.b32.xlu0 %v7903, 64
      %v7914 = vpop.permute.xlu0 %7913
      %7915 = vrot.lane.b32.xlu0 %v7904, 64
      %v7916 = vpop.permute.xlu0 %7915
      %7917 = vrot.lane.b32.xlu0 %v7905, 64
      %v7918 = vpop.permute.xlu0 %7917
      %7919 = vrot.lane.b32.xlu0 %v7906, 64
      %v7920 = vpop.permute.xlu0 %7919
      %7921 = vrot.lane.b32.xlu0 %v7907, 64
      %v7922 = vpop.permute.xlu0 %7921
      %7923 = vrot.lane.b32.xlu0 %v7908, 64
      %v7924 = vpop.permute.xlu0 %7923
      %v7933 = vmul.f32 %v7893, %v7910
      %v7934 = vmul.f32 %v7894, %v7912
      %v7935 = vmul.f32 %v7895, %v7914
      %v7936 = vmul.f32 %v7896, %v7916
      %v7937 = vmul.f32 %v7897, %v7918
      %v7938 = vmul.f32 %v7898, %v7920
      %v7939 = vmul.f32 %v7899, %v7922
      %v7940 = vmul.f32 %v7900, %v7924
      %v7949 = vrot.slane %v7934, 7
      %v7950 = vsel %vm6039, %v7949, %v7933
      %v7951 = vrot.slane %v7935, 6
      %v7952 = vsel %vm6042, %v7951, %v7950
      %v7953 = vrot.slane %v7936, 5
      %v7954 = vsel %vm6045, %v7953, %v7952
      %v7955 = vrot.slane %v7937, 4
      %v7956 = vsel %vm6048, %v7955, %v7954
      %v7957 = vrot.slane %v7938, 3
      %v7958 = vsel %vm6051, %v7957, %v7956
      %v7959 = vrot.slane %v7939, 2
      %v7960 = vsel %vm6054, %v7959, %v7958
      %v7961 = vrot.slane %v7940, 1
      %v7962 = vsel %vm6057, %v7961, %v7960
      %v7963 = vsel %vm2873, %v7962, 0
      %7965 = vmatpush.msra.mxu0 0.0
      %7966 = vmatpush.msra.mxu0 0.0
      %7967 = vmatpush.msra.mxu0 0.0
      %7968 = vmatpush.msra.mxu0 0.0
      %7969 = vmatpush.msra.mxu0 0.0
      %7970 = vmatpush.msra.mxu0 0.0
      %7971 = vmatpush.msra.mxu0 0.0
      %7972 = vmatpush.msra.mxu0 0.0
      %7973 = vmatpush.msra.mxu0 %v5833
      %7974 = vmatpush.msra.mxu0 %v5832
      %7975 = vmatpush.msra.mxu0 %v5831
      %7976 = vmatpush.msra.mxu0 %v5830
      %7977 = vmatpush.msra.mxu0 %v5829
      %7978 = vmatpush.msra.mxu0 %v5828
      %7979 = vmatpush.msra.mxu0 %v5827
      %7980 = vmatpush.msra.mxu0 %v5826
      %7981 = vmatmul.f32.gmra.mxu0 %v7963
      %v7982 = vpop.f32.mrf.mxu0
      %v7983 = vadd.f32 0.0, %v7982
      %7984 = vdwg.mxu0
      %7985 = vst.msk [vmem:[%s467 + $0x40] sm:$0xff] %vm541, %v7983
      %v7986 = vmul.f32 %v4194, %v7756
      %v7987 = vmul.f32 %v4196, %v7757
      %v7988 = vmul.f32 %v4198, %v7758
      %v7989 = vmul.f32 %v4200, %v7759
      %v7990 = vmul.f32 %v4202, %v7760
      %v7991 = vmul.f32 %v4204, %v7761
      %v7992 = vmul.f32 %v4206, %v7762
      %v7993 = vmul.f32 %v4208, %v7763
      %v7994 = vadd.f32 %v7986, %v5673
      %v7995 = vadd.f32 %v7987, %v5674
      %v7996 = vadd.f32 %v7988, %v5675
      %v7997 = vadd.f32 %v7989, %v5676
      %v7998 = vadd.f32 %v7990, %v5677
      %v7999 = vadd.f32 %v7991, %v5678
      %v8000 = vadd.f32 %v7992, %v5679
      %v8001 = vadd.f32 %v7993, %v5680
      %v8002 = vlaneseq
      %v8003 = vshrl.u32 %v8002, 7
      %v8004 = vadd.s32 %v8003, 10
      %8005 = vset.pattern.permute.xlu0 %v8004
      %8006 = vperm.xlu0 %8005, %v4953
      %v8007 = vpop.permute.xlu0 %8006
      %v8008 = vlaneseq
      %v8009 = vshrl.u32 %v8008, 7
      %v8010 = vadd.s32 %v8009, 10
      %8011 = vset.pattern.permute.xlu0 %v8010
      %8012 = vperm.xlu0 %8011, %v4960
      %v8013 = vpop.permute.xlu0 %8012
      %v8014 = vlaneseq
      %v8015 = vshrl.u32 %v8014, 7
      %v8016 = vadd.s32 %v8015, 10
      %8017 = vset.pattern.permute.xlu0 %v8016
      %8018 = vperm.xlu0 %8017, %v4967
      %v8019 = vpop.permute.xlu0 %8018
      %v8020 = vlaneseq
      %v8021 = vshrl.u32 %v8020, 7
      %v8022 = vadd.s32 %v8021, 10
      %8023 = vset.pattern.permute.xlu0 %v8022
      %8024 = vperm.xlu0 %8023, %v4974
      %v8025 = vpop.permute.xlu0 %8024
      %v8026 = vlaneseq
      %v8027 = vshrl.u32 %v8026, 7
      %v8028 = vadd.s32 %v8027, 10
      %8029 = vset.pattern.permute.xlu0 %v8028
      %8030 = vperm.xlu0 %8029, %v4981
      %v8031 = vpop.permute.xlu0 %8030
      %v8032 = vlaneseq
      %v8033 = vshrl.u32 %v8032, 7
      %v8034 = vadd.s32 %v8033, 10
      %8035 = vset.pattern.permute.xlu0 %v8034
      %8036 = vperm.xlu0 %8035, %v4988
      %v8037 = vpop.permute.xlu0 %8036
      %v8038 = vlaneseq
      %v8039 = vshrl.u32 %v8038, 7
      %v8040 = vadd.s32 %v8039, 10
      %8041 = vset.pattern.permute.xlu0 %v8040
      %8042 = vperm.xlu0 %8041, %v4995
      %v8043 = vpop.permute.xlu0 %8042
      %v8044 = vlaneseq
      %v8045 = vshrl.u32 %v8044, 7
      %v8046 = vadd.s32 %v8045, 10
      %8047 = vset.pattern.permute.xlu0 %v8046
      %8048 = vperm.xlu0 %8047, %v5002
      %v8049 = vpop.permute.xlu0 %8048
      %v8050 = vmul.f32 %v7994, %v8007
      %v8051 = vmul.f32 %v7995, %v8013
      %v8052 = vmul.f32 %v7996, %v8019
      %v8053 = vmul.f32 %v7997, %v8025
      %v8054 = vmul.f32 %v7998, %v8031
      %v8055 = vmul.f32 %v7999, %v8037
      %v8056 = vmul.f32 %v8000, %v8043
      %v8057 = vmul.f32 %v8001, %v8049
      %v8058 = vsel %vm2873, %v8050, 0.0
      %v8059 = vrot.slane %v8058, 4
      %v8060 = vadd.f32 %v8058, %v8059
      %v8061 = vrot.slane %v8060, 2
      %v8062 = vadd.f32 %v8060, %v8061
      %v8063 = vrot.slane %v8062, 1
      %v8064 = vadd.f32 %v8062, %v8063
      %v8065 = vsel %vm2873, %v8051, 0.0
      %v8066 = vrot.slane %v8065, 4
      %v8067 = vadd.f32 %v8065, %v8066
      %v8068 = vrot.slane %v8067, 2
      %v8069 = vadd.f32 %v8067, %v8068
      %v8070 = vrot.slane %v8069, 1
      %v8071 = vadd.f32 %v8069, %v8070
      %v8072 = vsel %vm2873, %v8052, 0.0
      %v8073 = vrot.slane %v8072, 4
      %v8074 = vadd.f32 %v8072, %v8073
      %v8075 = vrot.slane %v8074, 2
      %v8076 = vadd.f32 %v8074, %v8075
      %v8077 = vrot.slane %v8076, 1
      %v8078 = vadd.f32 %v8076, %v8077
      %v8079 = vsel %vm2873, %v8053, 0.0
      %v8080 = vrot.slane %v8079, 4
      %v8081 = vadd.f32 %v8079, %v8080
      %v8082 = vrot.slane %v8081, 2
      %v8083 = vadd.f32 %v8081, %v8082
      %v8084 = vrot.slane %v8083, 1
      %v8085 = vadd.f32 %v8083, %v8084
      %v8086 = vsel %vm2873, %v8054, 0.0
      %v8087 = vrot.slane %v8086, 4
      %v8088 = vadd.f32 %v8086, %v8087
      %v8089 = vrot.slane %v8088, 2
      %v8090 = vadd.f32 %v8088, %v8089
      %v8091 = vrot.slane %v8090, 1
      %v8092 = vadd.f32 %v8090, %v8091
      %v8093 = vsel %vm2873, %v8055, 0.0
      %v8094 = vrot.slane %v8093, 4
      %v8095 = vadd.f32 %v8093, %v8094
      %v8096 = vrot.slane %v8095, 2
      %v8097 = vadd.f32 %v8095, %v8096
      %v8098 = vrot.slane %v8097, 1
      %v8099 = vadd.f32 %v8097, %v8098
      %v8100 = vsel %vm2873, %v8056, 0.0
      %v8101 = vrot.slane %v8100, 4
      %v8102 = vadd.f32 %v8100, %v8101
      %v8103 = vrot.slane %v8102, 2
      %v8104 = vadd.f32 %v8102, %v8103
      %v8105 = vrot.slane %v8104, 1
      %v8106 = vadd.f32 %v8104, %v8105
      %v8107 = vsel %vm2873, %v8057, 0.0
      %v8108 = vrot.slane %v8107, 4
      %v8109 = vadd.f32 %v8107, %v8108
      %v8110 = vrot.slane %v8109, 2
      %v8111 = vadd.f32 %v8109, %v8110
      %v8112 = vrot.slane %v8111, 1
      %v8113 = vadd.f32 %v8111, %v8112
      %v8114 = vmul.f32 %v3138, %v5963
      %v8116 = vrot.slane %v8114, 1
      %v8117 = vrot.slane %v8114, 2
      %v8118 = vrot.slane %v8114, 3
      %v8119 = vrot.slane %v8114, 4
      %v8120 = vrot.slane %v8114, 5
      %v8121 = vrot.slane %v8114, 6
      %v8122 = vrot.slane %v8114, 7
      %v8131 = vadd.f32 %v8064, %v8114
      %v8132 = vadd.f32 %v8071, %v8116
      %v8133 = vadd.f32 %v8078, %v8117
      %v8134 = vadd.f32 %v8085, %v8118
      %v8135 = vadd.f32 %v8092, %v8119
      %v8136 = vadd.f32 %v8099, %v8120
      %v8137 = vadd.f32 %v8106, %v8121
      %v8138 = vadd.f32 %v8113, %v8122
      %v8140 = vrot.slane %v5818, 1
      %v8141 = vrot.slane %v5818, 2
      %v8142 = vrot.slane %v5818, 3
      %v8143 = vrot.slane %v5818, 4
      %v8144 = vrot.slane %v5818, 5
      %v8145 = vrot.slane %v5818, 6
      %v8146 = vrot.slane %v5818, 7
      %8147 = vrot.lane.b32.xlu0 %v5818, 64
      %v8148 = vpop.permute.xlu0 %8147
      %8149 = vrot.lane.b32.xlu0 %v8140, 64
      %v8150 = vpop.permute.xlu0 %8149
      %8151 = vrot.lane.b32.xlu0 %v8141, 64
      %v8152 = vpop.permute.xlu0 %8151
      %8153 = vrot.lane.b32.xlu0 %v8142, 64
      %v8154 = vpop.permute.xlu0 %8153
      %8155 = vrot.lane.b32.xlu0 %v8143, 64
      %v8156 = vpop.permute.xlu0 %8155
      %8157 = vrot.lane.b32.xlu0 %v8144, 64
      %v8158 = vpop.permute.xlu0 %8157
      %8159 = vrot.lane.b32.xlu0 %v8145, 64
      %v8160 = vpop.permute.xlu0 %8159
      %8161 = vrot.lane.b32.xlu0 %v8146, 64
      %v8162 = vpop.permute.xlu0 %8161
      %v8171 = vmul.f32 %v8131, %v8148
      %v8172 = vmul.f32 %v8132, %v8150
      %v8173 = vmul.f32 %v8133, %v8152
      %v8174 = vmul.f32 %v8134, %v8154
      %v8175 = vmul.f32 %v8135, %v8156
      %v8176 = vmul.f32 %v8136, %v8158
      %v8177 = vmul.f32 %v8137, %v8160
      %v8178 = vmul.f32 %v8138, %v8162
      %v8187 = vrot.slane %v8172, 7
      %v8188 = vsel %vm6039, %v8187, %v8171
      %v8189 = vrot.slane %v8173, 6
      %v8190 = vsel %vm6042, %v8189, %v8188
      %v8191 = vrot.slane %v8174, 5
      %v8192 = vsel %vm6045, %v8191, %v8190
      %v8193 = vrot.slane %v8175, 4
      %v8194 = vsel %vm6048, %v8193, %v8192
      %v8195 = vrot.slane %v8176, 3
      %v8196 = vsel %vm6051, %v8195, %v8194
      %v8197 = vrot.slane %v8177, 2
      %v8198 = vsel %vm6054, %v8197, %v8196
      %v8199 = vrot.slane %v8178, 1
      %v8200 = vsel %vm6057, %v8199, %v8198
      %v8201 = vsel %vm2873, %v8200, 0
      %8203 = vmatpush.msra.mxu0 0.0
      %8204 = vmatpush.msra.mxu0 0.0
      %8205 = vmatpush.msra.mxu0 0.0
      %8206 = vmatpush.msra.mxu0 0.0
      %8207 = vmatpush.msra.mxu0 0.0
      %8208 = vmatpush.msra.mxu0 0.0
      %8209 = vmatpush.msra.mxu0 0.0
      %8210 = vmatpush.msra.mxu0 0.0
      %8211 = vmatpush.msra.mxu0 %v5833
      %8212 = vmatpush.msra.mxu0 %v5832
      %8213 = vmatpush.msra.mxu0 %v5831
      %8214 = vmatpush.msra.mxu0 %v5830
      %8215 = vmatpush.msra.mxu0 %v5829
      %8216 = vmatpush.msra.mxu0 %v5828
      %8217 = vmatpush.msra.mxu0 %v5827
      %8218 = vmatpush.msra.mxu0 %v5826
      %8219 = vmatmul.f32.gmra.mxu0 %v8201
      %v8220 = vpop.f32.mrf.mxu0
      %v8221 = vadd.f32 0.0, %v8220
      %8222 = vdwg.mxu0
      %8223 = vst.msk [vmem:[%s467 + $0x48] sm:$0xff] %vm541, %v8221
      %v8224 = vmul.f32 %v4210, %v7994
      %v8225 = vmul.f32 %v4212, %v7995
      %v8226 = vmul.f32 %v4214, %v7996
      %v8227 = vmul.f32 %v4216, %v7997
      %v8228 = vmul.f32 %v4218, %v7998
      %v8229 = vmul.f32 %v4220, %v7999
      %v8230 = vmul.f32 %v4222, %v8000
      %v8231 = vmul.f32 %v4224, %v8001
      %v8232 = vadd.f32 %v8224, %v5681
      %v8233 = vadd.f32 %v8225, %v5682
      %v8234 = vadd.f32 %v8226, %v5683
      %v8235 = vadd.f32 %v8227, %v5684
      %v8236 = vadd.f32 %v8228, %v5685
      %v8237 = vadd.f32 %v8229, %v5686
      %v8238 = vadd.f32 %v8230, %v5687
      %v8239 = vadd.f32 %v8231, %v5688
      %v8240 = vlaneseq
      %v8241 = vshrl.u32 %v8240, 7
      %v8242 = vadd.s32 %v8241, 10
      %8243 = vset.pattern.permute.xlu0 %v8242
      %8244 = vperm.xlu0 %8243, %v5009
      %v8245 = vpop.permute.xlu0 %8244
      %v8246 = vlaneseq
      %v8247 = vshrl.u32 %v8246, 7
      %v8248 = vadd.s32 %v8247, 10
      %8249 = vset.pattern.permute.xlu0 %v8248
      %8250 = vperm.xlu0 %8249, %v5016
      %v8251 = vpop.permute.xlu0 %8250
      %v8252 = vlaneseq
      %v8253 = vshrl.u32 %v8252, 7
      %v8254 = vadd.s32 %v8253, 10
      %8255 = vset.pattern.permute.xlu0 %v8254
      %8256 = vperm.xlu0 %8255, %v5023
      %v8257 = vpop.permute.xlu0 %8256
      %v8258 = vlaneseq
      %v8259 = vshrl.u32 %v8258, 7
      %v8260 = vadd.s32 %v8259, 10
      %8261 = vset.pattern.permute.xlu0 %v8260
      %8262 = vperm.xlu0 %8261, %v5030
      %v8263 = vpop.permute.xlu0 %8262
      %v8264 = vlaneseq
      %v8265 = vshrl.u32 %v8264, 7
      %v8266 = vadd.s32 %v8265, 10
      %8267 = vset.pattern.permute.xlu0 %v8266
      %8268 = vperm.xlu0 %8267, %v5037
      %v8269 = vpop.permute.xlu0 %8268
      %v8270 = vlaneseq
      %v8271 = vshrl.u32 %v8270, 7
      %v8272 = vadd.s32 %v8271, 10
      %8273 = vset.pattern.permute.xlu0 %v8272
      %8274 = vperm.xlu0 %8273, %v5044
      %v8275 = vpop.permute.xlu0 %8274
      %v8276 = vlaneseq
      %v8277 = vshrl.u32 %v8276, 7
      %v8278 = vadd.s32 %v8277, 10
      %8279 = vset.pattern.permute.xlu0 %v8278
      %8280 = vperm.xlu0 %8279, %v5051
      %v8281 = vpop.permute.xlu0 %8280
      %v8282 = vlaneseq
      %v8283 = vshrl.u32 %v8282, 7
      %v8284 = vadd.s32 %v8283, 10
      %8285 = vset.pattern.permute.xlu0 %v8284
      %8286 = vperm.xlu0 %8285, %v5058
      %v8287 = vpop.permute.xlu0 %8286
      %v8288 = vmul.f32 %v8232, %v8245
      %v8289 = vmul.f32 %v8233, %v8251
      %v8290 = vmul.f32 %v8234, %v8257
      %v8291 = vmul.f32 %v8235, %v8263
      %v8292 = vmul.f32 %v8236, %v8269
      %v8293 = vmul.f32 %v8237, %v8275
      %v8294 = vmul.f32 %v8238, %v8281
      %v8295 = vmul.f32 %v8239, %v8287
      %v8296 = vsel %vm2873, %v8288, 0.0
      %v8297 = vrot.slane %v8296, 4
      %v8298 = vadd.f32 %v8296, %v8297
      %v8299 = vrot.slane %v8298, 2
      %v8300 = vadd.f32 %v8298, %v8299
      %v8301 = vrot.slane %v8300, 1
      %v8302 = vadd.f32 %v8300, %v8301
      %v8303 = vsel %vm2873, %v8289, 0.0
      %v8304 = vrot.slane %v8303, 4
      %v8305 = vadd.f32 %v8303, %v8304
      %v8306 = vrot.slane %v8305, 2
      %v8307 = vadd.f32 %v8305, %v8306
      %v8308 = vrot.slane %v8307, 1
      %v8309 = vadd.f32 %v8307, %v8308
      %v8310 = vsel %vm2873, %v8290, 0.0
      %v8311 = vrot.slane %v8310, 4
      %v8312 = vadd.f32 %v8310, %v8311
      %v8313 = vrot.slane %v8312, 2
      %v8314 = vadd.f32 %v8312, %v8313
      %v8315 = vrot.slane %v8314, 1
      %v8316 = vadd.f32 %v8314, %v8315
      %v8317 = vsel %vm2873, %v8291, 0.0
      %v8318 = vrot.slane %v8317, 4
      %v8319 = vadd.f32 %v8317, %v8318
      %v8320 = vrot.slane %v8319, 2
      %v8321 = vadd.f32 %v8319, %v8320
      %v8322 = vrot.slane %v8321, 1
      %v8323 = vadd.f32 %v8321, %v8322
      %v8324 = vsel %vm2873, %v8292, 0.0
      %v8325 = vrot.slane %v8324, 4
      %v8326 = vadd.f32 %v8324, %v8325
      %v8327 = vrot.slane %v8326, 2
      %v8328 = vadd.f32 %v8326, %v8327
      %v8329 = vrot.slane %v8328, 1
      %v8330 = vadd.f32 %v8328, %v8329
      %v8331 = vsel %vm2873, %v8293, 0.0
      %v8332 = vrot.slane %v8331, 4
      %v8333 = vadd.f32 %v8331, %v8332
      %v8334 = vrot.slane %v8333, 2
      %v8335 = vadd.f32 %v8333, %v8334
      %v8336 = vrot.slane %v8335, 1
      %v8337 = vadd.f32 %v8335, %v8336
      %v8338 = vsel %vm2873, %v8294, 0.0
      %v8339 = vrot.slane %v8338, 4
      %v8340 = vadd.f32 %v8338, %v8339
      %v8341 = vrot.slane %v8340, 2
      %v8342 = vadd.f32 %v8340, %v8341
      %v8343 = vrot.slane %v8342, 1
      %v8344 = vadd.f32 %v8342, %v8343
      %v8345 = vsel %vm2873, %v8295, 0.0
      %v8346 = vrot.slane %v8345, 4
      %v8347 = vadd.f32 %v8345, %v8346
      %v8348 = vrot.slane %v8347, 2
      %v8349 = vadd.f32 %v8347, %v8348
      %v8350 = vrot.slane %v8349, 1
      %v8351 = vadd.f32 %v8349, %v8350
      %v8352 = vmul.f32 %v3139, %v5963
      %v8354 = vrot.slane %v8352, 1
      %v8355 = vrot.slane %v8352, 2
      %v8356 = vrot.slane %v8352, 3
      %v8357 = vrot.slane %v8352, 4
      %v8358 = vrot.slane %v8352, 5
      %v8359 = vrot.slane %v8352, 6
      %v8360 = vrot.slane %v8352, 7
      %v8369 = vadd.f32 %v8302, %v8352
      %v8370 = vadd.f32 %v8309, %v8354
      %v8371 = vadd.f32 %v8316, %v8355
      %v8372 = vadd.f32 %v8323, %v8356
      %v8373 = vadd.f32 %v8330, %v8357
      %v8374 = vadd.f32 %v8337, %v8358
      %v8375 = vadd.f32 %v8344, %v8359
      %v8376 = vadd.f32 %v8351, %v8360
      %v8378 = vrot.slane %v5819, 1
      %v8379 = vrot.slane %v5819, 2
      %v8380 = vrot.slane %v5819, 3
      %v8381 = vrot.slane %v5819, 4
      %v8382 = vrot.slane %v5819, 5
      %v8383 = vrot.slane %v5819, 6
      %v8384 = vrot.slane %v5819, 7
      %8385 = vrot.lane.b32.xlu0 %v5819, 64
      %v8386 = vpop.permute.xlu0 %8385
      %8387 = vrot.lane.b32.xlu0 %v8378, 64
      %v8388 = vpop.permute.xlu0 %8387
      %8389 = vrot.lane.b32.xlu0 %v8379, 64
      %v8390 = vpop.permute.xlu0 %8389
      %8391 = vrot.lane.b32.xlu0 %v8380, 64
      %v8392 = vpop.permute.xlu0 %8391
      %8393 = vrot.lane.b32.xlu0 %v8381, 64
      %v8394 = vpop.permute.xlu0 %8393
      %8395 = vrot.lane.b32.xlu0 %v8382, 64
      %v8396 = vpop.permute.xlu0 %8395
      %8397 = vrot.lane.b32.xlu0 %v8383, 64
      %v8398 = vpop.permute.xlu0 %8397
      %8399 = vrot.lane.b32.xlu0 %v8384, 64
      %v8400 = vpop.permute.xlu0 %8399
      %v8409 = vmul.f32 %v8369, %v8386
      %v8410 = vmul.f32 %v8370, %v8388
      %v8411 = vmul.f32 %v8371, %v8390
      %v8412 = vmul.f32 %v8372, %v8392
      %v8413 = vmul.f32 %v8373, %v8394
      %v8414 = vmul.f32 %v8374, %v8396
      %v8415 = vmul.f32 %v8375, %v8398
      %v8416 = vmul.f32 %v8376, %v8400
      %v8425 = vrot.slane %v8410, 7
      %v8426 = vsel %vm6039, %v8425, %v8409
      %v8427 = vrot.slane %v8411, 6
      %v8428 = vsel %vm6042, %v8427, %v8426
      %v8429 = vrot.slane %v8412, 5
      %v8430 = vsel %vm6045, %v8429, %v8428
      %v8431 = vrot.slane %v8413, 4
      %v8432 = vsel %vm6048, %v8431, %v8430
      %v8433 = vrot.slane %v8414, 3
      %v8434 = vsel %vm6051, %v8433, %v8432
      %v8435 = vrot.slane %v8415, 2
      %v8436 = vsel %vm6054, %v8435, %v8434
      %v8437 = vrot.slane %v8416, 1
      %v8438 = vsel %vm6057, %v8437, %v8436
      %v8439 = vsel %vm2873, %v8438, 0
      %8441 = vmatpush.msra.mxu0 0.0
      %8442 = vmatpush.msra.mxu0 0.0
      %8443 = vmatpush.msra.mxu0 0.0
      %8444 = vmatpush.msra.mxu0 0.0
      %8445 = vmatpush.msra.mxu0 0.0
      %8446 = vmatpush.msra.mxu0 0.0
      %8447 = vmatpush.msra.mxu0 0.0
      %8448 = vmatpush.msra.mxu0 0.0
      %8449 = vmatpush.msra.mxu0 %v5833
      %8450 = vmatpush.msra.mxu0 %v5832
      %8451 = vmatpush.msra.mxu0 %v5831
      %8452 = vmatpush.msra.mxu0 %v5830
      %8453 = vmatpush.msra.mxu0 %v5829
      %8454 = vmatpush.msra.mxu0 %v5828
      %8455 = vmatpush.msra.mxu0 %v5827
      %8456 = vmatpush.msra.mxu0 %v5826
      %8457 = vmatmul.f32.gmra.mxu0 %v8439
      %v8458 = vpop.f32.mrf.mxu0
      %v8459 = vadd.f32 0.0, %v8458
      %8460 = vdwg.mxu0
      %8461 = vst.msk [vmem:[%s467 + $0x50] sm:$0xff] %vm541, %v8459
      %v8462 = vmul.f32 %v4226, %v8232
      %v8463 = vmul.f32 %v4228, %v8233
      %v8464 = vmul.f32 %v4230, %v8234
      %v8465 = vmul.f32 %v4232, %v8235
      %v8466 = vmul.f32 %v4234, %v8236
      %v8467 = vmul.f32 %v4236, %v8237
      %v8468 = vmul.f32 %v4238, %v8238
      %v8469 = vmul.f32 %v4240, %v8239
      %v8470 = vadd.f32 %v8462, %v5689
      %v8471 = vadd.f32 %v8463, %v5690
      %v8472 = vadd.f32 %v8464, %v5691
      %v8473 = vadd.f32 %v8465, %v5692
      %v8474 = vadd.f32 %v8466, %v5693
      %v8475 = vadd.f32 %v8467, %v5694
      %v8476 = vadd.f32 %v8468, %v5695
      %v8477 = vadd.f32 %v8469, %v5696
      %v8478 = vlaneseq
      %v8479 = vshrl.u32 %v8478, 7
      %v8480 = vadd.s32 %v8479, 10
      %8481 = vset.pattern.permute.xlu0 %v8480
      %8482 = vperm.xlu0 %8481, %v5065
      %v8483 = vpop.permute.xlu0 %8482
      %v8484 = vlaneseq
      %v8485 = vshrl.u32 %v8484, 7
      %v8486 = vadd.s32 %v8485, 10
      %8487 = vset.pattern.permute.xlu0 %v8486
      %8488 = vperm.xlu0 %8487, %v5072
      %v8489 = vpop.permute.xlu0 %8488
      %v8490 = vlaneseq
      %v8491 = vshrl.u32 %v8490, 7
      %v8492 = vadd.s32 %v8491, 10
      %8493 = vset.pattern.permute.xlu0 %v8492
      %8494 = vperm.xlu0 %8493, %v5079
      %v8495 = vpop.permute.xlu0 %8494
      %v8496 = vlaneseq
      %v8497 = vshrl.u32 %v8496, 7
      %v8498 = vadd.s32 %v8497, 10
      %8499 = vset.pattern.permute.xlu0 %v8498
      %8500 = vperm.xlu0 %8499, %v5086
      %v8501 = vpop.permute.xlu0 %8500
      %v8502 = vlaneseq
      %v8503 = vshrl.u32 %v8502, 7
      %v8504 = vadd.s32 %v8503, 10
      %8505 = vset.pattern.permute.xlu0 %v8504
      %8506 = vperm.xlu0 %8505, %v5093
      %v8507 = vpop.permute.xlu0 %8506
      %v8508 = vlaneseq
      %v8509 = vshrl.u32 %v8508, 7
      %v8510 = vadd.s32 %v8509, 10
      %8511 = vset.pattern.permute.xlu0 %v8510
      %8512 = vperm.xlu0 %8511, %v5100
      %v8513 = vpop.permute.xlu0 %8512
      %v8514 = vlaneseq
      %v8515 = vshrl.u32 %v8514, 7
      %v8516 = vadd.s32 %v8515, 10
      %8517 = vset.pattern.permute.xlu0 %v8516
      %8518 = vperm.xlu0 %8517, %v5107
      %v8519 = vpop.permute.xlu0 %8518
      %v8520 = vlaneseq
      %v8521 = vshrl.u32 %v8520, 7
      %v8522 = vadd.s32 %v8521, 10
      %8523 = vset.pattern.permute.xlu0 %v8522
      %8524 = vperm.xlu0 %8523, %v5114
      %v8525 = vpop.permute.xlu0 %8524
      %v8526 = vmul.f32 %v8470, %v8483
      %v8527 = vmul.f32 %v8471, %v8489
      %v8528 = vmul.f32 %v8472, %v8495
      %v8529 = vmul.f32 %v8473, %v8501
      %v8530 = vmul.f32 %v8474, %v8507
      %v8531 = vmul.f32 %v8475, %v8513
      %v8532 = vmul.f32 %v8476, %v8519
      %v8533 = vmul.f32 %v8477, %v8525
      %v8534 = vsel %vm2873, %v8526, 0.0
      %v8535 = vrot.slane %v8534, 4
      %v8536 = vadd.f32 %v8534, %v8535
      %v8537 = vrot.slane %v8536, 2
      %v8538 = vadd.f32 %v8536, %v8537
      %v8539 = vrot.slane %v8538, 1
      %v8540 = vadd.f32 %v8538, %v8539
      %v8541 = vsel %vm2873, %v8527, 0.0
      %v8542 = vrot.slane %v8541, 4
      %v8543 = vadd.f32 %v8541, %v8542
      %v8544 = vrot.slane %v8543, 2
      %v8545 = vadd.f32 %v8543, %v8544
      %v8546 = vrot.slane %v8545, 1
      %v8547 = vadd.f32 %v8545, %v8546
      %v8548 = vsel %vm2873, %v8528, 0.0
      %v8549 = vrot.slane %v8548, 4
      %v8550 = vadd.f32 %v8548, %v8549
      %v8551 = vrot.slane %v8550, 2
      %v8552 = vadd.f32 %v8550, %v8551
      %v8553 = vrot.slane %v8552, 1
      %v8554 = vadd.f32 %v8552, %v8553
      %v8555 = vsel %vm2873, %v8529, 0.0
      %v8556 = vrot.slane %v8555, 4
      %v8557 = vadd.f32 %v8555, %v8556
      %v8558 = vrot.slane %v8557, 2
      %v8559 = vadd.f32 %v8557, %v8558
      %v8560 = vrot.slane %v8559, 1
      %v8561 = vadd.f32 %v8559, %v8560
      %v8562 = vsel %vm2873, %v8530, 0.0
      %v8563 = vrot.slane %v8562, 4
      %v8564 = vadd.f32 %v8562, %v8563
      %v8565 = vrot.slane %v8564, 2
      %v8566 = vadd.f32 %v8564, %v8565
      %v8567 = vrot.slane %v8566, 1
      %v8568 = vadd.f32 %v8566, %v8567
      %v8569 = vsel %vm2873, %v8531, 0.0
      %v8570 = vrot.slane %v8569, 4
      %v8571 = vadd.f32 %v8569, %v8570
      %v8572 = vrot.slane %v8571, 2
      %v8573 = vadd.f32 %v8571, %v8572
      %v8574 = vrot.slane %v8573, 1
      %v8575 = vadd.f32 %v8573, %v8574
      %v8576 = vsel %vm2873, %v8532, 0.0
      %v8577 = vrot.slane %v8576, 4
      %v8578 = vadd.f32 %v8576, %v8577
      %v8579 = vrot.slane %v8578, 2
      %v8580 = vadd.f32 %v8578, %v8579
      %v8581 = vrot.slane %v8580, 1
      %v8582 = vadd.f32 %v8580, %v8581
      %v8583 = vsel %vm2873, %v8533, 0.0
      %v8584 = vrot.slane %v8583, 4
      %v8585 = vadd.f32 %v8583, %v8584
      %v8586 = vrot.slane %v8585, 2
      %v8587 = vadd.f32 %v8585, %v8586
      %v8588 = vrot.slane %v8587, 1
      %v8589 = vadd.f32 %v8587, %v8588
      %v8590 = vmul.f32 %v3140, %v5963
      %v8592 = vrot.slane %v8590, 1
      %v8593 = vrot.slane %v8590, 2
      %v8594 = vrot.slane %v8590, 3
      %v8595 = vrot.slane %v8590, 4
      %v8596 = vrot.slane %v8590, 5
      %v8597 = vrot.slane %v8590, 6
      %v8598 = vrot.slane %v8590, 7
      %v8607 = vadd.f32 %v8540, %v8590
      %v8608 = vadd.f32 %v8547, %v8592
      %v8609 = vadd.f32 %v8554, %v8593
      %v8610 = vadd.f32 %v8561, %v8594
      %v8611 = vadd.f32 %v8568, %v8595
      %v8612 = vadd.f32 %v8575, %v8596
      %v8613 = vadd.f32 %v8582, %v8597
      %v8614 = vadd.f32 %v8589, %v8598
      %v8616 = vrot.slane %v5820, 1
      %v8617 = vrot.slane %v5820, 2
      %v8618 = vrot.slane %v5820, 3
      %v8619 = vrot.slane %v5820, 4
      %v8620 = vrot.slane %v5820, 5
      %v8621 = vrot.slane %v5820, 6
      %v8622 = vrot.slane %v5820, 7
      %8623 = vrot.lane.b32.xlu0 %v5820, 64
      %v8624 = vpop.permute.xlu0 %8623
      %8625 = vrot.lane.b32.xlu0 %v8616, 64
      %v8626 = vpop.permute.xlu0 %8625
      %8627 = vrot.lane.b32.xlu0 %v8617, 64
      %v8628 = vpop.permute.xlu0 %8627
      %8629 = vrot.lane.b32.xlu0 %v8618, 64
      %v8630 = vpop.permute.xlu0 %8629
      %8631 = vrot.lane.b32.xlu0 %v8619, 64
      %v8632 = vpop.permute.xlu0 %8631
      %8633 = vrot.lane.b32.xlu0 %v8620, 64
      %v8634 = vpop.permute.xlu0 %8633
      %8635 = vrot.lane.b32.xlu0 %v8621, 64
      %v8636 = vpop.permute.xlu0 %8635
      %8637 = vrot.lane.b32.xlu0 %v8622, 64
      %v8638 = vpop.permute.xlu0 %8637
      %v8647 = vmul.f32 %v8607, %v8624
      %v8648 = vmul.f32 %v8608, %v8626
      %v8649 = vmul.f32 %v8609, %v8628
      %v8650 = vmul.f32 %v8610, %v8630
      %v8651 = vmul.f32 %v8611, %v8632
      %v8652 = vmul.f32 %v8612, %v8634
      %v8653 = vmul.f32 %v8613, %v8636
      %v8654 = vmul.f32 %v8614, %v8638
      %v8663 = vrot.slane %v8648, 7
      %v8664 = vsel %vm6039, %v8663, %v8647
      %v8665 = vrot.slane %v8649, 6
      %v8666 = vsel %vm6042, %v8665, %v8664
      %v8667 = vrot.slane %v8650, 5
      %v8668 = vsel %vm6045, %v8667, %v8666
      %v8669 = vrot.slane %v8651, 4
      %v8670 = vsel %vm6048, %v8669, %v8668
      %v8671 = vrot.slane %v8652, 3
      %v8672 = vsel %vm6051, %v8671, %v8670
      %v8673 = vrot.slane %v8653, 2
      %v8674 = vsel %vm6054, %v8673, %v8672
      %v8675 = vrot.slane %v8654, 1
      %v8676 = vsel %vm6057, %v8675, %v8674
      %v8677 = vsel %vm2873, %v8676, 0
      %8679 = vmatpush.msra.mxu0 0.0
      %8680 = vmatpush.msra.mxu0 0.0
      %8681 = vmatpush.msra.mxu0 0.0
      %8682 = vmatpush.msra.mxu0 0.0
      %8683 = vmatpush.msra.mxu0 0.0
      %8684 = vmatpush.msra.mxu0 0.0
      %8685 = vmatpush.msra.mxu0 0.0
      %8686 = vmatpush.msra.mxu0 0.0
      %8687 = vmatpush.msra.mxu0 %v5833
      %8688 = vmatpush.msra.mxu0 %v5832
      %8689 = vmatpush.msra.mxu0 %v5831
      %8690 = vmatpush.msra.mxu0 %v5830
      %8691 = vmatpush.msra.mxu0 %v5829
      %8692 = vmatpush.msra.mxu0 %v5828
      %8693 = vmatpush.msra.mxu0 %v5827
      %8694 = vmatpush.msra.mxu0 %v5826
      %8695 = vmatmul.f32.gmra.mxu0 %v8677
      %v8696 = vpop.f32.mrf.mxu0
      %v8697 = vadd.f32 0.0, %v8696
      %8698 = vdwg.mxu0
      %8699 = vst.msk [vmem:[%s467 + $0x58] sm:$0xff] %vm541, %v8697
      %v8700 = vmul.f32 %v4242, %v8470
      %v8701 = vmul.f32 %v4244, %v8471
      %v8702 = vmul.f32 %v4246, %v8472
      %v8703 = vmul.f32 %v4248, %v8473
      %v8704 = vmul.f32 %v4250, %v8474
      %v8705 = vmul.f32 %v4252, %v8475
      %v8706 = vmul.f32 %v4254, %v8476
      %v8707 = vmul.f32 %v4256, %v8477
      %v8708 = vadd.f32 %v8700, %v5697
      %v8709 = vadd.f32 %v8701, %v5698
      %v8710 = vadd.f32 %v8702, %v5699
      %v8711 = vadd.f32 %v8703, %v5700
      %v8712 = vadd.f32 %v8704, %v5701
      %v8713 = vadd.f32 %v8705, %v5702
      %v8714 = vadd.f32 %v8706, %v5703
      %v8715 = vadd.f32 %v8707, %v5704
      %v8716 = vlaneseq
      %v8717 = vshrl.u32 %v8716, 7
      %v8718 = vadd.s32 %v8717, 10
      %8719 = vset.pattern.permute.xlu0 %v8718
      %8720 = vperm.xlu0 %8719, %v5121
      %v8721 = vpop.permute.xlu0 %8720
      %v8722 = vlaneseq
      %v8723 = vshrl.u32 %v8722, 7
      %v8724 = vadd.s32 %v8723, 10
      %8725 = vset.pattern.permute.xlu0 %v8724
      %8726 = vperm.xlu0 %8725, %v5128
      %v8727 = vpop.permute.xlu0 %8726
      %v8728 = vlaneseq
      %v8729 = vshrl.u32 %v8728, 7
      %v8730 = vadd.s32 %v8729, 10
      %8731 = vset.pattern.permute.xlu0 %v8730
      %8732 = vperm.xlu0 %8731, %v5135
      %v8733 = vpop.permute.xlu0 %8732
      %v8734 = vlaneseq
      %v8735 = vshrl.u32 %v8734, 7
      %v8736 = vadd.s32 %v8735, 10
      %8737 = vset.pattern.permute.xlu0 %v8736
      %8738 = vperm.xlu0 %8737, %v5142
      %v8739 = vpop.permute.xlu0 %8738
      %v8740 = vlaneseq
      %v8741 = vshrl.u32 %v8740, 7
      %v8742 = vadd.s32 %v8741, 10
      %8743 = vset.pattern.permute.xlu0 %v8742
      %8744 = vperm.xlu0 %8743, %v5149
      %v8745 = vpop.permute.xlu0 %8744
      %v8746 = vlaneseq
      %v8747 = vshrl.u32 %v8746, 7
      %v8748 = vadd.s32 %v8747, 10
      %8749 = vset.pattern.permute.xlu0 %v8748
      %8750 = vperm.xlu0 %8749, %v5156
      %v8751 = vpop.permute.xlu0 %8750
      %v8752 = vlaneseq
      %v8753 = vshrl.u32 %v8752, 7
      %v8754 = vadd.s32 %v8753, 10
      %8755 = vset.pattern.permute.xlu0 %v8754
      %8756 = vperm.xlu0 %8755, %v5163
      %v8757 = vpop.permute.xlu0 %8756
      %v8758 = vlaneseq
      %v8759 = vshrl.u32 %v8758, 7
      %v8760 = vadd.s32 %v8759, 10
      %8761 = vset.pattern.permute.xlu0 %v8760
      %8762 = vperm.xlu0 %8761, %v5170
      %v8763 = vpop.permute.xlu0 %8762
      %v8764 = vmul.f32 %v8708, %v8721
      %v8765 = vmul.f32 %v8709, %v8727
      %v8766 = vmul.f32 %v8710, %v8733
      %v8767 = vmul.f32 %v8711, %v8739
      %v8768 = vmul.f32 %v8712, %v8745
      %v8769 = vmul.f32 %v8713, %v8751
      %v8770 = vmul.f32 %v8714, %v8757
      %v8771 = vmul.f32 %v8715, %v8763
      %v8772 = vsel %vm2873, %v8764, 0.0
      %v8773 = vrot.slane %v8772, 4
      %v8774 = vadd.f32 %v8772, %v8773
      %v8775 = vrot.slane %v8774, 2
      %v8776 = vadd.f32 %v8774, %v8775
      %v8777 = vrot.slane %v8776, 1
      %v8778 = vadd.f32 %v8776, %v8777
      %v8779 = vsel %vm2873, %v8765, 0.0
      %v8780 = vrot.slane %v8779, 4
      %v8781 = vadd.f32 %v8779, %v8780
      %v8782 = vrot.slane %v8781, 2
      %v8783 = vadd.f32 %v8781, %v8782
      %v8784 = vrot.slane %v8783, 1
      %v8785 = vadd.f32 %v8783, %v8784
      %v8786 = vsel %vm2873, %v8766, 0.0
      %v8787 = vrot.slane %v8786, 4
      %v8788 = vadd.f32 %v8786, %v8787
      %v8789 = vrot.slane %v8788, 2
      %v8790 = vadd.f32 %v8788, %v8789
      %v8791 = vrot.slane %v8790, 1
      %v8792 = vadd.f32 %v8790, %v8791
      %v8793 = vsel %vm2873, %v8767, 0.0
      %v8794 = vrot.slane %v8793, 4
      %v8795 = vadd.f32 %v8793, %v8794
      %v8796 = vrot.slane %v8795, 2
      %v8797 = vadd.f32 %v8795, %v8796
      %v8798 = vrot.slane %v8797, 1
      %v8799 = vadd.f32 %v8797, %v8798
      %v8800 = vsel %vm2873, %v8768, 0.0
      %v8801 = vrot.slane %v8800, 4
      %v8802 = vadd.f32 %v8800, %v8801
      %v8803 = vrot.slane %v8802, 2
      %v8804 = vadd.f32 %v8802, %v8803
      %v8805 = vrot.slane %v8804, 1
      %v8806 = vadd.f32 %v8804, %v8805
      %v8807 = vsel %vm2873, %v8769, 0.0
      %v8808 = vrot.slane %v8807, 4
      %v8809 = vadd.f32 %v8807, %v8808
      %v8810 = vrot.slane %v8809, 2
      %v8811 = vadd.f32 %v8809, %v8810
      %v8812 = vrot.slane %v8811, 1
      %v8813 = vadd.f32 %v8811, %v8812
      %v8814 = vsel %vm2873, %v8770, 0.0
      %v8815 = vrot.slane %v8814, 4
      %v8816 = vadd.f32 %v8814, %v8815
      %v8817 = vrot.slane %v8816, 2
      %v8818 = vadd.f32 %v8816, %v8817
      %v8819 = vrot.slane %v8818, 1
      %v8820 = vadd.f32 %v8818, %v8819
      %v8821 = vsel %vm2873, %v8771, 0.0
      %v8822 = vrot.slane %v8821, 4
      %v8823 = vadd.f32 %v8821, %v8822
      %v8824 = vrot.slane %v8823, 2
      %v8825 = vadd.f32 %v8823, %v8824
      %v8826 = vrot.slane %v8825, 1
      %v8827 = vadd.f32 %v8825, %v8826
      %v8828 = vmul.f32 %v3141, %v5963
      %v8830 = vrot.slane %v8828, 1
      %v8831 = vrot.slane %v8828, 2
      %v8832 = vrot.slane %v8828, 3
      %v8833 = vrot.slane %v8828, 4
      %v8834 = vrot.slane %v8828, 5
      %v8835 = vrot.slane %v8828, 6
      %v8836 = vrot.slane %v8828, 7
      %v8845 = vadd.f32 %v8778, %v8828
      %v8846 = vadd.f32 %v8785, %v8830
      %v8847 = vadd.f32 %v8792, %v8831
      %v8848 = vadd.f32 %v8799, %v8832
      %v8849 = vadd.f32 %v8806, %v8833
      %v8850 = vadd.f32 %v8813, %v8834
      %v8851 = vadd.f32 %v8820, %v8835
      %v8852 = vadd.f32 %v8827, %v8836
      %v8854 = vrot.slane %v5821, 1
      %v8855 = vrot.slane %v5821, 2
      %v8856 = vrot.slane %v5821, 3
      %v8857 = vrot.slane %v5821, 4
      %v8858 = vrot.slane %v5821, 5
      %v8859 = vrot.slane %v5821, 6
      %v8860 = vrot.slane %v5821, 7
      %8861 = vrot.lane.b32.xlu0 %v5821, 64
      %v8862 = vpop.permute.xlu0 %8861
      %8863 = vrot.lane.b32.xlu0 %v8854, 64
      %v8864 = vpop.permute.xlu0 %8863
      %8865 = vrot.lane.b32.xlu0 %v8855, 64
      %v8866 = vpop.permute.xlu0 %8865
      %8867 = vrot.lane.b32.xlu0 %v8856, 64
      %v8868 = vpop.permute.xlu0 %8867
      %8869 = vrot.lane.b32.xlu0 %v8857, 64
      %v8870 = vpop.permute.xlu0 %8869
      %8871 = vrot.lane.b32.xlu0 %v8858, 64
      %v8872 = vpop.permute.xlu0 %8871
      %8873 = vrot.lane.b32.xlu0 %v8859, 64
      %v8874 = vpop.permute.xlu0 %8873
      %8875 = vrot.lane.b32.xlu0 %v8860, 64
      %v8876 = vpop.permute.xlu0 %8875
      %v8885 = vmul.f32 %v8845, %v8862
      %v8886 = vmul.f32 %v8846, %v8864
      %v8887 = vmul.f32 %v8847, %v8866
      %v8888 = vmul.f32 %v8848, %v8868
      %v8889 = vmul.f32 %v8849, %v8870
      %v8890 = vmul.f32 %v8850, %v8872
      %v8891 = vmul.f32 %v8851, %v8874
      %v8892 = vmul.f32 %v8852, %v8876
      %v8901 = vrot.slane %v8886, 7
      %v8902 = vsel %vm6039, %v8901, %v8885
      %v8903 = vrot.slane %v8887, 6
      %v8904 = vsel %vm6042, %v8903, %v8902
      %v8905 = vrot.slane %v8888, 5
      %v8906 = vsel %vm6045, %v8905, %v8904
      %v8907 = vrot.slane %v8889, 4
      %v8908 = vsel %vm6048, %v8907, %v8906
      %v8909 = vrot.slane %v8890, 3
      %v8910 = vsel %vm6051, %v8909, %v8908
      %v8911 = vrot.slane %v8891, 2
      %v8912 = vsel %vm6054, %v8911, %v8910
      %v8913 = vrot.slane %v8892, 1
      %v8914 = vsel %vm6057, %v8913, %v8912
      %v8915 = vsel %vm2873, %v8914, 0
      %8917 = vmatpush.msra.mxu0 0.0
      %8918 = vmatpush.msra.mxu0 0.0
      %8919 = vmatpush.msra.mxu0 0.0
      %8920 = vmatpush.msra.mxu0 0.0
      %8921 = vmatpush.msra.mxu0 0.0
      %8922 = vmatpush.msra.mxu0 0.0
      %8923 = vmatpush.msra.mxu0 0.0
      %8924 = vmatpush.msra.mxu0 0.0
      %8925 = vmatpush.msra.mxu0 %v5833
      %8926 = vmatpush.msra.mxu0 %v5832
      %8927 = vmatpush.msra.mxu0 %v5831
      %8928 = vmatpush.msra.mxu0 %v5830
      %8929 = vmatpush.msra.mxu0 %v5829
      %8930 = vmatpush.msra.mxu0 %v5828
      %8931 = vmatpush.msra.mxu0 %v5827
      %8932 = vmatpush.msra.mxu0 %v5826
      %8933 = vmatmul.f32.gmra.mxu0 %v8915
      %v8934 = vpop.f32.mrf.mxu0
      %v8935 = vadd.f32 0.0, %v8934
      %8936 = vdwg.mxu0
      %8937 = vst.msk [vmem:[%s467 + $0x60] sm:$0xff] %vm541, %v8935
      %v8938 = vmul.f32 %v4258, %v8708
      %v8939 = vmul.f32 %v4260, %v8709
      %v8940 = vmul.f32 %v4262, %v8710
      %v8941 = vmul.f32 %v4264, %v8711
      %v8942 = vmul.f32 %v4266, %v8712
      %v8943 = vmul.f32 %v4268, %v8713
      %v8944 = vmul.f32 %v4270, %v8714
      %v8945 = vmul.f32 %v4272, %v8715
      %v8946 = vadd.f32 %v8938, %v5705
      %v8947 = vadd.f32 %v8939, %v5706
      %v8948 = vadd.f32 %v8940, %v5707
      %v8949 = vadd.f32 %v8941, %v5708
      %v8950 = vadd.f32 %v8942, %v5709
      %v8951 = vadd.f32 %v8943, %v5710
      %v8952 = vadd.f32 %v8944, %v5711
      %v8953 = vadd.f32 %v8945, %v5712
      %v8954 = vlaneseq
      %v8955 = vshrl.u32 %v8954, 7
      %v8956 = vadd.s32 %v8955, 10
      %8957 = vset.pattern.permute.xlu0 %v8956
      %8958 = vperm.xlu0 %8957, %v5177
      %v8959 = vpop.permute.xlu0 %8958
      %v8960 = vlaneseq
      %v8961 = vshrl.u32 %v8960, 7
      %v8962 = vadd.s32 %v8961, 10
      %8963 = vset.pattern.permute.xlu0 %v8962
      %8964 = vperm.xlu0 %8963, %v5184
      %v8965 = vpop.permute.xlu0 %8964
      %v8966 = vlaneseq
      %v8967 = vshrl.u32 %v8966, 7
      %v8968 = vadd.s32 %v8967, 10
      %8969 = vset.pattern.permute.xlu0 %v8968
      %8970 = vperm.xlu0 %8969, %v5191
      %v8971 = vpop.permute.xlu0 %8970
      %v8972 = vlaneseq
      %v8973 = vshrl.u32 %v8972, 7
      %v8974 = vadd.s32 %v8973, 10
      %8975 = vset.pattern.permute.xlu0 %v8974
      %8976 = vperm.xlu0 %8975, %v5198
      %v8977 = vpop.permute.xlu0 %8976
      %v8978 = vlaneseq
      %v8979 = vshrl.u32 %v8978, 7
      %v8980 = vadd.s32 %v8979, 10
      %8981 = vset.pattern.permute.xlu0 %v8980
      %8982 = vperm.xlu0 %8981, %v5205
      %v8983 = vpop.permute.xlu0 %8982
      %v8984 = vlaneseq
      %v8985 = vshrl.u32 %v8984, 7
      %v8986 = vadd.s32 %v8985, 10
      %8987 = vset.pattern.permute.xlu0 %v8986
      %8988 = vperm.xlu0 %8987, %v5212
      %v8989 = vpop.permute.xlu0 %8988
      %v8990 = vlaneseq
      %v8991 = vshrl.u32 %v8990, 7
      %v8992 = vadd.s32 %v8991, 10
      %8993 = vset.pattern.permute.xlu0 %v8992
      %8994 = vperm.xlu0 %8993, %v5219
      %v8995 = vpop.permute.xlu0 %8994
      %v8996 = vlaneseq
      %v8997 = vshrl.u32 %v8996, 7
      %v8998 = vadd.s32 %v8997, 10
      %8999 = vset.pattern.permute.xlu0 %v8998
      %9000 = vperm.xlu0 %8999, %v5226
      %v9001 = vpop.permute.xlu0 %9000
      %v9002 = vmul.f32 %v8946, %v8959
      %v9003 = vmul.f32 %v8947, %v8965
      %v9004 = vmul.f32 %v8948, %v8971
      %v9005 = vmul.f32 %v8949, %v8977
      %v9006 = vmul.f32 %v8950, %v8983
      %v9007 = vmul.f32 %v8951, %v8989
      %v9008 = vmul.f32 %v8952, %v8995
      %v9009 = vmul.f32 %v8953, %v9001
      %v9010 = vsel %vm2873, %v9002, 0.0
      %v9011 = vrot.slane %v9010, 4
      %v9012 = vadd.f32 %v9010, %v9011
      %v9013 = vrot.slane %v9012, 2
      %v9014 = vadd.f32 %v9012, %v9013
      %v9015 = vrot.slane %v9014, 1
      %v9016 = vadd.f32 %v9014, %v9015
      %v9017 = vsel %vm2873, %v9003, 0.0
      %v9018 = vrot.slane %v9017, 4
      %v9019 = vadd.f32 %v9017, %v9018
      %v9020 = vrot.slane %v9019, 2
      %v9021 = vadd.f32 %v9019, %v9020
      %v9022 = vrot.slane %v9021, 1
      %v9023 = vadd.f32 %v9021, %v9022
      %v9024 = vsel %vm2873, %v9004, 0.0
      %v9025 = vrot.slane %v9024, 4
      %v9026 = vadd.f32 %v9024, %v9025
      %v9027 = vrot.slane %v9026, 2
      %v9028 = vadd.f32 %v9026, %v9027
      %v9029 = vrot.slane %v9028, 1
      %v9030 = vadd.f32 %v9028, %v9029
      %v9031 = vsel %vm2873, %v9005, 0.0
      %v9032 = vrot.slane %v9031, 4
      %v9033 = vadd.f32 %v9031, %v9032
      %v9034 = vrot.slane %v9033, 2
      %v9035 = vadd.f32 %v9033, %v9034
      %v9036 = vrot.slane %v9035, 1
      %v9037 = vadd.f32 %v9035, %v9036
      %v9038 = vsel %vm2873, %v9006, 0.0
      %v9039 = vrot.slane %v9038, 4
      %v9040 = vadd.f32 %v9038, %v9039
      %v9041 = vrot.slane %v9040, 2
      %v9042 = vadd.f32 %v9040, %v9041
      %v9043 = vrot.slane %v9042, 1
      %v9044 = vadd.f32 %v9042, %v9043
      %v9045 = vsel %vm2873, %v9007, 0.0
      %v9046 = vrot.slane %v9045, 4
      %v9047 = vadd.f32 %v9045, %v9046
      %v9048 = vrot.slane %v9047, 2
      %v9049 = vadd.f32 %v9047, %v9048
      %v9050 = vrot.slane %v9049, 1
      %v9051 = vadd.f32 %v9049, %v9050
      %v9052 = vsel %vm2873, %v9008, 0.0
      %v9053 = vrot.slane %v9052, 4
      %v9054 = vadd.f32 %v9052, %v9053
      %v9055 = vrot.slane %v9054, 2
      %v9056 = vadd.f32 %v9054, %v9055
      %v9057 = vrot.slane %v9056, 1
      %v9058 = vadd.f32 %v9056, %v9057
      %v9059 = vsel %vm2873, %v9009, 0.0
      %v9060 = vrot.slane %v9059, 4
      %v9061 = vadd.f32 %v9059, %v9060
      %v9062 = vrot.slane %v9061, 2
      %v9063 = vadd.f32 %v9061, %v9062
      %v9064 = vrot.slane %v9063, 1
      %v9065 = vadd.f32 %v9063, %v9064
      %v9066 = vmul.f32 %v3142, %v5963
      %v9068 = vrot.slane %v9066, 1
      %v9069 = vrot.slane %v9066, 2
      %v9070 = vrot.slane %v9066, 3
      %v9071 = vrot.slane %v9066, 4
      %v9072 = vrot.slane %v9066, 5
      %v9073 = vrot.slane %v9066, 6
      %v9074 = vrot.slane %v9066, 7
      %v9083 = vadd.f32 %v9016, %v9066
      %v9084 = vadd.f32 %v9023, %v9068
      %v9085 = vadd.f32 %v9030, %v9069
      %v9086 = vadd.f32 %v9037, %v9070
      %v9087 = vadd.f32 %v9044, %v9071
      %v9088 = vadd.f32 %v9051, %v9072
      %v9089 = vadd.f32 %v9058, %v9073
      %v9090 = vadd.f32 %v9065, %v9074
      %v9092 = vrot.slane %v5822, 1
      %v9093 = vrot.slane %v5822, 2
      %v9094 = vrot.slane %v5822, 3
      %v9095 = vrot.slane %v5822, 4
      %v9096 = vrot.slane %v5822, 5
      %v9097 = vrot.slane %v5822, 6
      %v9098 = vrot.slane %v5822, 7
      %9099 = vrot.lane.b32.xlu0 %v5822, 64
      %v9100 = vpop.permute.xlu0 %9099
      %9101 = vrot.lane.b32.xlu0 %v9092, 64
      %v9102 = vpop.permute.xlu0 %9101
      %9103 = vrot.lane.b32.xlu0 %v9093, 64
      %v9104 = vpop.permute.xlu0 %9103
      %9105 = vrot.lane.b32.xlu0 %v9094, 64
      %v9106 = vpop.permute.xlu0 %9105
      %9107 = vrot.lane.b32.xlu0 %v9095, 64
      %v9108 = vpop.permute.xlu0 %9107
      %9109 = vrot.lane.b32.xlu0 %v9096, 64
      %v9110 = vpop.permute.xlu0 %9109
      %9111 = vrot.lane.b32.xlu0 %v9097, 64
      %v9112 = vpop.permute.xlu0 %9111
      %9113 = vrot.lane.b32.xlu0 %v9098, 64
      %v9114 = vpop.permute.xlu0 %9113
      %v9123 = vmul.f32 %v9083, %v9100
      %v9124 = vmul.f32 %v9084, %v9102
      %v9125 = vmul.f32 %v9085, %v9104
      %v9126 = vmul.f32 %v9086, %v9106
      %v9127 = vmul.f32 %v9087, %v9108
      %v9128 = vmul.f32 %v9088, %v9110
      %v9129 = vmul.f32 %v9089, %v9112
      %v9130 = vmul.f32 %v9090, %v9114
      %v9139 = vrot.slane %v9124, 7
      %v9140 = vsel %vm6039, %v9139, %v9123
      %v9141 = vrot.slane %v9125, 6
      %v9142 = vsel %vm6042, %v9141, %v9140
      %v9143 = vrot.slane %v9126, 5
      %v9144 = vsel %vm6045, %v9143, %v9142
      %v9145 = vrot.slane %v9127, 4
      %v9146 = vsel %vm6048, %v9145, %v9144
      %v9147 = vrot.slane %v9128, 3
      %v9148 = vsel %vm6051, %v9147, %v9146
      %v9149 = vrot.slane %v9129, 2
      %v9150 = vsel %vm6054, %v9149, %v9148
      %v9151 = vrot.slane %v9130, 1
      %v9152 = vsel %vm6057, %v9151, %v9150
      %v9153 = vsel %vm2873, %v9152, 0
      %9155 = vmatpush.msra.mxu0 0.0
      %9156 = vmatpush.msra.mxu0 0.0
      %9157 = vmatpush.msra.mxu0 0.0
      %9158 = vmatpush.msra.mxu0 0.0
      %9159 = vmatpush.msra.mxu0 0.0
      %9160 = vmatpush.msra.mxu0 0.0
      %9161 = vmatpush.msra.mxu0 0.0
      %9162 = vmatpush.msra.mxu0 0.0
      %9163 = vmatpush.msra.mxu0 %v5833
      %9164 = vmatpush.msra.mxu0 %v5832
      %9165 = vmatpush.msra.mxu0 %v5831
      %9166 = vmatpush.msra.mxu0 %v5830
      %9167 = vmatpush.msra.mxu0 %v5829
      %9168 = vmatpush.msra.mxu0 %v5828
      %9169 = vmatpush.msra.mxu0 %v5827
      %9170 = vmatpush.msra.mxu0 %v5826
      %9171 = vmatmul.f32.gmra.mxu0 %v9153
      %v9172 = vpop.f32.mrf.mxu0
      %v9173 = vadd.f32 0.0, %v9172
      %9174 = vdwg.mxu0
      %9175 = vst.msk [vmem:[%s467 + $0x68] sm:$0xff] %vm541, %v9173
      %v9176 = vmul.f32 %v4274, %v8946
      %v9177 = vmul.f32 %v4276, %v8947
      %v9178 = vmul.f32 %v4278, %v8948
      %v9179 = vmul.f32 %v4280, %v8949
      %v9180 = vmul.f32 %v4282, %v8950
      %v9181 = vmul.f32 %v4284, %v8951
      %v9182 = vmul.f32 %v4286, %v8952
      %v9183 = vmul.f32 %v4288, %v8953
      %v9184 = vadd.f32 %v9176, %v5713
      %v9185 = vadd.f32 %v9177, %v5714
      %v9186 = vadd.f32 %v9178, %v5715
      %v9187 = vadd.f32 %v9179, %v5716
      %v9188 = vadd.f32 %v9180, %v5717
      %v9189 = vadd.f32 %v9181, %v5718
      %v9190 = vadd.f32 %v9182, %v5719
      %v9191 = vadd.f32 %v9183, %v5720
      %v9192 = vlaneseq
      %v9193 = vshrl.u32 %v9192, 7
      %v9194 = vadd.s32 %v9193, 10
      %9195 = vset.pattern.permute.xlu0 %v9194
      %9196 = vperm.xlu0 %9195, %v5233
      %v9197 = vpop.permute.xlu0 %9196
      %v9198 = vlaneseq
      %v9199 = vshrl.u32 %v9198, 7
      %v9200 = vadd.s32 %v9199, 10
      %9201 = vset.pattern.permute.xlu0 %v9200
      %9202 = vperm.xlu0 %9201, %v5240
      %v9203 = vpop.permute.xlu0 %9202
      %v9204 = vlaneseq
      %v9205 = vshrl.u32 %v9204, 7
      %v9206 = vadd.s32 %v9205, 10
      %9207 = vset.pattern.permute.xlu0 %v9206
      %9208 = vperm.xlu0 %9207, %v5247
      %v9209 = vpop.permute.xlu0 %9208
      %v9210 = vlaneseq
      %v9211 = vshrl.u32 %v9210, 7
      %v9212 = vadd.s32 %v9211, 10
      %9213 = vset.pattern.permute.xlu0 %v9212
      %9214 = vperm.xlu0 %9213, %v5254
      %v9215 = vpop.permute.xlu0 %9214
      %v9216 = vlaneseq
      %v9217 = vshrl.u32 %v9216, 7
      %v9218 = vadd.s32 %v9217, 10
      %9219 = vset.pattern.permute.xlu0 %v9218
      %9220 = vperm.xlu0 %9219, %v5261
      %v9221 = vpop.permute.xlu0 %9220
      %v9222 = vlaneseq
      %v9223 = vshrl.u32 %v9222, 7
      %v9224 = vadd.s32 %v9223, 10
      %9225 = vset.pattern.permute.xlu0 %v9224
      %9226 = vperm.xlu0 %9225, %v5268
      %v9227 = vpop.permute.xlu0 %9226
      %v9228 = vlaneseq
      %v9229 = vshrl.u32 %v9228, 7
      %v9230 = vadd.s32 %v9229, 10
      %9231 = vset.pattern.permute.xlu0 %v9230
      %9232 = vperm.xlu0 %9231, %v5275
      %v9233 = vpop.permute.xlu0 %9232
      %v9234 = vlaneseq
      %v9235 = vshrl.u32 %v9234, 7
      %v9236 = vadd.s32 %v9235, 10
      %9237 = vset.pattern.permute.xlu0 %v9236
      %9238 = vperm.xlu0 %9237, %v5282
      %v9239 = vpop.permute.xlu0 %9238
      %v9240 = vmul.f32 %v9184, %v9197
      %v9241 = vmul.f32 %v9185, %v9203
      %v9242 = vmul.f32 %v9186, %v9209
      %v9243 = vmul.f32 %v9187, %v9215
      %v9244 = vmul.f32 %v9188, %v9221
      %v9245 = vmul.f32 %v9189, %v9227
      %v9246 = vmul.f32 %v9190, %v9233
      %v9247 = vmul.f32 %v9191, %v9239
      %v9248 = vsel %vm2873, %v9240, 0.0
      %v9249 = vrot.slane %v9248, 4
      %v9250 = vadd.f32 %v9248, %v9249
      %v9251 = vrot.slane %v9250, 2
      %v9252 = vadd.f32 %v9250, %v9251
      %v9253 = vrot.slane %v9252, 1
      %v9254 = vadd.f32 %v9252, %v9253
      %v9255 = vsel %vm2873, %v9241, 0.0
      %v9256 = vrot.slane %v9255, 4
      %v9257 = vadd.f32 %v9255, %v9256
      %v9258 = vrot.slane %v9257, 2
      %v9259 = vadd.f32 %v9257, %v9258
      %v9260 = vrot.slane %v9259, 1
      %v9261 = vadd.f32 %v9259, %v9260
      %v9262 = vsel %vm2873, %v9242, 0.0
      %v9263 = vrot.slane %v9262, 4
      %v9264 = vadd.f32 %v9262, %v9263
      %v9265 = vrot.slane %v9264, 2
      %v9266 = vadd.f32 %v9264, %v9265
      %v9267 = vrot.slane %v9266, 1
      %v9268 = vadd.f32 %v9266, %v9267
      %v9269 = vsel %vm2873, %v9243, 0.0
      %v9270 = vrot.slane %v9269, 4
      %v9271 = vadd.f32 %v9269, %v9270
      %v9272 = vrot.slane %v9271, 2
      %v9273 = vadd.f32 %v9271, %v9272
      %v9274 = vrot.slane %v9273, 1
      %v9275 = vadd.f32 %v9273, %v9274
      %v9276 = vsel %vm2873, %v9244, 0.0
      %v9277 = vrot.slane %v9276, 4
      %v9278 = vadd.f32 %v9276, %v9277
      %v9279 = vrot.slane %v9278, 2
      %v9280 = vadd.f32 %v9278, %v9279
      %v9281 = vrot.slane %v9280, 1
      %v9282 = vadd.f32 %v9280, %v9281
      %v9283 = vsel %vm2873, %v9245, 0.0
      %v9284 = vrot.slane %v9283, 4
      %v9285 = vadd.f32 %v9283, %v9284
      %v9286 = vrot.slane %v9285, 2
      %v9287 = vadd.f32 %v9285, %v9286
      %v9288 = vrot.slane %v9287, 1
      %v9289 = vadd.f32 %v9287, %v9288
      %v9290 = vsel %vm2873, %v9246, 0.0
      %v9291 = vrot.slane %v9290, 4
      %v9292 = vadd.f32 %v9290, %v9291
      %v9293 = vrot.slane %v9292, 2
      %v9294 = vadd.f32 %v9292, %v9293
      %v9295 = vrot.slane %v9294, 1
      %v9296 = vadd.f32 %v9294, %v9295
      %v9297 = vsel %vm2873, %v9247, 0.0
      %v9298 = vrot.slane %v9297, 4
      %v9299 = vadd.f32 %v9297, %v9298
      %v9300 = vrot.slane %v9299, 2
      %v9301 = vadd.f32 %v9299, %v9300
      %v9302 = vrot.slane %v9301, 1
      %v9303 = vadd.f32 %v9301, %v9302
      %v9304 = vmul.f32 %v3143, %v5963
      %v9306 = vrot.slane %v9304, 1
      %v9307 = vrot.slane %v9304, 2
      %v9308 = vrot.slane %v9304, 3
      %v9309 = vrot.slane %v9304, 4
      %v9310 = vrot.slane %v9304, 5
      %v9311 = vrot.slane %v9304, 6
      %v9312 = vrot.slane %v9304, 7
      %v9321 = vadd.f32 %v9254, %v9304
      %v9322 = vadd.f32 %v9261, %v9306
      %v9323 = vadd.f32 %v9268, %v9307
      %v9324 = vadd.f32 %v9275, %v9308
      %v9325 = vadd.f32 %v9282, %v9309
      %v9326 = vadd.f32 %v9289, %v9310
      %v9327 = vadd.f32 %v9296, %v9311
      %v9328 = vadd.f32 %v9303, %v9312
      %v9330 = vrot.slane %v5823, 1
      %v9331 = vrot.slane %v5823, 2
      %v9332 = vrot.slane %v5823, 3
      %v9333 = vrot.slane %v5823, 4
      %v9334 = vrot.slane %v5823, 5
      %v9335 = vrot.slane %v5823, 6
      %v9336 = vrot.slane %v5823, 7
      %9337 = vrot.lane.b32.xlu0 %v5823, 64
      %v9338 = vpop.permute.xlu0 %9337
      %9339 = vrot.lane.b32.xlu0 %v9330, 64
      %v9340 = vpop.permute.xlu0 %9339
      %9341 = vrot.lane.b32.xlu0 %v9331, 64
      %v9342 = vpop.permute.xlu0 %9341
      %9343 = vrot.lane.b32.xlu0 %v9332, 64
      %v9344 = vpop.permute.xlu0 %9343
      %9345 = vrot.lane.b32.xlu0 %v9333, 64
      %v9346 = vpop.permute.xlu0 %9345
      %9347 = vrot.lane.b32.xlu0 %v9334, 64
      %v9348 = vpop.permute.xlu0 %9347
      %9349 = vrot.lane.b32.xlu0 %v9335, 64
      %v9350 = vpop.permute.xlu0 %9349
      %9351 = vrot.lane.b32.xlu0 %v9336, 64
      %v9352 = vpop.permute.xlu0 %9351
      %v9361 = vmul.f32 %v9321, %v9338
      %v9362 = vmul.f32 %v9322, %v9340
      %v9363 = vmul.f32 %v9323, %v9342
      %v9364 = vmul.f32 %v9324, %v9344
      %v9365 = vmul.f32 %v9325, %v9346
      %v9366 = vmul.f32 %v9326, %v9348
      %v9367 = vmul.f32 %v9327, %v9350
      %v9368 = vmul.f32 %v9328, %v9352
      %v9377 = vrot.slane %v9362, 7
      %v9378 = vsel %vm6039, %v9377, %v9361
      %v9379 = vrot.slane %v9363, 6
      %v9380 = vsel %vm6042, %v9379, %v9378
      %v9381 = vrot.slane %v9364, 5
      %v9382 = vsel %vm6045, %v9381, %v9380
      %v9383 = vrot.slane %v9365, 4
      %v9384 = vsel %vm6048, %v9383, %v9382
      %v9385 = vrot.slane %v9366, 3
      %v9386 = vsel %vm6051, %v9385, %v9384
      %v9387 = vrot.slane %v9367, 2
      %v9388 = vsel %vm6054, %v9387, %v9386
      %v9389 = vrot.slane %v9368, 1
      %v9390 = vsel %vm6057, %v9389, %v9388
      %v9391 = vsel %vm2873, %v9390, 0
      %9393 = vmatpush.msra.mxu0 0.0
      %9394 = vmatpush.msra.mxu0 0.0
      %9395 = vmatpush.msra.mxu0 0.0
      %9396 = vmatpush.msra.mxu0 0.0
      %9397 = vmatpush.msra.mxu0 0.0
      %9398 = vmatpush.msra.mxu0 0.0
      %9399 = vmatpush.msra.mxu0 0.0
      %9400 = vmatpush.msra.mxu0 0.0
      %9401 = vmatpush.msra.mxu0 %v5833
      %9402 = vmatpush.msra.mxu0 %v5832
      %9403 = vmatpush.msra.mxu0 %v5831
      %9404 = vmatpush.msra.mxu0 %v5830
      %9405 = vmatpush.msra.mxu0 %v5829
      %9406 = vmatpush.msra.mxu0 %v5828
      %9407 = vmatpush.msra.mxu0 %v5827
      %9408 = vmatpush.msra.mxu0 %v5826
      %9409 = vmatmul.f32.gmra.mxu0 %v9391
      %v9410 = vpop.f32.mrf.mxu0
      %v9411 = vadd.f32 0.0, %v9410
      %9412 = vdwg.mxu0
      %9413 = vst.msk [vmem:[%s467 + $0x70] sm:$0xff] %vm541, %v9411
      %v9414 = vmul.f32 %v4290, %v9184
      %v9415 = vmul.f32 %v4292, %v9185
      %v9416 = vmul.f32 %v4294, %v9186
      %v9417 = vmul.f32 %v4296, %v9187
      %v9418 = vmul.f32 %v4298, %v9188
      %v9419 = vmul.f32 %v4300, %v9189
      %v9420 = vmul.f32 %v4302, %v9190
      %v9421 = vmul.f32 %v4304, %v9191
      %v9422 = vadd.f32 %v9414, %v5721
      %v9423 = vadd.f32 %v9415, %v5722
      %v9424 = vadd.f32 %v9416, %v5723
      %v9425 = vadd.f32 %v9417, %v5724
      %v9426 = vadd.f32 %v9418, %v5725
      %v9427 = vadd.f32 %v9419, %v5726
      %v9428 = vadd.f32 %v9420, %v5727
      %v9429 = vadd.f32 %v9421, %v5728
      %v9430 = vlaneseq
      %v9431 = vshrl.u32 %v9430, 7
      %v9432 = vadd.s32 %v9431, 10
      %9433 = vset.pattern.permute.xlu0 %v9432
      %9434 = vperm.xlu0 %9433, %v5289
      %v9435 = vpop.permute.xlu0 %9434
      %v9436 = vlaneseq
      %v9437 = vshrl.u32 %v9436, 7
      %v9438 = vadd.s32 %v9437, 10
      %9439 = vset.pattern.permute.xlu0 %v9438
      %9440 = vperm.xlu0 %9439, %v5296
      %v9441 = vpop.permute.xlu0 %9440
      %v9442 = vlaneseq
      %v9443 = vshrl.u32 %v9442, 7
      %v9444 = vadd.s32 %v9443, 10
      %9445 = vset.pattern.permute.xlu0 %v9444
      %9446 = vperm.xlu0 %9445, %v5303
      %v9447 = vpop.permute.xlu0 %9446
      %v9448 = vlaneseq
      %v9449 = vshrl.u32 %v9448, 7
      %v9450 = vadd.s32 %v9449, 10
      %9451 = vset.pattern.permute.xlu0 %v9450
      %9452 = vperm.xlu0 %9451, %v5310
      %v9453 = vpop.permute.xlu0 %9452
      %v9454 = vlaneseq
      %v9455 = vshrl.u32 %v9454, 7
      %v9456 = vadd.s32 %v9455, 10
      %9457 = vset.pattern.permute.xlu0 %v9456
      %9458 = vperm.xlu0 %9457, %v5317
      %v9459 = vpop.permute.xlu0 %9458
      %v9460 = vlaneseq
      %v9461 = vshrl.u32 %v9460, 7
      %v9462 = vadd.s32 %v9461, 10
      %9463 = vset.pattern.permute.xlu0 %v9462
      %9464 = vperm.xlu0 %9463, %v5324
      %v9465 = vpop.permute.xlu0 %9464
      %v9466 = vlaneseq
      %v9467 = vshrl.u32 %v9466, 7
      %v9468 = vadd.s32 %v9467, 10
      %9469 = vset.pattern.permute.xlu0 %v9468
      %9470 = vperm.xlu0 %9469, %v5331
      %v9471 = vpop.permute.xlu0 %9470
      %v9472 = vlaneseq
      %v9473 = vshrl.u32 %v9472, 7
      %v9474 = vadd.s32 %v9473, 10
      %9475 = vset.pattern.permute.xlu0 %v9474
      %9476 = vperm.xlu0 %9475, %v5338
      %v9477 = vpop.permute.xlu0 %9476
      %v9478 = vmul.f32 %v9422, %v9435
      %v9479 = vmul.f32 %v9423, %v9441
      %v9480 = vmul.f32 %v9424, %v9447
      %v9481 = vmul.f32 %v9425, %v9453
      %v9482 = vmul.f32 %v9426, %v9459
      %v9483 = vmul.f32 %v9427, %v9465
      %v9484 = vmul.f32 %v9428, %v9471
      %v9485 = vmul.f32 %v9429, %v9477
      %v9486 = vsel %vm2873, %v9478, 0.0
      %v9487 = vrot.slane %v9486, 4
      %v9488 = vadd.f32 %v9486, %v9487
      %v9489 = vrot.slane %v9488, 2
      %v9490 = vadd.f32 %v9488, %v9489
      %v9491 = vrot.slane %v9490, 1
      %v9492 = vadd.f32 %v9490, %v9491
      %v9493 = vsel %vm2873, %v9479, 0.0
      %v9494 = vrot.slane %v9493, 4
      %v9495 = vadd.f32 %v9493, %v9494
      %v9496 = vrot.slane %v9495, 2
      %v9497 = vadd.f32 %v9495, %v9496
      %v9498 = vrot.slane %v9497, 1
      %v9499 = vadd.f32 %v9497, %v9498
      %v9500 = vsel %vm2873, %v9480, 0.0
      %v9501 = vrot.slane %v9500, 4
      %v9502 = vadd.f32 %v9500, %v9501
      %v9503 = vrot.slane %v9502, 2
      %v9504 = vadd.f32 %v9502, %v9503
      %v9505 = vrot.slane %v9504, 1
      %v9506 = vadd.f32 %v9504, %v9505
      %v9507 = vsel %vm2873, %v9481, 0.0
      %v9508 = vrot.slane %v9507, 4
      %v9509 = vadd.f32 %v9507, %v9508
      %v9510 = vrot.slane %v9509, 2
      %v9511 = vadd.f32 %v9509, %v9510
      %v9512 = vrot.slane %v9511, 1
      %v9513 = vadd.f32 %v9511, %v9512
      %v9514 = vsel %vm2873, %v9482, 0.0
      %v9515 = vrot.slane %v9514, 4
      %v9516 = vadd.f32 %v9514, %v9515
      %v9517 = vrot.slane %v9516, 2
      %v9518 = vadd.f32 %v9516, %v9517
      %v9519 = vrot.slane %v9518, 1
      %v9520 = vadd.f32 %v9518, %v9519
      %v9521 = vsel %vm2873, %v9483, 0.0
      %v9522 = vrot.slane %v9521, 4
      %v9523 = vadd.f32 %v9521, %v9522
      %v9524 = vrot.slane %v9523, 2
      %v9525 = vadd.f32 %v9523, %v9524
      %v9526 = vrot.slane %v9525, 1
      %v9527 = vadd.f32 %v9525, %v9526
      %v9528 = vsel %vm2873, %v9484, 0.0
      %v9529 = vrot.slane %v9528, 4
      %v9530 = vadd.f32 %v9528, %v9529
      %v9531 = vrot.slane %v9530, 2
      %v9532 = vadd.f32 %v9530, %v9531
      %v9533 = vrot.slane %v9532, 1
      %v9534 = vadd.f32 %v9532, %v9533
      %v9535 = vsel %vm2873, %v9485, 0.0
      %v9536 = vrot.slane %v9535, 4
      %v9537 = vadd.f32 %v9535, %v9536
      %v9538 = vrot.slane %v9537, 2
      %v9539 = vadd.f32 %v9537, %v9538
      %v9540 = vrot.slane %v9539, 1
      %v9541 = vadd.f32 %v9539, %v9540
      %v9542 = vmul.f32 %v3144, %v5963
      %v9544 = vrot.slane %v9542, 1
      %v9545 = vrot.slane %v9542, 2
      %v9546 = vrot.slane %v9542, 3
      %v9547 = vrot.slane %v9542, 4
      %v9548 = vrot.slane %v9542, 5
      %v9549 = vrot.slane %v9542, 6
      %v9550 = vrot.slane %v9542, 7
      %v9559 = vadd.f32 %v9492, %v9542
      %v9560 = vadd.f32 %v9499, %v9544
      %v9561 = vadd.f32 %v9506, %v9545
      %v9562 = vadd.f32 %v9513, %v9546
      %v9563 = vadd.f32 %v9520, %v9547
      %v9564 = vadd.f32 %v9527, %v9548
      %v9565 = vadd.f32 %v9534, %v9549
      %v9566 = vadd.f32 %v9541, %v9550
      %v9568 = vrot.slane %v5824, 1
      %v9569 = vrot.slane %v5824, 2
      %v9570 = vrot.slane %v5824, 3
      %v9571 = vrot.slane %v5824, 4
      %v9572 = vrot.slane %v5824, 5
      %v9573 = vrot.slane %v5824, 6
      %v9574 = vrot.slane %v5824, 7
      %9575 = vrot.lane.b32.xlu0 %v5824, 64
      %v9576 = vpop.permute.xlu0 %9575
      %9577 = vrot.lane.b32.xlu0 %v9568, 64
      %v9578 = vpop.permute.xlu0 %9577
      %9579 = vrot.lane.b32.xlu0 %v9569, 64
      %v9580 = vpop.permute.xlu0 %9579
      %9581 = vrot.lane.b32.xlu0 %v9570, 64
      %v9582 = vpop.permute.xlu0 %9581
      %9583 = vrot.lane.b32.xlu0 %v9571, 64
      %v9584 = vpop.permute.xlu0 %9583
      %9585 = vrot.lane.b32.xlu0 %v9572, 64
      %v9586 = vpop.permute.xlu0 %9585
      %9587 = vrot.lane.b32.xlu0 %v9573, 64
      %v9588 = vpop.permute.xlu0 %9587
      %9589 = vrot.lane.b32.xlu0 %v9574, 64
      %v9590 = vpop.permute.xlu0 %9589
      %v9599 = vmul.f32 %v9559, %v9576
      %v9600 = vmul.f32 %v9560, %v9578
      %v9601 = vmul.f32 %v9561, %v9580
      %v9602 = vmul.f32 %v9562, %v9582
      %v9603 = vmul.f32 %v9563, %v9584
      %v9604 = vmul.f32 %v9564, %v9586
      %v9605 = vmul.f32 %v9565, %v9588
      %v9606 = vmul.f32 %v9566, %v9590
      %v9615 = vrot.slane %v9600, 7
      %v9616 = vsel %vm6039, %v9615, %v9599
      %v9617 = vrot.slane %v9601, 6
      %v9618 = vsel %vm6042, %v9617, %v9616
      %v9619 = vrot.slane %v9602, 5
      %v9620 = vsel %vm6045, %v9619, %v9618
      %v9621 = vrot.slane %v9603, 4
      %v9622 = vsel %vm6048, %v9621, %v9620
      %v9623 = vrot.slane %v9604, 3
      %v9624 = vsel %vm6051, %v9623, %v9622
      %v9625 = vrot.slane %v9605, 2
      %v9626 = vsel %vm6054, %v9625, %v9624
      %v9627 = vrot.slane %v9606, 1
      %v9628 = vsel %vm6057, %v9627, %v9626
      %v9629 = vsel %vm2873, %v9628, 0
      %9631 = vmatpush.msra.mxu0 0.0
      %9632 = vmatpush.msra.mxu0 0.0
      %9633 = vmatpush.msra.mxu0 0.0
      %9634 = vmatpush.msra.mxu0 0.0
      %9635 = vmatpush.msra.mxu0 0.0
      %9636 = vmatpush.msra.mxu0 0.0
      %9637 = vmatpush.msra.mxu0 0.0
      %9638 = vmatpush.msra.mxu0 0.0
      %9639 = vmatpush.msra.mxu0 %v5833
      %9640 = vmatpush.msra.mxu0 %v5832
      %9641 = vmatpush.msra.mxu0 %v5831
      %9642 = vmatpush.msra.mxu0 %v5830
      %9643 = vmatpush.msra.mxu0 %v5829
      %9644 = vmatpush.msra.mxu0 %v5828
      %9645 = vmatpush.msra.mxu0 %v5827
      %9646 = vmatpush.msra.mxu0 %v5826
      %9647 = vmatmul.f32.gmra.mxu0 %v9629
      %v9648 = vpop.f32.mrf.mxu0
      %v9649 = vadd.f32 0.0, %v9648
      %9650 = vdwg.mxu0
      %9651 = vst.msk [vmem:[%s467 + $0x78] sm:$0xff] %vm541, %v9649
      %p9652 = scmp.lt.s32.totalorder %s25, 1
      %s9653 = scalar_select %p9652, %s25, 1
      %s9654 = smul.addr %s9653, 16
      %s9655 = smul.addr %s9654, 8
      %s9656 = scalar_lea.vmem %s14, %s9655
      // Predicated region
      $region77: #{multi_scale_block.1} parent=75 // pred_check
        %p9657 = pneg %p342
      $region78: #{multi_scale_block.1} parent=75 // pred_check_branch
        %9659 = sbr.rel (%p9657) target = $region80
      $region79: #{multi_scale_block.1} parent=75 // pred_region
        _
      $region80: #{multi_scale_block.1} parent=75 // pred_fallthru
        _
    $region76: #{multi_scale_block.1} parent=5 // pred_fallthru
      _
    %p9660 = scmp.le.s32.totalorder 2, %s20
    // Predicated region
    $region81: #{multi_scale_block.1} parent=5 // pred_check
      %p9661 = pneg %p9660
    $region82: #{multi_scale_block.1} parent=5 // pred_check_branch
      %9663 = sbr.rel (%p9661) target = $region84
    $region83: #{multi_scale_block.1} parent=5 // pred_region
      %s9664 = ssub.s32 %s20, 2
      // Predicated region
      $region85: #{multi_scale_block.1} parent=83 // pred_check
        %p9665 = pneg %p348
      $region86: #{multi_scale_block.1} parent=83 // pred_check_branch
        %9667 = sbr.rel (%p9665) target = $region88
      $region87: #{multi_scale_block.1} parent=83 // pred_region
        %p9668 = scmp.lt.s32.totalorder %s26, 1
        %s9669 = scalar_select %p9668, %s26, 1
        %s9670 = smul.addr %s9669, 16
        %s9671 = smul.addr %s9670, 8
        %s9672 = scalar_lea.vmem %s14, %s9671
      $region88: #{multi_scale_block.1} parent=83 // pred_fallthru
        _
    $region84: #{multi_scale_block.1} parent=5 // pred_fallthru
      _
  $region6: #{multi_scale_block.1} parent=0 // loop_footer
    %s24 = sadd.s32 1, %s20
  $region7: #{multi_scale_block.1} parent=0 // loop_footer_branch
    %19 = sbr.rel target = $region3
  $region8: #{multi_scale_block.1} parent=0 // loop_exit
    _

</llo_original>
